<compile_context>
chip_gen: v5e
topology: v5e:2x2
jax: 0.10.0
libtpu: 0.0.40
codegen_flags: <defaults>
</compile_context>

<pallas_src>
import jax
import jax.numpy as jnp
from jax import lax
from jax.experimental import pallas as pl
from jax.experimental.pallas import tpu as pltpu


def _round_up(x, m):
    return (x + m - 1) // m * m


# ----------------------------------------------------------------------------
# Fused multi-layer LSTM kernel
# ----------------------------------------------------------------------------
def _make_stack_kernel(num_layers, t_chunk, b_pad, in_pads, hid_pads):
    """Build the fused stacked-LSTM kernel.

    Kernel ref order:
      x_ref,
      wx_0..wx_{L-1}, wh_0..wh_{L-1}, b_0..b_{L-1},
      out_ref,
      act_0..act_{L-2},                  (inter-layer activation slabs)
      gate_0..gate_{L-1},                (per-layer chunk input-projection)
      h_0, c_0, ..., h_{L-1}, c_{L-1}    (carried state)
    """
    L = num_layers

    def kernel(*refs):
        x_ref = refs[0]
        wx_refs = refs[1:1 + L]
        wh_refs = refs[1 + L:1 + 2 * L]
        b_refs = refs[1 + 2 * L:1 + 3 * L]
        out_ref = refs[1 + 3 * L]
        scratch = refs[2 + 3 * L:]
        act_refs = scratch[:L - 1]
        gate_refs = scratch[L - 1:2 * L - 1]
        hc_refs = scratch[2 * L - 1:]

        # Zero-init carried state on the first time-chunk only; VMEM scratch
        # persists across the (sequential, "arbitrary") time-chunk grid.
        @pl.when(pl.program_id(0) == 0)
        def _():
            for r in hc_refs:
                r[...] = jnp.zeros_like(r)

        def run_layer(l, in_slab, out_slab):
            hid = hid_pads[l]
            d_in = in_pads[l]
            w_x = wx_refs[l][...]            # (d_in, 4*hid)
            w_h = wh_refs[l][...]            # (hid,  4*hid)
            b = b_refs[l][...]               # (1,    4*hid)
            g_sc = gate_refs[l]
            h_sc = hc_refs[2 * l]
            c_sc = hc_refs[2 * l + 1]

            # Time-independent input projection for the WHOLE chunk in one
            # big lane-dense MXU call (bias folded in); only the small
            # h @ W_hh^T matmul remains inside the sequential recurrence.
            x_all = in_slab[...].astype(jnp.float32)
            xg = jnp.dot(x_all.reshape(t_chunk * b_pad, d_in), w_x,
                         preferred_element_type=jnp.float32) + b
            g_sc[...] = xg.reshape(t_chunk, b_pad, 4 * hid)

            def step(tt, carry):
                h_prev = h_sc[...]                       # (B_pad, hid)
                c_prev = c_sc[...]
                gates = g_sc[tt] + jnp.dot(
                    h_prev, w_h, preferred_element_type=jnp.float32)
                # Wrapper-reordered gate layout: [ i | f | o | g ]
                sig = jax.nn.sigmoid(gates[:, :3 * hid])   # one wide EUP slab
                i_g = sig[:, 0 * hid:1 * hid]
                f_g = sig[:, 1 * hid:2 * hid]
                o_g = sig[:, 2 * hid:3 * hid]
                g_g = jnp.tanh(gates[:, 3 * hid:4 * hid])
                c_new = f_g * c_prev + i_g * g_g
                h_new = o_g * jnp.tanh(c_new)
                c_sc[...] = c_new
                h_sc[...] = h_new
                out_slab[tt] = h_new.astype(out_slab.dtype)
                return carry

            lax.fori_loop(0, t_chunk, step, 0, unroll=True)

        # Chain the layers; intermediate activations live in VMEM slabs.
        in_slab = x_ref
        for l in range(L):
            out_slab = out_ref if l == L - 1 else act_refs[l]
            run_layer(l, in_slab, out_slab)
            in_slab = out_slab

    return kernel


# ----------------------------------------------------------------------------
# Host-side weight prep (gate reorder + pad + pre-transpose)
# ----------------------------------------------------------------------------
def _prep_layer(w_ih, w_hh, b_ih, b_hh, d_in_pad, h_pad):
    H = w_hh.shape[1]
    d_in = w_ih.shape[1]

    def reorder(w):
        # PyTorch gate blocks [i, f, g, o] -> [i, f, o, g]
        blk = w.reshape(4, H, -1)
        return jnp.concatenate([blk[0:2], blk[3:4], blk[2:3]], axis=0)

    w_ih_r = reorder(w_ih)                                   # (4, H, d_in)
    w_hh_r = reorder(w_hh)                                   # (4, H, H)
    b_r = reorder((b_ih + b_hh).reshape(4 * H, 1))[..., 0]   # (4, H)

    # Pad every gate block independently so block boundaries stay at
    # multiples of h_pad (lane-aligned slices in the kernel).
    w_ih_p = jnp.zeros((4, h_pad, d_in_pad), jnp.float32
                       ).at[:, :H, :d_in].set(w_ih_r)
    w_hh_p = jnp.zeros((4, h_pad, h_pad), jnp.float32
                       ).at[:, :H, :H].set(w_hh_r)
    b_p = jnp.zeros((4, h_pad), jnp.float32).at[:, :H].set(b_r)

    w_x_t = jnp.transpose(w_ih_p.reshape(4 * h_pad, d_in_pad))   # (d_in, 4h)
    w_h_t = jnp.transpose(w_hh_p.reshape(4 * h_pad, h_pad))      # (h,    4h)
    bias = b_p.reshape(1, 4 * h_pad)
    return w_x_t, w_h_t, bias


def fused_lstm_stack(x, layers, t_chunk=16):
    """Run a stack of LSTM layers (zero init state) in one pallas_call.

    x: (B, T, D_in) batch-first.  layers: list of dicts with PyTorch-layout
    weights {w_ih:(4H,Din), w_hh:(4H,H), b_ih:(4H,), b_hh:(4H,)}.
    Returns (B, T, H_last).
    """
    B, T, D_in = x.shape
    num_layers = len(layers)
    t_chunk = max(1, min(t_chunk, T))
    T_pad = _round_up(T, t_chunk)
    n_chunks = T_pad // t_chunk
    B_pad = _round_up(B, 8)

    in_dims, hid_dims = [], []
    d_prev = D_in
    for p in layers:
        H = p["w_hh"].shape[1]
        in_dims.append(d_prev)
        hid_dims.append(H)
        d_prev = H
    in_pads = [_round_up(d, 128) for d in in_dims]
    hid_pads = [_round_up(h, 128) for h in hid_dims]

    wx_list, wh_list, b_list = [], [], []
    for l, p in enumerate(layers):
        w_x, w_h, b_c = _prep_layer(p["w_ih"], p["w_hh"], p["b_ih"],
                                    p["b_hh"], in_pads[l], hid_pads[l])
        wx_list.append(w_x)
        wh_list.append(w_h)
        b_list.append(b_c)

    # Time-major, zero-padded input (padding at the END of time is exact
    # because only out[:T] is kept and final states are not returned).
    x_tm = jnp.transpose(x, (1, 0, 2)).astype(jnp.float32)
    x_p = jnp.zeros((T_pad, B_pad, in_pads[0]), jnp.float32
                    ).at[:T, :B, :D_in].set(x_tm)

    in_specs = [pl.BlockSpec((t_chunk, B_pad, in_pads[0]),
                             lambda c: (c, 0, 0))]
    for l in range(num_layers):      # W_ih^T (padded, reordered, transposed)
        in_specs.append(pl.BlockSpec((in_pads[l], 4 * hid_pads[l]),
                                     lambda c: (0, 0)))
    for l in range(num_layers):      # W_hh^T
        in_specs.append(pl.BlockSpec((hid_pads[l], 4 * hid_pads[l]),
                                     lambda c: (0, 0)))
    for l in range(num_layers):      # fused bias
        in_specs.append(pl.BlockSpec((1, 4 * hid_pads[l]),
                                     lambda c: (0, 0)))

    scratch = []
    for l in range(num_layers - 1):  # inter-layer activation slabs (f32)
        scratch.append(pltpu.VMEM((t_chunk, B_pad, hid_pads[l]), jnp.float32))
    for l in range(num_layers):      # per-layer chunk input-projection slabs
        scratch.append(pltpu.VMEM((t_chunk, B_pad, 4 * hid_pads[l]),
                                  jnp.float32))
    for l in range(num_layers):      # per-layer carried (h, c)
        scratch.append(pltpu.VMEM((B_pad, hid_pads[l]), jnp.float32))
        scratch.append(pltpu.VMEM((B_pad, hid_pads[l]), jnp.float32))

    kernel = _make_stack_kernel(num_layers, t_chunk, B_pad, in_pads, hid_pads)

    out_p = pl.pallas_call(
        kernel,
        out_shape=jax.ShapeDtypeStruct((T_pad, B_pad, hid_pads[-1]),
                                       jnp.float32),
        grid_spec=pltpu.PrefetchScalarGridSpec(
            num_scalar_prefetch=0,
            grid=(n_chunks,),
            in_specs=in_specs,
            out_specs=pl.BlockSpec((t_chunk, B_pad, hid_pads[-1]),
                                   lambda c: (c, 0, 0)),
            scratch_shapes=scratch),
        compiler_params=pltpu.CompilerParams(
            dimension_semantics=("arbitrary",)),   # time is a recurrence
    )(x_p, *wx_list, *wh_list, *b_list)

    out = out_p[:T, :B, :hid_dims[-1]]
    return jnp.transpose(out, (1, 0, 2)).astype(x.dtype)


# ----------------------------------------------------------------------------
# Parameter init (PyTorch-style) and the Seq2Seq wrapper
# ----------------------------------------------------------------------------
def init_lstm_params(key, input_dim, hidden_dim, num_layers):
    params = []
    scale = 1.0 / jnp.sqrt(jnp.float32(hidden_dim))
    for layer in range(num_layers):
        d_in = input_dim if layer == 0 else hidden_dim
        key, k1, k2, k3, k4 = jax.random.split(key, 5)
        params.append({
            "w_ih": jax.random.uniform(k1, (4 * hidden_dim, d_in),
                                       jnp.float32, -scale, scale),
            "w_hh": jax.random.uniform(k2, (4 * hidden_dim, hidden_dim),
                                       jnp.float32, -scale, scale),
            "b_ih": jax.random.uniform(k3, (4 * hidden_dim,),
                                       jnp.float32, -scale, scale),
            "b_hh": jax.random.uniform(k4, (4 * hidden_dim,),
                                       jnp.float32, -scale, scale),
        })
    return params, key


class Seq2SeqPallas:
    def __init__(self, input_dim, hidden_dim, output_dim, num_layers, key):
        self.encoder_params, key = init_lstm_params(
            key, input_dim, hidden_dim, num_layers)
        self.decoder_params, key = init_lstm_params(
            key, hidden_dim, output_dim, num_layers)
        # Encoder and decoder both start from zero state, so the whole
        # encoder->decoder pipeline is one fused stack of 2*num_layers LSTMs.
        self.all_params = self.encoder_params + self.decoder_params

    def __call__(self, x):
        return fused_lstm_stack(x, self.all_params)


# ----------------------------------------------------------------------------
# Pure-JAX reference (lax.scan) for a correctness check
# ----------------------------------------------------------------------------
def _lstm_layer_ref(x, p):
    B, T, _ = x.shape
    H = p["w_hh"].shape[1]

    def step(carry, x_t):
        h, c = carry
        gates = (x_t @ p["w_ih"].T + h @ p["w_hh"].T
                 + p["b_ih"] + p["b_hh"])
        i = jax.nn.sigmoid(gates[:, 0 * H:1 * H])
        f = jax.nn.sigmoid(gates[:, 1 * H:2 * H])
        g = jnp.tanh(gates[:, 2 * H:3 * H])
        o = jax.nn.sigmoid(gates[:, 3 * H:4 * H])
        c = f * c + i * g
        h = o * jnp.tanh(c)
        return (h, c), h

    init = (jnp.zeros((B, H), jnp.float32), jnp.zeros((B, H), jnp.float32))
    _, ys = lax.scan(step, init, jnp.transpose(x, (1, 0, 2)))
    return jnp.transpose(ys, (1, 0, 2))


def seq2seq_ref(x, params):
    h = x
    for p in params:
        h = _lstm_layer_ref(h, p)
    return h


if __name__ == "__main__":
    key = jax.random.PRNGKey(0)
    key, xkey = jax.random.split(key)

    batch, seq, input_dim, hidden_dim, output_dim, num_layers = 2, 8, 4, 32, 16, 2
    x = jax.random.normal(xkey, (batch, seq, input_dim), dtype=jnp.float32)

    model = Seq2SeqPallas(input_dim, hidden_dim, output_dim, num_layers, key)
    out = jax.block_until_ready(model(x))

    assert out.shape == (batch, seq, output_dim)
    assert jnp.all(jnp.isfinite(out))

    ref = jax.block_until_ready(seq2seq_ref(x, model.all_params))
    max_err = float(jnp.max(jnp.abs(out - ref)))
    assert max_err < 2e-3, f"mismatch vs reference: {max_err}"

    print("KERNEL_OK")
</pallas_src>

<mosaic_0001>
module attributes {stable_mosaic.version = 11 : i64} {
  func.func @kernel(%arg0: i32, %arg1: memref<8x8x128xf32, #tpu.memory_space<vmem>>, %arg2: memref<128x512xf32, #tpu.memory_space<vmem>>, %arg3: memref<128x512xf32, #tpu.memory_space<vmem>>, %arg4: memref<128x512xf32, #tpu.memory_space<vmem>>, %arg5: memref<128x512xf32, #tpu.memory_space<vmem>>, %arg6: memref<128x512xf32, #tpu.memory_space<vmem>>, %arg7: memref<128x512xf32, #tpu.memory_space<vmem>>, %arg8: memref<128x512xf32, #tpu.memory_space<vmem>>, %arg9: memref<128x512xf32, #tpu.memory_space<vmem>>, %arg10: memref<1x512xf32, #tpu.memory_space<vmem>>, %arg11: memref<1x512xf32, #tpu.memory_space<vmem>>, %arg12: memref<1x512xf32, #tpu.memory_space<vmem>>, %arg13: memref<1x512xf32, #tpu.memory_space<vmem>>, %arg14: memref<8x8x128xf32, #tpu.memory_space<vmem>>, %arg15: memref<8x8x128xf32, #tpu.memory_space<vmem>>, %arg16: memref<8x8x128xf32, #tpu.memory_space<vmem>>, %arg17: memref<8x8x128xf32, #tpu.memory_space<vmem>>, %arg18: memref<8x8x512xf32, #tpu.memory_space<vmem>>, %arg19: memref<8x8x512xf32, #tpu.memory_space<vmem>>, %arg20: memref<8x8x512xf32, #tpu.memory_space<vmem>>, %arg21: memref<8x8x512xf32, #tpu.memory_space<vmem>>, %arg22: memref<8x128xf32, #tpu.memory_space<vmem>>, %arg23: memref<8x128xf32, #tpu.memory_space<vmem>>, %arg24: memref<8x128xf32, #tpu.memory_space<vmem>>, %arg25: memref<8x128xf32, #tpu.memory_space<vmem>>, %arg26: memref<8x128xf32, #tpu.memory_space<vmem>>, %arg27: memref<8x128xf32, #tpu.memory_space<vmem>>, %arg28: memref<8x128xf32, #tpu.memory_space<vmem>>, %arg29: memref<8x128xf32, #tpu.memory_space<vmem>>) attributes {dimension_semantics = [#tpu.dimension_semantics<arbitrary>], iteration_bounds = array<i64: 1>, scalar_prefetch = 0 : i64, scratch_operands = 15 : i64, tpu.core_type = #tpu.core_type<tc>, window_params = [{transform_indices = @transform_0, window_bounds = array<i64: 8, 8, 128>}, {pipeline_mode = #tpu.pipeline_mode<synchronous>, transform_indices = @transform_1, window_bounds = array<i64: 128, 512>}, {pipeline_mode = #tpu.pipeline_mode<synchronous>, transform_indices = @transform_2, window_bounds = array<i64: 128, 512>}, {pipeline_mode = #tpu.pipeline_mode<synchronous>, transform_indices = @transform_3, window_bounds = array<i64: 128, 512>}, {pipeline_mode = #tpu.pipeline_mode<synchronous>, transform_indices = @transform_4, window_bounds = array<i64: 128, 512>}, {pipeline_mode = #tpu.pipeline_mode<synchronous>, transform_indices = @transform_5, window_bounds = array<i64: 128, 512>}, {pipeline_mode = #tpu.pipeline_mode<synchronous>, transform_indices = @transform_6, window_bounds = array<i64: 128, 512>}, {pipeline_mode = #tpu.pipeline_mode<synchronous>, transform_indices = @transform_7, window_bounds = array<i64: 128, 512>}, {pipeline_mode = #tpu.pipeline_mode<synchronous>, transform_indices = @transform_8, window_bounds = array<i64: 128, 512>}, {pipeline_mode = #tpu.pipeline_mode<synchronous>, transform_indices = @transform_9, window_bounds = array<i64: 1, 512>}, {pipeline_mode = #tpu.pipeline_mode<synchronous>, transform_indices = @transform_10, window_bounds = array<i64: 1, 512>}, {pipeline_mode = #tpu.pipeline_mode<synchronous>, transform_indices = @transform_11, window_bounds = array<i64: 1, 512>}, {pipeline_mode = #tpu.pipeline_mode<synchronous>, transform_indices = @transform_12, window_bounds = array<i64: 1, 512>}, {transform_indices = @transform_13, window_bounds = array<i64: 8, 8, 128>}]} {
    %c0_i32 = arith.constant 0 : i32
    %0 = arith.cmpi eq, %arg0, %c0_i32 : i32
    %1 = arith.extui %0 : i1 to i32
    %c0_i32_0 = arith.constant 0 : i32
    %2 = arith.cmpi ne, %1, %c0_i32_0 : i32
    scf.if %2 {
      %cst_527 = arith.constant 0.000000e+00 : f32
      %971 = vector.broadcast %cst_527 : f32 to vector<8x128xf32>
      %c0_528 = arith.constant 0 : index
      %c0_529 = arith.constant 0 : index
      %972 = vector.load %arg22[%c0_528, %c0_529] : memref<8x128xf32, #tpu.memory_space<vmem>>, vector<8x128xf32>
      tpu.vector_store %arg22[%c0_528, %c0_529], %971 {strides = array<i32>} : memref<8x128xf32, #tpu.memory_space<vmem>>, vector<8x128xf32>,
      %cst_530 = arith.constant 0.000000e+00 : f32
      %973 = vector.broadcast %cst_530 : f32 to vector<8x128xf32>
      %c0_531 = arith.constant 0 : index
      %c0_532 = arith.constant 0 : index
      %974 = vector.load %arg23[%c0_531, %c0_532] : memref<8x128xf32, #tpu.memory_space<vmem>>, vector<8x128xf32>
      tpu.vector_store %arg23[%c0_531, %c0_532], %973 {strides = array<i32>} : memref<8x128xf32, #tpu.memory_space<vmem>>, vector<8x128xf32>,
      %cst_533 = arith.constant 0.000000e+00 : f32
      %975 = vector.broadcast %cst_533 : f32 to vector<8x128xf32>
      %c0_534 = arith.constant 0 : index
      %c0_535 = arith.constant 0 : index
      %976 = vector.load %arg24[%c0_534, %c0_535] : memref<8x128xf32, #tpu.memory_space<vmem>>, vector<8x128xf32>
      tpu.vector_store %arg24[%c0_534, %c0_535], %975 {strides = array<i32>} : memref<8x128xf32, #tpu.memory_space<vmem>>, vector<8x128xf32>,
      %cst_536 = arith.constant 0.000000e+00 : f32
      %977 = vector.broadcast %cst_536 : f32 to vector<8x128xf32>
      %c0_537 = arith.constant 0 : index
      %c0_538 = arith.constant 0 : index
      %978 = vector.load %arg25[%c0_537, %c0_538] : memref<8x128xf32, #tpu.memory_space<vmem>>, vector<8x128xf32>
      tpu.vector_store %arg25[%c0_537, %c0_538], %977 {strides = array<i32>} : memref<8x128xf32, #tpu.memory_space<vmem>>, vector<8x128xf32>,
      %cst_539 = arith.constant 0.000000e+00 : f32
      %979 = vector.broadcast %cst_539 : f32 to vector<8x128xf32>
      %c0_540 = arith.constant 0 : index
      %c0_541 = arith.constant 0 : index
      %980 = vector.load %arg26[%c0_540, %c0_541] : memref<8x128xf32, #tpu.memory_space<vmem>>, vector<8x128xf32>
      tpu.vector_store %arg26[%c0_540, %c0_541], %979 {strides = array<i32>} : memref<8x128xf32, #tpu.memory_space<vmem>>, vector<8x128xf32>,
      %cst_542 = arith.constant 0.000000e+00 : f32
      %981 = vector.broadcast %cst_542 : f32 to vector<8x128xf32>
      %c0_543 = arith.constant 0 : index
      %c0_544 = arith.constant 0 : index
      %982 = vector.load %arg27[%c0_543, %c0_544] : memref<8x128xf32, #tpu.memory_space<vmem>>, vector<8x128xf32>
      tpu.vector_store %arg27[%c0_543, %c0_544], %981 {strides = array<i32>} : memref<8x128xf32, #tpu.memory_space<vmem>>, vector<8x128xf32>,
      %cst_545 = arith.constant 0.000000e+00 : f32
      %983 = vector.broadcast %cst_545 : f32 to vector<8x128xf32>
      %c0_546 = arith.constant 0 : index
      %c0_547 = arith.constant 0 : index
      %984 = vector.load %arg28[%c0_546, %c0_547] : memref<8x128xf32, #tpu.memory_space<vmem>>, vector<8x128xf32>
      tpu.vector_store %arg28[%c0_546, %c0_547], %983 {strides = array<i32>} : memref<8x128xf32, #tpu.memory_space<vmem>>, vector<8x128xf32>,
      %cst_548 = arith.constant 0.000000e+00 : f32
      %985 = vector.broadcast %cst_548 : f32 to vector<8x128xf32>
      %c0_549 = arith.constant 0 : index
      %c0_550 = arith.constant 0 : index
      %986 = vector.load %arg29[%c0_549, %c0_550] : memref<8x128xf32, #tpu.memory_space<vmem>>, vector<8x128xf32>
      tpu.vector_store %arg29[%c0_549, %c0_550], %985 {strides = array<i32>} : memref<8x128xf32, #tpu.memory_space<vmem>>, vector<8x128xf32>,
    } else {
    }
    %c0 = arith.constant 0 : index
    %c0_1 = arith.constant 0 : index
    %3 = vector.load %arg2[%c0, %c0_1] : memref<128x512xf32, #tpu.memory_space<vmem>>, vector<128x512xf32>
    %c0_2 = arith.constant 0 : index
    %c0_3 = arith.constant 0 : index
    %4 = vector.load %arg6[%c0_2, %c0_3] : memref<128x512xf32, #tpu.memory_space<vmem>>, vector<128x512xf32>
    %c0_4 = arith.constant 0 : index
    %c0_5 = arith.constant 0 : index
    %5 = vector.load %arg10[%c0_4, %c0_5] : memref<1x512xf32, #tpu.memory_space<vmem>>, vector<1x512xf32>
    %c0_6 = arith.constant 0 : index
    %c0_7 = arith.constant 0 : index
    %c0_8 = arith.constant 0 : index
    %6 = vector.load %arg1[%c0_6, %c0_7, %c0_8] : memref<8x8x128xf32, #tpu.memory_space<vmem>>, vector<8x8x128xf32>
    %7 = vector.shape_cast %6 : vector<8x8x128xf32> to vector<64x128xf32>
    %cst = arith.constant dense<0.000000e+00> : vector<64x512xf32>
    %8 = tpu.matmul %7, %3, %cst {dimension_numbers = #tpu.dot_dimension_numbers<[1], [0], [0], [1], [0, 0, 1, 1], [], []>} : vector<64x128xf32>, vector<128x512xf32>, vector<64x512xf32> -> vector<64x512xf32>
    %9 = vector.broadcast %5 : vector<1x512xf32> to vector<64x512xf32>
    %10 = arith.addf %8, %9 : vector<64x512xf32>
    %11 = vector.shape_cast %10 : vector<64x512xf32> to vector<8x8x512xf32>
    %c0_9 = arith.constant 0 : index
    %c0_10 = arith.constant 0 : index
    %c0_11 = arith.constant 0 : index
    %12 = vector.load %arg18[%c0_9, %c0_10, %c0_11] : memref<8x8x512xf32, #tpu.memory_space<vmem>>, vector<8x8x512xf32>
    tpu.vector_store %arg18[%c0_9, %c0_10, %c0_11], %11 {strides = array<i32>} : memref<8x8x512xf32, #tpu.memory_space<vmem>>, vector<8x8x512xf32>,
    %c0_i32_12 = arith.constant 0 : i32
    %c0_13 = arith.constant 0 : index
    %c0_14 = arith.constant 0 : index
    %13 = vector.load %arg22[%c0_13, %c0_14] : memref<8x128xf32, #tpu.memory_space<vmem>>, vector<8x128xf32>
    %c0_15 = arith.constant 0 : index
    %c0_16 = arith.constant 0 : index
    %14 = vector.load %arg23[%c0_15, %c0_16] : memref<8x128xf32, #tpu.memory_space<vmem>>, vector<8x128xf32>
    %15 = arith.index_cast %c0_i32_12 : i32 to index
    %c0_17 = arith.constant 0 : index
    %c0_18 = arith.constant 0 : index
    %16 = vector.load %arg18[%15, %c0_17, %c0_18] : memref<8x8x512xf32, #tpu.memory_space<vmem>>, vector<1x8x512xf32>
    %17 = vector.shape_cast %16 : vector<1x8x512xf32> to vector<8x512xf32>
    %cst_19 = arith.constant dense<0.000000e+00> : vector<8x512xf32>
    %18 = tpu.matmul %13, %4, %cst_19 {dimension_numbers = #tpu.dot_dimension_numbers<[1], [0], [0], [1], [0, 0, 1, 1], [], []>} : vector<8x128xf32>, vector<128x512xf32>, vector<8x512xf32> -> vector<8x512xf32>
    %19 = arith.addf %17, %18 : vector<8x512xf32>
    %20 = vector.extract_strided_slice %19 {offsets = [0, 0], sizes = [8, 384], strides = [1, 1]} : vector<8x512xf32> to vector<8x384xf32>
    %21 = arith.negf %20 : vector<8x384xf32>
    %22 = math.exp %21 : vector<8x384xf32>
    %cst_20 = arith.constant 1.000000e+00 : f32
    %23 = vector.broadcast %cst_20 : f32 to vector<8x384xf32>
    %24 = arith.addf %23, %22 : vector<8x384xf32>
    %25 = arith.divf %23, %24 : vector<8x384xf32>
    %26 = vector.extract_strided_slice %25 {offsets = [0, 0], sizes = [8, 128], strides = [1, 1]} : vector<8x384xf32> to vector<8x128xf32>
    %27 = vector.extract_strided_slice %25 {offsets = [0, 128], sizes = [8, 128], strides = [1, 1]} : vector<8x384xf32> to vector<8x128xf32>
    %28 = vector.extract_strided_slice %25 {offsets = [0, 256], sizes = [8, 128], strides = [1, 1]} : vector<8x384xf32> to vector<8x128xf32>
    %29 = vector.extract_strided_slice %19 {offsets = [0, 384], sizes = [8, 128], strides = [1, 1]} : vector<8x512xf32> to vector<8x128xf32>
    %30 = math.tanh %29 : vector<8x128xf32>
    %31 = arith.mulf %27, %14 : vector<8x128xf32>
    %32 = arith.mulf %26, %30 : vector<8x128xf32>
    %33 = arith.addf %31, %32 : vector<8x128xf32>
    %34 = math.tanh %33 : vector<8x128xf32>
    %35 = arith.mulf %28, %34 : vector<8x128xf32>
    %c0_21 = arith.constant 0 : index
    %c0_22 = arith.constant 0 : index
    %36 = vector.load %arg23[%c0_21, %c0_22] : memref<8x128xf32, #tpu.memory_space<vmem>>, vector<8x128xf32>
    tpu.vector_store %arg23[%c0_21, %c0_22], %33 {strides = array<i32>} : memref<8x128xf32, #tpu.memory_space<vmem>>, vector<8x128xf32>,
    %c0_23 = arith.constant 0 : index
    %c0_24 = arith.constant 0 : index
    %37 = vector.load %arg22[%c0_23, %c0_24] : memref<8x128xf32, #tpu.memory_space<vmem>>, vector<8x128xf32>
    tpu.vector_store %arg22[%c0_23, %c0_24], %35 {strides = array<i32>} : memref<8x128xf32, #tpu.memory_space<vmem>>, vector<8x128xf32>,
    %38 = arith.index_cast %c0_i32_12 : i32 to index
    %c0_25 = arith.constant 0 : index
    %c0_26 = arith.constant 0 : index
    %39 = vector.load %arg15[%38, %c0_25, %c0_26] : memref<8x8x128xf32, #tpu.memory_space<vmem>>, vector<1x8x128xf32>
    %40 = vector.shape_cast %39 : vector<1x8x128xf32> to vector<8x128xf32>
    %41 = vector.shape_cast %35 : vector<8x128xf32> to vector<1x8x128xf32>
    tpu.vector_store %arg15[%38, %c0_25, %c0_26], %41 {strides = array<i32>} : memref<8x8x128xf32, #tpu.memory_space<vmem>>, vector<1x8x128xf32>,
    %c1_i32 = arith.constant 1 : i32
    %c0_27 = arith.constant 0 : index
    %c0_28 = arith.constant 0 : index
    %42 = vector.load %arg22[%c0_27, %c0_28] : memref<8x128xf32, #tpu.memory_space<vmem>>, vector<8x128xf32>
    %c0_29 = arith.constant 0 : index
    %c0_30 = arith.constant 0 : index
    %43 = vector.load %arg23[%c0_29, %c0_30] : memref<8x128xf32, #tpu.memory_space<vmem>>, vector<8x128xf32>
    %44 = arith.index_cast %c1_i32 : i32 to index
    %c0_31 = arith.constant 0 : index
    %c0_32 = arith.constant 0 : index
    %45 = vector.load %arg18[%44, %c0_31, %c0_32] : memref<8x8x512xf32, #tpu.memory_space<vmem>>, vector<1x8x512xf32>
    %46 = vector.shape_cast %45 : vector<1x8x512xf32> to vector<8x512xf32>
    %cst_33 = arith.constant dense<0.000000e+00> : vector<8x512xf32>
    %47 = tpu.matmul %42, %4, %cst_33 {dimension_numbers = #tpu.dot_dimension_numbers<[1], [0], [0], [1], [0, 0, 1, 1], [], []>} : vector<8x128xf32>, vector<128x512xf32>, vector<8x512xf32> -> vector<8x512xf32>
    %48 = arith.addf %46, %47 : vector<8x512xf32>
    %49 = vector.extract_strided_slice %48 {offsets = [0, 0], sizes = [8, 384], strides = [1, 1]} : vector<8x512xf32> to vector<8x384xf32>
    %50 = arith.negf %49 : vector<8x384xf32>
    %51 = math.exp %50 : vector<8x384xf32>
    %cst_34 = arith.constant 1.000000e+00 : f32
    %52 = vector.broadcast %cst_34 : f32 to vector<8x384xf32>
    %53 = arith.addf %52, %51 : vector<8x384xf32>
    %54 = arith.divf %52, %53 : vector<8x384xf32>
    %55 = vector.extract_strided_slice %54 {offsets = [0, 0], sizes = [8, 128], strides = [1, 1]} : vector<8x384xf32> to vector<8x128xf32>
    %56 = vector.extract_strided_slice %54 {offsets = [0, 128], sizes = [8, 128], strides = [1, 1]} : vector<8x384xf32> to vector<8x128xf32>
    %57 = vector.extract_strided_slice %54 {offsets = [0, 256], sizes = [8, 128], strides = [1, 1]} : vector<8x384xf32> to vector<8x128xf32>
    %58 = vector.extract_strided_slice %48 {offsets = [0, 384], sizes = [8, 128], strides = [1, 1]} : vector<8x512xf32> to vector<8x128xf32>
    %59 = math.tanh %58 : vector<8x128xf32>
    %60 = arith.mulf %56, %43 : vector<8x128xf32>
    %61 = arith.mulf %55, %59 : vector<8x128xf32>
    %62 = arith.addf %60, %61 : vector<8x128xf32>
    %63 = math.tanh %62 : vector<8x128xf32>
    %64 = arith.mulf %57, %63 : vector<8x128xf32>
    %c0_35 = arith.constant 0 : index
    %c0_36 = arith.constant 0 : index
    %65 = vector.load %arg23[%c0_35, %c0_36] : memref<8x128xf32, #tpu.memory_space<vmem>>, vector<8x128xf32>
    tpu.vector_store %arg23[%c0_35, %c0_36], %62 {strides = array<i32>} : memref<8x128xf32, #tpu.memory_space<vmem>>, vector<8x128xf32>,
    %c0_37 = arith.constant 0 : index
    %c0_38 = arith.constant 0 : index
    %66 = vector.load %arg22[%c0_37, %c0_38] : memref<8x128xf32, #tpu.memory_space<vmem>>, vector<8x128xf32>
    tpu.vector_store %arg22[%c0_37, %c0_38], %64 {strides = array<i32>} : memref<8x128xf32, #tpu.memory_space<vmem>>, vector<8x128xf32>,
    %67 = arith.index_cast %c1_i32 : i32 to index
    %c0_39 = arith.constant 0 : index
    %c0_40 = arith.constant 0 : index
    %68 = vector.load %arg15[%67, %c0_39, %c0_40] : memref<8x8x128xf32, #tpu.memory_space<vmem>>, vector<1x8x128xf32>
    %69 = vector.shape_cast %68 : vector<1x8x128xf32> to vector<8x128xf32>
    %70 = vector.shape_cast %64 : vector<8x128xf32> to vector<1x8x128xf32>
    tpu.vector_store %arg15[%67, %c0_39, %c0_40], %70 {strides = array<i32>} : memref<8x8x128xf32, #tpu.memory_space<vmem>>, vector<1x8x128xf32>,
    %c2_i32 = arith.constant 2 : i32
    %c0_41 = arith.constant 0 : index
    %c0_42 = arith.constant 0 : index
    %71 = vector.load %arg22[%c0_41, %c0_42] : memref<8x128xf32, #tpu.memory_space<vmem>>, vector<8x128xf32>
    %c0_43 = arith.constant 0 : index
    %c0_44 = arith.constant 0 : index
    %72 = vector.load %arg23[%c0_43, %c0_44] : memref<8x128xf32, #tpu.memory_space<vmem>>, vector<8x128xf32>
    %73 = arith.index_cast %c2_i32 : i32 to index
    %c0_45 = arith.constant 0 : index
    %c0_46 = arith.constant 0 : index
    %74 = vector.load %arg18[%73, %c0_45, %c0_46] : memref<8x8x512xf32, #tpu.memory_space<vmem>>, vector<1x8x512xf32>
    %75 = vector.shape_cast %74 : vector<1x8x512xf32> to vector<8x512xf32>
    %cst_47 = arith.constant dense<0.000000e+00> : vector<8x512xf32>
    %76 = tpu.matmul %71, %4, %cst_47 {dimension_numbers = #tpu.dot_dimension_numbers<[1], [0], [0], [1], [0, 0, 1, 1], [], []>} : vector<8x128xf32>, vector<128x512xf32>, vector<8x512xf32> -> vector<8x512xf32>
    %77 = arith.addf %75, %76 : vector<8x512xf32>
    %78 = vector.extract_strided_slice %77 {offsets = [0, 0], sizes = [8, 384], strides = [1, 1]} : vector<8x512xf32> to vector<8x384xf32>
    %79 = arith.negf %78 : vector<8x384xf32>
    %80 = math.exp %79 : vector<8x384xf32>
    %cst_48 = arith.constant 1.000000e+00 : f32
    %81 = vector.broadcast %cst_48 : f32 to vector<8x384xf32>
    %82 = arith.addf %81, %80 : vector<8x384xf32>
    %83 = arith.divf %81, %82 : vector<8x384xf32>
    %84 = vector.extract_strided_slice %83 {offsets = [0, 0], sizes = [8, 128], strides = [1, 1]} : vector<8x384xf32> to vector<8x128xf32>
    %85 = vector.extract_strided_slice %83 {offsets = [0, 128], sizes = [8, 128], strides = [1, 1]} : vector<8x384xf32> to vector<8x128xf32>
    %86 = vector.extract_strided_slice %83 {offsets = [0, 256], sizes = [8, 128], strides = [1, 1]} : vector<8x384xf32> to vector<8x128xf32>
    %87 = vector.extract_strided_slice %77 {offsets = [0, 384], sizes = [8, 128], strides = [1, 1]} : vector<8x512xf32> to vector<8x128xf32>
    %88 = math.tanh %87 : vector<8x128xf32>
    %89 = arith.mulf %85, %72 : vector<8x128xf32>
    %90 = arith.mulf %84, %88 : vector<8x128xf32>
    %91 = arith.addf %89, %90 : vector<8x128xf32>
    %92 = math.tanh %91 : vector<8x128xf32>
    %93 = arith.mulf %86, %92 : vector<8x128xf32>
    %c0_49 = arith.constant 0 : index
    %c0_50 = arith.constant 0 : index
    %94 = vector.load %arg23[%c0_49, %c0_50] : memref<8x128xf32, #tpu.memory_space<vmem>>, vector<8x128xf32>
    tpu.vector_store %arg23[%c0_49, %c0_50], %91 {strides = array<i32>} : memref<8x128xf32, #tpu.memory_space<vmem>>, vector<8x128xf32>,
    %c0_51 = arith.constant 0 : index
    %c0_52 = arith.constant 0 : index
    %95 = vector.load %arg22[%c0_51, %c0_52] : memref<8x128xf32, #tpu.memory_space<vmem>>, vector<8x128xf32>
    tpu.vector_store %arg22[%c0_51, %c0_52], %93 {strides = array<i32>} : memref<8x128xf32, #tpu.memory_space<vmem>>, vector<8x128xf32>,
    %96 = arith.index_cast %c2_i32 : i32 to index
    %c0_53 = arith.constant 0 : index
    %c0_54 = arith.constant 0 : index
    %97 = vector.load %arg15[%96, %c0_53, %c0_54] : memref<8x8x128xf32, #tpu.memory_space<vmem>>, vector<1x8x128xf32>
    %98 = vector.shape_cast %97 : vector<1x8x128xf32> to vector<8x128xf32>
    %99 = vector.shape_cast %93 : vector<8x128xf32> to vector<1x8x128xf32>
    tpu.vector_store %arg15[%96, %c0_53, %c0_54], %99 {strides = array<i32>} : memref<8x8x128xf32, #tpu.memory_space<vmem>>, vector<1x8x128xf32>,
    %c3_i32 = arith.constant 3 : i32
    %c0_55 = arith.constant 0 : index
    %c0_56 = arith.constant 0 : index
    %100 = vector.load %arg22[%c0_55, %c0_56] : memref<8x128xf32, #tpu.memory_space<vmem>>, vector<8x128xf32>
    %c0_57 = arith.constant 0 : index
    %c0_58 = arith.constant 0 : index
    %101 = vector.load %arg23[%c0_57, %c0_58] : memref<8x128xf32, #tpu.memory_space<vmem>>, vector<8x128xf32>
    %102 = arith.index_cast %c3_i32 : i32 to index
    %c0_59 = arith.constant 0 : index
    %c0_60 = arith.constant 0 : index
    %103 = vector.load %arg18[%102, %c0_59, %c0_60] : memref<8x8x512xf32, #tpu.memory_space<vmem>>, vector<1x8x512xf32>
    %104 = vector.shape_cast %103 : vector<1x8x512xf32> to vector<8x512xf32>
    %cst_61 = arith.constant dense<0.000000e+00> : vector<8x512xf32>
    %105 = tpu.matmul %100, %4, %cst_61 {dimension_numbers = #tpu.dot_dimension_numbers<[1], [0], [0], [1], [0, 0, 1, 1], [], []>} : vector<8x128xf32>, vector<128x512xf32>, vector<8x512xf32> -> vector<8x512xf32>
    %106 = arith.addf %104, %105 : vector<8x512xf32>
    %107 = vector.extract_strided_slice %106 {offsets = [0, 0], sizes = [8, 384], strides = [1, 1]} : vector<8x512xf32> to vector<8x384xf32>
    %108 = arith.negf %107 : vector<8x384xf32>
    %109 = math.exp %108 : vector<8x384xf32>
    %cst_62 = arith.constant 1.000000e+00 : f32
    %110 = vector.broadcast %cst_62 : f32 to vector<8x384xf32>
    %111 = arith.addf %110, %109 : vector<8x384xf32>
    %112 = arith.divf %110, %111 : vector<8x384xf32>
    %113 = vector.extract_strided_slice %112 {offsets = [0, 0], sizes = [8, 128], strides = [1, 1]} : vector<8x384xf32> to vector<8x128xf32>
    %114 = vector.extract_strided_slice %112 {offsets = [0, 128], sizes = [8, 128], strides = [1, 1]} : vector<8x384xf32> to vector<8x128xf32>
    %115 = vector.extract_strided_slice %112 {offsets = [0, 256], sizes = [8, 128], strides = [1, 1]} : vector<8x384xf32> to vector<8x128xf32>
    %116 = vector.extract_strided_slice %106 {offsets = [0, 384], sizes = [8, 128], strides = [1, 1]} : vector<8x512xf32> to vector<8x128xf32>
    %117 = math.tanh %116 : vector<8x128xf32>
    %118 = arith.mulf %114, %101 : vector<8x128xf32>
    %119 = arith.mulf %113, %117 : vector<8x128xf32>
    %120 = arith.addf %118, %119 : vector<8x128xf32>
    %121 = math.tanh %120 : vector<8x128xf32>
    %122 = arith.mulf %115, %121 : vector<8x128xf32>
    %c0_63 = arith.constant 0 : index
    %c0_64 = arith.constant 0 : index
    %123 = vector.load %arg23[%c0_63, %c0_64] : memref<8x128xf32, #tpu.memory_space<vmem>>, vector<8x128xf32>
    tpu.vector_store %arg23[%c0_63, %c0_64], %120 {strides = array<i32>} : memref<8x128xf32, #tpu.memory_space<vmem>>, vector<8x128xf32>,
    %c0_65 = arith.constant 0 : index
    %c0_66 = arith.constant 0 : index
    %124 = vector.load %arg22[%c0_65, %c0_66] : memref<8x128xf32, #tpu.memory_space<vmem>>, vector<8x128xf32>
    tpu.vector_store %arg22[%c0_65, %c0_66], %122 {strides = array<i32>} : memref<8x128xf32, #tpu.memory_space<vmem>>, vector<8x128xf32>,
    %125 = arith.index_cast %c3_i32 : i32 to index
    %c0_67 = arith.constant 0 : index
    %c0_68 = arith.constant 0 : index
    %126 = vector.load %arg15[%125, %c0_67, %c0_68] : memref<8x8x128xf32, #tpu.memory_space<vmem>>, vector<1x8x128xf32>
    %127 = vector.shape_cast %126 : vector<1x8x128xf32> to vector<8x128xf32>
    %128 = vector.shape_cast %122 : vector<8x128xf32> to vector<1x8x128xf32>
    tpu.vector_store %arg15[%125, %c0_67, %c0_68], %128 {strides = array<i32>} : memref<8x8x128xf32, #tpu.memory_space<vmem>>, vector<1x8x128xf32>,
    %c4_i32 = arith.constant 4 : i32
    %c0_69 = arith.constant 0 : index
    %c0_70 = arith.constant 0 : index
    %129 = vector.load %arg22[%c0_69, %c0_70] : memref<8x128xf32, #tpu.memory_space<vmem>>, vector<8x128xf32>
    %c0_71 = arith.constant 0 : index
    %c0_72 = arith.constant 0 : index
    %130 = vector.load %arg23[%c0_71, %c0_72] : memref<8x128xf32, #tpu.memory_space<vmem>>, vector<8x128xf32>
    %131 = arith.index_cast %c4_i32 : i32 to index
    %c0_73 = arith.constant 0 : index
    %c0_74 = arith.constant 0 : index
    %132 = vector.load %arg18[%131, %c0_73, %c0_74] : memref<8x8x512xf32, #tpu.memory_space<vmem>>, vector<1x8x512xf32>
    %133 = vector.shape_cast %132 : vector<1x8x512xf32> to vector<8x512xf32>
    %cst_75 = arith.constant dense<0.000000e+00> : vector<8x512xf32>
    %134 = tpu.matmul %129, %4, %cst_75 {dimension_numbers = #tpu.dot_dimension_numbers<[1], [0], [0], [1], [0, 0, 1, 1], [], []>} : vector<8x128xf32>, vector<128x512xf32>, vector<8x512xf32> -> vector<8x512xf32>
    %135 = arith.addf %133, %134 : vector<8x512xf32>
    %136 = vector.extract_strided_slice %135 {offsets = [0, 0], sizes = [8, 384], strides = [1, 1]} : vector<8x512xf32> to vector<8x384xf32>
    %137 = arith.negf %136 : vector<8x384xf32>
    %138 = math.exp %137 : vector<8x384xf32>
    %cst_76 = arith.constant 1.000000e+00 : f32
    %139 = vector.broadcast %cst_76 : f32 to vector<8x384xf32>
    %140 = arith.addf %139, %138 : vector<8x384xf32>
    %141 = arith.divf %139, %140 : vector<8x384xf32>
    %142 = vector.extract_strided_slice %141 {offsets = [0, 0], sizes = [8, 128], strides = [1, 1]} : vector<8x384xf32> to vector<8x128xf32>
    %143 = vector.extract_strided_slice %141 {offsets = [0, 128], sizes = [8, 128], strides = [1, 1]} : vector<8x384xf32> to vector<8x128xf32>
    %144 = vector.extract_strided_slice %141 {offsets = [0, 256], sizes = [8, 128], strides = [1, 1]} : vector<8x384xf32> to vector<8x128xf32>
    %145 = vector.extract_strided_slice %135 {offsets = [0, 384], sizes = [8, 128], strides = [1, 1]} : vector<8x512xf32> to vector<8x128xf32>
    %146 = math.tanh %145 : vector<8x128xf32>
    %147 = arith.mulf %143, %130 : vector<8x128xf32>
    %148 = arith.mulf %142, %146 : vector<8x128xf32>
    %149 = arith.addf %147, %148 : vector<8x128xf32>
    %150 = math.tanh %149 : vector<8x128xf32>
    %151 = arith.mulf %144, %150 : vector<8x128xf32>
    %c0_77 = arith.constant 0 : index
    %c0_78 = arith.constant 0 : index
    %152 = vector.load %arg23[%c0_77, %c0_78] : memref<8x128xf32, #tpu.memory_space<vmem>>, vector<8x128xf32>
    tpu.vector_store %arg23[%c0_77, %c0_78], %149 {strides = array<i32>} : memref<8x128xf32, #tpu.memory_space<vmem>>, vector<8x128xf32>,
    %c0_79 = arith.constant 0 : index
    %c0_80 = arith.constant 0 : index
    %153 = vector.load %arg22[%c0_79, %c0_80] : memref<8x128xf32, #tpu.memory_space<vmem>>, vector<8x128xf32>
    tpu.vector_store %arg22[%c0_79, %c0_80], %151 {strides = array<i32>} : memref<8x128xf32, #tpu.memory_space<vmem>>, vector<8x128xf32>,
    %154 = arith.index_cast %c4_i32 : i32 to index
    %c0_81 = arith.constant 0 : index
    %c0_82 = arith.constant 0 : index
    %155 = vector.load %arg15[%154, %c0_81, %c0_82] : memref<8x8x128xf32, #tpu.memory_space<vmem>>, vector<1x8x128xf32>
    %156 = vector.shape_cast %155 : vector<1x8x128xf32> to vector<8x128xf32>
    %157 = vector.shape_cast %151 : vector<8x128xf32> to vector<1x8x128xf32>
    tpu.vector_store %arg15[%154, %c0_81, %c0_82], %157 {strides = array<i32>} : memref<8x8x128xf32, #tpu.memory_space<vmem>>, vector<1x8x128xf32>,
    %c5_i32 = arith.constant 5 : i32
    %c0_83 = arith.constant 0 : index
    %c0_84 = arith.constant 0 : index
    %158 = vector.load %arg22[%c0_83, %c0_84] : memref<8x128xf32, #tpu.memory_space<vmem>>, vector<8x128xf32>
    %c0_85 = arith.constant 0 : index
    %c0_86 = arith.constant 0 : index
    %159 = vector.load %arg23[%c0_85, %c0_86] : memref<8x128xf32, #tpu.memory_space<vmem>>, vector<8x128xf32>
    %160 = arith.index_cast %c5_i32 : i32 to index
    %c0_87 = arith.constant 0 : index
    %c0_88 = arith.constant 0 : index
    %161 = vector.load %arg18[%160, %c0_87, %c0_88] : memref<8x8x512xf32, #tpu.memory_space<vmem>>, vector<1x8x512xf32>
    %162 = vector.shape_cast %161 : vector<1x8x512xf32> to vector<8x512xf32>
    %cst_89 = arith.constant dense<0.000000e+00> : vector<8x512xf32>
    %163 = tpu.matmul %158, %4, %cst_89 {dimension_numbers = #tpu.dot_dimension_numbers<[1], [0], [0], [1], [0, 0, 1, 1], [], []>} : vector<8x128xf32>, vector<128x512xf32>, vector<8x512xf32> -> vector<8x512xf32>
    %164 = arith.addf %162, %163 : vector<8x512xf32>
    %165 = vector.extract_strided_slice %164 {offsets = [0, 0], sizes = [8, 384], strides = [1, 1]} : vector<8x512xf32> to vector<8x384xf32>
    %166 = arith.negf %165 : vector<8x384xf32>
    %167 = math.exp %166 : vector<8x384xf32>
    %cst_90 = arith.constant 1.000000e+00 : f32
    %168 = vector.broadcast %cst_90 : f32 to vector<8x384xf32>
    %169 = arith.addf %168, %167 : vector<8x384xf32>
    %170 = arith.divf %168, %169 : vector<8x384xf32>
    %171 = vector.extract_strided_slice %170 {offsets = [0, 0], sizes = [8, 128], strides = [1, 1]} : vector<8x384xf32> to vector<8x128xf32>
    %172 = vector.extract_strided_slice %170 {offsets = [0, 128], sizes = [8, 128], strides = [1, 1]} : vector<8x384xf32> to vector<8x128xf32>
    %173 = vector.extract_strided_slice %170 {offsets = [0, 256], sizes = [8, 128], strides = [1, 1]} : vector<8x384xf32> to vector<8x128xf32>
    %174 = vector.extract_strided_slice %164 {offsets = [0, 384], sizes = [8, 128], strides = [1, 1]} : vector<8x512xf32> to vector<8x128xf32>
    %175 = math.tanh %174 : vector<8x128xf32>
    %176 = arith.mulf %172, %159 : vector<8x128xf32>
    %177 = arith.mulf %171, %175 : vector<8x128xf32>
    %178 = arith.addf %176, %177 : vector<8x128xf32>
    %179 = math.tanh %178 : vector<8x128xf32>
    %180 = arith.mulf %173, %179 : vector<8x128xf32>
    %c0_91 = arith.constant 0 : index
    %c0_92 = arith.constant 0 : index
    %181 = vector.load %arg23[%c0_91, %c0_92] : memref<8x128xf32, #tpu.memory_space<vmem>>, vector<8x128xf32>
    tpu.vector_store %arg23[%c0_91, %c0_92], %178 {strides = array<i32>} : memref<8x128xf32, #tpu.memory_space<vmem>>, vector<8x128xf32>,
    %c0_93 = arith.constant 0 : index
    %c0_94 = arith.constant 0 : index
    %182 = vector.load %arg22[%c0_93, %c0_94] : memref<8x128xf32, #tpu.memory_space<vmem>>, vector<8x128xf32>
    tpu.vector_store %arg22[%c0_93, %c0_94], %180 {strides = array<i32>} : memref<8x128xf32, #tpu.memory_space<vmem>>, vector<8x128xf32>,
    %183 = arith.index_cast %c5_i32 : i32 to index
    %c0_95 = arith.constant 0 : index
    %c0_96 = arith.constant 0 : index
    %184 = vector.load %arg15[%183, %c0_95, %c0_96] : memref<8x8x128xf32, #tpu.memory_space<vmem>>, vector<1x8x128xf32>
    %185 = vector.shape_cast %184 : vector<1x8x128xf32> to vector<8x128xf32>
    %186 = vector.shape_cast %180 : vector<8x128xf32> to vector<1x8x128xf32>
    tpu.vector_store %arg15[%183, %c0_95, %c0_96], %186 {strides = array<i32>} : memref<8x8x128xf32, #tpu.memory_space<vmem>>, vector<1x8x128xf32>,
    %c6_i32 = arith.constant 6 : i32
    %c0_97 = arith.constant 0 : index
    %c0_98 = arith.constant 0 : index
    %187 = vector.load %arg22[%c0_97, %c0_98] : memref<8x128xf32, #tpu.memory_space<vmem>>, vector<8x128xf32>
    %c0_99 = arith.constant 0 : index
    %c0_100 = arith.constant 0 : index
    %188 = vector.load %arg23[%c0_99, %c0_100] : memref<8x128xf32, #tpu.memory_space<vmem>>, vector<8x128xf32>
    %189 = arith.index_cast %c6_i32 : i32 to index
    %c0_101 = arith.constant 0 : index
    %c0_102 = arith.constant 0 : index
    %190 = vector.load %arg18[%189, %c0_101, %c0_102] : memref<8x8x512xf32, #tpu.memory_space<vmem>>, vector<1x8x512xf32>
    %191 = vector.shape_cast %190 : vector<1x8x512xf32> to vector<8x512xf32>
    %cst_103 = arith.constant dense<0.000000e+00> : vector<8x512xf32>
    %192 = tpu.matmul %187, %4, %cst_103 {dimension_numbers = #tpu.dot_dimension_numbers<[1], [0], [0], [1], [0, 0, 1, 1], [], []>} : vector<8x128xf32>, vector<128x512xf32>, vector<8x512xf32> -> vector<8x512xf32>
    %193 = arith.addf %191, %192 : vector<8x512xf32>
    %194 = vector.extract_strided_slice %193 {offsets = [0, 0], sizes = [8, 384], strides = [1, 1]} : vector<8x512xf32> to vector<8x384xf32>
    %195 = arith.negf %194 : vector<8x384xf32>
    %196 = math.exp %195 : vector<8x384xf32>
    %cst_104 = arith.constant 1.000000e+00 : f32
    %197 = vector.broadcast %cst_104 : f32 to vector<8x384xf32>
    %198 = arith.addf %197, %196 : vector<8x384xf32>
    %199 = arith.divf %197, %198 : vector<8x384xf32>
    %200 = vector.extract_strided_slice %199 {offsets = [0, 0], sizes = [8, 128], strides = [1, 1]} : vector<8x384xf32> to vector<8x128xf32>
    %201 = vector.extract_strided_slice %199 {offsets = [0, 128], sizes = [8, 128], strides = [1, 1]} : vector<8x384xf32> to vector<8x128xf32>
    %202 = vector.extract_strided_slice %199 {offsets = [0, 256], sizes = [8, 128], strides = [1, 1]} : vector<8x384xf32> to vector<8x128xf32>
    %203 = vector.extract_strided_slice %193 {offsets = [0, 384], sizes = [8, 128], strides = [1, 1]} : vector<8x512xf32> to vector<8x128xf32>
    %204 = math.tanh %203 : vector<8x128xf32>
    %205 = arith.mulf %201, %188 : vector<8x128xf32>
    %206 = arith.mulf %200, %204 : vector<8x128xf32>
    %207 = arith.addf %205, %206 : vector<8x128xf32>
    %208 = math.tanh %207 : vector<8x128xf32>
    %209 = arith.mulf %202, %208 : vector<8x128xf32>
    %c0_105 = arith.constant 0 : index
    %c0_106 = arith.constant 0 : index
    %210 = vector.load %arg23[%c0_105, %c0_106] : memref<8x128xf32, #tpu.memory_space<vmem>>, vector<8x128xf32>
    tpu.vector_store %arg23[%c0_105, %c0_106], %207 {strides = array<i32>} : memref<8x128xf32, #tpu.memory_space<vmem>>, vector<8x128xf32>,
    %c0_107 = arith.constant 0 : index
    %c0_108 = arith.constant 0 : index
    %211 = vector.load %arg22[%c0_107, %c0_108] : memref<8x128xf32, #tpu.memory_space<vmem>>, vector<8x128xf32>
    tpu.vector_store %arg22[%c0_107, %c0_108], %209 {strides = array<i32>} : memref<8x128xf32, #tpu.memory_space<vmem>>, vector<8x128xf32>,
    %212 = arith.index_cast %c6_i32 : i32 to index
    %c0_109 = arith.constant 0 : index
    %c0_110 = arith.constant 0 : index
    %213 = vector.load %arg15[%212, %c0_109, %c0_110] : memref<8x8x128xf32, #tpu.memory_space<vmem>>, vector<1x8x128xf32>
    %214 = vector.shape_cast %213 : vector<1x8x128xf32> to vector<8x128xf32>
    %215 = vector.shape_cast %209 : vector<8x128xf32> to vector<1x8x128xf32>
    tpu.vector_store %arg15[%212, %c0_109, %c0_110], %215 {strides = array<i32>} : memref<8x8x128xf32, #tpu.memory_space<vmem>>, vector<1x8x128xf32>,
    %c7_i32 = arith.constant 7 : i32
    %c0_111 = arith.constant 0 : index
    %c0_112 = arith.constant 0 : index
    %216 = vector.load %arg22[%c0_111, %c0_112] : memref<8x128xf32, #tpu.memory_space<vmem>>, vector<8x128xf32>
    %c0_113 = arith.constant 0 : index
    %c0_114 = arith.constant 0 : index
    %217 = vector.load %arg23[%c0_113, %c0_114] : memref<8x128xf32, #tpu.memory_space<vmem>>, vector<8x128xf32>
    %218 = arith.index_cast %c7_i32 : i32 to index
    %c0_115 = arith.constant 0 : index
    %c0_116 = arith.constant 0 : index
    %219 = vector.load %arg18[%218, %c0_115, %c0_116] : memref<8x8x512xf32, #tpu.memory_space<vmem>>, vector<1x8x512xf32>
    %220 = vector.shape_cast %219 : vector<1x8x512xf32> to vector<8x512xf32>
    %cst_117 = arith.constant dense<0.000000e+00> : vector<8x512xf32>
    %221 = tpu.matmul %216, %4, %cst_117 {dimension_numbers = #tpu.dot_dimension_numbers<[1], [0], [0], [1], [0, 0, 1, 1], [], []>} : vector<8x128xf32>, vector<128x512xf32>, vector<8x512xf32> -> vector<8x512xf32>
    %222 = arith.addf %220, %221 : vector<8x512xf32>
    %223 = vector.extract_strided_slice %222 {offsets = [0, 0], sizes = [8, 384], strides = [1, 1]} : vector<8x512xf32> to vector<8x384xf32>
    %224 = arith.negf %223 : vector<8x384xf32>
    %225 = math.exp %224 : vector<8x384xf32>
    %cst_118 = arith.constant 1.000000e+00 : f32
    %226 = vector.broadcast %cst_118 : f32 to vector<8x384xf32>
    %227 = arith.addf %226, %225 : vector<8x384xf32>
    %228 = arith.divf %226, %227 : vector<8x384xf32>
    %229 = vector.extract_strided_slice %228 {offsets = [0, 0], sizes = [8, 128], strides = [1, 1]} : vector<8x384xf32> to vector<8x128xf32>
    %230 = vector.extract_strided_slice %228 {offsets = [0, 128], sizes = [8, 128], strides = [1, 1]} : vector<8x384xf32> to vector<8x128xf32>
    %231 = vector.extract_strided_slice %228 {offsets = [0, 256], sizes = [8, 128], strides = [1, 1]} : vector<8x384xf32> to vector<8x128xf32>
    %232 = vector.extract_strided_slice %222 {offsets = [0, 384], sizes = [8, 128], strides = [1, 1]} : vector<8x512xf32> to vector<8x128xf32>
    %233 = math.tanh %232 : vector<8x128xf32>
    %234 = arith.mulf %230, %217 : vector<8x128xf32>
    %235 = arith.mulf %229, %233 : vector<8x128xf32>
    %236 = arith.addf %234, %235 : vector<8x128xf32>
    %237 = math.tanh %236 : vector<8x128xf32>
    %238 = arith.mulf %231, %237 : vector<8x128xf32>
    %c0_119 = arith.constant 0 : index
    %c0_120 = arith.constant 0 : index
    %239 = vector.load %arg23[%c0_119, %c0_120] : memref<8x128xf32, #tpu.memory_space<vmem>>, vector<8x128xf32>
    tpu.vector_store %arg23[%c0_119, %c0_120], %236 {strides = array<i32>} : memref<8x128xf32, #tpu.memory_space<vmem>>, vector<8x128xf32>,
    %c0_121 = arith.constant 0 : index
    %c0_122 = arith.constant 0 : index
    %240 = vector.load %arg22[%c0_121, %c0_122] : memref<8x128xf32, #tpu.memory_space<vmem>>, vector<8x128xf32>
    tpu.vector_store %arg22[%c0_121, %c0_122], %238 {strides = array<i32>} : memref<8x128xf32, #tpu.memory_space<vmem>>, vector<8x128xf32>,
    %241 = arith.index_cast %c7_i32 : i32 to index
    %c0_123 = arith.constant 0 : index
    %c0_124 = arith.constant 0 : index
    %242 = vector.load %arg15[%241, %c0_123, %c0_124] : memref<8x8x128xf32, #tpu.memory_space<vmem>>, vector<1x8x128xf32>
    %243 = vector.shape_cast %242 : vector<1x8x128xf32> to vector<8x128xf32>
    %244 = vector.shape_cast %238 : vector<8x128xf32> to vector<1x8x128xf32>
    tpu.vector_store %arg15[%241, %c0_123, %c0_124], %244 {strides = array<i32>} : memref<8x8x128xf32, #tpu.memory_space<vmem>>, vector<1x8x128xf32>,
    %c8_i32 = arith.constant 8 : i32
    %c0_125 = arith.constant 0 : index
    %c0_126 = arith.constant 0 : index
    %245 = vector.load %arg3[%c0_125, %c0_126] : memref<128x512xf32, #tpu.memory_space<vmem>>, vector<128x512xf32>
    %c0_127 = arith.constant 0 : index
    %c0_128 = arith.constant 0 : index
    %246 = vector.load %arg7[%c0_127, %c0_128] : memref<128x512xf32, #tpu.memory_space<vmem>>, vector<128x512xf32>
    %c0_129 = arith.constant 0 : index
    %c0_130 = arith.constant 0 : index
    %247 = vector.load %arg11[%c0_129, %c0_130] : memref<1x512xf32, #tpu.memory_space<vmem>>, vector<1x512xf32>
    %c0_131 = arith.constant 0 : index
    %c0_132 = arith.constant 0 : index
    %c0_133 = arith.constant 0 : index
    %248 = vector.load %arg15[%c0_131, %c0_132, %c0_133] : memref<8x8x128xf32, #tpu.memory_space<vmem>>, vector<8x8x128xf32>
    %249 = vector.shape_cast %248 : vector<8x8x128xf32> to vector<64x128xf32>
    %cst_134 = arith.constant dense<0.000000e+00> : vector<64x512xf32>
    %250 = tpu.matmul %249, %245, %cst_134 {dimension_numbers = #tpu.dot_dimension_numbers<[1], [0], [0], [1], [0, 0, 1, 1], [], []>} : vector<64x128xf32>, vector<128x512xf32>, vector<64x512xf32> -> vector<64x512xf32>
    %251 = vector.broadcast %247 : vector<1x512xf32> to vector<64x512xf32>
    %252 = arith.addf %250, %251 : vector<64x512xf32>
    %253 = vector.shape_cast %252 : vector<64x512xf32> to vector<8x8x512xf32>
    %c0_135 = arith.constant 0 : index
    %c0_136 = arith.constant 0 : index
    %c0_137 = arith.constant 0 : index
    %254 = vector.load %arg19[%c0_135, %c0_136, %c0_137] : memref<8x8x512xf32, #tpu.memory_space<vmem>>, vector<8x8x512xf32>
    tpu.vector_store %arg19[%c0_135, %c0_136, %c0_137], %253 {strides = array<i32>} : memref<8x8x512xf32, #tpu.memory_space<vmem>>, vector<8x8x512xf32>,
    %c0_i32_138 = arith.constant 0 : i32
    %c0_139 = arith.constant 0 : index
    %c0_140 = arith.constant 0 : index
    %255 = vector.load %arg24[%c0_139, %c0_140] : memref<8x128xf32, #tpu.memory_space<vmem>>, vector<8x128xf32>
    %c0_141 = arith.constant 0 : index
    %c0_142 = arith.constant 0 : index
    %256 = vector.load %arg25[%c0_141, %c0_142] : memref<8x128xf32, #tpu.memory_space<vmem>>, vector<8x128xf32>
    %257 = arith.index_cast %c0_i32_138 : i32 to index
    %c0_143 = arith.constant 0 : index
    %c0_144 = arith.constant 0 : index
    %258 = vector.load %arg19[%257, %c0_143, %c0_144] : memref<8x8x512xf32, #tpu.memory_space<vmem>>, vector<1x8x512xf32>
    %259 = vector.shape_cast %258 : vector<1x8x512xf32> to vector<8x512xf32>
    %cst_145 = arith.constant dense<0.000000e+00> : vector<8x512xf32>
    %260 = tpu.matmul %255, %246, %cst_145 {dimension_numbers = #tpu.dot_dimension_numbers<[1], [0], [0], [1], [0, 0, 1, 1], [], []>} : vector<8x128xf32>, vector<128x512xf32>, vector<8x512xf32> -> vector<8x512xf32>
    %261 = arith.addf %259, %260 : vector<8x512xf32>
    %262 = vector.extract_strided_slice %261 {offsets = [0, 0], sizes = [8, 384], strides = [1, 1]} : vector<8x512xf32> to vector<8x384xf32>
    %263 = arith.negf %262 : vector<8x384xf32>
    %264 = math.exp %263 : vector<8x384xf32>
    %cst_146 = arith.constant 1.000000e+00 : f32
    %265 = vector.broadcast %cst_146 : f32 to vector<8x384xf32>
    %266 = arith.addf %265, %264 : vector<8x384xf32>
    %267 = arith.divf %265, %266 : vector<8x384xf32>
    %268 = vector.extract_strided_slice %267 {offsets = [0, 0], sizes = [8, 128], strides = [1, 1]} : vector<8x384xf32> to vector<8x128xf32>
    %269 = vector.extract_strided_slice %267 {offsets = [0, 128], sizes = [8, 128], strides = [1, 1]} : vector<8x384xf32> to vector<8x128xf32>
    %270 = vector.extract_strided_slice %267 {offsets = [0, 256], sizes = [8, 128], strides = [1, 1]} : vector<8x384xf32> to vector<8x128xf32>
    %271 = vector.extract_strided_slice %261 {offsets = [0, 384], sizes = [8, 128], strides = [1, 1]} : vector<8x512xf32> to vector<8x128xf32>
    %272 = math.tanh %271 : vector<8x128xf32>
    %273 = arith.mulf %269, %256 : vector<8x128xf32>
    %274 = arith.mulf %268, %272 : vector<8x128xf32>
    %275 = arith.addf %273, %274 : vector<8x128xf32>
    %276 = math.tanh %275 : vector<8x128xf32>
    %277 = arith.mulf %270, %276 : vector<8x128xf32>
    %c0_147 = arith.constant 0 : index
    %c0_148 = arith.constant 0 : index
    %278 = vector.load %arg25[%c0_147, %c0_148] : memref<8x128xf32, #tpu.memory_space<vmem>>, vector<8x128xf32>
    tpu.vector_store %arg25[%c0_147, %c0_148], %275 {strides = array<i32>} : memref<8x128xf32, #tpu.memory_space<vmem>>, vector<8x128xf32>,
    %c0_149 = arith.constant 0 : index
    %c0_150 = arith.constant 0 : index
    %279 = vector.load %arg24[%c0_149, %c0_150] : memref<8x128xf32, #tpu.memory_space<vmem>>, vector<8x128xf32>
    tpu.vector_store %arg24[%c0_149, %c0_150], %277 {strides = array<i32>} : memref<8x128xf32, #tpu.memory_space<vmem>>, vector<8x128xf32>,
    %280 = arith.index_cast %c0_i32_138 : i32 to index
    %c0_151 = arith.constant 0 : index
    %c0_152 = arith.constant 0 : index
    %281 = vector.load %arg16[%280, %c0_151, %c0_152] : memref<8x8x128xf32, #tpu.memory_space<vmem>>, vector<1x8x128xf32>
    %282 = vector.shape_cast %281 : vector<1x8x128xf32> to vector<8x128xf32>
    %283 = vector.shape_cast %277 : vector<8x128xf32> to vector<1x8x128xf32>
    tpu.vector_store %arg16[%280, %c0_151, %c0_152], %283 {strides = array<i32>} : memref<8x8x128xf32, #tpu.memory_space<vmem>>, vector<1x8x128xf32>,
    %c1_i32_153 = arith.constant 1 : i32
    %c0_154 = arith.constant 0 : index
    %c0_155 = arith.constant 0 : index
    %284 = vector.load %arg24[%c0_154, %c0_155] : memref<8x128xf32, #tpu.memory_space<vmem>>, vector<8x128xf32>
    %c0_156 = arith.constant 0 : index
    %c0_157 = arith.constant 0 : index
    %285 = vector.load %arg25[%c0_156, %c0_157] : memref<8x128xf32, #tpu.memory_space<vmem>>, vector<8x128xf32>
    %286 = arith.index_cast %c1_i32_153 : i32 to index
    %c0_158 = arith.constant 0 : index
    %c0_159 = arith.constant 0 : index
    %287 = vector.load %arg19[%286, %c0_158, %c0_159] : memref<8x8x512xf32, #tpu.memory_space<vmem>>, vector<1x8x512xf32>
    %288 = vector.shape_cast %287 : vector<1x8x512xf32> to vector<8x512xf32>
    %cst_160 = arith.constant dense<0.000000e+00> : vector<8x512xf32>
    %289 = tpu.matmul %284, %246, %cst_160 {dimension_numbers = #tpu.dot_dimension_numbers<[1], [0], [0], [1], [0, 0, 1, 1], [], []>} : vector<8x128xf32>, vector<128x512xf32>, vector<8x512xf32> -> vector<8x512xf32>
    %290 = arith.addf %288, %289 : vector<8x512xf32>
    %291 = vector.extract_strided_slice %290 {offsets = [0, 0], sizes = [8, 384], strides = [1, 1]} : vector<8x512xf32> to vector<8x384xf32>
    %292 = arith.negf %291 : vector<8x384xf32>
    %293 = math.exp %292 : vector<8x384xf32>
    %cst_161 = arith.constant 1.000000e+00 : f32
    %294 = vector.broadcast %cst_161 : f32 to vector<8x384xf32>
    %295 = arith.addf %294, %293 : vector<8x384xf32>
    %296 = arith.divf %294, %295 : vector<8x384xf32>
    %297 = vector.extract_strided_slice %296 {offsets = [0, 0], sizes = [8, 128], strides = [1, 1]} : vector<8x384xf32> to vector<8x128xf32>
    %298 = vector.extract_strided_slice %296 {offsets = [0, 128], sizes = [8, 128], strides = [1, 1]} : vector<8x384xf32> to vector<8x128xf32>
    %299 = vector.extract_strided_slice %296 {offsets = [0, 256], sizes = [8, 128], strides = [1, 1]} : vector<8x384xf32> to vector<8x128xf32>
    %300 = vector.extract_strided_slice %290 {offsets = [0, 384], sizes = [8, 128], strides = [1, 1]} : vector<8x512xf32> to vector<8x128xf32>
    %301 = math.tanh %300 : vector<8x128xf32>
    %302 = arith.mulf %298, %285 : vector<8x128xf32>
    %303 = arith.mulf %297, %301 : vector<8x128xf32>
    %304 = arith.addf %302, %303 : vector<8x128xf32>
    %305 = math.tanh %304 : vector<8x128xf32>
    %306 = arith.mulf %299, %305 : vector<8x128xf32>
    %c0_162 = arith.constant 0 : index
    %c0_163 = arith.constant 0 : index
    %307 = vector.load %arg25[%c0_162, %c0_163] : memref<8x128xf32, #tpu.memory_space<vmem>>, vector<8x128xf32>
    tpu.vector_store %arg25[%c0_162, %c0_163], %304 {strides = array<i32>} : memref<8x128xf32, #tpu.memory_space<vmem>>, vector<8x128xf32>,
    %c0_164 = arith.constant 0 : index
    %c0_165 = arith.constant 0 : index
    %308 = vector.load %arg24[%c0_164, %c0_165] : memref<8x128xf32, #tpu.memory_space<vmem>>, vector<8x128xf32>
    tpu.vector_store %arg24[%c0_164, %c0_165], %306 {strides = array<i32>} : memref<8x128xf32, #tpu.memory_space<vmem>>, vector<8x128xf32>,
    %309 = arith.index_cast %c1_i32_153 : i32 to index
    %c0_166 = arith.constant 0 : index
    %c0_167 = arith.constant 0 : index
    %310 = vector.load %arg16[%309, %c0_166, %c0_167] : memref<8x8x128xf32, #tpu.memory_space<vmem>>, vector<1x8x128xf32>
    %311 = vector.shape_cast %310 : vector<1x8x128xf32> to vector<8x128xf32>
    %312 = vector.shape_cast %306 : vector<8x128xf32> to vector<1x8x128xf32>
    tpu.vector_store %arg16[%309, %c0_166, %c0_167], %312 {strides = array<i32>} : memref<8x8x128xf32, #tpu.memory_space<vmem>>, vector<1x8x128xf32>,
    %c2_i32_168 = arith.constant 2 : i32
    %c0_169 = arith.constant 0 : index
    %c0_170 = arith.constant 0 : index
    %313 = vector.load %arg24[%c0_169, %c0_170] : memref<8x128xf32, #tpu.memory_space<vmem>>, vector<8x128xf32>
    %c0_171 = arith.constant 0 : index
    %c0_172 = arith.constant 0 : index
    %314 = vector.load %arg25[%c0_171, %c0_172] : memref<8x128xf32, #tpu.memory_space<vmem>>, vector<8x128xf32>
    %315 = arith.index_cast %c2_i32_168 : i32 to index
    %c0_173 = arith.constant 0 : index
    %c0_174 = arith.constant 0 : index
    %316 = vector.load %arg19[%315, %c0_173, %c0_174] : memref<8x8x512xf32, #tpu.memory_space<vmem>>, vector<1x8x512xf32>
    %317 = vector.shape_cast %316 : vector<1x8x512xf32> to vector<8x512xf32>
    %cst_175 = arith.constant dense<0.000000e+00> : vector<8x512xf32>
    %318 = tpu.matmul %313, %246, %cst_175 {dimension_numbers = #tpu.dot_dimension_numbers<[1], [0], [0], [1], [0, 0, 1, 1], [], []>} : vector<8x128xf32>, vector<128x512xf32>, vector<8x512xf32> -> vector<8x512xf32>
    %319 = arith.addf %317, %318 : vector<8x512xf32>
    %320 = vector.extract_strided_slice %319 {offsets = [0, 0], sizes = [8, 384], strides = [1, 1]} : vector<8x512xf32> to vector<8x384xf32>
    %321 = arith.negf %320 : vector<8x384xf32>
    %322 = math.exp %321 : vector<8x384xf32>
    %cst_176 = arith.constant 1.000000e+00 : f32
    %323 = vector.broadcast %cst_176 : f32 to vector<8x384xf32>
    %324 = arith.addf %323, %322 : vector<8x384xf32>
    %325 = arith.divf %323, %324 : vector<8x384xf32>
    %326 = vector.extract_strided_slice %325 {offsets = [0, 0], sizes = [8, 128], strides = [1, 1]} : vector<8x384xf32> to vector<8x128xf32>
    %327 = vector.extract_strided_slice %325 {offsets = [0, 128], sizes = [8, 128], strides = [1, 1]} : vector<8x384xf32> to vector<8x128xf32>
    %328 = vector.extract_strided_slice %325 {offsets = [0, 256], sizes = [8, 128], strides = [1, 1]} : vector<8x384xf32> to vector<8x128xf32>
    %329 = vector.extract_strided_slice %319 {offsets = [0, 384], sizes = [8, 128], strides = [1, 1]} : vector<8x512xf32> to vector<8x128xf32>
    %330 = math.tanh %329 : vector<8x128xf32>
    %331 = arith.mulf %327, %314 : vector<8x128xf32>
    %332 = arith.mulf %326, %330 : vector<8x128xf32>
    %333 = arith.addf %331, %332 : vector<8x128xf32>
    %334 = math.tanh %333 : vector<8x128xf32>
    %335 = arith.mulf %328, %334 : vector<8x128xf32>
    %c0_177 = arith.constant 0 : index
    %c0_178 = arith.constant 0 : index
    %336 = vector.load %arg25[%c0_177, %c0_178] : memref<8x128xf32, #tpu.memory_space<vmem>>, vector<8x128xf32>
    tpu.vector_store %arg25[%c0_177, %c0_178], %333 {strides = array<i32>} : memref<8x128xf32, #tpu.memory_space<vmem>>, vector<8x128xf32>,
    %c0_179 = arith.constant 0 : index
    %c0_180 = arith.constant 0 : index
    %337 = vector.load %arg24[%c0_179, %c0_180] : memref<8x128xf32, #tpu.memory_space<vmem>>, vector<8x128xf32>
    tpu.vector_store %arg24[%c0_179, %c0_180], %335 {strides = array<i32>} : memref<8x128xf32, #tpu.memory_space<vmem>>, vector<8x128xf32>,
    %338 = arith.index_cast %c2_i32_168 : i32 to index
    %c0_181 = arith.constant 0 : index
    %c0_182 = arith.constant 0 : index
    %339 = vector.load %arg16[%338, %c0_181, %c0_182] : memref<8x8x128xf32, #tpu.memory_space<vmem>>, vector<1x8x128xf32>
    %340 = vector.shape_cast %339 : vector<1x8x128xf32> to vector<8x128xf32>
    %341 = vector.shape_cast %335 : vector<8x128xf32> to vector<1x8x128xf32>
    tpu.vector_store %arg16[%338, %c0_181, %c0_182], %341 {strides = array<i32>} : memref<8x8x128xf32, #tpu.memory_space<vmem>>, vector<1x8x128xf32>,
    %c3_i32_183 = arith.constant 3 : i32
    %c0_184 = arith.constant 0 : index
    %c0_185 = arith.constant 0 : index
    %342 = vector.load %arg24[%c0_184, %c0_185] : memref<8x128xf32, #tpu.memory_space<vmem>>, vector<8x128xf32>
    %c0_186 = arith.constant 0 : index
    %c0_187 = arith.constant 0 : index
    %343 = vector.load %arg25[%c0_186, %c0_187] : memref<8x128xf32, #tpu.memory_space<vmem>>, vector<8x128xf32>
    %344 = arith.index_cast %c3_i32_183 : i32 to index
    %c0_188 = arith.constant 0 : index
    %c0_189 = arith.constant 0 : index
    %345 = vector.load %arg19[%344, %c0_188, %c0_189] : memref<8x8x512xf32, #tpu.memory_space<vmem>>, vector<1x8x512xf32>
    %346 = vector.shape_cast %345 : vector<1x8x512xf32> to vector<8x512xf32>
    %cst_190 = arith.constant dense<0.000000e+00> : vector<8x512xf32>
    %347 = tpu.matmul %342, %246, %cst_190 {dimension_numbers = #tpu.dot_dimension_numbers<[1], [0], [0], [1], [0, 0, 1, 1], [], []>} : vector<8x128xf32>, vector<128x512xf32>, vector<8x512xf32> -> vector<8x512xf32>
    %348 = arith.addf %346, %347 : vector<8x512xf32>
    %349 = vector.extract_strided_slice %348 {offsets = [0, 0], sizes = [8, 384], strides = [1, 1]} : vector<8x512xf32> to vector<8x384xf32>
    %350 = arith.negf %349 : vector<8x384xf32>
    %351 = math.exp %350 : vector<8x384xf32>
    %cst_191 = arith.constant 1.000000e+00 : f32
    %352 = vector.broadcast %cst_191 : f32 to vector<8x384xf32>
    %353 = arith.addf %352, %351 : vector<8x384xf32>
    %354 = arith.divf %352, %353 : vector<8x384xf32>
    %355 = vector.extract_strided_slice %354 {offsets = [0, 0], sizes = [8, 128], strides = [1, 1]} : vector<8x384xf32> to vector<8x128xf32>
    %356 = vector.extract_strided_slice %354 {offsets = [0, 128], sizes = [8, 128], strides = [1, 1]} : vector<8x384xf32> to vector<8x128xf32>
    %357 = vector.extract_strided_slice %354 {offsets = [0, 256], sizes = [8, 128], strides = [1, 1]} : vector<8x384xf32> to vector<8x128xf32>
    %358 = vector.extract_strided_slice %348 {offsets = [0, 384], sizes = [8, 128], strides = [1, 1]} : vector<8x512xf32> to vector<8x128xf32>
    %359 = math.tanh %358 : vector<8x128xf32>
    %360 = arith.mulf %356, %343 : vector<8x128xf32>
    %361 = arith.mulf %355, %359 : vector<8x128xf32>
    %362 = arith.addf %360, %361 : vector<8x128xf32>
    %363 = math.tanh %362 : vector<8x128xf32>
    %364 = arith.mulf %357, %363 : vector<8x128xf32>
    %c0_192 = arith.constant 0 : index
    %c0_193 = arith.constant 0 : index
    %365 = vector.load %arg25[%c0_192, %c0_193] : memref<8x128xf32, #tpu.memory_space<vmem>>, vector<8x128xf32>
    tpu.vector_store %arg25[%c0_192, %c0_193], %362 {strides = array<i32>} : memref<8x128xf32, #tpu.memory_space<vmem>>, vector<8x128xf32>,
    %c0_194 = arith.constant 0 : index
    %c0_195 = arith.constant 0 : index
    %366 = vector.load %arg24[%c0_194, %c0_195] : memref<8x128xf32, #tpu.memory_space<vmem>>, vector<8x128xf32>
    tpu.vector_store %arg24[%c0_194, %c0_195], %364 {strides = array<i32>} : memref<8x128xf32, #tpu.memory_space<vmem>>, vector<8x128xf32>,
    %367 = arith.index_cast %c3_i32_183 : i32 to index
    %c0_196 = arith.constant 0 : index
    %c0_197 = arith.constant 0 : index
    %368 = vector.load %arg16[%367, %c0_196, %c0_197] : memref<8x8x128xf32, #tpu.memory_space<vmem>>, vector<1x8x128xf32>
    %369 = vector.shape_cast %368 : vector<1x8x128xf32> to vector<8x128xf32>
    %370 = vector.shape_cast %364 : vector<8x128xf32> to vector<1x8x128xf32>
    tpu.vector_store %arg16[%367, %c0_196, %c0_197], %370 {strides = array<i32>} : memref<8x8x128xf32, #tpu.memory_space<vmem>>, vector<1x8x128xf32>,
    %c4_i32_198 = arith.constant 4 : i32
    %c0_199 = arith.constant 0 : index
    %c0_200 = arith.constant 0 : index
    %371 = vector.load %arg24[%c0_199, %c0_200] : memref<8x128xf32, #tpu.memory_space<vmem>>, vector<8x128xf32>
    %c0_201 = arith.constant 0 : index
    %c0_202 = arith.constant 0 : index
    %372 = vector.load %arg25[%c0_201, %c0_202] : memref<8x128xf32, #tpu.memory_space<vmem>>, vector<8x128xf32>
    %373 = arith.index_cast %c4_i32_198 : i32 to index
    %c0_203 = arith.constant 0 : index
    %c0_204 = arith.constant 0 : index
    %374 = vector.load %arg19[%373, %c0_203, %c0_204] : memref<8x8x512xf32, #tpu.memory_space<vmem>>, vector<1x8x512xf32>
    %375 = vector.shape_cast %374 : vector<1x8x512xf32> to vector<8x512xf32>
    %cst_205 = arith.constant dense<0.000000e+00> : vector<8x512xf32>
    %376 = tpu.matmul %371, %246, %cst_205 {dimension_numbers = #tpu.dot_dimension_numbers<[1], [0], [0], [1], [0, 0, 1, 1], [], []>} : vector<8x128xf32>, vector<128x512xf32>, vector<8x512xf32> -> vector<8x512xf32>
    %377 = arith.addf %375, %376 : vector<8x512xf32>
    %378 = vector.extract_strided_slice %377 {offsets = [0, 0], sizes = [8, 384], strides = [1, 1]} : vector<8x512xf32> to vector<8x384xf32>
    %379 = arith.negf %378 : vector<8x384xf32>
    %380 = math.exp %379 : vector<8x384xf32>
    %cst_206 = arith.constant 1.000000e+00 : f32
    %381 = vector.broadcast %cst_206 : f32 to vector<8x384xf32>
    %382 = arith.addf %381, %380 : vector<8x384xf32>
    %383 = arith.divf %381, %382 : vector<8x384xf32>
    %384 = vector.extract_strided_slice %383 {offsets = [0, 0], sizes = [8, 128], strides = [1, 1]} : vector<8x384xf32> to vector<8x128xf32>
    %385 = vector.extract_strided_slice %383 {offsets = [0, 128], sizes = [8, 128], strides = [1, 1]} : vector<8x384xf32> to vector<8x128xf32>
    %386 = vector.extract_strided_slice %383 {offsets = [0, 256], sizes = [8, 128], strides = [1, 1]} : vector<8x384xf32> to vector<8x128xf32>
    %387 = vector.extract_strided_slice %377 {offsets = [0, 384], sizes = [8, 128], strides = [1, 1]} : vector<8x512xf32> to vector<8x128xf32>
    %388 = math.tanh %387 : vector<8x128xf32>
    %389 = arith.mulf %385, %372 : vector<8x128xf32>
    %390 = arith.mulf %384, %388 : vector<8x128xf32>
    %391 = arith.addf %389, %390 : vector<8x128xf32>
    %392 = math.tanh %391 : vector<8x128xf32>
    %393 = arith.mulf %386, %392 : vector<8x128xf32>
    %c0_207 = arith.constant 0 : index
    %c0_208 = arith.constant 0 : index
    %394 = vector.load %arg25[%c0_207, %c0_208] : memref<8x128xf32, #tpu.memory_space<vmem>>, vector<8x128xf32>
    tpu.vector_store %arg25[%c0_207, %c0_208], %391 {strides = array<i32>} : memref<8x128xf32, #tpu.memory_space<vmem>>, vector<8x128xf32>,
    %c0_209 = arith.constant 0 : index
    %c0_210 = arith.constant 0 : index
    %395 = vector.load %arg24[%c0_209, %c0_210] : memref<8x128xf32, #tpu.memory_space<vmem>>, vector<8x128xf32>
    tpu.vector_store %arg24[%c0_209, %c0_210], %393 {strides = array<i32>} : memref<8x128xf32, #tpu.memory_space<vmem>>, vector<8x128xf32>,
    %396 = arith.index_cast %c4_i32_198 : i32 to index
    %c0_211 = arith.constant 0 : index
    %c0_212 = arith.constant 0 : index
    %397 = vector.load %arg16[%396, %c0_211, %c0_212] : memref<8x8x128xf32, #tpu.memory_space<vmem>>, vector<1x8x128xf32>
    %398 = vector.shape_cast %397 : vector<1x8x128xf32> to vector<8x128xf32>
    %399 = vector.shape_cast %393 : vector<8x128xf32> to vector<1x8x128xf32>
    tpu.vector_store %arg16[%396, %c0_211, %c0_212], %399 {strides = array<i32>} : memref<8x8x128xf32, #tpu.memory_space<vmem>>, vector<1x8x128xf32>,
    %c5_i32_213 = arith.constant 5 : i32
    %c0_214 = arith.constant 0 : index
    %c0_215 = arith.constant 0 : index
    %400 = vector.load %arg24[%c0_214, %c0_215] : memref<8x128xf32, #tpu.memory_space<vmem>>, vector<8x128xf32>
    %c0_216 = arith.constant 0 : index
    %c0_217 = arith.constant 0 : index
    %401 = vector.load %arg25[%c0_216, %c0_217] : memref<8x128xf32, #tpu.memory_space<vmem>>, vector<8x128xf32>
    %402 = arith.index_cast %c5_i32_213 : i32 to index
    %c0_218 = arith.constant 0 : index
    %c0_219 = arith.constant 0 : index
    %403 = vector.load %arg19[%402, %c0_218, %c0_219] : memref<8x8x512xf32, #tpu.memory_space<vmem>>, vector<1x8x512xf32>
    %404 = vector.shape_cast %403 : vector<1x8x512xf32> to vector<8x512xf32>
    %cst_220 = arith.constant dense<0.000000e+00> : vector<8x512xf32>
    %405 = tpu.matmul %400, %246, %cst_220 {dimension_numbers = #tpu.dot_dimension_numbers<[1], [0], [0], [1], [0, 0, 1, 1], [], []>} : vector<8x128xf32>, vector<128x512xf32>, vector<8x512xf32> -> vector<8x512xf32>
    %406 = arith.addf %404, %405 : vector<8x512xf32>
    %407 = vector.extract_strided_slice %406 {offsets = [0, 0], sizes = [8, 384], strides = [1, 1]} : vector<8x512xf32> to vector<8x384xf32>
    %408 = arith.negf %407 : vector<8x384xf32>
    %409 = math.exp %408 : vector<8x384xf32>
    %cst_221 = arith.constant 1.000000e+00 : f32
    %410 = vector.broadcast %cst_221 : f32 to vector<8x384xf32>
    %411 = arith.addf %410, %409 : vector<8x384xf32>
    %412 = arith.divf %410, %411 : vector<8x384xf32>
    %413 = vector.extract_strided_slice %412 {offsets = [0, 0], sizes = [8, 128], strides = [1, 1]} : vector<8x384xf32> to vector<8x128xf32>
    %414 = vector.extract_strided_slice %412 {offsets = [0, 128], sizes = [8, 128], strides = [1, 1]} : vector<8x384xf32> to vector<8x128xf32>
    %415 = vector.extract_strided_slice %412 {offsets = [0, 256], sizes = [8, 128], strides = [1, 1]} : vector<8x384xf32> to vector<8x128xf32>
    %416 = vector.extract_strided_slice %406 {offsets = [0, 384], sizes = [8, 128], strides = [1, 1]} : vector<8x512xf32> to vector<8x128xf32>
    %417 = math.tanh %416 : vector<8x128xf32>
    %418 = arith.mulf %414, %401 : vector<8x128xf32>
    %419 = arith.mulf %413, %417 : vector<8x128xf32>
    %420 = arith.addf %418, %419 : vector<8x128xf32>
    %421 = math.tanh %420 : vector<8x128xf32>
    %422 = arith.mulf %415, %421 : vector<8x128xf32>
    %c0_222 = arith.constant 0 : index
    %c0_223 = arith.constant 0 : index
    %423 = vector.load %arg25[%c0_222, %c0_223] : memref<8x128xf32, #tpu.memory_space<vmem>>, vector<8x128xf32>
    tpu.vector_store %arg25[%c0_222, %c0_223], %420 {strides = array<i32>} : memref<8x128xf32, #tpu.memory_space<vmem>>, vector<8x128xf32>,
    %c0_224 = arith.constant 0 : index
    %c0_225 = arith.constant 0 : index
    %424 = vector.load %arg24[%c0_224, %c0_225] : memref<8x128xf32, #tpu.memory_space<vmem>>, vector<8x128xf32>
    tpu.vector_store %arg24[%c0_224, %c0_225], %422 {strides = array<i32>} : memref<8x128xf32, #tpu.memory_space<vmem>>, vector<8x128xf32>,
    %425 = arith.index_cast %c5_i32_213 : i32 to index
    %c0_226 = arith.constant 0 : index
    %c0_227 = arith.constant 0 : index
    %426 = vector.load %arg16[%425, %c0_226, %c0_227] : memref<8x8x128xf32, #tpu.memory_space<vmem>>, vector<1x8x128xf32>
    %427 = vector.shape_cast %426 : vector<1x8x128xf32> to vector<8x128xf32>
    %428 = vector.shape_cast %422 : vector<8x128xf32> to vector<1x8x128xf32>
    tpu.vector_store %arg16[%425, %c0_226, %c0_227], %428 {strides = array<i32>} : memref<8x8x128xf32, #tpu.memory_space<vmem>>, vector<1x8x128xf32>,
    %c6_i32_228 = arith.constant 6 : i32
    %c0_229 = arith.constant 0 : index
    %c0_230 = arith.constant 0 : index
    %429 = vector.load %arg24[%c0_229, %c0_230] : memref<8x128xf32, #tpu.memory_space<vmem>>, vector<8x128xf32>
    %c0_231 = arith.constant 0 : index
    %c0_232 = arith.constant 0 : index
    %430 = vector.load %arg25[%c0_231, %c0_232] : memref<8x128xf32, #tpu.memory_space<vmem>>, vector<8x128xf32>
    %431 = arith.index_cast %c6_i32_228 : i32 to index
    %c0_233 = arith.constant 0 : index
    %c0_234 = arith.constant 0 : index
    %432 = vector.load %arg19[%431, %c0_233, %c0_234] : memref<8x8x512xf32, #tpu.memory_space<vmem>>, vector<1x8x512xf32>
    %433 = vector.shape_cast %432 : vector<1x8x512xf32> to vector<8x512xf32>
    %cst_235 = arith.constant dense<0.000000e+00> : vector<8x512xf32>
    %434 = tpu.matmul %429, %246, %cst_235 {dimension_numbers = #tpu.dot_dimension_numbers<[1], [0], [0], [1], [0, 0, 1, 1], [], []>} : vector<8x128xf32>, vector<128x512xf32>, vector<8x512xf32> -> vector<8x512xf32>
    %435 = arith.addf %433, %434 : vector<8x512xf32>
    %436 = vector.extract_strided_slice %435 {offsets = [0, 0], sizes = [8, 384], strides = [1, 1]} : vector<8x512xf32> to vector<8x384xf32>
    %437 = arith.negf %436 : vector<8x384xf32>
    %438 = math.exp %437 : vector<8x384xf32>
    %cst_236 = arith.constant 1.000000e+00 : f32
    %439 = vector.broadcast %cst_236 : f32 to vector<8x384xf32>
    %440 = arith.addf %439, %438 : vector<8x384xf32>
    %441 = arith.divf %439, %440 : vector<8x384xf32>
    %442 = vector.extract_strided_slice %441 {offsets = [0, 0], sizes = [8, 128], strides = [1, 1]} : vector<8x384xf32> to vector<8x128xf32>
    %443 = vector.extract_strided_slice %441 {offsets = [0, 128], sizes = [8, 128], strides = [1, 1]} : vector<8x384xf32> to vector<8x128xf32>
    %444 = vector.extract_strided_slice %441 {offsets = [0, 256], sizes = [8, 128], strides = [1, 1]} : vector<8x384xf32> to vector<8x128xf32>
    %445 = vector.extract_strided_slice %435 {offsets = [0, 384], sizes = [8, 128], strides = [1, 1]} : vector<8x512xf32> to vector<8x128xf32>
    %446 = math.tanh %445 : vector<8x128xf32>
    %447 = arith.mulf %443, %430 : vector<8x128xf32>
    %448 = arith.mulf %442, %446 : vector<8x128xf32>
    %449 = arith.addf %447, %448 : vector<8x128xf32>
    %450 = math.tanh %449 : vector<8x128xf32>
    %451 = arith.mulf %444, %450 : vector<8x128xf32>
    %c0_237 = arith.constant 0 : index
    %c0_238 = arith.constant 0 : index
    %452 = vector.load %arg25[%c0_237, %c0_238] : memref<8x128xf32, #tpu.memory_space<vmem>>, vector<8x128xf32>
    tpu.vector_store %arg25[%c0_237, %c0_238], %449 {strides = array<i32>} : memref<8x128xf32, #tpu.memory_space<vmem>>, vector<8x128xf32>,
    %c0_239 = arith.constant 0 : index
    %c0_240 = arith.constant 0 : index
    %453 = vector.load %arg24[%c0_239, %c0_240] : memref<8x128xf32, #tpu.memory_space<vmem>>, vector<8x128xf32>
    tpu.vector_store %arg24[%c0_239, %c0_240], %451 {strides = array<i32>} : memref<8x128xf32, #tpu.memory_space<vmem>>, vector<8x128xf32>,
    %454 = arith.index_cast %c6_i32_228 : i32 to index
    %c0_241 = arith.constant 0 : index
    %c0_242 = arith.constant 0 : index
    %455 = vector.load %arg16[%454, %c0_241, %c0_242] : memref<8x8x128xf32, #tpu.memory_space<vmem>>, vector<1x8x128xf32>
    %456 = vector.shape_cast %455 : vector<1x8x128xf32> to vector<8x128xf32>
    %457 = vector.shape_cast %451 : vector<8x128xf32> to vector<1x8x128xf32>
    tpu.vector_store %arg16[%454, %c0_241, %c0_242], %457 {strides = array<i32>} : memref<8x8x128xf32, #tpu.memory_space<vmem>>, vector<1x8x128xf32>,
    %c7_i32_243 = arith.constant 7 : i32
    %c0_244 = arith.constant 0 : index
    %c0_245 = arith.constant 0 : index
    %458 = vector.load %arg24[%c0_244, %c0_245] : memref<8x128xf32, #tpu.memory_space<vmem>>, vector<8x128xf32>
    %c0_246 = arith.constant 0 : index
    %c0_247 = arith.constant 0 : index
    %459 = vector.load %arg25[%c0_246, %c0_247] : memref<8x128xf32, #tpu.memory_space<vmem>>, vector<8x128xf32>
    %460 = arith.index_cast %c7_i32_243 : i32 to index
    %c0_248 = arith.constant 0 : index
    %c0_249 = arith.constant 0 : index
    %461 = vector.load %arg19[%460, %c0_248, %c0_249] : memref<8x8x512xf32, #tpu.memory_space<vmem>>, vector<1x8x512xf32>
    %462 = vector.shape_cast %461 : vector<1x8x512xf32> to vector<8x512xf32>
    %cst_250 = arith.constant dense<0.000000e+00> : vector<8x512xf32>
    %463 = tpu.matmul %458, %246, %cst_250 {dimension_numbers = #tpu.dot_dimension_numbers<[1], [0], [0], [1], [0, 0, 1, 1], [], []>} : vector<8x128xf32>, vector<128x512xf32>, vector<8x512xf32> -> vector<8x512xf32>
    %464 = arith.addf %462, %463 : vector<8x512xf32>
    %465 = vector.extract_strided_slice %464 {offsets = [0, 0], sizes = [8, 384], strides = [1, 1]} : vector<8x512xf32> to vector<8x384xf32>
    %466 = arith.negf %465 : vector<8x384xf32>
    %467 = math.exp %466 : vector<8x384xf32>
    %cst_251 = arith.constant 1.000000e+00 : f32
    %468 = vector.broadcast %cst_251 : f32 to vector<8x384xf32>
    %469 = arith.addf %468, %467 : vector<8x384xf32>
    %470 = arith.divf %468, %469 : vector<8x384xf32>
    %471 = vector.extract_strided_slice %470 {offsets = [0, 0], sizes = [8, 128], strides = [1, 1]} : vector<8x384xf32> to vector<8x128xf32>
    %472 = vector.extract_strided_slice %470 {offsets = [0, 128], sizes = [8, 128], strides = [1, 1]} : vector<8x384xf32> to vector<8x128xf32>
    %473 = vector.extract_strided_slice %470 {offsets = [0, 256], sizes = [8, 128], strides = [1, 1]} : vector<8x384xf32> to vector<8x128xf32>
    %474 = vector.extract_strided_slice %464 {offsets = [0, 384], sizes = [8, 128], strides = [1, 1]} : vector<8x512xf32> to vector<8x128xf32>
    %475 = math.tanh %474 : vector<8x128xf32>
    %476 = arith.mulf %472, %459 : vector<8x128xf32>
    %477 = arith.mulf %471, %475 : vector<8x128xf32>
    %478 = arith.addf %476, %477 : vector<8x128xf32>
    %479 = math.tanh %478 : vector<8x128xf32>
    %480 = arith.mulf %473, %479 : vector<8x128xf32>
    %c0_252 = arith.constant 0 : index
    %c0_253 = arith.constant 0 : index
    %481 = vector.load %arg25[%c0_252, %c0_253] : memref<8x128xf32, #tpu.memory_space<vmem>>, vector<8x128xf32>
    tpu.vector_store %arg25[%c0_252, %c0_253], %478 {strides = array<i32>} : memref<8x128xf32, #tpu.memory_space<vmem>>, vector<8x128xf32>,
    %c0_254 = arith.constant 0 : index
    %c0_255 = arith.constant 0 : index
    %482 = vector.load %arg24[%c0_254, %c0_255] : memref<8x128xf32, #tpu.memory_space<vmem>>, vector<8x128xf32>
    tpu.vector_store %arg24[%c0_254, %c0_255], %480 {strides = array<i32>} : memref<8x128xf32, #tpu.memory_space<vmem>>, vector<8x128xf32>,
    %483 = arith.index_cast %c7_i32_243 : i32 to index
    %c0_256 = arith.constant 0 : index
    %c0_257 = arith.constant 0 : index
    %484 = vector.load %arg16[%483, %c0_256, %c0_257] : memref<8x8x128xf32, #tpu.memory_space<vmem>>, vector<1x8x128xf32>
    %485 = vector.shape_cast %484 : vector<1x8x128xf32> to vector<8x128xf32>
    %486 = vector.shape_cast %480 : vector<8x128xf32> to vector<1x8x128xf32>
    tpu.vector_store %arg16[%483, %c0_256, %c0_257], %486 {strides = array<i32>} : memref<8x8x128xf32, #tpu.memory_space<vmem>>, vector<1x8x128xf32>,
    %c8_i32_258 = arith.constant 8 : i32
    %c0_259 = arith.constant 0 : index
    %c0_260 = arith.constant 0 : index
    %487 = vector.load %arg4[%c0_259, %c0_260] : memref<128x512xf32, #tpu.memory_space<vmem>>, vector<128x512xf32>
    %c0_261 = arith.constant 0 : index
    %c0_262 = arith.constant 0 : index
    %488 = vector.load %arg8[%c0_261, %c0_262] : memref<128x512xf32, #tpu.memory_space<vmem>>, vector<128x512xf32>
    %c0_263 = arith.constant 0 : index
    %c0_264 = arith.constant 0 : index
    %489 = vector.load %arg12[%c0_263, %c0_264] : memref<1x512xf32, #tpu.memory_space<vmem>>, vector<1x512xf32>
    %c0_265 = arith.constant 0 : index
    %c0_266 = arith.constant 0 : index
    %c0_267 = arith.constant 0 : index
    %490 = vector.load %arg16[%c0_265, %c0_266, %c0_267] : memref<8x8x128xf32, #tpu.memory_space<vmem>>, vector<8x8x128xf32>
    %491 = vector.shape_cast %490 : vector<8x8x128xf32> to vector<64x128xf32>
    %cst_268 = arith.constant dense<0.000000e+00> : vector<64x512xf32>
    %492 = tpu.matmul %491, %487, %cst_268 {dimension_numbers = #tpu.dot_dimension_numbers<[1], [0], [0], [1], [0, 0, 1, 1], [], []>} : vector<64x128xf32>, vector<128x512xf32>, vector<64x512xf32> -> vector<64x512xf32>
    %493 = vector.broadcast %489 : vector<1x512xf32> to vector<64x512xf32>
    %494 = arith.addf %492, %493 : vector<64x512xf32>
    %495 = vector.shape_cast %494 : vector<64x512xf32> to vector<8x8x512xf32>
    %c0_269 = arith.constant 0 : index
    %c0_270 = arith.constant 0 : index
    %c0_271 = arith.constant 0 : index
    %496 = vector.load %arg20[%c0_269, %c0_270, %c0_271] : memref<8x8x512xf32, #tpu.memory_space<vmem>>, vector<8x8x512xf32>
    tpu.vector_store %arg20[%c0_269, %c0_270, %c0_271], %495 {strides = array<i32>} : memref<8x8x512xf32, #tpu.memory_space<vmem>>, vector<8x8x512xf32>,
    %c0_i32_272 = arith.constant 0 : i32
    %c0_273 = arith.constant 0 : index
    %c0_274 = arith.constant 0 : index
    %497 = vector.load %arg26[%c0_273, %c0_274] : memref<8x128xf32, #tpu.memory_space<vmem>>, vector<8x128xf32>
    %c0_275 = arith.constant 0 : index
    %c0_276 = arith.constant 0 : index
    %498 = vector.load %arg27[%c0_275, %c0_276] : memref<8x128xf32, #tpu.memory_space<vmem>>, vector<8x128xf32>
    %499 = arith.index_cast %c0_i32_272 : i32 to index
    %c0_277 = arith.constant 0 : index
    %c0_278 = arith.constant 0 : index
    %500 = vector.load %arg20[%499, %c0_277, %c0_278] : memref<8x8x512xf32, #tpu.memory_space<vmem>>, vector<1x8x512xf32>
    %501 = vector.shape_cast %500 : vector<1x8x512xf32> to vector<8x512xf32>
    %cst_279 = arith.constant dense<0.000000e+00> : vector<8x512xf32>
    %502 = tpu.matmul %497, %488, %cst_279 {dimension_numbers = #tpu.dot_dimension_numbers<[1], [0], [0], [1], [0, 0, 1, 1], [], []>} : vector<8x128xf32>, vector<128x512xf32>, vector<8x512xf32> -> vector<8x512xf32>
    %503 = arith.addf %501, %502 : vector<8x512xf32>
    %504 = vector.extract_strided_slice %503 {offsets = [0, 0], sizes = [8, 384], strides = [1, 1]} : vector<8x512xf32> to vector<8x384xf32>
    %505 = arith.negf %504 : vector<8x384xf32>
    %506 = math.exp %505 : vector<8x384xf32>
    %cst_280 = arith.constant 1.000000e+00 : f32
    %507 = vector.broadcast %cst_280 : f32 to vector<8x384xf32>
    %508 = arith.addf %507, %506 : vector<8x384xf32>
    %509 = arith.divf %507, %508 : vector<8x384xf32>
    %510 = vector.extract_strided_slice %509 {offsets = [0, 0], sizes = [8, 128], strides = [1, 1]} : vector<8x384xf32> to vector<8x128xf32>
    %511 = vector.extract_strided_slice %509 {offsets = [0, 128], sizes = [8, 128], strides = [1, 1]} : vector<8x384xf32> to vector<8x128xf32>
    %512 = vector.extract_strided_slice %509 {offsets = [0, 256], sizes = [8, 128], strides = [1, 1]} : vector<8x384xf32> to vector<8x128xf32>
    %513 = vector.extract_strided_slice %503 {offsets = [0, 384], sizes = [8, 128], strides = [1, 1]} : vector<8x512xf32> to vector<8x128xf32>
    %514 = math.tanh %513 : vector<8x128xf32>
    %515 = arith.mulf %511, %498 : vector<8x128xf32>
    %516 = arith.mulf %510, %514 : vector<8x128xf32>
    %517 = arith.addf %515, %516 : vector<8x128xf32>
    %518 = math.tanh %517 : vector<8x128xf32>
    %519 = arith.mulf %512, %518 : vector<8x128xf32>
    %c0_281 = arith.constant 0 : index
    %c0_282 = arith.constant 0 : index
    %520 = vector.load %arg27[%c0_281, %c0_282] : memref<8x128xf32, #tpu.memory_space<vmem>>, vector<8x128xf32>
    tpu.vector_store %arg27[%c0_281, %c0_282], %517 {strides = array<i32>} : memref<8x128xf32, #tpu.memory_space<vmem>>, vector<8x128xf32>,
    %c0_283 = arith.constant 0 : index
    %c0_284 = arith.constant 0 : index
    %521 = vector.load %arg26[%c0_283, %c0_284] : memref<8x128xf32, #tpu.memory_space<vmem>>, vector<8x128xf32>
    tpu.vector_store %arg26[%c0_283, %c0_284], %519 {strides = array<i32>} : memref<8x128xf32, #tpu.memory_space<vmem>>, vector<8x128xf32>,
    %522 = arith.index_cast %c0_i32_272 : i32 to index
    %c0_285 = arith.constant 0 : index
    %c0_286 = arith.constant 0 : index
    %523 = vector.load %arg17[%522, %c0_285, %c0_286] : memref<8x8x128xf32, #tpu.memory_space<vmem>>, vector<1x8x128xf32>
    %524 = vector.shape_cast %523 : vector<1x8x128xf32> to vector<8x128xf32>
    %525 = vector.shape_cast %519 : vector<8x128xf32> to vector<1x8x128xf32>
    tpu.vector_store %arg17[%522, %c0_285, %c0_286], %525 {strides = array<i32>} : memref<8x8x128xf32, #tpu.memory_space<vmem>>, vector<1x8x128xf32>,
    %c1_i32_287 = arith.constant 1 : i32
    %c0_288 = arith.constant 0 : index
    %c0_289 = arith.constant 0 : index
    %526 = vector.load %arg26[%c0_288, %c0_289] : memref<8x128xf32, #tpu.memory_space<vmem>>, vector<8x128xf32>
    %c0_290 = arith.constant 0 : index
    %c0_291 = arith.constant 0 : index
    %527 = vector.load %arg27[%c0_290, %c0_291] : memref<8x128xf32, #tpu.memory_space<vmem>>, vector<8x128xf32>
    %528 = arith.index_cast %c1_i32_287 : i32 to index
    %c0_292 = arith.constant 0 : index
    %c0_293 = arith.constant 0 : index
    %529 = vector.load %arg20[%528, %c0_292, %c0_293] : memref<8x8x512xf32, #tpu.memory_space<vmem>>, vector<1x8x512xf32>
    %530 = vector.shape_cast %529 : vector<1x8x512xf32> to vector<8x512xf32>
    %cst_294 = arith.constant dense<0.000000e+00> : vector<8x512xf32>
    %531 = tpu.matmul %526, %488, %cst_294 {dimension_numbers = #tpu.dot_dimension_numbers<[1], [0], [0], [1], [0, 0, 1, 1], [], []>} : vector<8x128xf32>, vector<128x512xf32>, vector<8x512xf32> -> vector<8x512xf32>
    %532 = arith.addf %530, %531 : vector<8x512xf32>
    %533 = vector.extract_strided_slice %532 {offsets = [0, 0], sizes = [8, 384], strides = [1, 1]} : vector<8x512xf32> to vector<8x384xf32>
    %534 = arith.negf %533 : vector<8x384xf32>
    %535 = math.exp %534 : vector<8x384xf32>
    %cst_295 = arith.constant 1.000000e+00 : f32
    %536 = vector.broadcast %cst_295 : f32 to vector<8x384xf32>
    %537 = arith.addf %536, %535 : vector<8x384xf32>
    %538 = arith.divf %536, %537 : vector<8x384xf32>
    %539 = vector.extract_strided_slice %538 {offsets = [0, 0], sizes = [8, 128], strides = [1, 1]} : vector<8x384xf32> to vector<8x128xf32>
    %540 = vector.extract_strided_slice %538 {offsets = [0, 128], sizes = [8, 128], strides = [1, 1]} : vector<8x384xf32> to vector<8x128xf32>
    %541 = vector.extract_strided_slice %538 {offsets = [0, 256], sizes = [8, 128], strides = [1, 1]} : vector<8x384xf32> to vector<8x128xf32>
    %542 = vector.extract_strided_slice %532 {offsets = [0, 384], sizes = [8, 128], strides = [1, 1]} : vector<8x512xf32> to vector<8x128xf32>
    %543 = math.tanh %542 : vector<8x128xf32>
    %544 = arith.mulf %540, %527 : vector<8x128xf32>
    %545 = arith.mulf %539, %543 : vector<8x128xf32>
    %546 = arith.addf %544, %545 : vector<8x128xf32>
    %547 = math.tanh %546 : vector<8x128xf32>
    %548 = arith.mulf %541, %547 : vector<8x128xf32>
    %c0_296 = arith.constant 0 : index
    %c0_297 = arith.constant 0 : index
    %549 = vector.load %arg27[%c0_296, %c0_297] : memref<8x128xf32, #tpu.memory_space<vmem>>, vector<8x128xf32>
    tpu.vector_store %arg27[%c0_296, %c0_297], %546 {strides = array<i32>} : memref<8x128xf32, #tpu.memory_space<vmem>>, vector<8x128xf32>,
    %c0_298 = arith.constant 0 : index
    %c0_299 = arith.constant 0 : index
    %550 = vector.load %arg26[%c0_298, %c0_299] : memref<8x128xf32, #tpu.memory_space<vmem>>, vector<8x128xf32>
    tpu.vector_store %arg26[%c0_298, %c0_299], %548 {strides = array<i32>} : memref<8x128xf32, #tpu.memory_space<vmem>>, vector<8x128xf32>,
    %551 = arith.index_cast %c1_i32_287 : i32 to index
    %c0_300 = arith.constant 0 : index
    %c0_301 = arith.constant 0 : index
    %552 = vector.load %arg17[%551, %c0_300, %c0_301] : memref<8x8x128xf32, #tpu.memory_space<vmem>>, vector<1x8x128xf32>
    %553 = vector.shape_cast %552 : vector<1x8x128xf32> to vector<8x128xf32>
    %554 = vector.shape_cast %548 : vector<8x128xf32> to vector<1x8x128xf32>
    tpu.vector_store %arg17[%551, %c0_300, %c0_301], %554 {strides = array<i32>} : memref<8x8x128xf32, #tpu.memory_space<vmem>>, vector<1x8x128xf32>,
    %c2_i32_302 = arith.constant 2 : i32
    %c0_303 = arith.constant 0 : index
    %c0_304 = arith.constant 0 : index
    %555 = vector.load %arg26[%c0_303, %c0_304] : memref<8x128xf32, #tpu.memory_space<vmem>>, vector<8x128xf32>
    %c0_305 = arith.constant 0 : index
    %c0_306 = arith.constant 0 : index
    %556 = vector.load %arg27[%c0_305, %c0_306] : memref<8x128xf32, #tpu.memory_space<vmem>>, vector<8x128xf32>
    %557 = arith.index_cast %c2_i32_302 : i32 to index
    %c0_307 = arith.constant 0 : index
    %c0_308 = arith.constant 0 : index
    %558 = vector.load %arg20[%557, %c0_307, %c0_308] : memref<8x8x512xf32, #tpu.memory_space<vmem>>, vector<1x8x512xf32>
    %559 = vector.shape_cast %558 : vector<1x8x512xf32> to vector<8x512xf32>
    %cst_309 = arith.constant dense<0.000000e+00> : vector<8x512xf32>
    %560 = tpu.matmul %555, %488, %cst_309 {dimension_numbers = #tpu.dot_dimension_numbers<[1], [0], [0], [1], [0, 0, 1, 1], [], []>} : vector<8x128xf32>, vector<128x512xf32>, vector<8x512xf32> -> vector<8x512xf32>
    %561 = arith.addf %559, %560 : vector<8x512xf32>
    %562 = vector.extract_strided_slice %561 {offsets = [0, 0], sizes = [8, 384], strides = [1, 1]} : vector<8x512xf32> to vector<8x384xf32>
    %563 = arith.negf %562 : vector<8x384xf32>
    %564 = math.exp %563 : vector<8x384xf32>
    %cst_310 = arith.constant 1.000000e+00 : f32
    %565 = vector.broadcast %cst_310 : f32 to vector<8x384xf32>
    %566 = arith.addf %565, %564 : vector<8x384xf32>
    %567 = arith.divf %565, %566 : vector<8x384xf32>
    %568 = vector.extract_strided_slice %567 {offsets = [0, 0], sizes = [8, 128], strides = [1, 1]} : vector<8x384xf32> to vector<8x128xf32>
    %569 = vector.extract_strided_slice %567 {offsets = [0, 128], sizes = [8, 128], strides = [1, 1]} : vector<8x384xf32> to vector<8x128xf32>
    %570 = vector.extract_strided_slice %567 {offsets = [0, 256], sizes = [8, 128], strides = [1, 1]} : vector<8x384xf32> to vector<8x128xf32>
    %571 = vector.extract_strided_slice %561 {offsets = [0, 384], sizes = [8, 128], strides = [1, 1]} : vector<8x512xf32> to vector<8x128xf32>
    %572 = math.tanh %571 : vector<8x128xf32>
    %573 = arith.mulf %569, %556 : vector<8x128xf32>
    %574 = arith.mulf %568, %572 : vector<8x128xf32>
    %575 = arith.addf %573, %574 : vector<8x128xf32>
    %576 = math.tanh %575 : vector<8x128xf32>
    %577 = arith.mulf %570, %576 : vector<8x128xf32>
    %c0_311 = arith.constant 0 : index
    %c0_312 = arith.constant 0 : index
    %578 = vector.load %arg27[%c0_311, %c0_312] : memref<8x128xf32, #tpu.memory_space<vmem>>, vector<8x128xf32>
    tpu.vector_store %arg27[%c0_311, %c0_312], %575 {strides = array<i32>} : memref<8x128xf32, #tpu.memory_space<vmem>>, vector<8x128xf32>,
    %c0_313 = arith.constant 0 : index
    %c0_314 = arith.constant 0 : index
    %579 = vector.load %arg26[%c0_313, %c0_314] : memref<8x128xf32, #tpu.memory_space<vmem>>, vector<8x128xf32>
    tpu.vector_store %arg26[%c0_313, %c0_314], %577 {strides = array<i32>} : memref<8x128xf32, #tpu.memory_space<vmem>>, vector<8x128xf32>,
    %580 = arith.index_cast %c2_i32_302 : i32 to index
    %c0_315 = arith.constant 0 : index
    %c0_316 = arith.constant 0 : index
    %581 = vector.load %arg17[%580, %c0_315, %c0_316] : memref<8x8x128xf32, #tpu.memory_space<vmem>>, vector<1x8x128xf32>
    %582 = vector.shape_cast %581 : vector<1x8x128xf32> to vector<8x128xf32>
    %583 = vector.shape_cast %577 : vector<8x128xf32> to vector<1x8x128xf32>
    tpu.vector_store %arg17[%580, %c0_315, %c0_316], %583 {strides = array<i32>} : memref<8x8x128xf32, #tpu.memory_space<vmem>>, vector<1x8x128xf32>,
    %c3_i32_317 = arith.constant 3 : i32
    %c0_318 = arith.constant 0 : index
    %c0_319 = arith.constant 0 : index
    %584 = vector.load %arg26[%c0_318, %c0_319] : memref<8x128xf32, #tpu.memory_space<vmem>>, vector<8x128xf32>
    %c0_320 = arith.constant 0 : index
    %c0_321 = arith.constant 0 : index
    %585 = vector.load %arg27[%c0_320, %c0_321] : memref<8x128xf32, #tpu.memory_space<vmem>>, vector<8x128xf32>
    %586 = arith.index_cast %c3_i32_317 : i32 to index
    %c0_322 = arith.constant 0 : index
    %c0_323 = arith.constant 0 : index
    %587 = vector.load %arg20[%586, %c0_322, %c0_323] : memref<8x8x512xf32, #tpu.memory_space<vmem>>, vector<1x8x512xf32>
    %588 = vector.shape_cast %587 : vector<1x8x512xf32> to vector<8x512xf32>
    %cst_324 = arith.constant dense<0.000000e+00> : vector<8x512xf32>
    %589 = tpu.matmul %584, %488, %cst_324 {dimension_numbers = #tpu.dot_dimension_numbers<[1], [0], [0], [1], [0, 0, 1, 1], [], []>} : vector<8x128xf32>, vector<128x512xf32>, vector<8x512xf32> -> vector<8x512xf32>
    %590 = arith.addf %588, %589 : vector<8x512xf32>
    %591 = vector.extract_strided_slice %590 {offsets = [0, 0], sizes = [8, 384], strides = [1, 1]} : vector<8x512xf32> to vector<8x384xf32>
    %592 = arith.negf %591 : vector<8x384xf32>
    %593 = math.exp %592 : vector<8x384xf32>
    %cst_325 = arith.constant 1.000000e+00 : f32
    %594 = vector.broadcast %cst_325 : f32 to vector<8x384xf32>
    %595 = arith.addf %594, %593 : vector<8x384xf32>
    %596 = arith.divf %594, %595 : vector<8x384xf32>
    %597 = vector.extract_strided_slice %596 {offsets = [0, 0], sizes = [8, 128], strides = [1, 1]} : vector<8x384xf32> to vector<8x128xf32>
    %598 = vector.extract_strided_slice %596 {offsets = [0, 128], sizes = [8, 128], strides = [1, 1]} : vector<8x384xf32> to vector<8x128xf32>
    %599 = vector.extract_strided_slice %596 {offsets = [0, 256], sizes = [8, 128], strides = [1, 1]} : vector<8x384xf32> to vector<8x128xf32>
    %600 = vector.extract_strided_slice %590 {offsets = [0, 384], sizes = [8, 128], strides = [1, 1]} : vector<8x512xf32> to vector<8x128xf32>
    %601 = math.tanh %600 : vector<8x128xf32>
    %602 = arith.mulf %598, %585 : vector<8x128xf32>
    %603 = arith.mulf %597, %601 : vector<8x128xf32>
    %604 = arith.addf %602, %603 : vector<8x128xf32>
    %605 = math.tanh %604 : vector<8x128xf32>
    %606 = arith.mulf %599, %605 : vector<8x128xf32>
    %c0_326 = arith.constant 0 : index
    %c0_327 = arith.constant 0 : index
    %607 = vector.load %arg27[%c0_326, %c0_327] : memref<8x128xf32, #tpu.memory_space<vmem>>, vector<8x128xf32>
    tpu.vector_store %arg27[%c0_326, %c0_327], %604 {strides = array<i32>} : memref<8x128xf32, #tpu.memory_space<vmem>>, vector<8x128xf32>,
    %c0_328 = arith.constant 0 : index
    %c0_329 = arith.constant 0 : index
    %608 = vector.load %arg26[%c0_328, %c0_329] : memref<8x128xf32, #tpu.memory_space<vmem>>, vector<8x128xf32>
    tpu.vector_store %arg26[%c0_328, %c0_329], %606 {strides = array<i32>} : memref<8x128xf32, #tpu.memory_space<vmem>>, vector<8x128xf32>,
    %609 = arith.index_cast %c3_i32_317 : i32 to index
    %c0_330 = arith.constant 0 : index
    %c0_331 = arith.constant 0 : index
    %610 = vector.load %arg17[%609, %c0_330, %c0_331] : memref<8x8x128xf32, #tpu.memory_space<vmem>>, vector<1x8x128xf32>
    %611 = vector.shape_cast %610 : vector<1x8x128xf32> to vector<8x128xf32>
    %612 = vector.shape_cast %606 : vector<8x128xf32> to vector<1x8x128xf32>
    tpu.vector_store %arg17[%609, %c0_330, %c0_331], %612 {strides = array<i32>} : memref<8x8x128xf32, #tpu.memory_space<vmem>>, vector<1x8x128xf32>,
    %c4_i32_332 = arith.constant 4 : i32
    %c0_333 = arith.constant 0 : index
    %c0_334 = arith.constant 0 : index
    %613 = vector.load %arg26[%c0_333, %c0_334] : memref<8x128xf32, #tpu.memory_space<vmem>>, vector<8x128xf32>
    %c0_335 = arith.constant 0 : index
    %c0_336 = arith.constant 0 : index
    %614 = vector.load %arg27[%c0_335, %c0_336] : memref<8x128xf32, #tpu.memory_space<vmem>>, vector<8x128xf32>
    %615 = arith.index_cast %c4_i32_332 : i32 to index
    %c0_337 = arith.constant 0 : index
    %c0_338 = arith.constant 0 : index
    %616 = vector.load %arg20[%615, %c0_337, %c0_338] : memref<8x8x512xf32, #tpu.memory_space<vmem>>, vector<1x8x512xf32>
    %617 = vector.shape_cast %616 : vector<1x8x512xf32> to vector<8x512xf32>
    %cst_339 = arith.constant dense<0.000000e+00> : vector<8x512xf32>
    %618 = tpu.matmul %613, %488, %cst_339 {dimension_numbers = #tpu.dot_dimension_numbers<[1], [0], [0], [1], [0, 0, 1, 1], [], []>} : vector<8x128xf32>, vector<128x512xf32>, vector<8x512xf32> -> vector<8x512xf32>
    %619 = arith.addf %617, %618 : vector<8x512xf32>
    %620 = vector.extract_strided_slice %619 {offsets = [0, 0], sizes = [8, 384], strides = [1, 1]} : vector<8x512xf32> to vector<8x384xf32>
    %621 = arith.negf %620 : vector<8x384xf32>
    %622 = math.exp %621 : vector<8x384xf32>
    %cst_340 = arith.constant 1.000000e+00 : f32
    %623 = vector.broadcast %cst_340 : f32 to vector<8x384xf32>
    %624 = arith.addf %623, %622 : vector<8x384xf32>
    %625 = arith.divf %623, %624 : vector<8x384xf32>
    %626 = vector.extract_strided_slice %625 {offsets = [0, 0], sizes = [8, 128], strides = [1, 1]} : vector<8x384xf32> to vector<8x128xf32>
    %627 = vector.extract_strided_slice %625 {offsets = [0, 128], sizes = [8, 128], strides = [1, 1]} : vector<8x384xf32> to vector<8x128xf32>
    %628 = vector.extract_strided_slice %625 {offsets = [0, 256], sizes = [8, 128], strides = [1, 1]} : vector<8x384xf32> to vector<8x128xf32>
    %629 = vector.extract_strided_slice %619 {offsets = [0, 384], sizes = [8, 128], strides = [1, 1]} : vector<8x512xf32> to vector<8x128xf32>
    %630 = math.tanh %629 : vector<8x128xf32>
    %631 = arith.mulf %627, %614 : vector<8x128xf32>
    %632 = arith.mulf %626, %630 : vector<8x128xf32>
    %633 = arith.addf %631, %632 : vector<8x128xf32>
    %634 = math.tanh %633 : vector<8x128xf32>
    %635 = arith.mulf %628, %634 : vector<8x128xf32>
    %c0_341 = arith.constant 0 : index
    %c0_342 = arith.constant 0 : index
    %636 = vector.load %arg27[%c0_341, %c0_342] : memref<8x128xf32, #tpu.memory_space<vmem>>, vector<8x128xf32>
    tpu.vector_store %arg27[%c0_341, %c0_342], %633 {strides = array<i32>} : memref<8x128xf32, #tpu.memory_space<vmem>>, vector<8x128xf32>,
    %c0_343 = arith.constant 0 : index
    %c0_344 = arith.constant 0 : index
    %637 = vector.load %arg26[%c0_343, %c0_344] : memref<8x128xf32, #tpu.memory_space<vmem>>, vector<8x128xf32>
    tpu.vector_store %arg26[%c0_343, %c0_344], %635 {strides = array<i32>} : memref<8x128xf32, #tpu.memory_space<vmem>>, vector<8x128xf32>,
    %638 = arith.index_cast %c4_i32_332 : i32 to index
    %c0_345 = arith.constant 0 : index
    %c0_346 = arith.constant 0 : index
    %639 = vector.load %arg17[%638, %c0_345, %c0_346] : memref<8x8x128xf32, #tpu.memory_space<vmem>>, vector<1x8x128xf32>
    %640 = vector.shape_cast %639 : vector<1x8x128xf32> to vector<8x128xf32>
    %641 = vector.shape_cast %635 : vector<8x128xf32> to vector<1x8x128xf32>
    tpu.vector_store %arg17[%638, %c0_345, %c0_346], %641 {strides = array<i32>} : memref<8x8x128xf32, #tpu.memory_space<vmem>>, vector<1x8x128xf32>,
    %c5_i32_347 = arith.constant 5 : i32
    %c0_348 = arith.constant 0 : index
    %c0_349 = arith.constant 0 : index
    %642 = vector.load %arg26[%c0_348, %c0_349] : memref<8x128xf32, #tpu.memory_space<vmem>>, vector<8x128xf32>
    %c0_350 = arith.constant 0 : index
    %c0_351 = arith.constant 0 : index
    %643 = vector.load %arg27[%c0_350, %c0_351] : memref<8x128xf32, #tpu.memory_space<vmem>>, vector<8x128xf32>
    %644 = arith.index_cast %c5_i32_347 : i32 to index
    %c0_352 = arith.constant 0 : index
    %c0_353 = arith.constant 0 : index
    %645 = vector.load %arg20[%644, %c0_352, %c0_353] : memref<8x8x512xf32, #tpu.memory_space<vmem>>, vector<1x8x512xf32>
    %646 = vector.shape_cast %645 : vector<1x8x512xf32> to vector<8x512xf32>
    %cst_354 = arith.constant dense<0.000000e+00> : vector<8x512xf32>
    %647 = tpu.matmul %642, %488, %cst_354 {dimension_numbers = #tpu.dot_dimension_numbers<[1], [0], [0], [1], [0, 0, 1, 1], [], []>} : vector<8x128xf32>, vector<128x512xf32>, vector<8x512xf32> -> vector<8x512xf32>
    %648 = arith.addf %646, %647 : vector<8x512xf32>
    %649 = vector.extract_strided_slice %648 {offsets = [0, 0], sizes = [8, 384], strides = [1, 1]} : vector<8x512xf32> to vector<8x384xf32>
    %650 = arith.negf %649 : vector<8x384xf32>
    %651 = math.exp %650 : vector<8x384xf32>
    %cst_355 = arith.constant 1.000000e+00 : f32
    %652 = vector.broadcast %cst_355 : f32 to vector<8x384xf32>
    %653 = arith.addf %652, %651 : vector<8x384xf32>
    %654 = arith.divf %652, %653 : vector<8x384xf32>
    %655 = vector.extract_strided_slice %654 {offsets = [0, 0], sizes = [8, 128], strides = [1, 1]} : vector<8x384xf32> to vector<8x128xf32>
    %656 = vector.extract_strided_slice %654 {offsets = [0, 128], sizes = [8, 128], strides = [1, 1]} : vector<8x384xf32> to vector<8x128xf32>
    %657 = vector.extract_strided_slice %654 {offsets = [0, 256], sizes = [8, 128], strides = [1, 1]} : vector<8x384xf32> to vector<8x128xf32>
    %658 = vector.extract_strided_slice %648 {offsets = [0, 384], sizes = [8, 128], strides = [1, 1]} : vector<8x512xf32> to vector<8x128xf32>
    %659 = math.tanh %658 : vector<8x128xf32>
    %660 = arith.mulf %656, %643 : vector<8x128xf32>
    %661 = arith.mulf %655, %659 : vector<8x128xf32>
    %662 = arith.addf %660, %661 : vector<8x128xf32>
    %663 = math.tanh %662 : vector<8x128xf32>
    %664 = arith.mulf %657, %663 : vector<8x128xf32>
    %c0_356 = arith.constant 0 : index
    %c0_357 = arith.constant 0 : index
    %665 = vector.load %arg27[%c0_356, %c0_357] : memref<8x128xf32, #tpu.memory_space<vmem>>, vector<8x128xf32>
    tpu.vector_store %arg27[%c0_356, %c0_357], %662 {strides = array<i32>} : memref<8x128xf32, #tpu.memory_space<vmem>>, vector<8x128xf32>,
    %c0_358 = arith.constant 0 : index
    %c0_359 = arith.constant 0 : index
    %666 = vector.load %arg26[%c0_358, %c0_359] : memref<8x128xf32, #tpu.memory_space<vmem>>, vector<8x128xf32>
    tpu.vector_store %arg26[%c0_358, %c0_359], %664 {strides = array<i32>} : memref<8x128xf32, #tpu.memory_space<vmem>>, vector<8x128xf32>,
    %667 = arith.index_cast %c5_i32_347 : i32 to index
    %c0_360 = arith.constant 0 : index
    %c0_361 = arith.constant 0 : index
    %668 = vector.load %arg17[%667, %c0_360, %c0_361] : memref<8x8x128xf32, #tpu.memory_space<vmem>>, vector<1x8x128xf32>
    %669 = vector.shape_cast %668 : vector<1x8x128xf32> to vector<8x128xf32>
    %670 = vector.shape_cast %664 : vector<8x128xf32> to vector<1x8x128xf32>
    tpu.vector_store %arg17[%667, %c0_360, %c0_361], %670 {strides = array<i32>} : memref<8x8x128xf32, #tpu.memory_space<vmem>>, vector<1x8x128xf32>,
    %c6_i32_362 = arith.constant 6 : i32
    %c0_363 = arith.constant 0 : index
    %c0_364 = arith.constant 0 : index
    %671 = vector.load %arg26[%c0_363, %c0_364] : memref<8x128xf32, #tpu.memory_space<vmem>>, vector<8x128xf32>
    %c0_365 = arith.constant 0 : index
    %c0_366 = arith.constant 0 : index
    %672 = vector.load %arg27[%c0_365, %c0_366] : memref<8x128xf32, #tpu.memory_space<vmem>>, vector<8x128xf32>
    %673 = arith.index_cast %c6_i32_362 : i32 to index
    %c0_367 = arith.constant 0 : index
    %c0_368 = arith.constant 0 : index
    %674 = vector.load %arg20[%673, %c0_367, %c0_368] : memref<8x8x512xf32, #tpu.memory_space<vmem>>, vector<1x8x512xf32>
    %675 = vector.shape_cast %674 : vector<1x8x512xf32> to vector<8x512xf32>
    %cst_369 = arith.constant dense<0.000000e+00> : vector<8x512xf32>
    %676 = tpu.matmul %671, %488, %cst_369 {dimension_numbers = #tpu.dot_dimension_numbers<[1], [0], [0], [1], [0, 0, 1, 1], [], []>} : vector<8x128xf32>, vector<128x512xf32>, vector<8x512xf32> -> vector<8x512xf32>
    %677 = arith.addf %675, %676 : vector<8x512xf32>
    %678 = vector.extract_strided_slice %677 {offsets = [0, 0], sizes = [8, 384], strides = [1, 1]} : vector<8x512xf32> to vector<8x384xf32>
    %679 = arith.negf %678 : vector<8x384xf32>
    %680 = math.exp %679 : vector<8x384xf32>
    %cst_370 = arith.constant 1.000000e+00 : f32
    %681 = vector.broadcast %cst_370 : f32 to vector<8x384xf32>
    %682 = arith.addf %681, %680 : vector<8x384xf32>
    %683 = arith.divf %681, %682 : vector<8x384xf32>
    %684 = vector.extract_strided_slice %683 {offsets = [0, 0], sizes = [8, 128], strides = [1, 1]} : vector<8x384xf32> to vector<8x128xf32>
    %685 = vector.extract_strided_slice %683 {offsets = [0, 128], sizes = [8, 128], strides = [1, 1]} : vector<8x384xf32> to vector<8x128xf32>
    %686 = vector.extract_strided_slice %683 {offsets = [0, 256], sizes = [8, 128], strides = [1, 1]} : vector<8x384xf32> to vector<8x128xf32>
    %687 = vector.extract_strided_slice %677 {offsets = [0, 384], sizes = [8, 128], strides = [1, 1]} : vector<8x512xf32> to vector<8x128xf32>
    %688 = math.tanh %687 : vector<8x128xf32>
    %689 = arith.mulf %685, %672 : vector<8x128xf32>
    %690 = arith.mulf %684, %688 : vector<8x128xf32>
    %691 = arith.addf %689, %690 : vector<8x128xf32>
    %692 = math.tanh %691 : vector<8x128xf32>
    %693 = arith.mulf %686, %692 : vector<8x128xf32>
    %c0_371 = arith.constant 0 : index
    %c0_372 = arith.constant 0 : index
    %694 = vector.load %arg27[%c0_371, %c0_372] : memref<8x128xf32, #tpu.memory_space<vmem>>, vector<8x128xf32>
    tpu.vector_store %arg27[%c0_371, %c0_372], %691 {strides = array<i32>} : memref<8x128xf32, #tpu.memory_space<vmem>>, vector<8x128xf32>,
    %c0_373 = arith.constant 0 : index
    %c0_374 = arith.constant 0 : index
    %695 = vector.load %arg26[%c0_373, %c0_374] : memref<8x128xf32, #tpu.memory_space<vmem>>, vector<8x128xf32>
    tpu.vector_store %arg26[%c0_373, %c0_374], %693 {strides = array<i32>} : memref<8x128xf32, #tpu.memory_space<vmem>>, vector<8x128xf32>,
    %696 = arith.index_cast %c6_i32_362 : i32 to index
    %c0_375 = arith.constant 0 : index
    %c0_376 = arith.constant 0 : index
    %697 = vector.load %arg17[%696, %c0_375, %c0_376] : memref<8x8x128xf32, #tpu.memory_space<vmem>>, vector<1x8x128xf32>
    %698 = vector.shape_cast %697 : vector<1x8x128xf32> to vector<8x128xf32>
    %699 = vector.shape_cast %693 : vector<8x128xf32> to vector<1x8x128xf32>
    tpu.vector_store %arg17[%696, %c0_375, %c0_376], %699 {strides = array<i32>} : memref<8x8x128xf32, #tpu.memory_space<vmem>>, vector<1x8x128xf32>,
    %c7_i32_377 = arith.constant 7 : i32
    %c0_378 = arith.constant 0 : index
    %c0_379 = arith.constant 0 : index
    %700 = vector.load %arg26[%c0_378, %c0_379] : memref<8x128xf32, #tpu.memory_space<vmem>>, vector<8x128xf32>
    %c0_380 = arith.constant 0 : index
    %c0_381 = arith.constant 0 : index
    %701 = vector.load %arg27[%c0_380, %c0_381] : memref<8x128xf32, #tpu.memory_space<vmem>>, vector<8x128xf32>
    %702 = arith.index_cast %c7_i32_377 : i32 to index
    %c0_382 = arith.constant 0 : index
    %c0_383 = arith.constant 0 : index
    %703 = vector.load %arg20[%702, %c0_382, %c0_383] : memref<8x8x512xf32, #tpu.memory_space<vmem>>, vector<1x8x512xf32>
    %704 = vector.shape_cast %703 : vector<1x8x512xf32> to vector<8x512xf32>
    %cst_384 = arith.constant dense<0.000000e+00> : vector<8x512xf32>
    %705 = tpu.matmul %700, %488, %cst_384 {dimension_numbers = #tpu.dot_dimension_numbers<[1], [0], [0], [1], [0, 0, 1, 1], [], []>} : vector<8x128xf32>, vector<128x512xf32>, vector<8x512xf32> -> vector<8x512xf32>
    %706 = arith.addf %704, %705 : vector<8x512xf32>
    %707 = vector.extract_strided_slice %706 {offsets = [0, 0], sizes = [8, 384], strides = [1, 1]} : vector<8x512xf32> to vector<8x384xf32>
    %708 = arith.negf %707 : vector<8x384xf32>
    %709 = math.exp %708 : vector<8x384xf32>
    %cst_385 = arith.constant 1.000000e+00 : f32
    %710 = vector.broadcast %cst_385 : f32 to vector<8x384xf32>
    %711 = arith.addf %710, %709 : vector<8x384xf32>
    %712 = arith.divf %710, %711 : vector<8x384xf32>
    %713 = vector.extract_strided_slice %712 {offsets = [0, 0], sizes = [8, 128], strides = [1, 1]} : vector<8x384xf32> to vector<8x128xf32>
    %714 = vector.extract_strided_slice %712 {offsets = [0, 128], sizes = [8, 128], strides = [1, 1]} : vector<8x384xf32> to vector<8x128xf32>
    %715 = vector.extract_strided_slice %712 {offsets = [0, 256], sizes = [8, 128], strides = [1, 1]} : vector<8x384xf32> to vector<8x128xf32>
    %716 = vector.extract_strided_slice %706 {offsets = [0, 384], sizes = [8, 128], strides = [1, 1]} : vector<8x512xf32> to vector<8x128xf32>
    %717 = math.tanh %716 : vector<8x128xf32>
    %718 = arith.mulf %714, %701 : vector<8x128xf32>
    %719 = arith.mulf %713, %717 : vector<8x128xf32>
    %720 = arith.addf %718, %719 : vector<8x128xf32>
    %721 = math.tanh %720 : vector<8x128xf32>
    %722 = arith.mulf %715, %721 : vector<8x128xf32>
    %c0_386 = arith.constant 0 : index
    %c0_387 = arith.constant 0 : index
    %723 = vector.load %arg27[%c0_386, %c0_387] : memref<8x128xf32, #tpu.memory_space<vmem>>, vector<8x128xf32>
    tpu.vector_store %arg27[%c0_386, %c0_387], %720 {strides = array<i32>} : memref<8x128xf32, #tpu.memory_space<vmem>>, vector<8x128xf32>,
    %c0_388 = arith.constant 0 : index
    %c0_389 = arith.constant 0 : index
    %724 = vector.load %arg26[%c0_388, %c0_389] : memref<8x128xf32, #tpu.memory_space<vmem>>, vector<8x128xf32>
    tpu.vector_store %arg26[%c0_388, %c0_389], %722 {strides = array<i32>} : memref<8x128xf32, #tpu.memory_space<vmem>>, vector<8x128xf32>,
    %725 = arith.index_cast %c7_i32_377 : i32 to index
    %c0_390 = arith.constant 0 : index
    %c0_391 = arith.constant 0 : index
    %726 = vector.load %arg17[%725, %c0_390, %c0_391] : memref<8x8x128xf32, #tpu.memory_space<vmem>>, vector<1x8x128xf32>
    %727 = vector.shape_cast %726 : vector<1x8x128xf32> to vector<8x128xf32>
    %728 = vector.shape_cast %722 : vector<8x128xf32> to vector<1x8x128xf32>
    tpu.vector_store %arg17[%725, %c0_390, %c0_391], %728 {strides = array<i32>} : memref<8x8x128xf32, #tpu.memory_space<vmem>>, vector<1x8x128xf32>,
    %c8_i32_392 = arith.constant 8 : i32
    %c0_393 = arith.constant 0 : index
    %c0_394 = arith.constant 0 : index
    %729 = vector.load %arg5[%c0_393, %c0_394] : memref<128x512xf32, #tpu.memory_space<vmem>>, vector<128x512xf32>
    %c0_395 = arith.constant 0 : index
    %c0_396 = arith.constant 0 : index
    %730 = vector.load %arg9[%c0_395, %c0_396] : memref<128x512xf32, #tpu.memory_space<vmem>>, vector<128x512xf32>
    %c0_397 = arith.constant 0 : index
    %c0_398 = arith.constant 0 : index
    %731 = vector.load %arg13[%c0_397, %c0_398] : memref<1x512xf32, #tpu.memory_space<vmem>>, vector<1x512xf32>
    %c0_399 = arith.constant 0 : index
    %c0_400 = arith.constant 0 : index
    %c0_401 = arith.constant 0 : index
    %732 = vector.load %arg17[%c0_399, %c0_400, %c0_401] : memref<8x8x128xf32, #tpu.memory_space<vmem>>, vector<8x8x128xf32>
    %733 = vector.shape_cast %732 : vector<8x8x128xf32> to vector<64x128xf32>
    %cst_402 = arith.constant dense<0.000000e+00> : vector<64x512xf32>
    %734 = tpu.matmul %733, %729, %cst_402 {dimension_numbers = #tpu.dot_dimension_numbers<[1], [0], [0], [1], [0, 0, 1, 1], [], []>} : vector<64x128xf32>, vector<128x512xf32>, vector<64x512xf32> -> vector<64x512xf32>
    %735 = vector.broadcast %731 : vector<1x512xf32> to vector<64x512xf32>
    %736 = arith.addf %734, %735 : vector<64x512xf32>
    %737 = vector.shape_cast %736 : vector<64x512xf32> to vector<8x8x512xf32>
    %c0_403 = arith.constant 0 : index
    %c0_404 = arith.constant 0 : index
    %c0_405 = arith.constant 0 : index
    %738 = vector.load %arg21[%c0_403, %c0_404, %c0_405] : memref<8x8x512xf32, #tpu.memory_space<vmem>>, vector<8x8x512xf32>
    tpu.vector_store %arg21[%c0_403, %c0_404, %c0_405], %737 {strides = array<i32>} : memref<8x8x512xf32, #tpu.memory_space<vmem>>, vector<8x8x512xf32>,
    %c0_i32_406 = arith.constant 0 : i32
    %c0_407 = arith.constant 0 : index
    %c0_408 = arith.constant 0 : index
    %739 = vector.load %arg28[%c0_407, %c0_408] : memref<8x128xf32, #tpu.memory_space<vmem>>, vector<8x128xf32>
    %c0_409 = arith.constant 0 : index
    %c0_410 = arith.constant 0 : index
    %740 = vector.load %arg29[%c0_409, %c0_410] : memref<8x128xf32, #tpu.memory_space<vmem>>, vector<8x128xf32>
    %741 = arith.index_cast %c0_i32_406 : i32 to index
    %c0_411 = arith.constant 0 : index
    %c0_412 = arith.constant 0 : index
    %742 = vector.load %arg21[%741, %c0_411, %c0_412] : memref<8x8x512xf32, #tpu.memory_space<vmem>>, vector<1x8x512xf32>
    %743 = vector.shape_cast %742 : vector<1x8x512xf32> to vector<8x512xf32>
    %cst_413 = arith.constant dense<0.000000e+00> : vector<8x512xf32>
    %744 = tpu.matmul %739, %730, %cst_413 {dimension_numbers = #tpu.dot_dimension_numbers<[1], [0], [0], [1], [0, 0, 1, 1], [], []>} : vector<8x128xf32>, vector<128x512xf32>, vector<8x512xf32> -> vector<8x512xf32>
    %745 = arith.addf %743, %744 : vector<8x512xf32>
    %746 = vector.extract_strided_slice %745 {offsets = [0, 0], sizes = [8, 384], strides = [1, 1]} : vector<8x512xf32> to vector<8x384xf32>
    %747 = arith.negf %746 : vector<8x384xf32>
    %748 = math.exp %747 : vector<8x384xf32>
    %cst_414 = arith.constant 1.000000e+00 : f32
    %749 = vector.broadcast %cst_414 : f32 to vector<8x384xf32>
    %750 = arith.addf %749, %748 : vector<8x384xf32>
    %751 = arith.divf %749, %750 : vector<8x384xf32>
    %752 = vector.extract_strided_slice %751 {offsets = [0, 0], sizes = [8, 128], strides = [1, 1]} : vector<8x384xf32> to vector<8x128xf32>
    %753 = vector.extract_strided_slice %751 {offsets = [0, 128], sizes = [8, 128], strides = [1, 1]} : vector<8x384xf32> to vector<8x128xf32>
    %754 = vector.extract_strided_slice %751 {offsets = [0, 256], sizes = [8, 128], strides = [1, 1]} : vector<8x384xf32> to vector<8x128xf32>
    %755 = vector.extract_strided_slice %745 {offsets = [0, 384], sizes = [8, 128], strides = [1, 1]} : vector<8x512xf32> to vector<8x128xf32>
    %756 = math.tanh %755 : vector<8x128xf32>
    %757 = arith.mulf %753, %740 : vector<8x128xf32>
    %758 = arith.mulf %752, %756 : vector<8x128xf32>
    %759 = arith.addf %757, %758 : vector<8x128xf32>
    %760 = math.tanh %759 : vector<8x128xf32>
    %761 = arith.mulf %754, %760 : vector<8x128xf32>
    %c0_415 = arith.constant 0 : index
    %c0_416 = arith.constant 0 : index
    %762 = vector.load %arg29[%c0_415, %c0_416] : memref<8x128xf32, #tpu.memory_space<vmem>>, vector<8x128xf32>
    tpu.vector_store %arg29[%c0_415, %c0_416], %759 {strides = array<i32>} : memref<8x128xf32, #tpu.memory_space<vmem>>, vector<8x128xf32>,
    %c0_417 = arith.constant 0 : index
    %c0_418 = arith.constant 0 : index
    %763 = vector.load %arg28[%c0_417, %c0_418] : memref<8x128xf32, #tpu.memory_space<vmem>>, vector<8x128xf32>
    tpu.vector_store %arg28[%c0_417, %c0_418], %761 {strides = array<i32>} : memref<8x128xf32, #tpu.memory_space<vmem>>, vector<8x128xf32>,
    %764 = arith.index_cast %c0_i32_406 : i32 to index
    %c0_419 = arith.constant 0 : index
    %c0_420 = arith.constant 0 : index
    %765 = vector.load %arg14[%764, %c0_419, %c0_420] : memref<8x8x128xf32, #tpu.memory_space<vmem>>, vector<1x8x128xf32>
    %766 = vector.shape_cast %765 : vector<1x8x128xf32> to vector<8x128xf32>
    %767 = vector.shape_cast %761 : vector<8x128xf32> to vector<1x8x128xf32>
    tpu.vector_store %arg14[%764, %c0_419, %c0_420], %767 {strides = array<i32>} : memref<8x8x128xf32, #tpu.memory_space<vmem>>, vector<1x8x128xf32>,
    %c1_i32_421 = arith.constant 1 : i32
    %c0_422 = arith.constant 0 : index
    %c0_423 = arith.constant 0 : index
    %768 = vector.load %arg28[%c0_422, %c0_423] : memref<8x128xf32, #tpu.memory_space<vmem>>, vector<8x128xf32>
    %c0_424 = arith.constant 0 : index
    %c0_425 = arith.constant 0 : index
    %769 = vector.load %arg29[%c0_424, %c0_425] : memref<8x128xf32, #tpu.memory_space<vmem>>, vector<8x128xf32>
    %770 = arith.index_cast %c1_i32_421 : i32 to index
    %c0_426 = arith.constant 0 : index
    %c0_427 = arith.constant 0 : index
    %771 = vector.load %arg21[%770, %c0_426, %c0_427] : memref<8x8x512xf32, #tpu.memory_space<vmem>>, vector<1x8x512xf32>
    %772 = vector.shape_cast %771 : vector<1x8x512xf32> to vector<8x512xf32>
    %cst_428 = arith.constant dense<0.000000e+00> : vector<8x512xf32>
    %773 = tpu.matmul %768, %730, %cst_428 {dimension_numbers = #tpu.dot_dimension_numbers<[1], [0], [0], [1], [0, 0, 1, 1], [], []>} : vector<8x128xf32>, vector<128x512xf32>, vector<8x512xf32> -> vector<8x512xf32>
    %774 = arith.addf %772, %773 : vector<8x512xf32>
    %775 = vector.extract_strided_slice %774 {offsets = [0, 0], sizes = [8, 384], strides = [1, 1]} : vector<8x512xf32> to vector<8x384xf32>
    %776 = arith.negf %775 : vector<8x384xf32>
    %777 = math.exp %776 : vector<8x384xf32>
    %cst_429 = arith.constant 1.000000e+00 : f32
    %778 = vector.broadcast %cst_429 : f32 to vector<8x384xf32>
    %779 = arith.addf %778, %777 : vector<8x384xf32>
    %780 = arith.divf %778, %779 : vector<8x384xf32>
    %781 = vector.extract_strided_slice %780 {offsets = [0, 0], sizes = [8, 128], strides = [1, 1]} : vector<8x384xf32> to vector<8x128xf32>
    %782 = vector.extract_strided_slice %780 {offsets = [0, 128], sizes = [8, 128], strides = [1, 1]} : vector<8x384xf32> to vector<8x128xf32>
    %783 = vector.extract_strided_slice %780 {offsets = [0, 256], sizes = [8, 128], strides = [1, 1]} : vector<8x384xf32> to vector<8x128xf32>
    %784 = vector.extract_strided_slice %774 {offsets = [0, 384], sizes = [8, 128], strides = [1, 1]} : vector<8x512xf32> to vector<8x128xf32>
    %785 = math.tanh %784 : vector<8x128xf32>
    %786 = arith.mulf %782, %769 : vector<8x128xf32>
    %787 = arith.mulf %781, %785 : vector<8x128xf32>
    %788 = arith.addf %786, %787 : vector<8x128xf32>
    %789 = math.tanh %788 : vector<8x128xf32>
    %790 = arith.mulf %783, %789 : vector<8x128xf32>
    %c0_430 = arith.constant 0 : index
    %c0_431 = arith.constant 0 : index
    %791 = vector.load %arg29[%c0_430, %c0_431] : memref<8x128xf32, #tpu.memory_space<vmem>>, vector<8x128xf32>
    tpu.vector_store %arg29[%c0_430, %c0_431], %788 {strides = array<i32>} : memref<8x128xf32, #tpu.memory_space<vmem>>, vector<8x128xf32>,
    %c0_432 = arith.constant 0 : index
    %c0_433 = arith.constant 0 : index
    %792 = vector.load %arg28[%c0_432, %c0_433] : memref<8x128xf32, #tpu.memory_space<vmem>>, vector<8x128xf32>
    tpu.vector_store %arg28[%c0_432, %c0_433], %790 {strides = array<i32>} : memref<8x128xf32, #tpu.memory_space<vmem>>, vector<8x128xf32>,
    %793 = arith.index_cast %c1_i32_421 : i32 to index
    %c0_434 = arith.constant 0 : index
    %c0_435 = arith.constant 0 : index
    %794 = vector.load %arg14[%793, %c0_434, %c0_435] : memref<8x8x128xf32, #tpu.memory_space<vmem>>, vector<1x8x128xf32>
    %795 = vector.shape_cast %794 : vector<1x8x128xf32> to vector<8x128xf32>
    %796 = vector.shape_cast %790 : vector<8x128xf32> to vector<1x8x128xf32>
    tpu.vector_store %arg14[%793, %c0_434, %c0_435], %796 {strides = array<i32>} : memref<8x8x128xf32, #tpu.memory_space<vmem>>, vector<1x8x128xf32>,
    %c2_i32_436 = arith.constant 2 : i32
    %c0_437 = arith.constant 0 : index
    %c0_438 = arith.constant 0 : index
    %797 = vector.load %arg28[%c0_437, %c0_438] : memref<8x128xf32, #tpu.memory_space<vmem>>, vector<8x128xf32>
    %c0_439 = arith.constant 0 : index
    %c0_440 = arith.constant 0 : index
    %798 = vector.load %arg29[%c0_439, %c0_440] : memref<8x128xf32, #tpu.memory_space<vmem>>, vector<8x128xf32>
    %799 = arith.index_cast %c2_i32_436 : i32 to index
    %c0_441 = arith.constant 0 : index
    %c0_442 = arith.constant 0 : index
    %800 = vector.load %arg21[%799, %c0_441, %c0_442] : memref<8x8x512xf32, #tpu.memory_space<vmem>>, vector<1x8x512xf32>
    %801 = vector.shape_cast %800 : vector<1x8x512xf32> to vector<8x512xf32>
    %cst_443 = arith.constant dense<0.000000e+00> : vector<8x512xf32>
    %802 = tpu.matmul %797, %730, %cst_443 {dimension_numbers = #tpu.dot_dimension_numbers<[1], [0], [0], [1], [0, 0, 1, 1], [], []>} : vector<8x128xf32>, vector<128x512xf32>, vector<8x512xf32> -> vector<8x512xf32>
    %803 = arith.addf %801, %802 : vector<8x512xf32>
    %804 = vector.extract_strided_slice %803 {offsets = [0, 0], sizes = [8, 384], strides = [1, 1]} : vector<8x512xf32> to vector<8x384xf32>
    %805 = arith.negf %804 : vector<8x384xf32>
    %806 = math.exp %805 : vector<8x384xf32>
    %cst_444 = arith.constant 1.000000e+00 : f32
    %807 = vector.broadcast %cst_444 : f32 to vector<8x384xf32>
    %808 = arith.addf %807, %806 : vector<8x384xf32>
    %809 = arith.divf %807, %808 : vector<8x384xf32>
    %810 = vector.extract_strided_slice %809 {offsets = [0, 0], sizes = [8, 128], strides = [1, 1]} : vector<8x384xf32> to vector<8x128xf32>
    %811 = vector.extract_strided_slice %809 {offsets = [0, 128], sizes = [8, 128], strides = [1, 1]} : vector<8x384xf32> to vector<8x128xf32>
    %812 = vector.extract_strided_slice %809 {offsets = [0, 256], sizes = [8, 128], strides = [1, 1]} : vector<8x384xf32> to vector<8x128xf32>
    %813 = vector.extract_strided_slice %803 {offsets = [0, 384], sizes = [8, 128], strides = [1, 1]} : vector<8x512xf32> to vector<8x128xf32>
    %814 = math.tanh %813 : vector<8x128xf32>
    %815 = arith.mulf %811, %798 : vector<8x128xf32>
    %816 = arith.mulf %810, %814 : vector<8x128xf32>
    %817 = arith.addf %815, %816 : vector<8x128xf32>
    %818 = math.tanh %817 : vector<8x128xf32>
    %819 = arith.mulf %812, %818 : vector<8x128xf32>
    %c0_445 = arith.constant 0 : index
    %c0_446 = arith.constant 0 : index
    %820 = vector.load %arg29[%c0_445, %c0_446] : memref<8x128xf32, #tpu.memory_space<vmem>>, vector<8x128xf32>
    tpu.vector_store %arg29[%c0_445, %c0_446], %817 {strides = array<i32>} : memref<8x128xf32, #tpu.memory_space<vmem>>, vector<8x128xf32>,
    %c0_447 = arith.constant 0 : index
    %c0_448 = arith.constant 0 : index
    %821 = vector.load %arg28[%c0_447, %c0_448] : memref<8x128xf32, #tpu.memory_space<vmem>>, vector<8x128xf32>
    tpu.vector_store %arg28[%c0_447, %c0_448], %819 {strides = array<i32>} : memref<8x128xf32, #tpu.memory_space<vmem>>, vector<8x128xf32>,
    %822 = arith.index_cast %c2_i32_436 : i32 to index
    %c0_449 = arith.constant 0 : index
    %c0_450 = arith.constant 0 : index
    %823 = vector.load %arg14[%822, %c0_449, %c0_450] : memref<8x8x128xf32, #tpu.memory_space<vmem>>, vector<1x8x128xf32>
    %824 = vector.shape_cast %823 : vector<1x8x128xf32> to vector<8x128xf32>
    %825 = vector.shape_cast %819 : vector<8x128xf32> to vector<1x8x128xf32>
    tpu.vector_store %arg14[%822, %c0_449, %c0_450], %825 {strides = array<i32>} : memref<8x8x128xf32, #tpu.memory_space<vmem>>, vector<1x8x128xf32>,
    %c3_i32_451 = arith.constant 3 : i32
    %c0_452 = arith.constant 0 : index
    %c0_453 = arith.constant 0 : index
    %826 = vector.load %arg28[%c0_452, %c0_453] : memref<8x128xf32, #tpu.memory_space<vmem>>, vector<8x128xf32>
    %c0_454 = arith.constant 0 : index
    %c0_455 = arith.constant 0 : index
    %827 = vector.load %arg29[%c0_454, %c0_455] : memref<8x128xf32, #tpu.memory_space<vmem>>, vector<8x128xf32>
    %828 = arith.index_cast %c3_i32_451 : i32 to index
    %c0_456 = arith.constant 0 : index
    %c0_457 = arith.constant 0 : index
    %829 = vector.load %arg21[%828, %c0_456, %c0_457] : memref<8x8x512xf32, #tpu.memory_space<vmem>>, vector<1x8x512xf32>
    %830 = vector.shape_cast %829 : vector<1x8x512xf32> to vector<8x512xf32>
    %cst_458 = arith.constant dense<0.000000e+00> : vector<8x512xf32>
    %831 = tpu.matmul %826, %730, %cst_458 {dimension_numbers = #tpu.dot_dimension_numbers<[1], [0], [0], [1], [0, 0, 1, 1], [], []>} : vector<8x128xf32>, vector<128x512xf32>, vector<8x512xf32> -> vector<8x512xf32>
    %832 = arith.addf %830, %831 : vector<8x512xf32>
    %833 = vector.extract_strided_slice %832 {offsets = [0, 0], sizes = [8, 384], strides = [1, 1]} : vector<8x512xf32> to vector<8x384xf32>
    %834 = arith.negf %833 : vector<8x384xf32>
    %835 = math.exp %834 : vector<8x384xf32>
    %cst_459 = arith.constant 1.000000e+00 : f32
    %836 = vector.broadcast %cst_459 : f32 to vector<8x384xf32>
    %837 = arith.addf %836, %835 : vector<8x384xf32>
    %838 = arith.divf %836, %837 : vector<8x384xf32>
    %839 = vector.extract_strided_slice %838 {offsets = [0, 0], sizes = [8, 128], strides = [1, 1]} : vector<8x384xf32> to vector<8x128xf32>
    %840 = vector.extract_strided_slice %838 {offsets = [0, 128], sizes = [8, 128], strides = [1, 1]} : vector<8x384xf32> to vector<8x128xf32>
    %841 = vector.extract_strided_slice %838 {offsets = [0, 256], sizes = [8, 128], strides = [1, 1]} : vector<8x384xf32> to vector<8x128xf32>
    %842 = vector.extract_strided_slice %832 {offsets = [0, 384], sizes = [8, 128], strides = [1, 1]} : vector<8x512xf32> to vector<8x128xf32>
    %843 = math.tanh %842 : vector<8x128xf32>
    %844 = arith.mulf %840, %827 : vector<8x128xf32>
    %845 = arith.mulf %839, %843 : vector<8x128xf32>
    %846 = arith.addf %844, %845 : vector<8x128xf32>
    %847 = math.tanh %846 : vector<8x128xf32>
    %848 = arith.mulf %841, %847 : vector<8x128xf32>
    %c0_460 = arith.constant 0 : index
    %c0_461 = arith.constant 0 : index
    %849 = vector.load %arg29[%c0_460, %c0_461] : memref<8x128xf32, #tpu.memory_space<vmem>>, vector<8x128xf32>
    tpu.vector_store %arg29[%c0_460, %c0_461], %846 {strides = array<i32>} : memref<8x128xf32, #tpu.memory_space<vmem>>, vector<8x128xf32>,
    %c0_462 = arith.constant 0 : index
    %c0_463 = arith.constant 0 : index
    %850 = vector.load %arg28[%c0_462, %c0_463] : memref<8x128xf32, #tpu.memory_space<vmem>>, vector<8x128xf32>
    tpu.vector_store %arg28[%c0_462, %c0_463], %848 {strides = array<i32>} : memref<8x128xf32, #tpu.memory_space<vmem>>, vector<8x128xf32>,
    %851 = arith.index_cast %c3_i32_451 : i32 to index
    %c0_464 = arith.constant 0 : index
    %c0_465 = arith.constant 0 : index
    %852 = vector.load %arg14[%851, %c0_464, %c0_465] : memref<8x8x128xf32, #tpu.memory_space<vmem>>, vector<1x8x128xf32>
    %853 = vector.shape_cast %852 : vector<1x8x128xf32> to vector<8x128xf32>
    %854 = vector.shape_cast %848 : vector<8x128xf32> to vector<1x8x128xf32>
    tpu.vector_store %arg14[%851, %c0_464, %c0_465], %854 {strides = array<i32>} : memref<8x8x128xf32, #tpu.memory_space<vmem>>, vector<1x8x128xf32>,
    %c4_i32_466 = arith.constant 4 : i32
    %c0_467 = arith.constant 0 : index
    %c0_468 = arith.constant 0 : index
    %855 = vector.load %arg28[%c0_467, %c0_468] : memref<8x128xf32, #tpu.memory_space<vmem>>, vector<8x128xf32>
    %c0_469 = arith.constant 0 : index
    %c0_470 = arith.constant 0 : index
    %856 = vector.load %arg29[%c0_469, %c0_470] : memref<8x128xf32, #tpu.memory_space<vmem>>, vector<8x128xf32>
    %857 = arith.index_cast %c4_i32_466 : i32 to index
    %c0_471 = arith.constant 0 : index
    %c0_472 = arith.constant 0 : index
    %858 = vector.load %arg21[%857, %c0_471, %c0_472] : memref<8x8x512xf32, #tpu.memory_space<vmem>>, vector<1x8x512xf32>
    %859 = vector.shape_cast %858 : vector<1x8x512xf32> to vector<8x512xf32>
    %cst_473 = arith.constant dense<0.000000e+00> : vector<8x512xf32>
    %860 = tpu.matmul %855, %730, %cst_473 {dimension_numbers = #tpu.dot_dimension_numbers<[1], [0], [0], [1], [0, 0, 1, 1], [], []>} : vector<8x128xf32>, vector<128x512xf32>, vector<8x512xf32> -> vector<8x512xf32>
    %861 = arith.addf %859, %860 : vector<8x512xf32>
    %862 = vector.extract_strided_slice %861 {offsets = [0, 0], sizes = [8, 384], strides = [1, 1]} : vector<8x512xf32> to vector<8x384xf32>
    %863 = arith.negf %862 : vector<8x384xf32>
    %864 = math.exp %863 : vector<8x384xf32>
    %cst_474 = arith.constant 1.000000e+00 : f32
    %865 = vector.broadcast %cst_474 : f32 to vector<8x384xf32>
    %866 = arith.addf %865, %864 : vector<8x384xf32>
    %867 = arith.divf %865, %866 : vector<8x384xf32>
    %868 = vector.extract_strided_slice %867 {offsets = [0, 0], sizes = [8, 128], strides = [1, 1]} : vector<8x384xf32> to vector<8x128xf32>
    %869 = vector.extract_strided_slice %867 {offsets = [0, 128], sizes = [8, 128], strides = [1, 1]} : vector<8x384xf32> to vector<8x128xf32>
    %870 = vector.extract_strided_slice %867 {offsets = [0, 256], sizes = [8, 128], strides = [1, 1]} : vector<8x384xf32> to vector<8x128xf32>
    %871 = vector.extract_strided_slice %861 {offsets = [0, 384], sizes = [8, 128], strides = [1, 1]} : vector<8x512xf32> to vector<8x128xf32>
    %872 = math.tanh %871 : vector<8x128xf32>
    %873 = arith.mulf %869, %856 : vector<8x128xf32>
    %874 = arith.mulf %868, %872 : vector<8x128xf32>
    %875 = arith.addf %873, %874 : vector<8x128xf32>
    %876 = math.tanh %875 : vector<8x128xf32>
    %877 = arith.mulf %870, %876 : vector<8x128xf32>
    %c0_475 = arith.constant 0 : index
    %c0_476 = arith.constant 0 : index
    %878 = vector.load %arg29[%c0_475, %c0_476] : memref<8x128xf32, #tpu.memory_space<vmem>>, vector<8x128xf32>
    tpu.vector_store %arg29[%c0_475, %c0_476], %875 {strides = array<i32>} : memref<8x128xf32, #tpu.memory_space<vmem>>, vector<8x128xf32>,
    %c0_477 = arith.constant 0 : index
    %c0_478 = arith.constant 0 : index
    %879 = vector.load %arg28[%c0_477, %c0_478] : memref<8x128xf32, #tpu.memory_space<vmem>>, vector<8x128xf32>
    tpu.vector_store %arg28[%c0_477, %c0_478], %877 {strides = array<i32>} : memref<8x128xf32, #tpu.memory_space<vmem>>, vector<8x128xf32>,
    %880 = arith.index_cast %c4_i32_466 : i32 to index
    %c0_479 = arith.constant 0 : index
    %c0_480 = arith.constant 0 : index
    %881 = vector.load %arg14[%880, %c0_479, %c0_480] : memref<8x8x128xf32, #tpu.memory_space<vmem>>, vector<1x8x128xf32>
    %882 = vector.shape_cast %881 : vector<1x8x128xf32> to vector<8x128xf32>
    %883 = vector.shape_cast %877 : vector<8x128xf32> to vector<1x8x128xf32>
    tpu.vector_store %arg14[%880, %c0_479, %c0_480], %883 {strides = array<i32>} : memref<8x8x128xf32, #tpu.memory_space<vmem>>, vector<1x8x128xf32>,
    %c5_i32_481 = arith.constant 5 : i32
    %c0_482 = arith.constant 0 : index
    %c0_483 = arith.constant 0 : index
    %884 = vector.load %arg28[%c0_482, %c0_483] : memref<8x128xf32, #tpu.memory_space<vmem>>, vector<8x128xf32>
    %c0_484 = arith.constant 0 : index
    %c0_485 = arith.constant 0 : index
    %885 = vector.load %arg29[%c0_484, %c0_485] : memref<8x128xf32, #tpu.memory_space<vmem>>, vector<8x128xf32>
    %886 = arith.index_cast %c5_i32_481 : i32 to index
    %c0_486 = arith.constant 0 : index
    %c0_487 = arith.constant 0 : index
    %887 = vector.load %arg21[%886, %c0_486, %c0_487] : memref<8x8x512xf32, #tpu.memory_space<vmem>>, vector<1x8x512xf32>
    %888 = vector.shape_cast %887 : vector<1x8x512xf32> to vector<8x512xf32>
    %cst_488 = arith.constant dense<0.000000e+00> : vector<8x512xf32>
    %889 = tpu.matmul %884, %730, %cst_488 {dimension_numbers = #tpu.dot_dimension_numbers<[1], [0], [0], [1], [0, 0, 1, 1], [], []>} : vector<8x128xf32>, vector<128x512xf32>, vector<8x512xf32> -> vector<8x512xf32>
    %890 = arith.addf %888, %889 : vector<8x512xf32>
    %891 = vector.extract_strided_slice %890 {offsets = [0, 0], sizes = [8, 384], strides = [1, 1]} : vector<8x512xf32> to vector<8x384xf32>
    %892 = arith.negf %891 : vector<8x384xf32>
    %893 = math.exp %892 : vector<8x384xf32>
    %cst_489 = arith.constant 1.000000e+00 : f32
    %894 = vector.broadcast %cst_489 : f32 to vector<8x384xf32>
    %895 = arith.addf %894, %893 : vector<8x384xf32>
    %896 = arith.divf %894, %895 : vector<8x384xf32>
    %897 = vector.extract_strided_slice %896 {offsets = [0, 0], sizes = [8, 128], strides = [1, 1]} : vector<8x384xf32> to vector<8x128xf32>
    %898 = vector.extract_strided_slice %896 {offsets = [0, 128], sizes = [8, 128], strides = [1, 1]} : vector<8x384xf32> to vector<8x128xf32>
    %899 = vector.extract_strided_slice %896 {offsets = [0, 256], sizes = [8, 128], strides = [1, 1]} : vector<8x384xf32> to vector<8x128xf32>
    %900 = vector.extract_strided_slice %890 {offsets = [0, 384], sizes = [8, 128], strides = [1, 1]} : vector<8x512xf32> to vector<8x128xf32>
    %901 = math.tanh %900 : vector<8x128xf32>
    %902 = arith.mulf %898, %885 : vector<8x128xf32>
    %903 = arith.mulf %897, %901 : vector<8x128xf32>
    %904 = arith.addf %902, %903 : vector<8x128xf32>
    %905 = math.tanh %904 : vector<8x128xf32>
    %906 = arith.mulf %899, %905 : vector<8x128xf32>
    %c0_490 = arith.constant 0 : index
    %c0_491 = arith.constant 0 : index
    %907 = vector.load %arg29[%c0_490, %c0_491] : memref<8x128xf32, #tpu.memory_space<vmem>>, vector<8x128xf32>
    tpu.vector_store %arg29[%c0_490, %c0_491], %904 {strides = array<i32>} : memref<8x128xf32, #tpu.memory_space<vmem>>, vector<8x128xf32>,
    %c0_492 = arith.constant 0 : index
    %c0_493 = arith.constant 0 : index
    %908 = vector.load %arg28[%c0_492, %c0_493] : memref<8x128xf32, #tpu.memory_space<vmem>>, vector<8x128xf32>
    tpu.vector_store %arg28[%c0_492, %c0_493], %906 {strides = array<i32>} : memref<8x128xf32, #tpu.memory_space<vmem>>, vector<8x128xf32>,
    %909 = arith.index_cast %c5_i32_481 : i32 to index
    %c0_494 = arith.constant 0 : index
    %c0_495 = arith.constant 0 : index
    %910 = vector.load %arg14[%909, %c0_494, %c0_495] : memref<8x8x128xf32, #tpu.memory_space<vmem>>, vector<1x8x128xf32>
    %911 = vector.shape_cast %910 : vector<1x8x128xf32> to vector<8x128xf32>
    %912 = vector.shape_cast %906 : vector<8x128xf32> to vector<1x8x128xf32>
    tpu.vector_store %arg14[%909, %c0_494, %c0_495], %912 {strides = array<i32>} : memref<8x8x128xf32, #tpu.memory_space<vmem>>, vector<1x8x128xf32>,
    %c6_i32_496 = arith.constant 6 : i32
    %c0_497 = arith.constant 0 : index
    %c0_498 = arith.constant 0 : index
    %913 = vector.load %arg28[%c0_497, %c0_498] : memref<8x128xf32, #tpu.memory_space<vmem>>, vector<8x128xf32>
    %c0_499 = arith.constant 0 : index
    %c0_500 = arith.constant 0 : index
    %914 = vector.load %arg29[%c0_499, %c0_500] : memref<8x128xf32, #tpu.memory_space<vmem>>, vector<8x128xf32>
    %915 = arith.index_cast %c6_i32_496 : i32 to index
    %c0_501 = arith.constant 0 : index
    %c0_502 = arith.constant 0 : index
    %916 = vector.load %arg21[%915, %c0_501, %c0_502] : memref<8x8x512xf32, #tpu.memory_space<vmem>>, vector<1x8x512xf32>
    %917 = vector.shape_cast %916 : vector<1x8x512xf32> to vector<8x512xf32>
    %cst_503 = arith.constant dense<0.000000e+00> : vector<8x512xf32>
    %918 = tpu.matmul %913, %730, %cst_503 {dimension_numbers = #tpu.dot_dimension_numbers<[1], [0], [0], [1], [0, 0, 1, 1], [], []>} : vector<8x128xf32>, vector<128x512xf32>, vector<8x512xf32> -> vector<8x512xf32>
    %919 = arith.addf %917, %918 : vector<8x512xf32>
    %920 = vector.extract_strided_slice %919 {offsets = [0, 0], sizes = [8, 384], strides = [1, 1]} : vector<8x512xf32> to vector<8x384xf32>
    %921 = arith.negf %920 : vector<8x384xf32>
    %922 = math.exp %921 : vector<8x384xf32>
    %cst_504 = arith.constant 1.000000e+00 : f32
    %923 = vector.broadcast %cst_504 : f32 to vector<8x384xf32>
    %924 = arith.addf %923, %922 : vector<8x384xf32>
    %925 = arith.divf %923, %924 : vector<8x384xf32>
    %926 = vector.extract_strided_slice %925 {offsets = [0, 0], sizes = [8, 128], strides = [1, 1]} : vector<8x384xf32> to vector<8x128xf32>
    %927 = vector.extract_strided_slice %925 {offsets = [0, 128], sizes = [8, 128], strides = [1, 1]} : vector<8x384xf32> to vector<8x128xf32>
    %928 = vector.extract_strided_slice %925 {offsets = [0, 256], sizes = [8, 128], strides = [1, 1]} : vector<8x384xf32> to vector<8x128xf32>
    %929 = vector.extract_strided_slice %919 {offsets = [0, 384], sizes = [8, 128], strides = [1, 1]} : vector<8x512xf32> to vector<8x128xf32>
    %930 = math.tanh %929 : vector<8x128xf32>
    %931 = arith.mulf %927, %914 : vector<8x128xf32>
    %932 = arith.mulf %926, %930 : vector<8x128xf32>
    %933 = arith.addf %931, %932 : vector<8x128xf32>
    %934 = math.tanh %933 : vector<8x128xf32>
    %935 = arith.mulf %928, %934 : vector<8x128xf32>
    %c0_505 = arith.constant 0 : index
    %c0_506 = arith.constant 0 : index
    %936 = vector.load %arg29[%c0_505, %c0_506] : memref<8x128xf32, #tpu.memory_space<vmem>>, vector<8x128xf32>
    tpu.vector_store %arg29[%c0_505, %c0_506], %933 {strides = array<i32>} : memref<8x128xf32, #tpu.memory_space<vmem>>, vector<8x128xf32>,
    %c0_507 = arith.constant 0 : index
    %c0_508 = arith.constant 0 : index
    %937 = vector.load %arg28[%c0_507, %c0_508] : memref<8x128xf32, #tpu.memory_space<vmem>>, vector<8x128xf32>
    tpu.vector_store %arg28[%c0_507, %c0_508], %935 {strides = array<i32>} : memref<8x128xf32, #tpu.memory_space<vmem>>, vector<8x128xf32>,
    %938 = arith.index_cast %c6_i32_496 : i32 to index
    %c0_509 = arith.constant 0 : index
    %c0_510 = arith.constant 0 : index
    %939 = vector.load %arg14[%938, %c0_509, %c0_510] : memref<8x8x128xf32, #tpu.memory_space<vmem>>, vector<1x8x128xf32>
    %940 = vector.shape_cast %939 : vector<1x8x128xf32> to vector<8x128xf32>
    %941 = vector.shape_cast %935 : vector<8x128xf32> to vector<1x8x128xf32>
    tpu.vector_store %arg14[%938, %c0_509, %c0_510], %941 {strides = array<i32>} : memref<8x8x128xf32, #tpu.memory_space<vmem>>, vector<1x8x128xf32>,
    %c7_i32_511 = arith.constant 7 : i32
    %c0_512 = arith.constant 0 : index
    %c0_513 = arith.constant 0 : index
    %942 = vector.load %arg28[%c0_512, %c0_513] : memref<8x128xf32, #tpu.memory_space<vmem>>, vector<8x128xf32>
    %c0_514 = arith.constant 0 : index
    %c0_515 = arith.constant 0 : index
    %943 = vector.load %arg29[%c0_514, %c0_515] : memref<8x128xf32, #tpu.memory_space<vmem>>, vector<8x128xf32>
    %944 = arith.index_cast %c7_i32_511 : i32 to index
    %c0_516 = arith.constant 0 : index
    %c0_517 = arith.constant 0 : index
    %945 = vector.load %arg21[%944, %c0_516, %c0_517] : memref<8x8x512xf32, #tpu.memory_space<vmem>>, vector<1x8x512xf32>
    %946 = vector.shape_cast %945 : vector<1x8x512xf32> to vector<8x512xf32>
    %cst_518 = arith.constant dense<0.000000e+00> : vector<8x512xf32>
    %947 = tpu.matmul %942, %730, %cst_518 {dimension_numbers = #tpu.dot_dimension_numbers<[1], [0], [0], [1], [0, 0, 1, 1], [], []>} : vector<8x128xf32>, vector<128x512xf32>, vector<8x512xf32> -> vector<8x512xf32>
    %948 = arith.addf %946, %947 : vector<8x512xf32>
    %949 = vector.extract_strided_slice %948 {offsets = [0, 0], sizes = [8, 384], strides = [1, 1]} : vector<8x512xf32> to vector<8x384xf32>
    %950 = arith.negf %949 : vector<8x384xf32>
    %951 = math.exp %950 : vector<8x384xf32>
    %cst_519 = arith.constant 1.000000e+00 : f32
    %952 = vector.broadcast %cst_519 : f32 to vector<8x384xf32>
    %953 = arith.addf %952, %951 : vector<8x384xf32>
    %954 = arith.divf %952, %953 : vector<8x384xf32>
    %955 = vector.extract_strided_slice %954 {offsets = [0, 0], sizes = [8, 128], strides = [1, 1]} : vector<8x384xf32> to vector<8x128xf32>
    %956 = vector.extract_strided_slice %954 {offsets = [0, 128], sizes = [8, 128], strides = [1, 1]} : vector<8x384xf32> to vector<8x128xf32>
    %957 = vector.extract_strided_slice %954 {offsets = [0, 256], sizes = [8, 128], strides = [1, 1]} : vector<8x384xf32> to vector<8x128xf32>
    %958 = vector.extract_strided_slice %948 {offsets = [0, 384], sizes = [8, 128], strides = [1, 1]} : vector<8x512xf32> to vector<8x128xf32>
    %959 = math.tanh %958 : vector<8x128xf32>
    %960 = arith.mulf %956, %943 : vector<8x128xf32>
    %961 = arith.mulf %955, %959 : vector<8x128xf32>
    %962 = arith.addf %960, %961 : vector<8x128xf32>
    %963 = math.tanh %962 : vector<8x128xf32>
    %964 = arith.mulf %957, %963 : vector<8x128xf32>
    %c0_520 = arith.constant 0 : index
    %c0_521 = arith.constant 0 : index
    %965 = vector.load %arg29[%c0_520, %c0_521] : memref<8x128xf32, #tpu.memory_space<vmem>>, vector<8x128xf32>
    tpu.vector_store %arg29[%c0_520, %c0_521], %962 {strides = array<i32>} : memref<8x128xf32, #tpu.memory_space<vmem>>, vector<8x128xf32>,
    %c0_522 = arith.constant 0 : index
    %c0_523 = arith.constant 0 : index
    %966 = vector.load %arg28[%c0_522, %c0_523] : memref<8x128xf32, #tpu.memory_space<vmem>>, vector<8x128xf32>
    tpu.vector_store %arg28[%c0_522, %c0_523], %964 {strides = array<i32>} : memref<8x128xf32, #tpu.memory_space<vmem>>, vector<8x128xf32>,
    %967 = arith.index_cast %c7_i32_511 : i32 to index
    %c0_524 = arith.constant 0 : index
    %c0_525 = arith.constant 0 : index
    %968 = vector.load %arg14[%967, %c0_524, %c0_525] : memref<8x8x128xf32, #tpu.memory_space<vmem>>, vector<1x8x128xf32>
    %969 = vector.shape_cast %968 : vector<1x8x128xf32> to vector<8x128xf32>
    %970 = vector.shape_cast %964 : vector<8x128xf32> to vector<1x8x128xf32>
    tpu.vector_store %arg14[%967, %c0_524, %c0_525], %970 {strides = array<i32>} : memref<8x8x128xf32, #tpu.memory_space<vmem>>, vector<1x8x128xf32>,
    %c8_i32_526 = arith.constant 8 : i32
    return
  }
  func.func @transform_0(%arg0: i32) -> (i32, i32, i32) {
    %c0_i32 = arith.constant 0 : i32
    %c0_i32_0 = arith.constant 0 : i32
    %c0_i32_1 = arith.constant 0 : i32
    return %arg0, %c0_i32, %c0_i32_0 : i32, i32, i32
  }
  func.func @transform_1(%arg0: i32) -> (i32, i32) {
    %c0_i32 = arith.constant 0 : i32
    %c0_i32_0 = arith.constant 0 : i32
    %c0_i32_1 = arith.constant 0 : i32
    return %c0_i32, %c0_i32_0 : i32, i32
  }
  func.func @transform_2(%arg0: i32) -> (i32, i32) {
    %c0_i32 = arith.constant 0 : i32
    %c0_i32_0 = arith.constant 0 : i32
    %c0_i32_1 = arith.constant 0 : i32
    return %c0_i32, %c0_i32_0 : i32, i32
  }
  func.func @transform_3(%arg0: i32) -> (i32, i32) {
    %c0_i32 = arith.constant 0 : i32
    %c0_i32_0 = arith.constant 0 : i32
    %c0_i32_1 = arith.constant 0 : i32
    return %c0_i32, %c0_i32_0 : i32, i32
  }
  func.func @transform_4(%arg0: i32) -> (i32, i32) {
    %c0_i32 = arith.constant 0 : i32
    %c0_i32_0 = arith.constant 0 : i32
    %c0_i32_1 = arith.constant 0 : i32
    return %c0_i32, %c0_i32_0 : i32, i32
  }
  func.func @transform_5(%arg0: i32) -> (i32, i32) {
    %c0_i32 = arith.constant 0 : i32
    %c0_i32_0 = arith.constant 0 : i32
    %c0_i32_1 = arith.constant 0 : i32
    return %c0_i32, %c0_i32_0 : i32, i32
  }
  func.func @transform_6(%arg0: i32) -> (i32, i32) {
    %c0_i32 = arith.constant 0 : i32
    %c0_i32_0 = arith.constant 0 : i32
    %c0_i32_1 = arith.constant 0 : i32
    return %c0_i32, %c0_i32_0 : i32, i32
  }
  func.func @transform_7(%arg0: i32) -> (i32, i32) {
    %c0_i32 = arith.constant 0 : i32
    %c0_i32_0 = arith.constant 0 : i32
    %c0_i32_1 = arith.constant 0 : i32
    return %c0_i32, %c0_i32_0 : i32, i32
  }
  func.func @transform_8(%arg0: i32) -> (i32, i32) {
    %c0_i32 = arith.constant 0 : i32
    %c0_i32_0 = arith.constant 0 : i32
    %c0_i32_1 = arith.constant 0 : i32
    return %c0_i32, %c0_i32_0 : i32, i32
  }
  func.func @transform_9(%arg0: i32) -> (i32, i32) {
    %c0_i32 = arith.constant 0 : i32
    %c0_i32_0 = arith.constant 0 : i32
    %c0_i32_1 = arith.constant 0 : i32
    return %c0_i32, %c0_i32_0 : i32, i32
  }
  func.func @transform_10(%arg0: i32) -> (i32, i32) {
    %c0_i32 = arith.constant 0 : i32
    %c0_i32_0 = arith.constant 0 : i32
    %c0_i32_1 = arith.constant 0 : i32
    return %c0_i32, %c0_i32_0 : i32, i32
  }
  func.func @transform_11(%arg0: i32) -> (i32, i32) {
    %c0_i32 = arith.constant 0 : i32
    %c0_i32_0 = arith.constant 0 : i32
    %c0_i32_1 = arith.constant 0 : i32
    return %c0_i32, %c0_i32_0 : i32, i32
  }
  func.func @transform_12(%arg0: i32) -> (i32, i32) {
    %c0_i32 = arith.constant 0 : i32
    %c0_i32_0 = arith.constant 0 : i32
    %c0_i32_1 = arith.constant 0 : i32
    return %c0_i32, %c0_i32_0 : i32, i32
  }
  func.func @transform_13(%arg0: i32) -> (i32, i32, i32) {
    %c0_i32 = arith.constant 0 : i32
    %c0_i32_0 = arith.constant 0 : i32
    %c0_i32_1 = arith.constant 0 : i32
    return %arg0, %c0_i32, %c0_i32_0 : i32, i32, i32
  }
}

</mosaic_0001>

<llo_original>
// kernel: tpu_custom_call.1
$region0: #{tpu_custom_call.1}
  #allocation0 [shape = 'u32[]', space=smem, size = 0x4, offset = 0x4, fixed_abs, tag = 'smem constant byte address 0x4 - core index']
  #allocation1 [shape = 'u32[72,128]{1,0:T(1,128)}', space=vmem, size = 0x9000, scoped, tag = 'internal scratch']
  #allocation2 [shape = 'f32[8,8,128]{2,1,0:T(8,128)}', space=vmem, size = 0x8000, scoped, tag = 'scratch operand']
  #allocation3 [shape = 'f32[8,8,128]{2,1,0:T(8,128)}', space=vmem, size = 0x8000, scoped, tag = 'scratch operand']
  #allocation4 [shape = 'f32[8,8,128]{2,1,0:T(8,128)}', space=vmem, size = 0x8000, scoped, tag = 'scratch operand']
  #allocation5 [shape = 'f32[8,8,512]{2,1,0:T(8,128)}', space=vmem, size = 0x20000, scoped, tag = 'scratch operand']
  #allocation6 [shape = 'f32[8,8,512]{2,1,0:T(8,128)}', space=vmem, size = 0x20000, scoped, tag = 'scratch operand']
  #allocation7 [shape = 'f32[8,8,512]{2,1,0:T(8,128)}', space=vmem, size = 0x20000, scoped, tag = 'scratch operand']
  #allocation8 [shape = 'f32[8,8,512]{2,1,0:T(8,128)}', space=vmem, size = 0x20000, scoped, tag = 'scratch operand']
  #allocation9 [shape = 'f32[8,128]{1,0:T(8,128)}', space=vmem, size = 0x1000, scoped, tag = 'scratch operand']
  #allocation10 [shape = 'f32[8,128]{1,0:T(8,128)}', space=vmem, size = 0x1000, scoped, tag = 'scratch operand']
  #allocation11 [shape = 'f32[8,128]{1,0:T(8,128)}', space=vmem, size = 0x1000, scoped, tag = 'scratch operand']
  #allocation12 [shape = 'f32[8,128]{1,0:T(8,128)}', space=vmem, size = 0x1000, scoped, tag = 'scratch operand']
  #allocation13 [shape = 'f32[8,128]{1,0:T(8,128)}', space=vmem, size = 0x1000, scoped, tag = 'scratch operand']
  #allocation14 [shape = 'f32[8,128]{1,0:T(8,128)}', space=vmem, size = 0x1000, scoped, tag = 'scratch operand']
  #allocation15 [shape = 'f32[8,128]{1,0:T(8,128)}', space=vmem, size = 0x1000, scoped, tag = 'scratch operand']
  #allocation16 [shape = 'f32[8,128]{1,0:T(8,128)}', space=vmem, size = 0x1000, scoped, tag = 'scratch operand']
  %s0 = inlined_call_operand.hbm [shape: f32[8,8,128], index: 0, kind: input, shape index: {}]
  %s1 = inlined_call_operand.hbm [shape: f32[128,512], index: 1, kind: input, shape index: {}]
  %s2 = inlined_call_operand.hbm [shape: f32[128,512], index: 2, kind: input, shape index: {}]
  %s3 = inlined_call_operand.hbm [shape: f32[128,512], index: 3, kind: input, shape index: {}]
  %s4 = inlined_call_operand.hbm [shape: f32[128,512], index: 4, kind: input, shape index: {}]
  %s5 = inlined_call_operand.hbm [shape: f32[128,512], index: 5, kind: input, shape index: {}]
  %s6 = inlined_call_operand.hbm [shape: f32[128,512], index: 6, kind: input, shape index: {}]
  %s7 = inlined_call_operand.hbm [shape: f32[128,512], index: 7, kind: input, shape index: {}]
  %s8 = inlined_call_operand.hbm [shape: f32[128,512], index: 8, kind: input, shape index: {}]
  %s9 = inlined_call_operand.vmem [shape: f32[1,512], index: 9, kind: input, shape index: {}]
  %s10 = inlined_call_operand.vmem [shape: f32[1,512], index: 10, kind: input, shape index: {}]
  %s11 = inlined_call_operand.hbm [shape: f32[1,512], index: 11, kind: input, shape index: {}]
  %s12 = inlined_call_operand.hbm [shape: f32[1,512], index: 12, kind: input, shape index: {}]
  %s13 = inlined_call_operand.hbm [shape: f32[8,8,128], index: 13, kind: output, shape index: {}]
  %s14 = sld [smem:[#allocation0]]
  $region110: #{tpu_custom_call.1} parent=0
    _
  %s16 = ssub.s32 1, %s14
  %s17 = scalar_select 0, %s16, %s14
  $region1: #{tpu_custom_call.1} parent=0
    #allocation17 [shape = 'u8[32768]{0}', space=vmem, size = 0x8000, scoped, tag = 'input window, operand 0, single buffered']
    #allocation18 [shape = 's32[1]{0}', space=sflag, size = 0x4, scoped, tag = 'scoped memory for tpu_custom_call.1']
    #allocation19 [shape = 's32[1]{0}', space=sflag, size = 0x4, scoped, tag = 'scoped memory for tpu_custom_call.1']
    #allocation20 [shape = 'u8[262144]{0}', space=vmem, size = 0x40000, scoped, tag = 'input window, operand 1, single buffered']
    #allocation21 [shape = 's32[1]{0}', space=sflag, size = 0x4, scoped, tag = 'scoped memory for tpu_custom_call.1']
    #allocation22 [shape = 'u8[262144]{0}', space=vmem, size = 0x40000, scoped, tag = 'input window, operand 2, single buffered']
    #allocation23 [shape = 'u8[262144]{0}', space=vmem, size = 0x40000, scoped, tag = 'input window, operand 3, single buffered']
    #allocation24 [shape = 's32[1]{0}', space=sflag, size = 0x4, scoped, tag = 'scoped memory for tpu_custom_call.1']
    #allocation25 [shape = 'u8[262144]{0}', space=vmem, size = 0x40000, scoped, tag = 'input window, operand 4, single buffered']
    #allocation26 [shape = 'u8[262144]{0}', space=vmem, size = 0x40000, scoped, tag = 'input window, operand 5, single buffered']
    #allocation27 [shape = 's32[1]{0}', space=sflag, size = 0x4, scoped, tag = 'scoped memory for tpu_custom_call.1']
    #allocation28 [shape = 'u8[262144]{0}', space=vmem, size = 0x40000, scoped, tag = 'input window, operand 6, single buffered']
    #allocation29 [shape = 'u8[262144]{0}', space=vmem, size = 0x40000, scoped, tag = 'input window, operand 7, single buffered']
    #allocation30 [shape = 's32[1]{0}', space=sflag, size = 0x4, scoped, tag = 'scoped memory for tpu_custom_call.1']
    #allocation31 [shape = 'u8[262144]{0}', space=vmem, size = 0x40000, scoped, tag = 'input window, operand 8, single buffered']
    #allocation32 [shape = 'u8[2048]{0}', space=vmem, size = 0x800, scoped, tag = 'input window, operand 11, single buffered']
    #allocation33 [shape = 's32[1]{0}', space=sflag, size = 0x4, scoped, tag = 'scoped memory for tpu_custom_call.1']
    #allocation34 [shape = 'u8[2048]{0}', space=vmem, size = 0x800, scoped, tag = 'input window, operand 12, single buffered']
    #allocation35 [shape = 'u8[32768]{0}', space=vmem, size = 0x8000, scoped, tag = 'output window, operand 0, single buffered']
    %18 = vsyncpa [#allocation18], 0
    %19 = vsyncpa [#allocation21], 0
    %20 = vsyncpa [#allocation24], 0
    %21 = vsyncpa [#allocation27], 0
    %22 = vsyncpa [#allocation30], 0
    %23 = vsyncpa [#allocation33], 0
    %24 = vsyncpa [#allocation19], 0
    // Predicated region
    $region2: #{tpu_custom_call.1} parent=1 // pred_check
      _
    $region3: #{tpu_custom_call.1} parent=1 // pred_check_branch
      %26 = sbr.rel (0) target = $region5
    $region4: #{tpu_custom_call.1} parent=1 // pred_region
      %28 = vsyncadd [#allocation18], 0
      %s29 = sshll.u32 %s0, 4
      %s30 = int_to_ptr.hbm [resolvable:$true] %s29
      %s31 = sshll.u32 [#allocation17], 4
      %s32 = int_to_ptr.vmem [resolvable:$true] %s31
      %37 = dma.hbm_to_vmem [thread:$0]  %s30, 1024, %s32, [#allocation18], 128, 128, 8
    $region5: #{tpu_custom_call.1} parent=1 // pred_fallthru
      _
    // Predicated region
    $region6: #{tpu_custom_call.1} parent=1 // pred_check
      _
    $region7: #{tpu_custom_call.1} parent=1 // pred_check_branch
      %39 = sbr.rel (0) target = $region9
    $region8: #{tpu_custom_call.1} parent=1 // pred_region
      %41 = vsyncadd [#allocation21], 0
      %s42 = sshll.u32 %s1, 4
      %s43 = int_to_ptr.hbm [resolvable:$true] %s42
      %s44 = sshll.u32 [#allocation20], 4
      %s45 = int_to_ptr.vmem [resolvable:$true] %s44
      %50 = dma.hbm_to_vmem [thread:$0]  %s43, 8192, %s45, [#allocation21], 512, 512, 32
    $region9: #{tpu_custom_call.1} parent=1 // pred_fallthru
      _
    // Predicated region
    $region10: #{tpu_custom_call.1} parent=1 // pred_check
      _
    $region11: #{tpu_custom_call.1} parent=1 // pred_check_branch
      %52 = sbr.rel (0) target = $region13
    $region12: #{tpu_custom_call.1} parent=1 // pred_region
      %54 = vsyncadd [#allocation21], 0
      %s55 = sshll.u32 %s2, 4
      %s56 = int_to_ptr.hbm [resolvable:$true] %s55
      %s57 = sshll.u32 [#allocation22], 4
      %s58 = int_to_ptr.vmem [resolvable:$true] %s57
      %63 = dma.hbm_to_vmem [thread:$0]  %s56, 8192, %s58, [#allocation21], 512, 512, 32
    $region13: #{tpu_custom_call.1} parent=1 // pred_fallthru
      _
    // Predicated region
    $region14: #{tpu_custom_call.1} parent=1 // pred_check
      _
    $region15: #{tpu_custom_call.1} parent=1 // pred_check_branch
      %65 = sbr.rel (0) target = $region17
    $region16: #{tpu_custom_call.1} parent=1 // pred_region
      %67 = vsyncadd [#allocation24], 0
      %s68 = sshll.u32 %s3, 4
      %s69 = int_to_ptr.hbm [resolvable:$true] %s68
      %s70 = sshll.u32 [#allocation23], 4
      %s71 = int_to_ptr.vmem [resolvable:$true] %s70
      %76 = dma.hbm_to_vmem [thread:$0]  %s69, 8192, %s71, [#allocation24], 512, 512, 32
    $region17: #{tpu_custom_call.1} parent=1 // pred_fallthru
      _
    // Predicated region
    $region18: #{tpu_custom_call.1} parent=1 // pred_check
      _
    $region19: #{tpu_custom_call.1} parent=1 // pred_check_branch
      %78 = sbr.rel (0) target = $region21
    $region20: #{tpu_custom_call.1} parent=1 // pred_region
      %80 = vsyncadd [#allocation24], 0
      %s81 = sshll.u32 %s4, 4
      %s82 = int_to_ptr.hbm [resolvable:$true] %s81
      %s83 = sshll.u32 [#allocation25], 4
      %s84 = int_to_ptr.vmem [resolvable:$true] %s83
      %89 = dma.hbm_to_vmem [thread:$0]  %s82, 8192, %s84, [#allocation24], 512, 512, 32
    $region21: #{tpu_custom_call.1} parent=1 // pred_fallthru
      _
    // Predicated region
    $region22: #{tpu_custom_call.1} parent=1 // pred_check
      _
    $region23: #{tpu_custom_call.1} parent=1 // pred_check_branch
      %91 = sbr.rel (0) target = $region25
    $region24: #{tpu_custom_call.1} parent=1 // pred_region
      %93 = vsyncadd [#allocation27], 0
      %s94 = sshll.u32 %s5, 4
      %s95 = int_to_ptr.hbm [resolvable:$true] %s94
      %s96 = sshll.u32 [#allocation26], 4
      %s97 = int_to_ptr.vmem [resolvable:$true] %s96
      %102 = dma.hbm_to_vmem [thread:$0]  %s95, 8192, %s97, [#allocation27], 512, 512, 32
    $region25: #{tpu_custom_call.1} parent=1 // pred_fallthru
      _
    // Predicated region
    $region26: #{tpu_custom_call.1} parent=1 // pred_check
      _
    $region27: #{tpu_custom_call.1} parent=1 // pred_check_branch
      %104 = sbr.rel (0) target = $region29
    $region28: #{tpu_custom_call.1} parent=1 // pred_region
      %106 = vsyncadd [#allocation27], 0
      %s107 = sshll.u32 %s6, 4
      %s108 = int_to_ptr.hbm [resolvable:$true] %s107
      %s109 = sshll.u32 [#allocation28], 4
      %s110 = int_to_ptr.vmem [resolvable:$true] %s109
      %115 = dma.hbm_to_vmem [thread:$0]  %s108, 8192, %s110, [#allocation27], 512, 512, 32
    $region29: #{tpu_custom_call.1} parent=1 // pred_fallthru
      _
    // Predicated region
    $region30: #{tpu_custom_call.1} parent=1 // pred_check
      _
    $region31: #{tpu_custom_call.1} parent=1 // pred_check_branch
      %117 = sbr.rel (0) target = $region33
    $region32: #{tpu_custom_call.1} parent=1 // pred_region
      %119 = vsyncadd [#allocation30], 0
      %s120 = sshll.u32 %s7, 4
      %s121 = int_to_ptr.hbm [resolvable:$true] %s120
      %s122 = sshll.u32 [#allocation29], 4
      %s123 = int_to_ptr.vmem [resolvable:$true] %s122
      %128 = dma.hbm_to_vmem [thread:$0]  %s121, 8192, %s123, [#allocation30], 512, 512, 32
    $region33: #{tpu_custom_call.1} parent=1 // pred_fallthru
      _
    // Predicated region
    $region34: #{tpu_custom_call.1} parent=1 // pred_check
      _
    $region35: #{tpu_custom_call.1} parent=1 // pred_check_branch
      %130 = sbr.rel (0) target = $region37
    $region36: #{tpu_custom_call.1} parent=1 // pred_region
      %132 = vsyncadd [#allocation30], 0
      %s133 = sshll.u32 %s8, 4
      %s134 = int_to_ptr.hbm [resolvable:$true] %s133
      %s135 = sshll.u32 [#allocation31], 4
      %s136 = int_to_ptr.vmem [resolvable:$true] %s135
      %141 = dma.hbm_to_vmem [thread:$0]  %s134, 8192, %s136, [#allocation30], 512, 512, 32
    $region37: #{tpu_custom_call.1} parent=1 // pred_fallthru
      _
    // Predicated region
    $region38: #{tpu_custom_call.1} parent=1 // pred_check
      _
    $region39: #{tpu_custom_call.1} parent=1 // pred_check_branch
      %143 = sbr.rel (0) target = $region41
    $region40: #{tpu_custom_call.1} parent=1 // pred_region
      _
    $region41: #{tpu_custom_call.1} parent=1 // pred_fallthru
      _
    // Predicated region
    $region42: #{tpu_custom_call.1} parent=1 // pred_check
      _
    $region43: #{tpu_custom_call.1} parent=1 // pred_check_branch
      %145 = sbr.rel (0) target = $region45
    $region44: #{tpu_custom_call.1} parent=1 // pred_region
      _
    $region45: #{tpu_custom_call.1} parent=1 // pred_fallthru
      _
    // Predicated region
    $region46: #{tpu_custom_call.1} parent=1 // pred_check
      _
    $region47: #{tpu_custom_call.1} parent=1 // pred_check_branch
      %147 = sbr.rel (0) target = $region49
    $region48: #{tpu_custom_call.1} parent=1 // pred_region
      %149 = vsyncadd [#allocation33], 0
      %s151 = sshll.u32 %s11, 4
      %s152 = int_to_ptr.hbm [resolvable:$true] %s151
      %s153 = sshll.u32 [#allocation32], 4
      %s154 = int_to_ptr.vmem [resolvable:$true] %s153
      %156 = dma.hbm_to_vmem [thread:$0]  %s152, 64, %s154, [#allocation33]
    $region49: #{tpu_custom_call.1} parent=1 // pred_fallthru
      _
    // Predicated region
    $region50: #{tpu_custom_call.1} parent=1 // pred_check
      _
    $region51: #{tpu_custom_call.1} parent=1 // pred_check_branch
      %158 = sbr.rel (0) target = $region53
    $region52: #{tpu_custom_call.1} parent=1 // pred_region
      %160 = vsyncadd [#allocation33], 0
      %s162 = sshll.u32 %s12, 4
      %s163 = int_to_ptr.hbm [resolvable:$true] %s162
      %s164 = sshll.u32 [#allocation34], 4
      %s165 = int_to_ptr.vmem [resolvable:$true] %s164
      %167 = dma.hbm_to_vmem [thread:$0]  %s163, 64, %s165, [#allocation33]
    $region53: #{tpu_custom_call.1} parent=1 // pred_fallthru
      _
    // Predicated region
    $region54: #{tpu_custom_call.1} parent=1 // pred_check
      _
    $region55: #{tpu_custom_call.1} parent=1 // pred_check_branch
      %169 = sbr.rel (0) target = $region57
    $region56: #{tpu_custom_call.1} parent=1 // pred_region
      %171 = dma.done [#allocation18], 1024
    $region57: #{tpu_custom_call.1} parent=1 // pred_fallthru
      _
    // Predicated region
    $region58: #{tpu_custom_call.1} parent=1 // pred_check
      _
    $region59: #{tpu_custom_call.1} parent=1 // pred_check_branch
      %173 = sbr.rel (0) target = $region61
    $region60: #{tpu_custom_call.1} parent=1 // pred_region
      %175 = dma.done [#allocation21], 8192
    $region61: #{tpu_custom_call.1} parent=1 // pred_fallthru
      _
    // Predicated region
    $region62: #{tpu_custom_call.1} parent=1 // pred_check
      _
    $region63: #{tpu_custom_call.1} parent=1 // pred_check_branch
      %177 = sbr.rel (0) target = $region65
    $region64: #{tpu_custom_call.1} parent=1 // pred_region
      %179 = dma.done [#allocation21], 8192
    $region65: #{tpu_custom_call.1} parent=1 // pred_fallthru
      _
    // Predicated region
    $region66: #{tpu_custom_call.1} parent=1 // pred_check
      _
    $region67: #{tpu_custom_call.1} parent=1 // pred_check_branch
      %181 = sbr.rel (0) target = $region69
    $region68: #{tpu_custom_call.1} parent=1 // pred_region
      %183 = dma.done [#allocation24], 8192
    $region69: #{tpu_custom_call.1} parent=1 // pred_fallthru
      _
    // Predicated region
    $region70: #{tpu_custom_call.1} parent=1 // pred_check
      _
    $region71: #{tpu_custom_call.1} parent=1 // pred_check_branch
      %185 = sbr.rel (0) target = $region73
    $region72: #{tpu_custom_call.1} parent=1 // pred_region
      %187 = dma.done [#allocation24], 8192
    $region73: #{tpu_custom_call.1} parent=1 // pred_fallthru
      _
    // Predicated region
    $region74: #{tpu_custom_call.1} parent=1 // pred_check
      _
    $region75: #{tpu_custom_call.1} parent=1 // pred_check_branch
      %189 = sbr.rel (0) target = $region77
    $region76: #{tpu_custom_call.1} parent=1 // pred_region
      %191 = dma.done [#allocation27], 8192
    $region77: #{tpu_custom_call.1} parent=1 // pred_fallthru
      _
    // Predicated region
    $region78: #{tpu_custom_call.1} parent=1 // pred_check
      _
    $region79: #{tpu_custom_call.1} parent=1 // pred_check_branch
      %193 = sbr.rel (0) target = $region81
    $region80: #{tpu_custom_call.1} parent=1 // pred_region
      %195 = dma.done [#allocation27], 8192
    $region81: #{tpu_custom_call.1} parent=1 // pred_fallthru
      _
    // Predicated region
    $region82: #{tpu_custom_call.1} parent=1 // pred_check
      _
    $region83: #{tpu_custom_call.1} parent=1 // pred_check_branch
      %197 = sbr.rel (0) target = $region85
    $region84: #{tpu_custom_call.1} parent=1 // pred_region
      %199 = dma.done [#allocation30], 8192
    $region85: #{tpu_custom_call.1} parent=1 // pred_fallthru
      _
    // Predicated region
    $region86: #{tpu_custom_call.1} parent=1 // pred_check
      _
    $region87: #{tpu_custom_call.1} parent=1 // pred_check_branch
      %201 = sbr.rel (0) target = $region89
    $region88: #{tpu_custom_call.1} parent=1 // pred_region
      %203 = dma.done [#allocation30], 8192
    $region89: #{tpu_custom_call.1} parent=1 // pred_fallthru
      _
    // Predicated region
    $region90: #{tpu_custom_call.1} parent=1 // pred_check
      _
    $region91: #{tpu_custom_call.1} parent=1 // pred_check_branch
      %205 = sbr.rel (0) target = $region93
    $region92: #{tpu_custom_call.1} parent=1 // pred_region
      %207 = dma.done [#allocation33], 64
    $region93: #{tpu_custom_call.1} parent=1 // pred_fallthru
      _
    // Predicated region
    $region94: #{tpu_custom_call.1} parent=1 // pred_check
      _
    $region95: #{tpu_custom_call.1} parent=1 // pred_check_branch
      %209 = sbr.rel (0) target = $region97
    $region96: #{tpu_custom_call.1} parent=1 // pred_region
      %211 = dma.done [#allocation33], 64
    $region97: #{tpu_custom_call.1} parent=1 // pred_fallthru
      _
    %p212 = scmp.eq.s32.totalorder 0, 0
    // Predicated region
    $region98: #{tpu_custom_call.1} parent=1 // pred_check
      %p213 = pneg %p212
    $region99: #{tpu_custom_call.1} parent=1 // pred_check_branch
      %215 = sbr.rel (%p213) target = $region101
    $region100: #{tpu_custom_call.1} parent=1 // pred_region
      %216 = vst [vmem:[#allocation9] sm:$0xff] 0.0
      %217 = vst [vmem:[#allocation10] sm:$0xff] 0.0
      %218 = vst [vmem:[#allocation11] sm:$0xff] 0.0
      %219 = vst [vmem:[#allocation12] sm:$0xff] 0.0
      %220 = vst [vmem:[#allocation13] sm:$0xff] 0.0
      %221 = vst [vmem:[#allocation14] sm:$0xff] 0.0
      %222 = vst [vmem:[#allocation15] sm:$0xff] 0.0
      %223 = vst [vmem:[#allocation16] sm:$0xff] 0.0
    $region101: #{tpu_custom_call.1} parent=1 // pred_fallthru
      _
    %v224 = vld [vmem:[#allocation20] sm:$0xff]
    %v225 = vld [vmem:[#allocation20 + $0x8] sm:$0xff]
    %v226 = vld [vmem:[#allocation20 + $0x10] sm:$0xff]
    %v227 = vld [vmem:[#allocation20 + $0x18] sm:$0xff]
    %v228 = vld [vmem:[#allocation20 + $0x20] sm:$0xff]
    %v229 = vld [vmem:[#allocation20 + $0x28] sm:$0xff]
    %v230 = vld [vmem:[#allocation20 + $0x30] sm:$0xff]
    %v231 = vld [vmem:[#allocation20 + $0x38] sm:$0xff]
    %v232 = vld [vmem:[#allocation20 + $0x40] sm:$0xff]
    %v233 = vld [vmem:[#allocation20 + $0x48] sm:$0xff]
    %v234 = vld [vmem:[#allocation20 + $0x50] sm:$0xff]
    %v235 = vld [vmem:[#allocation20 + $0x58] sm:$0xff]
    %v236 = vld [vmem:[#allocation20 + $0x60] sm:$0xff]
    %v237 = vld [vmem:[#allocation20 + $0x68] sm:$0xff]
    %v238 = vld [vmem:[#allocation20 + $0x70] sm:$0xff]
    %v239 = vld [vmem:[#allocation20 + $0x78] sm:$0xff]
    %v240 = vld [vmem:[#allocation20 + $0x80] sm:$0xff]
    %v241 = vld [vmem:[#allocation20 + $0x88] sm:$0xff]
    %v242 = vld [vmem:[#allocation20 + $0x90] sm:$0xff]
    %v243 = vld [vmem:[#allocation20 + $0x98] sm:$0xff]
    %v244 = vld [vmem:[#allocation20 + $0xa0] sm:$0xff]
    %v245 = vld [vmem:[#allocation20 + $0xa8] sm:$0xff]
    %v246 = vld [vmem:[#allocation20 + $0xb0] sm:$0xff]
    %v247 = vld [vmem:[#allocation20 + $0xb8] sm:$0xff]
    %v248 = vld [vmem:[#allocation20 + $0xc0] sm:$0xff]
    %v249 = vld [vmem:[#allocation20 + $0xc8] sm:$0xff]
    %v250 = vld [vmem:[#allocation20 + $0xd0] sm:$0xff]
    %v251 = vld [vmem:[#allocation20 + $0xd8] sm:$0xff]
    %v252 = vld [vmem:[#allocation20 + $0xe0] sm:$0xff]
    %v253 = vld [vmem:[#allocation20 + $0xe8] sm:$0xff]
    %v254 = vld [vmem:[#allocation20 + $0xf0] sm:$0xff]
    %v255 = vld [vmem:[#allocation20 + $0xf8] sm:$0xff]
    %v256 = vld [vmem:[#allocation20 + $0x100] sm:$0xff]
    %v257 = vld [vmem:[#allocation20 + $0x108] sm:$0xff]
    %v258 = vld [vmem:[#allocation20 + $0x110] sm:$0xff]
    %v259 = vld [vmem:[#allocation20 + $0x118] sm:$0xff]
    %v260 = vld [vmem:[#allocation20 + $0x120] sm:$0xff]
    %v261 = vld [vmem:[#allocation20 + $0x128] sm:$0xff]
    %v262 = vld [vmem:[#allocation20 + $0x130] sm:$0xff]
    %v263 = vld [vmem:[#allocation20 + $0x138] sm:$0xff]
    %v264 = vld [vmem:[#allocation20 + $0x140] sm:$0xff]
    %v265 = vld [vmem:[#allocation20 + $0x148] sm:$0xff]
    %v266 = vld [vmem:[#allocation20 + $0x150] sm:$0xff]
    %v267 = vld [vmem:[#allocation20 + $0x158] sm:$0xff]
    %v268 = vld [vmem:[#allocation20 + $0x160] sm:$0xff]
    %v269 = vld [vmem:[#allocation20 + $0x168] sm:$0xff]
    %v270 = vld [vmem:[#allocation20 + $0x170] sm:$0xff]
    %v271 = vld [vmem:[#allocation20 + $0x178] sm:$0xff]
    %v272 = vld [vmem:[#allocation20 + $0x180] sm:$0xff]
    %v273 = vld [vmem:[#allocation20 + $0x188] sm:$0xff]
    %v274 = vld [vmem:[#allocation20 + $0x190] sm:$0xff]
    %v275 = vld [vmem:[#allocation20 + $0x198] sm:$0xff]
    %v276 = vld [vmem:[#allocation20 + $0x1a0] sm:$0xff]
    %v277 = vld [vmem:[#allocation20 + $0x1a8] sm:$0xff]
    %v278 = vld [vmem:[#allocation20 + $0x1b0] sm:$0xff]
    %v279 = vld [vmem:[#allocation20 + $0x1b8] sm:$0xff]
    %v280 = vld [vmem:[#allocation20 + $0x1c0] sm:$0xff]
    %v281 = vld [vmem:[#allocation20 + $0x1c8] sm:$0xff]
    %v282 = vld [vmem:[#allocation20 + $0x1d0] sm:$0xff]
    %v283 = vld [vmem:[#allocation20 + $0x1d8] sm:$0xff]
    %v284 = vld [vmem:[#allocation20 + $0x1e0] sm:$0xff]
    %v285 = vld [vmem:[#allocation20 + $0x1e8] sm:$0xff]
    %v286 = vld [vmem:[#allocation20 + $0x1f0] sm:$0xff]
    %v287 = vld [vmem:[#allocation20 + $0x1f8] sm:$0xff]
    %v288 = vld [vmem:[#allocation26] sm:$0xff]
    %v289 = vld [vmem:[#allocation26 + $0x8] sm:$0xff]
    %v290 = vld [vmem:[#allocation26 + $0x10] sm:$0xff]
    %v291 = vld [vmem:[#allocation26 + $0x18] sm:$0xff]
    %v292 = vld [vmem:[#allocation26 + $0x20] sm:$0xff]
    %v293 = vld [vmem:[#allocation26 + $0x28] sm:$0xff]
    %v294 = vld [vmem:[#allocation26 + $0x30] sm:$0xff]
    %v295 = vld [vmem:[#allocation26 + $0x38] sm:$0xff]
    %v296 = vld [vmem:[#allocation26 + $0x40] sm:$0xff]
    %v297 = vld [vmem:[#allocation26 + $0x48] sm:$0xff]
    %v298 = vld [vmem:[#allocation26 + $0x50] sm:$0xff]
    %v299 = vld [vmem:[#allocation26 + $0x58] sm:$0xff]
    %v300 = vld [vmem:[#allocation26 + $0x60] sm:$0xff]
    %v301 = vld [vmem:[#allocation26 + $0x68] sm:$0xff]
    %v302 = vld [vmem:[#allocation26 + $0x70] sm:$0xff]
    %v303 = vld [vmem:[#allocation26 + $0x78] sm:$0xff]
    %v304 = vld [vmem:[#allocation26 + $0x80] sm:$0xff]
    %v305 = vld [vmem:[#allocation26 + $0x88] sm:$0xff]
    %v306 = vld [vmem:[#allocation26 + $0x90] sm:$0xff]
    %v307 = vld [vmem:[#allocation26 + $0x98] sm:$0xff]
    %v308 = vld [vmem:[#allocation26 + $0xa0] sm:$0xff]
    %v309 = vld [vmem:[#allocation26 + $0xa8] sm:$0xff]
    %v310 = vld [vmem:[#allocation26 + $0xb0] sm:$0xff]
    %v311 = vld [vmem:[#allocation26 + $0xb8] sm:$0xff]
    %v312 = vld [vmem:[#allocation26 + $0xc0] sm:$0xff]
    %v313 = vld [vmem:[#allocation26 + $0xc8] sm:$0xff]
    %v314 = vld [vmem:[#allocation26 + $0xd0] sm:$0xff]
    %v315 = vld [vmem:[#allocation26 + $0xd8] sm:$0xff]
    %v316 = vld [vmem:[#allocation26 + $0xe0] sm:$0xff]
    %v317 = vld [vmem:[#allocation26 + $0xe8] sm:$0xff]
    %v318 = vld [vmem:[#allocation26 + $0xf0] sm:$0xff]
    %v319 = vld [vmem:[#allocation26 + $0xf8] sm:$0xff]
    %v320 = vld [vmem:[#allocation26 + $0x100] sm:$0xff]
    %v321 = vld [vmem:[#allocation26 + $0x108] sm:$0xff]
    %v322 = vld [vmem:[#allocation26 + $0x110] sm:$0xff]
    %v323 = vld [vmem:[#allocation26 + $0x118] sm:$0xff]
    %v324 = vld [vmem:[#allocation26 + $0x120] sm:$0xff]
    %v325 = vld [vmem:[#allocation26 + $0x128] sm:$0xff]
    %v326 = vld [vmem:[#allocation26 + $0x130] sm:$0xff]
    %v327 = vld [vmem:[#allocation26 + $0x138] sm:$0xff]
    %v328 = vld [vmem:[#allocation26 + $0x140] sm:$0xff]
    %v329 = vld [vmem:[#allocation26 + $0x148] sm:$0xff]
    %v330 = vld [vmem:[#allocation26 + $0x150] sm:$0xff]
    %v331 = vld [vmem:[#allocation26 + $0x158] sm:$0xff]
    %v332 = vld [vmem:[#allocation26 + $0x160] sm:$0xff]
    %v333 = vld [vmem:[#allocation26 + $0x168] sm:$0xff]
    %v334 = vld [vmem:[#allocation26 + $0x170] sm:$0xff]
    %v335 = vld [vmem:[#allocation26 + $0x178] sm:$0xff]
    %v336 = vld [vmem:[#allocation26 + $0x180] sm:$0xff]
    %v337 = vld [vmem:[#allocation26 + $0x188] sm:$0xff]
    %v338 = vld [vmem:[#allocation26 + $0x190] sm:$0xff]
    %v339 = vld [vmem:[#allocation26 + $0x198] sm:$0xff]
    %v340 = vld [vmem:[#allocation26 + $0x1a0] sm:$0xff]
    %v341 = vld [vmem:[#allocation26 + $0x1a8] sm:$0xff]
    %v342 = vld [vmem:[#allocation26 + $0x1b0] sm:$0xff]
    %v343 = vld [vmem:[#allocation26 + $0x1b8] sm:$0xff]
    %v344 = vld [vmem:[#allocation26 + $0x1c0] sm:$0xff]
    %v345 = vld [vmem:[#allocation26 + $0x1c8] sm:$0xff]
    %v346 = vld [vmem:[#allocation26 + $0x1d0] sm:$0xff]
    %v347 = vld [vmem:[#allocation26 + $0x1d8] sm:$0xff]
    %v348 = vld [vmem:[#allocation26 + $0x1e0] sm:$0xff]
    %v349 = vld [vmem:[#allocation26 + $0x1e8] sm:$0xff]
    %v350 = vld [vmem:[#allocation26 + $0x1f0] sm:$0xff]
    %v351 = vld [vmem:[#allocation26 + $0x1f8] sm:$0xff]
    %v352 = vld [vmem:[%s9] sm:$0xf]
    %v353 = vld [vmem:[#allocation17] sm:$0xff]
    %v354 = vld [vmem:[#allocation17 + $0x8] sm:$0xff]
    %v355 = vld [vmem:[#allocation17 + $0x10] sm:$0xff]
    %v356 = vld [vmem:[#allocation17 + $0x18] sm:$0xff]
    %v357 = vld [vmem:[#allocation17 + $0x20] sm:$0xff]
    %v358 = vld [vmem:[#allocation17 + $0x28] sm:$0xff]
    %v359 = vld [vmem:[#allocation17 + $0x30] sm:$0xff]
    %v360 = vld [vmem:[#allocation17 + $0x38] sm:$0xff]
    %v362 = vperm.slane %v352, 0
    %v363 = vperm.slane %v352, 1
    %v364 = vperm.slane %v352, 2
    %v365 = vperm.slane %v352, 3
    %370 = vmatpush.msra.mxu0 %v284
    %371 = vmatpush.msra.mxu0 %v280
    %372 = vmatpush.msra.mxu0 %v276
    %373 = vmatpush.msra.mxu0 %v272
    %374 = vmatpush.msra.mxu0 %v268
    %375 = vmatpush.msra.mxu0 %v264
    %376 = vmatpush.msra.mxu0 %v260
    %377 = vmatpush.msra.mxu0 %v256
    %378 = vmatpush.msra.mxu0 %v252
    %379 = vmatpush.msra.mxu0 %v248
    %380 = vmatpush.msra.mxu0 %v244
    %381 = vmatpush.msra.mxu0 %v240
    %382 = vmatpush.msra.mxu0 %v236
    %383 = vmatpush.msra.mxu0 %v232
    %384 = vmatpush.msra.mxu0 %v228
    %385 = vmatpush.msra.mxu0 %v224
    %386 = vmatmul.f32.gmra.mxu0 %v353
    %v387 = vpop.f32.mrf.mxu0
    %v388 = vadd.f32 %v362, %v387
    %389 = vmatmul.f32.gmra.mxu0 %v354
    %v390 = vpop.f32.mrf.mxu0
    %v391 = vadd.f32 %v362, %v390
    %392 = vmatmul.f32.gmra.mxu0 %v355
    %v393 = vpop.f32.mrf.mxu0
    %v394 = vadd.f32 %v362, %v393
    %395 = vmatmul.f32.gmra.mxu0 %v356
    %v396 = vpop.f32.mrf.mxu0
    %v397 = vadd.f32 %v362, %v396
    %398 = vmatmul.f32.gmra.mxu0 %v357
    %v399 = vpop.f32.mrf.mxu0
    %v400 = vadd.f32 %v362, %v399
    %401 = vmatmul.f32.gmra.mxu0 %v358
    %v402 = vpop.f32.mrf.mxu0
    %v403 = vadd.f32 %v362, %v402
    %404 = vmatmul.f32.gmra.mxu0 %v359
    %v405 = vpop.f32.mrf.mxu0
    %v406 = vadd.f32 %v362, %v405
    %407 = vmatmul.f32.gmra.mxu0 %v360
    %v408 = vpop.f32.mrf.mxu0
    %v409 = vadd.f32 %v362, %v408
    %410 = vdwg.mxu0
    %411 = vmatpush.msra.mxu0 %v285
    %412 = vmatpush.msra.mxu0 %v281
    %413 = vmatpush.msra.mxu0 %v277
    %414 = vmatpush.msra.mxu0 %v273
    %415 = vmatpush.msra.mxu0 %v269
    %416 = vmatpush.msra.mxu0 %v265
    %417 = vmatpush.msra.mxu0 %v261
    %418 = vmatpush.msra.mxu0 %v257
    %419 = vmatpush.msra.mxu0 %v253
    %420 = vmatpush.msra.mxu0 %v249
    %421 = vmatpush.msra.mxu0 %v245
    %422 = vmatpush.msra.mxu0 %v241
    %423 = vmatpush.msra.mxu0 %v237
    %424 = vmatpush.msra.mxu0 %v233
    %425 = vmatpush.msra.mxu0 %v229
    %426 = vmatpush.msra.mxu0 %v225
    %427 = vmatmul.f32.gmra.mxu0 %v353
    %v428 = vpop.f32.mrf.mxu0
    %v429 = vadd.f32 %v363, %v428
    %430 = vmatmul.f32.gmra.mxu0 %v354
    %v431 = vpop.f32.mrf.mxu0
    %v432 = vadd.f32 %v363, %v431
    %433 = vmatmul.f32.gmra.mxu0 %v355
    %v434 = vpop.f32.mrf.mxu0
    %v435 = vadd.f32 %v363, %v434
    %436 = vmatmul.f32.gmra.mxu0 %v356
    %v437 = vpop.f32.mrf.mxu0
    %v438 = vadd.f32 %v363, %v437
    %439 = vmatmul.f32.gmra.mxu0 %v357
    %v440 = vpop.f32.mrf.mxu0
    %v441 = vadd.f32 %v363, %v440
    %442 = vmatmul.f32.gmra.mxu0 %v358
    %v443 = vpop.f32.mrf.mxu0
    %v444 = vadd.f32 %v363, %v443
    %445 = vmatmul.f32.gmra.mxu0 %v359
    %v446 = vpop.f32.mrf.mxu0
    %v447 = vadd.f32 %v363, %v446
    %448 = vmatmul.f32.gmra.mxu0 %v360
    %v449 = vpop.f32.mrf.mxu0
    %v450 = vadd.f32 %v363, %v449
    %451 = vdwg.mxu0
    %452 = vmatpush.msra.mxu0 %v286
    %453 = vmatpush.msra.mxu0 %v282
    %454 = vmatpush.msra.mxu0 %v278
    %455 = vmatpush.msra.mxu0 %v274
    %456 = vmatpush.msra.mxu0 %v270
    %457 = vmatpush.msra.mxu0 %v266
    %458 = vmatpush.msra.mxu0 %v262
    %459 = vmatpush.msra.mxu0 %v258
    %460 = vmatpush.msra.mxu0 %v254
    %461 = vmatpush.msra.mxu0 %v250
    %462 = vmatpush.msra.mxu0 %v246
    %463 = vmatpush.msra.mxu0 %v242
    %464 = vmatpush.msra.mxu0 %v238
    %465 = vmatpush.msra.mxu0 %v234
    %466 = vmatpush.msra.mxu0 %v230
    %467 = vmatpush.msra.mxu0 %v226
    %468 = vmatmul.f32.gmra.mxu0 %v353
    %v469 = vpop.f32.mrf.mxu0
    %v470 = vadd.f32 %v364, %v469
    %471 = vmatmul.f32.gmra.mxu0 %v354
    %v472 = vpop.f32.mrf.mxu0
    %v473 = vadd.f32 %v364, %v472
    %474 = vmatmul.f32.gmra.mxu0 %v355
    %v475 = vpop.f32.mrf.mxu0
    %v476 = vadd.f32 %v364, %v475
    %477 = vmatmul.f32.gmra.mxu0 %v356
    %v478 = vpop.f32.mrf.mxu0
    %v479 = vadd.f32 %v364, %v478
    %480 = vmatmul.f32.gmra.mxu0 %v357
    %v481 = vpop.f32.mrf.mxu0
    %v482 = vadd.f32 %v364, %v481
    %483 = vmatmul.f32.gmra.mxu0 %v358
    %v484 = vpop.f32.mrf.mxu0
    %v485 = vadd.f32 %v364, %v484
    %486 = vmatmul.f32.gmra.mxu0 %v359
    %v487 = vpop.f32.mrf.mxu0
    %v488 = vadd.f32 %v364, %v487
    %489 = vmatmul.f32.gmra.mxu0 %v360
    %v490 = vpop.f32.mrf.mxu0
    %v491 = vadd.f32 %v364, %v490
    %492 = vdwg.mxu0
    %493 = vmatpush.msra.mxu0 %v287
    %494 = vmatpush.msra.mxu0 %v283
    %495 = vmatpush.msra.mxu0 %v279
    %496 = vmatpush.msra.mxu0 %v275
    %497 = vmatpush.msra.mxu0 %v271
    %498 = vmatpush.msra.mxu0 %v267
    %499 = vmatpush.msra.mxu0 %v263
    %500 = vmatpush.msra.mxu0 %v259
    %501 = vmatpush.msra.mxu0 %v255
    %502 = vmatpush.msra.mxu0 %v251
    %503 = vmatpush.msra.mxu0 %v247
    %504 = vmatpush.msra.mxu0 %v243
    %505 = vmatpush.msra.mxu0 %v239
    %506 = vmatpush.msra.mxu0 %v235
    %507 = vmatpush.msra.mxu0 %v231
    %508 = vmatpush.msra.mxu0 %v227
    %509 = vmatmul.f32.gmra.mxu0 %v353
    %v510 = vpop.f32.mrf.mxu0
    %v511 = vadd.f32 %v365, %v510
    %512 = vmatmul.f32.gmra.mxu0 %v354
    %v513 = vpop.f32.mrf.mxu0
    %v514 = vadd.f32 %v365, %v513
    %515 = vmatmul.f32.gmra.mxu0 %v355
    %v516 = vpop.f32.mrf.mxu0
    %v517 = vadd.f32 %v365, %v516
    %518 = vmatmul.f32.gmra.mxu0 %v356
    %v519 = vpop.f32.mrf.mxu0
    %v520 = vadd.f32 %v365, %v519
    %521 = vmatmul.f32.gmra.mxu0 %v357
    %v522 = vpop.f32.mrf.mxu0
    %v523 = vadd.f32 %v365, %v522
    %524 = vmatmul.f32.gmra.mxu0 %v358
    %v525 = vpop.f32.mrf.mxu0
    %v526 = vadd.f32 %v365, %v525
    %527 = vmatmul.f32.gmra.mxu0 %v359
    %v528 = vpop.f32.mrf.mxu0
    %v529 = vadd.f32 %v365, %v528
    %530 = vmatmul.f32.gmra.mxu0 %v360
    %v531 = vpop.f32.mrf.mxu0
    %v532 = vadd.f32 %v365, %v531
    %533 = vdwg.mxu0
    %534 = vst [vmem:[#allocation5] sm:$0xff] %v388
    %535 = vst [vmem:[#allocation5 + $0x8] sm:$0xff] %v429
    %536 = vst [vmem:[#allocation5 + $0x10] sm:$0xff] %v470
    %537 = vst [vmem:[#allocation5 + $0x18] sm:$0xff] %v511
    %538 = vst [vmem:[#allocation5 + $0x20] sm:$0xff] %v391
    %539 = vst [vmem:[#allocation5 + $0x28] sm:$0xff] %v432
    %540 = vst [vmem:[#allocation5 + $0x30] sm:$0xff] %v473
    %541 = vst [vmem:[#allocation5 + $0x38] sm:$0xff] %v514
    %542 = vst [vmem:[#allocation5 + $0x40] sm:$0xff] %v394
    %543 = vst [vmem:[#allocation5 + $0x48] sm:$0xff] %v435
    %544 = vst [vmem:[#allocation5 + $0x50] sm:$0xff] %v476
    %545 = vst [vmem:[#allocation5 + $0x58] sm:$0xff] %v517
    %546 = vst [vmem:[#allocation5 + $0x60] sm:$0xff] %v397
    %547 = vst [vmem:[#allocation5 + $0x68] sm:$0xff] %v438
    %548 = vst [vmem:[#allocation5 + $0x70] sm:$0xff] %v479
    %549 = vst [vmem:[#allocation5 + $0x78] sm:$0xff] %v520
    %550 = vst [vmem:[#allocation5 + $0x80] sm:$0xff] %v400
    %551 = vst [vmem:[#allocation5 + $0x88] sm:$0xff] %v441
    %552 = vst [vmem:[#allocation5 + $0x90] sm:$0xff] %v482
    %553 = vst [vmem:[#allocation5 + $0x98] sm:$0xff] %v523
    %554 = vst [vmem:[#allocation5 + $0xa0] sm:$0xff] %v403
    %555 = vst [vmem:[#allocation5 + $0xa8] sm:$0xff] %v444
    %556 = vst [vmem:[#allocation5 + $0xb0] sm:$0xff] %v485
    %557 = vst [vmem:[#allocation5 + $0xb8] sm:$0xff] %v526
    %558 = vst [vmem:[#allocation5 + $0xc0] sm:$0xff] %v406
    %559 = vst [vmem:[#allocation5 + $0xc8] sm:$0xff] %v447
    %560 = vst [vmem:[#allocation5 + $0xd0] sm:$0xff] %v488
    %561 = vst [vmem:[#allocation5 + $0xd8] sm:$0xff] %v529
    %562 = vst [vmem:[#allocation5 + $0xe0] sm:$0xff] %v409
    %563 = vst [vmem:[#allocation5 + $0xe8] sm:$0xff] %v450
    %564 = vst [vmem:[#allocation5 + $0xf0] sm:$0xff] %v491
    %565 = vst [vmem:[#allocation5 + $0xf8] sm:$0xff] %v532
    %v566 = vld [vmem:[#allocation9] sm:$0xff]
    %v567 = vld [vmem:[#allocation10] sm:$0xff]
    %v568 = vld [vmem:[#allocation5] sm:$0xff]
    %v569 = vld [vmem:[#allocation5 + $0x8] sm:$0xff]
    %v570 = vld [vmem:[#allocation5 + $0x10] sm:$0xff]
    %v571 = vld [vmem:[#allocation5 + $0x18] sm:$0xff]
    %572 = vmatpush.msra.mxu0 %v348
    %573 = vmatpush.msra.mxu0 %v344
    %574 = vmatpush.msra.mxu0 %v340
    %575 = vmatpush.msra.mxu0 %v336
    %576 = vmatpush.msra.mxu0 %v332
    %577 = vmatpush.msra.mxu0 %v328
    %578 = vmatpush.msra.mxu0 %v324
    %579 = vmatpush.msra.mxu0 %v320
    %580 = vmatpush.msra.mxu0 %v316
    %581 = vmatpush.msra.mxu0 %v312
    %582 = vmatpush.msra.mxu0 %v308
    %583 = vmatpush.msra.mxu0 %v304
    %584 = vmatpush.msra.mxu0 %v300
    %585 = vmatpush.msra.mxu0 %v296
    %586 = vmatpush.msra.mxu0 %v292
    %587 = vmatpush.msra.mxu0 %v288
    %588 = vmatmul.f32.gmra.mxu0 %v566
    %v589 = vpop.f32.mrf.mxu0
    %v590 = vadd.f32 0.0, %v589
    %591 = vdwg.mxu0
    %592 = vmatpush.msra.mxu0 %v349
    %593 = vmatpush.msra.mxu0 %v345
    %594 = vmatpush.msra.mxu0 %v341
    %595 = vmatpush.msra.mxu0 %v337
    %596 = vmatpush.msra.mxu0 %v333
    %597 = vmatpush.msra.mxu0 %v329
    %598 = vmatpush.msra.mxu0 %v325
    %599 = vmatpush.msra.mxu0 %v321
    %600 = vmatpush.msra.mxu0 %v317
    %601 = vmatpush.msra.mxu0 %v313
    %602 = vmatpush.msra.mxu0 %v309
    %603 = vmatpush.msra.mxu0 %v305
    %604 = vmatpush.msra.mxu0 %v301
    %605 = vmatpush.msra.mxu0 %v297
    %606 = vmatpush.msra.mxu0 %v293
    %607 = vmatpush.msra.mxu0 %v289
    %608 = vmatmul.f32.gmra.mxu0 %v566
    %v609 = vpop.f32.mrf.mxu0
    %v610 = vadd.f32 0.0, %v609
    %611 = vdwg.mxu0
    %612 = vmatpush.msra.mxu0 %v350
    %613 = vmatpush.msra.mxu0 %v346
    %614 = vmatpush.msra.mxu0 %v342
    %615 = vmatpush.msra.mxu0 %v338
    %616 = vmatpush.msra.mxu0 %v334
    %617 = vmatpush.msra.mxu0 %v330
    %618 = vmatpush.msra.mxu0 %v326
    %619 = vmatpush.msra.mxu0 %v322
    %620 = vmatpush.msra.mxu0 %v318
    %621 = vmatpush.msra.mxu0 %v314
    %622 = vmatpush.msra.mxu0 %v310
    %623 = vmatpush.msra.mxu0 %v306
    %624 = vmatpush.msra.mxu0 %v302
    %625 = vmatpush.msra.mxu0 %v298
    %626 = vmatpush.msra.mxu0 %v294
    %627 = vmatpush.msra.mxu0 %v290
    %628 = vmatmul.f32.gmra.mxu0 %v566
    %v629 = vpop.f32.mrf.mxu0
    %v630 = vadd.f32 0.0, %v629
    %631 = vdwg.mxu0
    %632 = vmatpush.msra.mxu0 %v351
    %633 = vmatpush.msra.mxu0 %v347
    %634 = vmatpush.msra.mxu0 %v343
    %635 = vmatpush.msra.mxu0 %v339
    %636 = vmatpush.msra.mxu0 %v335
    %637 = vmatpush.msra.mxu0 %v331
    %638 = vmatpush.msra.mxu0 %v327
    %639 = vmatpush.msra.mxu0 %v323
    %640 = vmatpush.msra.mxu0 %v319
    %641 = vmatpush.msra.mxu0 %v315
    %642 = vmatpush.msra.mxu0 %v311
    %643 = vmatpush.msra.mxu0 %v307
    %644 = vmatpush.msra.mxu0 %v303
    %645 = vmatpush.msra.mxu0 %v299
    %646 = vmatpush.msra.mxu0 %v295
    %647 = vmatpush.msra.mxu0 %v291
    %648 = vmatmul.f32.gmra.mxu0 %v566
    %v649 = vpop.f32.mrf.mxu0
    %v650 = vadd.f32 0.0, %v649
    %651 = vdwg.mxu0
    %v652 = vadd.f32 %v568, %v590
    %v653 = vadd.f32 %v569, %v610
    %v654 = vadd.f32 %v570, %v630
    %v655 = vadd.f32 %v571, %v650
    %v656 = vxor.u32 %v652, 2147483648
    %v657 = vxor.u32 %v653, 2147483648
    %v658 = vxor.u32 %v654, 2147483648
    %v659 = vmul.f32 %v656, 1.442695
    %v660 = vpow.pop %v659
    %v661 = vmul.f32 %v657, 1.442695
    %v662 = vpow.pop %v661
    %v663 = vmul.f32 %v658, 1.442695
    %v664 = vpow.pop %v663
    %v665 = vadd.f32 %v660, 1.0
    %v666 = vadd.f32 %v662, 1.0
    %v667 = vadd.f32 %v664, 1.0
    %v668 = vrcp.pop %v665
    %v669 = vmul.f32 %v665, %v668
    %v670 = vsub.f32 1.0, %v669
    %v671 = vmul.f32 %v668, %v670
    %v672 = vadd.f32 %v668, %v671
    %vm673 = vweird.f32 %v665
    %vm674 = vweird.f32 %v668
    %vm675 = vmor %vm673, %vm674
    %v676 = vsel %vm675, %v668, %v672
    %v677 = vand.u32 2147483647, %v665
    %vm678 = vcmp.eq.f32.partialorder %v677, 8.507059e+37
    %v679 = vand.u32 %v665, 2147483648
    %v680 = vor.u32 1.1754944e-38, %v679
    %v681 = vsel %vm678, %v680, %v676
    %v682 = vmul.f32 1.0, %v681
    %v683 = vrcp.pop %v666
    %v684 = vmul.f32 %v666, %v683
    %v685 = vsub.f32 1.0, %v684
    %v686 = vmul.f32 %v683, %v685
    %v687 = vadd.f32 %v683, %v686
    %vm688 = vweird.f32 %v666
    %vm689 = vweird.f32 %v683
    %vm690 = vmor %vm688, %vm689
    %v691 = vsel %vm690, %v683, %v687
    %v692 = vand.u32 2147483647, %v666
    %vm693 = vcmp.eq.f32.partialorder %v692, 8.507059e+37
    %v694 = vand.u32 %v666, 2147483648
    %v695 = vor.u32 1.1754944e-38, %v694
    %v696 = vsel %vm693, %v695, %v691
    %v697 = vmul.f32 1.0, %v696
    %v698 = vrcp.pop %v667
    %v699 = vmul.f32 %v667, %v698
    %v700 = vsub.f32 1.0, %v699
    %v701 = vmul.f32 %v698, %v700
    %v702 = vadd.f32 %v698, %v701
    %vm703 = vweird.f32 %v667
    %vm704 = vweird.f32 %v698
    %vm705 = vmor %vm703, %vm704
    %v706 = vsel %vm705, %v698, %v702
    %v707 = vand.u32 2147483647, %v667
    %vm708 = vcmp.eq.f32.partialorder %v707, 8.507059e+37
    %v709 = vand.u32 %v667, 2147483648
    %v710 = vor.u32 1.1754944e-38, %v709
    %v711 = vsel %vm708, %v710, %v706
    %v712 = vmul.f32 1.0, %v711
    %v713 = vtanh.pop %v655
    %v714 = vmul.f32 %v697, %v567
    %v715 = vmul.f32 %v682, %v713
    %v716 = vadd.f32 %v714, %v715
    %v717 = vtanh.pop %v716
    %v718 = vmul.f32 %v712, %v717
    %719 = vst [vmem:[#allocation10] sm:$0xff] %v716
    %720 = vst [vmem:[#allocation9] sm:$0xff] %v718
    %721 = vst [vmem:[#allocation2] sm:$0xff] %v718
    %v722 = vld [vmem:[#allocation9] sm:$0xff]
    %v723 = vld [vmem:[#allocation10] sm:$0xff]
    %s724 = scalar_lea.vmem [#allocation5], 32
    %v725 = vld [vmem:[%s724] sm:$0xff]
    %v726 = vld [vmem:[%s724 + $0x8] sm:$0xff]
    %v727 = vld [vmem:[%s724 + $0x10] sm:$0xff]
    %v728 = vld [vmem:[%s724 + $0x18] sm:$0xff]
    %729 = vmatpush.msra.mxu0 %v348
    %730 = vmatpush.msra.mxu0 %v344
    %731 = vmatpush.msra.mxu0 %v340
    %732 = vmatpush.msra.mxu0 %v336
    %733 = vmatpush.msra.mxu0 %v332
    %734 = vmatpush.msra.mxu0 %v328
    %735 = vmatpush.msra.mxu0 %v324
    %736 = vmatpush.msra.mxu0 %v320
    %737 = vmatpush.msra.mxu0 %v316
    %738 = vmatpush.msra.mxu0 %v312
    %739 = vmatpush.msra.mxu0 %v308
    %740 = vmatpush.msra.mxu0 %v304
    %741 = vmatpush.msra.mxu0 %v300
    %742 = vmatpush.msra.mxu0 %v296
    %743 = vmatpush.msra.mxu0 %v292
    %744 = vmatpush.msra.mxu0 %v288
    %745 = vmatmul.f32.gmra.mxu0 %v722
    %v746 = vpop.f32.mrf.mxu0
    %v747 = vadd.f32 0.0, %v746
    %748 = vdwg.mxu0
    %749 = vmatpush.msra.mxu0 %v349
    %750 = vmatpush.msra.mxu0 %v345
    %751 = vmatpush.msra.mxu0 %v341
    %752 = vmatpush.msra.mxu0 %v337
    %753 = vmatpush.msra.mxu0 %v333
    %754 = vmatpush.msra.mxu0 %v329
    %755 = vmatpush.msra.mxu0 %v325
    %756 = vmatpush.msra.mxu0 %v321
    %757 = vmatpush.msra.mxu0 %v317
    %758 = vmatpush.msra.mxu0 %v313
    %759 = vmatpush.msra.mxu0 %v309
    %760 = vmatpush.msra.mxu0 %v305
    %761 = vmatpush.msra.mxu0 %v301
    %762 = vmatpush.msra.mxu0 %v297
    %763 = vmatpush.msra.mxu0 %v293
    %764 = vmatpush.msra.mxu0 %v289
    %765 = vmatmul.f32.gmra.mxu0 %v722
    %v766 = vpop.f32.mrf.mxu0
    %v767 = vadd.f32 0.0, %v766
    %768 = vdwg.mxu0
    %769 = vmatpush.msra.mxu0 %v350
    %770 = vmatpush.msra.mxu0 %v346
    %771 = vmatpush.msra.mxu0 %v342
    %772 = vmatpush.msra.mxu0 %v338
    %773 = vmatpush.msra.mxu0 %v334
    %774 = vmatpush.msra.mxu0 %v330
    %775 = vmatpush.msra.mxu0 %v326
    %776 = vmatpush.msra.mxu0 %v322
    %777 = vmatpush.msra.mxu0 %v318
    %778 = vmatpush.msra.mxu0 %v314
    %779 = vmatpush.msra.mxu0 %v310
    %780 = vmatpush.msra.mxu0 %v306
    %781 = vmatpush.msra.mxu0 %v302
    %782 = vmatpush.msra.mxu0 %v298
    %783 = vmatpush.msra.mxu0 %v294
    %784 = vmatpush.msra.mxu0 %v290
    %785 = vmatmul.f32.gmra.mxu0 %v722
    %v786 = vpop.f32.mrf.mxu0
    %v787 = vadd.f32 0.0, %v786
    %788 = vdwg.mxu0
    %789 = vmatpush.msra.mxu0 %v351
    %790 = vmatpush.msra.mxu0 %v347
    %791 = vmatpush.msra.mxu0 %v343
    %792 = vmatpush.msra.mxu0 %v339
    %793 = vmatpush.msra.mxu0 %v335
    %794 = vmatpush.msra.mxu0 %v331
    %795 = vmatpush.msra.mxu0 %v327
    %796 = vmatpush.msra.mxu0 %v323
    %797 = vmatpush.msra.mxu0 %v319
    %798 = vmatpush.msra.mxu0 %v315
    %799 = vmatpush.msra.mxu0 %v311
    %800 = vmatpush.msra.mxu0 %v307
    %801 = vmatpush.msra.mxu0 %v303
    %802 = vmatpush.msra.mxu0 %v299
    %803 = vmatpush.msra.mxu0 %v295
    %804 = vmatpush.msra.mxu0 %v291
    %805 = vmatmul.f32.gmra.mxu0 %v722
    %v806 = vpop.f32.mrf.mxu0
    %v807 = vadd.f32 0.0, %v806
    %808 = vdwg.mxu0
    %v809 = vadd.f32 %v725, %v747
    %v810 = vadd.f32 %v726, %v767
    %v811 = vadd.f32 %v727, %v787
    %v812 = vadd.f32 %v728, %v807
    %v813 = vxor.u32 %v809, 2147483648
    %v814 = vxor.u32 %v810, 2147483648
    %v815 = vxor.u32 %v811, 2147483648
    %v816 = vmul.f32 %v813, 1.442695
    %v817 = vpow.pop %v816
    %v818 = vmul.f32 %v814, 1.442695
    %v819 = vpow.pop %v818
    %v820 = vmul.f32 %v815, 1.442695
    %v821 = vpow.pop %v820
    %v822 = vadd.f32 %v817, 1.0
    %v823 = vadd.f32 %v819, 1.0
    %v824 = vadd.f32 %v821, 1.0
    %v825 = vrcp.pop %v822
    %v826 = vmul.f32 %v822, %v825
    %v827 = vsub.f32 1.0, %v826
    %v828 = vmul.f32 %v825, %v827
    %v829 = vadd.f32 %v825, %v828
    %vm830 = vweird.f32 %v822
    %vm831 = vweird.f32 %v825
    %vm832 = vmor %vm830, %vm831
    %v833 = vsel %vm832, %v825, %v829
    %v834 = vand.u32 2147483647, %v822
    %vm835 = vcmp.eq.f32.partialorder %v834, 8.507059e+37
    %v836 = vand.u32 %v822, 2147483648
    %v837 = vor.u32 1.1754944e-38, %v836
    %v838 = vsel %vm835, %v837, %v833
    %v839 = vmul.f32 1.0, %v838
    %v840 = vrcp.pop %v823
    %v841 = vmul.f32 %v823, %v840
    %v842 = vsub.f32 1.0, %v841
    %v843 = vmul.f32 %v840, %v842
    %v844 = vadd.f32 %v840, %v843
    %vm845 = vweird.f32 %v823
    %vm846 = vweird.f32 %v840
    %vm847 = vmor %vm845, %vm846
    %v848 = vsel %vm847, %v840, %v844
    %v849 = vand.u32 2147483647, %v823
    %vm850 = vcmp.eq.f32.partialorder %v849, 8.507059e+37
    %v851 = vand.u32 %v823, 2147483648
    %v852 = vor.u32 1.1754944e-38, %v851
    %v853 = vsel %vm850, %v852, %v848
    %v854 = vmul.f32 1.0, %v853
    %v855 = vrcp.pop %v824
    %v856 = vmul.f32 %v824, %v855
    %v857 = vsub.f32 1.0, %v856
    %v858 = vmul.f32 %v855, %v857
    %v859 = vadd.f32 %v855, %v858
    %vm860 = vweird.f32 %v824
    %vm861 = vweird.f32 %v855
    %vm862 = vmor %vm860, %vm861
    %v863 = vsel %vm862, %v855, %v859
    %v864 = vand.u32 2147483647, %v824
    %vm865 = vcmp.eq.f32.partialorder %v864, 8.507059e+37
    %v866 = vand.u32 %v824, 2147483648
    %v867 = vor.u32 1.1754944e-38, %v866
    %v868 = vsel %vm865, %v867, %v863
    %v869 = vmul.f32 1.0, %v868
    %v870 = vtanh.pop %v812
    %v871 = vmul.f32 %v854, %v723
    %v872 = vmul.f32 %v839, %v870
    %v873 = vadd.f32 %v871, %v872
    %v874 = vtanh.pop %v873
    %v875 = vmul.f32 %v869, %v874
    %876 = vst [vmem:[#allocation10] sm:$0xff] %v873
    %877 = vst [vmem:[#allocation9] sm:$0xff] %v875
    %s878 = scalar_lea.vmem [#allocation2], 8
    %879 = vst [vmem:[%s878] sm:$0xff] %v875
    %v880 = vld [vmem:[#allocation9] sm:$0xff]
    %v881 = vld [vmem:[#allocation10] sm:$0xff]
    %s882 = scalar_lea.vmem [#allocation5], 64
    %v883 = vld [vmem:[%s882] sm:$0xff]
    %v884 = vld [vmem:[%s882 + $0x8] sm:$0xff]
    %v885 = vld [vmem:[%s882 + $0x10] sm:$0xff]
    %v886 = vld [vmem:[%s882 + $0x18] sm:$0xff]
    %887 = vmatpush.msra.mxu0 %v348
    %888 = vmatpush.msra.mxu0 %v344
    %889 = vmatpush.msra.mxu0 %v340
    %890 = vmatpush.msra.mxu0 %v336
    %891 = vmatpush.msra.mxu0 %v332
    %892 = vmatpush.msra.mxu0 %v328
    %893 = vmatpush.msra.mxu0 %v324
    %894 = vmatpush.msra.mxu0 %v320
    %895 = vmatpush.msra.mxu0 %v316
    %896 = vmatpush.msra.mxu0 %v312
    %897 = vmatpush.msra.mxu0 %v308
    %898 = vmatpush.msra.mxu0 %v304
    %899 = vmatpush.msra.mxu0 %v300
    %900 = vmatpush.msra.mxu0 %v296
    %901 = vmatpush.msra.mxu0 %v292
    %902 = vmatpush.msra.mxu0 %v288
    %903 = vmatmul.f32.gmra.mxu0 %v880
    %v904 = vpop.f32.mrf.mxu0
    %v905 = vadd.f32 0.0, %v904
    %906 = vdwg.mxu0
    %907 = vmatpush.msra.mxu0 %v349
    %908 = vmatpush.msra.mxu0 %v345
    %909 = vmatpush.msra.mxu0 %v341
    %910 = vmatpush.msra.mxu0 %v337
    %911 = vmatpush.msra.mxu0 %v333
    %912 = vmatpush.msra.mxu0 %v329
    %913 = vmatpush.msra.mxu0 %v325
    %914 = vmatpush.msra.mxu0 %v321
    %915 = vmatpush.msra.mxu0 %v317
    %916 = vmatpush.msra.mxu0 %v313
    %917 = vmatpush.msra.mxu0 %v309
    %918 = vmatpush.msra.mxu0 %v305
    %919 = vmatpush.msra.mxu0 %v301
    %920 = vmatpush.msra.mxu0 %v297
    %921 = vmatpush.msra.mxu0 %v293
    %922 = vmatpush.msra.mxu0 %v289
    %923 = vmatmul.f32.gmra.mxu0 %v880
    %v924 = vpop.f32.mrf.mxu0
    %v925 = vadd.f32 0.0, %v924
    %926 = vdwg.mxu0
    %927 = vmatpush.msra.mxu0 %v350
    %928 = vmatpush.msra.mxu0 %v346
    %929 = vmatpush.msra.mxu0 %v342
    %930 = vmatpush.msra.mxu0 %v338
    %931 = vmatpush.msra.mxu0 %v334
    %932 = vmatpush.msra.mxu0 %v330
    %933 = vmatpush.msra.mxu0 %v326
    %934 = vmatpush.msra.mxu0 %v322
    %935 = vmatpush.msra.mxu0 %v318
    %936 = vmatpush.msra.mxu0 %v314
    %937 = vmatpush.msra.mxu0 %v310
    %938 = vmatpush.msra.mxu0 %v306
    %939 = vmatpush.msra.mxu0 %v302
    %940 = vmatpush.msra.mxu0 %v298
    %941 = vmatpush.msra.mxu0 %v294
    %942 = vmatpush.msra.mxu0 %v290
    %943 = vmatmul.f32.gmra.mxu0 %v880
    %v944 = vpop.f32.mrf.mxu0
    %v945 = vadd.f32 0.0, %v944
    %946 = vdwg.mxu0
    %947 = vmatpush.msra.mxu0 %v351
    %948 = vmatpush.msra.mxu0 %v347
    %949 = vmatpush.msra.mxu0 %v343
    %950 = vmatpush.msra.mxu0 %v339
    %951 = vmatpush.msra.mxu0 %v335
    %952 = vmatpush.msra.mxu0 %v331
    %953 = vmatpush.msra.mxu0 %v327
    %954 = vmatpush.msra.mxu0 %v323
    %955 = vmatpush.msra.mxu0 %v319
    %956 = vmatpush.msra.mxu0 %v315
    %957 = vmatpush.msra.mxu0 %v311
    %958 = vmatpush.msra.mxu0 %v307
    %959 = vmatpush.msra.mxu0 %v303
    %960 = vmatpush.msra.mxu0 %v299
    %961 = vmatpush.msra.mxu0 %v295
    %962 = vmatpush.msra.mxu0 %v291
    %963 = vmatmul.f32.gmra.mxu0 %v880
    %v964 = vpop.f32.mrf.mxu0
    %v965 = vadd.f32 0.0, %v964
    %966 = vdwg.mxu0
    %v967 = vadd.f32 %v883, %v905
    %v968 = vadd.f32 %v884, %v925
    %v969 = vadd.f32 %v885, %v945
    %v970 = vadd.f32 %v886, %v965
    %v971 = vxor.u32 %v967, 2147483648
    %v972 = vxor.u32 %v968, 2147483648
    %v973 = vxor.u32 %v969, 2147483648
    %v974 = vmul.f32 %v971, 1.442695
    %v975 = vpow.pop %v974
    %v976 = vmul.f32 %v972, 1.442695
    %v977 = vpow.pop %v976
    %v978 = vmul.f32 %v973, 1.442695
    %v979 = vpow.pop %v978
    %v980 = vadd.f32 %v975, 1.0
    %v981 = vadd.f32 %v977, 1.0
    %v982 = vadd.f32 %v979, 1.0
    %v983 = vrcp.pop %v980
    %v984 = vmul.f32 %v980, %v983
    %v985 = vsub.f32 1.0, %v984
    %v986 = vmul.f32 %v983, %v985
    %v987 = vadd.f32 %v983, %v986
    %vm988 = vweird.f32 %v980
    %vm989 = vweird.f32 %v983
    %vm990 = vmor %vm988, %vm989
    %v991 = vsel %vm990, %v983, %v987
    %v992 = vand.u32 2147483647, %v980
    %vm993 = vcmp.eq.f32.partialorder %v992, 8.507059e+37
    %v994 = vand.u32 %v980, 2147483648
    %v995 = vor.u32 1.1754944e-38, %v994
    %v996 = vsel %vm993, %v995, %v991
    %v997 = vmul.f32 1.0, %v996
    %v998 = vrcp.pop %v981
    %v999 = vmul.f32 %v981, %v998
    %v1000 = vsub.f32 1.0, %v999
    %v1001 = vmul.f32 %v998, %v1000
    %v1002 = vadd.f32 %v998, %v1001
    %vm1003 = vweird.f32 %v981
    %vm1004 = vweird.f32 %v998
    %vm1005 = vmor %vm1003, %vm1004
    %v1006 = vsel %vm1005, %v998, %v1002
    %v1007 = vand.u32 2147483647, %v981
    %vm1008 = vcmp.eq.f32.partialorder %v1007, 8.507059e+37
    %v1009 = vand.u32 %v981, 2147483648
    %v1010 = vor.u32 1.1754944e-38, %v1009
    %v1011 = vsel %vm1008, %v1010, %v1006
    %v1012 = vmul.f32 1.0, %v1011
    %v1013 = vrcp.pop %v982
    %v1014 = vmul.f32 %v982, %v1013
    %v1015 = vsub.f32 1.0, %v1014
    %v1016 = vmul.f32 %v1013, %v1015
    %v1017 = vadd.f32 %v1013, %v1016
    %vm1018 = vweird.f32 %v982
    %vm1019 = vweird.f32 %v1013
    %vm1020 = vmor %vm1018, %vm1019
    %v1021 = vsel %vm1020, %v1013, %v1017
    %v1022 = vand.u32 2147483647, %v982
    %vm1023 = vcmp.eq.f32.partialorder %v1022, 8.507059e+37
    %v1024 = vand.u32 %v982, 2147483648
    %v1025 = vor.u32 1.1754944e-38, %v1024
    %v1026 = vsel %vm1023, %v1025, %v1021
    %v1027 = vmul.f32 1.0, %v1026
    %v1028 = vtanh.pop %v970
    %v1029 = vmul.f32 %v1012, %v881
    %v1030 = vmul.f32 %v997, %v1028
    %v1031 = vadd.f32 %v1029, %v1030
    %v1032 = vtanh.pop %v1031
    %v1033 = vmul.f32 %v1027, %v1032
    %1034 = vst [vmem:[#allocation10] sm:$0xff] %v1031
    %1035 = vst [vmem:[#allocation9] sm:$0xff] %v1033
    %s1036 = scalar_lea.vmem [#allocation2], 16
    %1037 = vst [vmem:[%s1036] sm:$0xff] %v1033
    %v1038 = vld [vmem:[#allocation9] sm:$0xff]
    %v1039 = vld [vmem:[#allocation10] sm:$0xff]
    %s1040 = scalar_lea.vmem [#allocation5], 96
    %v1041 = vld [vmem:[%s1040] sm:$0xff]
    %v1042 = vld [vmem:[%s1040 + $0x8] sm:$0xff]
    %v1043 = vld [vmem:[%s1040 + $0x10] sm:$0xff]
    %v1044 = vld [vmem:[%s1040 + $0x18] sm:$0xff]
    %1045 = vmatpush.msra.mxu0 %v348
    %1046 = vmatpush.msra.mxu0 %v344
    %1047 = vmatpush.msra.mxu0 %v340
    %1048 = vmatpush.msra.mxu0 %v336
    %1049 = vmatpush.msra.mxu0 %v332
    %1050 = vmatpush.msra.mxu0 %v328
    %1051 = vmatpush.msra.mxu0 %v324
    %1052 = vmatpush.msra.mxu0 %v320
    %1053 = vmatpush.msra.mxu0 %v316
    %1054 = vmatpush.msra.mxu0 %v312
    %1055 = vmatpush.msra.mxu0 %v308
    %1056 = vmatpush.msra.mxu0 %v304
    %1057 = vmatpush.msra.mxu0 %v300
    %1058 = vmatpush.msra.mxu0 %v296
    %1059 = vmatpush.msra.mxu0 %v292
    %1060 = vmatpush.msra.mxu0 %v288
    %1061 = vmatmul.f32.gmra.mxu0 %v1038
    %v1062 = vpop.f32.mrf.mxu0
    %v1063 = vadd.f32 0.0, %v1062
    %1064 = vdwg.mxu0
    %1065 = vmatpush.msra.mxu0 %v349
    %1066 = vmatpush.msra.mxu0 %v345
    %1067 = vmatpush.msra.mxu0 %v341
    %1068 = vmatpush.msra.mxu0 %v337
    %1069 = vmatpush.msra.mxu0 %v333
    %1070 = vmatpush.msra.mxu0 %v329
    %1071 = vmatpush.msra.mxu0 %v325
    %1072 = vmatpush.msra.mxu0 %v321
    %1073 = vmatpush.msra.mxu0 %v317
    %1074 = vmatpush.msra.mxu0 %v313
    %1075 = vmatpush.msra.mxu0 %v309
    %1076 = vmatpush.msra.mxu0 %v305
    %1077 = vmatpush.msra.mxu0 %v301
    %1078 = vmatpush.msra.mxu0 %v297
    %1079 = vmatpush.msra.mxu0 %v293
    %1080 = vmatpush.msra.mxu0 %v289
    %1081 = vmatmul.f32.gmra.mxu0 %v1038
    %v1082 = vpop.f32.mrf.mxu0
    %v1083 = vadd.f32 0.0, %v1082
    %1084 = vdwg.mxu0
    %1085 = vmatpush.msra.mxu0 %v350
    %1086 = vmatpush.msra.mxu0 %v346
    %1087 = vmatpush.msra.mxu0 %v342
    %1088 = vmatpush.msra.mxu0 %v338
    %1089 = vmatpush.msra.mxu0 %v334
    %1090 = vmatpush.msra.mxu0 %v330
    %1091 = vmatpush.msra.mxu0 %v326
    %1092 = vmatpush.msra.mxu0 %v322
    %1093 = vmatpush.msra.mxu0 %v318
    %1094 = vmatpush.msra.mxu0 %v314
    %1095 = vmatpush.msra.mxu0 %v310
    %1096 = vmatpush.msra.mxu0 %v306
    %1097 = vmatpush.msra.mxu0 %v302
    %1098 = vmatpush.msra.mxu0 %v298
    %1099 = vmatpush.msra.mxu0 %v294
    %1100 = vmatpush.msra.mxu0 %v290
    %1101 = vmatmul.f32.gmra.mxu0 %v1038
    %v1102 = vpop.f32.mrf.mxu0
    %v1103 = vadd.f32 0.0, %v1102
    %1104 = vdwg.mxu0
    %1105 = vmatpush.msra.mxu0 %v351
    %1106 = vmatpush.msra.mxu0 %v347
    %1107 = vmatpush.msra.mxu0 %v343
    %1108 = vmatpush.msra.mxu0 %v339
    %1109 = vmatpush.msra.mxu0 %v335
    %1110 = vmatpush.msra.mxu0 %v331
    %1111 = vmatpush.msra.mxu0 %v327
    %1112 = vmatpush.msra.mxu0 %v323
    %1113 = vmatpush.msra.mxu0 %v319
    %1114 = vmatpush.msra.mxu0 %v315
    %1115 = vmatpush.msra.mxu0 %v311
    %1116 = vmatpush.msra.mxu0 %v307
    %1117 = vmatpush.msra.mxu0 %v303
    %1118 = vmatpush.msra.mxu0 %v299
    %1119 = vmatpush.msra.mxu0 %v295
    %1120 = vmatpush.msra.mxu0 %v291
    %1121 = vmatmul.f32.gmra.mxu0 %v1038
    %v1122 = vpop.f32.mrf.mxu0
    %v1123 = vadd.f32 0.0, %v1122
    %1124 = vdwg.mxu0
    %v1125 = vadd.f32 %v1041, %v1063
    %v1126 = vadd.f32 %v1042, %v1083
    %v1127 = vadd.f32 %v1043, %v1103
    %v1128 = vadd.f32 %v1044, %v1123
    %v1129 = vxor.u32 %v1125, 2147483648
    %v1130 = vxor.u32 %v1126, 2147483648
    %v1131 = vxor.u32 %v1127, 2147483648
    %v1132 = vmul.f32 %v1129, 1.442695
    %v1133 = vpow.pop %v1132
    %v1134 = vmul.f32 %v1130, 1.442695
    %v1135 = vpow.pop %v1134
    %v1136 = vmul.f32 %v1131, 1.442695
    %v1137 = vpow.pop %v1136
    %v1138 = vadd.f32 %v1133, 1.0
    %v1139 = vadd.f32 %v1135, 1.0
    %v1140 = vadd.f32 %v1137, 1.0
    %v1141 = vrcp.pop %v1138
    %v1142 = vmul.f32 %v1138, %v1141
    %v1143 = vsub.f32 1.0, %v1142
    %v1144 = vmul.f32 %v1141, %v1143
    %v1145 = vadd.f32 %v1141, %v1144
    %vm1146 = vweird.f32 %v1138
    %vm1147 = vweird.f32 %v1141
    %vm1148 = vmor %vm1146, %vm1147
    %v1149 = vsel %vm1148, %v1141, %v1145
    %v1150 = vand.u32 2147483647, %v1138
    %vm1151 = vcmp.eq.f32.partialorder %v1150, 8.507059e+37
    %v1152 = vand.u32 %v1138, 2147483648
    %v1153 = vor.u32 1.1754944e-38, %v1152
    %v1154 = vsel %vm1151, %v1153, %v1149
    %v1155 = vmul.f32 1.0, %v1154
    %v1156 = vrcp.pop %v1139
    %v1157 = vmul.f32 %v1139, %v1156
    %v1158 = vsub.f32 1.0, %v1157
    %v1159 = vmul.f32 %v1156, %v1158
    %v1160 = vadd.f32 %v1156, %v1159
    %vm1161 = vweird.f32 %v1139
    %vm1162 = vweird.f32 %v1156
    %vm1163 = vmor %vm1161, %vm1162
    %v1164 = vsel %vm1163, %v1156, %v1160
    %v1165 = vand.u32 2147483647, %v1139
    %vm1166 = vcmp.eq.f32.partialorder %v1165, 8.507059e+37
    %v1167 = vand.u32 %v1139, 2147483648
    %v1168 = vor.u32 1.1754944e-38, %v1167
    %v1169 = vsel %vm1166, %v1168, %v1164
    %v1170 = vmul.f32 1.0, %v1169
    %v1171 = vrcp.pop %v1140
    %v1172 = vmul.f32 %v1140, %v1171
    %v1173 = vsub.f32 1.0, %v1172
    %v1174 = vmul.f32 %v1171, %v1173
    %v1175 = vadd.f32 %v1171, %v1174
    %vm1176 = vweird.f32 %v1140
    %vm1177 = vweird.f32 %v1171
    %vm1178 = vmor %vm1176, %vm1177
    %v1179 = vsel %vm1178, %v1171, %v1175
    %v1180 = vand.u32 2147483647, %v1140
    %vm1181 = vcmp.eq.f32.partialorder %v1180, 8.507059e+37
    %v1182 = vand.u32 %v1140, 2147483648
    %v1183 = vor.u32 1.1754944e-38, %v1182
    %v1184 = vsel %vm1181, %v1183, %v1179
    %v1185 = vmul.f32 1.0, %v1184
    %v1186 = vtanh.pop %v1128
    %v1187 = vmul.f32 %v1170, %v1039
    %v1188 = vmul.f32 %v1155, %v1186
    %v1189 = vadd.f32 %v1187, %v1188
    %v1190 = vtanh.pop %v1189
    %v1191 = vmul.f32 %v1185, %v1190
    %1192 = vst [vmem:[#allocation10] sm:$0xff] %v1189
    %1193 = vst [vmem:[#allocation9] sm:$0xff] %v1191
    %s1194 = scalar_lea.vmem [#allocation2], 24
    %1195 = vst [vmem:[%s1194] sm:$0xff] %v1191
    %v1196 = vld [vmem:[#allocation9] sm:$0xff]
    %v1197 = vld [vmem:[#allocation10] sm:$0xff]
    %s1198 = scalar_lea.vmem [#allocation5], 128
    %v1199 = vld [vmem:[%s1198] sm:$0xff]
    %v1200 = vld [vmem:[%s1198 + $0x8] sm:$0xff]
    %v1201 = vld [vmem:[%s1198 + $0x10] sm:$0xff]
    %v1202 = vld [vmem:[%s1198 + $0x18] sm:$0xff]
    %1203 = vmatpush.msra.mxu0 %v348
    %1204 = vmatpush.msra.mxu0 %v344
    %1205 = vmatpush.msra.mxu0 %v340
    %1206 = vmatpush.msra.mxu0 %v336
    %1207 = vmatpush.msra.mxu0 %v332
    %1208 = vmatpush.msra.mxu0 %v328
    %1209 = vmatpush.msra.mxu0 %v324
    %1210 = vmatpush.msra.mxu0 %v320
    %1211 = vmatpush.msra.mxu0 %v316
    %1212 = vmatpush.msra.mxu0 %v312
    %1213 = vmatpush.msra.mxu0 %v308
    %1214 = vmatpush.msra.mxu0 %v304
    %1215 = vmatpush.msra.mxu0 %v300
    %1216 = vmatpush.msra.mxu0 %v296
    %1217 = vmatpush.msra.mxu0 %v292
    %1218 = vmatpush.msra.mxu0 %v288
    %1219 = vmatmul.f32.gmra.mxu0 %v1196
    %v1220 = vpop.f32.mrf.mxu0
    %v1221 = vadd.f32 0.0, %v1220
    %1222 = vdwg.mxu0
    %1223 = vmatpush.msra.mxu0 %v349
    %1224 = vmatpush.msra.mxu0 %v345
    %1225 = vmatpush.msra.mxu0 %v341
    %1226 = vmatpush.msra.mxu0 %v337
    %1227 = vmatpush.msra.mxu0 %v333
    %1228 = vmatpush.msra.mxu0 %v329
    %1229 = vmatpush.msra.mxu0 %v325
    %1230 = vmatpush.msra.mxu0 %v321
    %1231 = vmatpush.msra.mxu0 %v317
    %1232 = vmatpush.msra.mxu0 %v313
    %1233 = vmatpush.msra.mxu0 %v309
    %1234 = vmatpush.msra.mxu0 %v305
    %1235 = vmatpush.msra.mxu0 %v301
    %1236 = vmatpush.msra.mxu0 %v297
    %1237 = vmatpush.msra.mxu0 %v293
    %1238 = vmatpush.msra.mxu0 %v289
    %1239 = vmatmul.f32.gmra.mxu0 %v1196
    %v1240 = vpop.f32.mrf.mxu0
    %v1241 = vadd.f32 0.0, %v1240
    %1242 = vdwg.mxu0
    %1243 = vmatpush.msra.mxu0 %v350
    %1244 = vmatpush.msra.mxu0 %v346
    %1245 = vmatpush.msra.mxu0 %v342
    %1246 = vmatpush.msra.mxu0 %v338
    %1247 = vmatpush.msra.mxu0 %v334
    %1248 = vmatpush.msra.mxu0 %v330
    %1249 = vmatpush.msra.mxu0 %v326
    %1250 = vmatpush.msra.mxu0 %v322
    %1251 = vmatpush.msra.mxu0 %v318
    %1252 = vmatpush.msra.mxu0 %v314
    %1253 = vmatpush.msra.mxu0 %v310
    %1254 = vmatpush.msra.mxu0 %v306
    %1255 = vmatpush.msra.mxu0 %v302
    %1256 = vmatpush.msra.mxu0 %v298
    %1257 = vmatpush.msra.mxu0 %v294
    %1258 = vmatpush.msra.mxu0 %v290
    %1259 = vmatmul.f32.gmra.mxu0 %v1196
    %v1260 = vpop.f32.mrf.mxu0
    %v1261 = vadd.f32 0.0, %v1260
    %1262 = vdwg.mxu0
    %1263 = vmatpush.msra.mxu0 %v351
    %1264 = vmatpush.msra.mxu0 %v347
    %1265 = vmatpush.msra.mxu0 %v343
    %1266 = vmatpush.msra.mxu0 %v339
    %1267 = vmatpush.msra.mxu0 %v335
    %1268 = vmatpush.msra.mxu0 %v331
    %1269 = vmatpush.msra.mxu0 %v327
    %1270 = vmatpush.msra.mxu0 %v323
    %1271 = vmatpush.msra.mxu0 %v319
    %1272 = vmatpush.msra.mxu0 %v315
    %1273 = vmatpush.msra.mxu0 %v311
    %1274 = vmatpush.msra.mxu0 %v307
    %1275 = vmatpush.msra.mxu0 %v303
    %1276 = vmatpush.msra.mxu0 %v299
    %1277 = vmatpush.msra.mxu0 %v295
    %1278 = vmatpush.msra.mxu0 %v291
    %1279 = vmatmul.f32.gmra.mxu0 %v1196
    %v1280 = vpop.f32.mrf.mxu0
    %v1281 = vadd.f32 0.0, %v1280
    %1282 = vdwg.mxu0
    %v1283 = vadd.f32 %v1199, %v1221
    %v1284 = vadd.f32 %v1200, %v1241
    %v1285 = vadd.f32 %v1201, %v1261
    %v1286 = vadd.f32 %v1202, %v1281
    %v1287 = vxor.u32 %v1283, 2147483648
    %v1288 = vxor.u32 %v1284, 2147483648
    %v1289 = vxor.u32 %v1285, 2147483648
    %v1290 = vmul.f32 %v1287, 1.442695
    %v1291 = vpow.pop %v1290
    %v1292 = vmul.f32 %v1288, 1.442695
    %v1293 = vpow.pop %v1292
    %v1294 = vmul.f32 %v1289, 1.442695
    %v1295 = vpow.pop %v1294
    %v1296 = vadd.f32 %v1291, 1.0
    %v1297 = vadd.f32 %v1293, 1.0
    %v1298 = vadd.f32 %v1295, 1.0
    %v1299 = vrcp.pop %v1296
    %v1300 = vmul.f32 %v1296, %v1299
    %v1301 = vsub.f32 1.0, %v1300
    %v1302 = vmul.f32 %v1299, %v1301
    %v1303 = vadd.f32 %v1299, %v1302
    %vm1304 = vweird.f32 %v1296
    %vm1305 = vweird.f32 %v1299
    %vm1306 = vmor %vm1304, %vm1305
    %v1307 = vsel %vm1306, %v1299, %v1303
    %v1308 = vand.u32 2147483647, %v1296
    %vm1309 = vcmp.eq.f32.partialorder %v1308, 8.507059e+37
    %v1310 = vand.u32 %v1296, 2147483648
    %v1311 = vor.u32 1.1754944e-38, %v1310
    %v1312 = vsel %vm1309, %v1311, %v1307
    %v1313 = vmul.f32 1.0, %v1312
    %v1314 = vrcp.pop %v1297
    %v1315 = vmul.f32 %v1297, %v1314
    %v1316 = vsub.f32 1.0, %v1315
    %v1317 = vmul.f32 %v1314, %v1316
    %v1318 = vadd.f32 %v1314, %v1317
    %vm1319 = vweird.f32 %v1297
    %vm1320 = vweird.f32 %v1314
    %vm1321 = vmor %vm1319, %vm1320
    %v1322 = vsel %vm1321, %v1314, %v1318
    %v1323 = vand.u32 2147483647, %v1297
    %vm1324 = vcmp.eq.f32.partialorder %v1323, 8.507059e+37
    %v1325 = vand.u32 %v1297, 2147483648
    %v1326 = vor.u32 1.1754944e-38, %v1325
    %v1327 = vsel %vm1324, %v1326, %v1322
    %v1328 = vmul.f32 1.0, %v1327
    %v1329 = vrcp.pop %v1298
    %v1330 = vmul.f32 %v1298, %v1329
    %v1331 = vsub.f32 1.0, %v1330
    %v1332 = vmul.f32 %v1329, %v1331
    %v1333 = vadd.f32 %v1329, %v1332
    %vm1334 = vweird.f32 %v1298
    %vm1335 = vweird.f32 %v1329
    %vm1336 = vmor %vm1334, %vm1335
    %v1337 = vsel %vm1336, %v1329, %v1333
    %v1338 = vand.u32 2147483647, %v1298
    %vm1339 = vcmp.eq.f32.partialorder %v1338, 8.507059e+37
    %v1340 = vand.u32 %v1298, 2147483648
    %v1341 = vor.u32 1.1754944e-38, %v1340
    %v1342 = vsel %vm1339, %v1341, %v1337
    %v1343 = vmul.f32 1.0, %v1342
    %v1344 = vtanh.pop %v1286
    %v1345 = vmul.f32 %v1328, %v1197
    %v1346 = vmul.f32 %v1313, %v1344
    %v1347 = vadd.f32 %v1345, %v1346
    %v1348 = vtanh.pop %v1347
    %v1349 = vmul.f32 %v1343, %v1348
    %1350 = vst [vmem:[#allocation10] sm:$0xff] %v1347
    %1351 = vst [vmem:[#allocation9] sm:$0xff] %v1349
    %s1352 = scalar_lea.vmem [#allocation2], 32
    %1353 = vst [vmem:[%s1352] sm:$0xff] %v1349
    %v1354 = vld [vmem:[#allocation9] sm:$0xff]
    %v1355 = vld [vmem:[#allocation10] sm:$0xff]
    %s1356 = scalar_lea.vmem [#allocation5], 160
    %v1357 = vld [vmem:[%s1356] sm:$0xff]
    %v1358 = vld [vmem:[%s1356 + $0x8] sm:$0xff]
    %v1359 = vld [vmem:[%s1356 + $0x10] sm:$0xff]
    %v1360 = vld [vmem:[%s1356 + $0x18] sm:$0xff]
    %1361 = vmatpush.msra.mxu0 %v348
    %1362 = vmatpush.msra.mxu0 %v344
    %1363 = vmatpush.msra.mxu0 %v340
    %1364 = vmatpush.msra.mxu0 %v336
    %1365 = vmatpush.msra.mxu0 %v332
    %1366 = vmatpush.msra.mxu0 %v328
    %1367 = vmatpush.msra.mxu0 %v324
    %1368 = vmatpush.msra.mxu0 %v320
    %1369 = vmatpush.msra.mxu0 %v316
    %1370 = vmatpush.msra.mxu0 %v312
    %1371 = vmatpush.msra.mxu0 %v308
    %1372 = vmatpush.msra.mxu0 %v304
    %1373 = vmatpush.msra.mxu0 %v300
    %1374 = vmatpush.msra.mxu0 %v296
    %1375 = vmatpush.msra.mxu0 %v292
    %1376 = vmatpush.msra.mxu0 %v288
    %1377 = vmatmul.f32.gmra.mxu0 %v1354
    %v1378 = vpop.f32.mrf.mxu0
    %v1379 = vadd.f32 0.0, %v1378
    %1380 = vdwg.mxu0
    %1381 = vmatpush.msra.mxu0 %v349
    %1382 = vmatpush.msra.mxu0 %v345
    %1383 = vmatpush.msra.mxu0 %v341
    %1384 = vmatpush.msra.mxu0 %v337
    %1385 = vmatpush.msra.mxu0 %v333
    %1386 = vmatpush.msra.mxu0 %v329
    %1387 = vmatpush.msra.mxu0 %v325
    %1388 = vmatpush.msra.mxu0 %v321
    %1389 = vmatpush.msra.mxu0 %v317
    %1390 = vmatpush.msra.mxu0 %v313
    %1391 = vmatpush.msra.mxu0 %v309
    %1392 = vmatpush.msra.mxu0 %v305
    %1393 = vmatpush.msra.mxu0 %v301
    %1394 = vmatpush.msra.mxu0 %v297
    %1395 = vmatpush.msra.mxu0 %v293
    %1396 = vmatpush.msra.mxu0 %v289
    %1397 = vmatmul.f32.gmra.mxu0 %v1354
    %v1398 = vpop.f32.mrf.mxu0
    %v1399 = vadd.f32 0.0, %v1398
    %1400 = vdwg.mxu0
    %1401 = vmatpush.msra.mxu0 %v350
    %1402 = vmatpush.msra.mxu0 %v346
    %1403 = vmatpush.msra.mxu0 %v342
    %1404 = vmatpush.msra.mxu0 %v338
    %1405 = vmatpush.msra.mxu0 %v334
    %1406 = vmatpush.msra.mxu0 %v330
    %1407 = vmatpush.msra.mxu0 %v326
    %1408 = vmatpush.msra.mxu0 %v322
    %1409 = vmatpush.msra.mxu0 %v318
    %1410 = vmatpush.msra.mxu0 %v314
    %1411 = vmatpush.msra.mxu0 %v310
    %1412 = vmatpush.msra.mxu0 %v306
    %1413 = vmatpush.msra.mxu0 %v302
    %1414 = vmatpush.msra.mxu0 %v298
    %1415 = vmatpush.msra.mxu0 %v294
    %1416 = vmatpush.msra.mxu0 %v290
    %1417 = vmatmul.f32.gmra.mxu0 %v1354
    %v1418 = vpop.f32.mrf.mxu0
    %v1419 = vadd.f32 0.0, %v1418
    %1420 = vdwg.mxu0
    %1421 = vmatpush.msra.mxu0 %v351
    %1422 = vmatpush.msra.mxu0 %v347
    %1423 = vmatpush.msra.mxu0 %v343
    %1424 = vmatpush.msra.mxu0 %v339
    %1425 = vmatpush.msra.mxu0 %v335
    %1426 = vmatpush.msra.mxu0 %v331
    %1427 = vmatpush.msra.mxu0 %v327
    %1428 = vmatpush.msra.mxu0 %v323
    %1429 = vmatpush.msra.mxu0 %v319
    %1430 = vmatpush.msra.mxu0 %v315
    %1431 = vmatpush.msra.mxu0 %v311
    %1432 = vmatpush.msra.mxu0 %v307
    %1433 = vmatpush.msra.mxu0 %v303
    %1434 = vmatpush.msra.mxu0 %v299
    %1435 = vmatpush.msra.mxu0 %v295
    %1436 = vmatpush.msra.mxu0 %v291
    %1437 = vmatmul.f32.gmra.mxu0 %v1354
    %v1438 = vpop.f32.mrf.mxu0
    %v1439 = vadd.f32 0.0, %v1438
    %1440 = vdwg.mxu0
    %v1441 = vadd.f32 %v1357, %v1379
    %v1442 = vadd.f32 %v1358, %v1399
    %v1443 = vadd.f32 %v1359, %v1419
    %v1444 = vadd.f32 %v1360, %v1439
    %v1445 = vxor.u32 %v1441, 2147483648
    %v1446 = vxor.u32 %v1442, 2147483648
    %v1447 = vxor.u32 %v1443, 2147483648
    %v1448 = vmul.f32 %v1445, 1.442695
    %v1449 = vpow.pop %v1448
    %v1450 = vmul.f32 %v1446, 1.442695
    %v1451 = vpow.pop %v1450
    %v1452 = vmul.f32 %v1447, 1.442695
    %v1453 = vpow.pop %v1452
    %v1454 = vadd.f32 %v1449, 1.0
    %v1455 = vadd.f32 %v1451, 1.0
    %v1456 = vadd.f32 %v1453, 1.0
    %v1457 = vrcp.pop %v1454
    %v1458 = vmul.f32 %v1454, %v1457
    %v1459 = vsub.f32 1.0, %v1458
    %v1460 = vmul.f32 %v1457, %v1459
    %v1461 = vadd.f32 %v1457, %v1460
    %vm1462 = vweird.f32 %v1454
    %vm1463 = vweird.f32 %v1457
    %vm1464 = vmor %vm1462, %vm1463
    %v1465 = vsel %vm1464, %v1457, %v1461
    %v1466 = vand.u32 2147483647, %v1454
    %vm1467 = vcmp.eq.f32.partialorder %v1466, 8.507059e+37
    %v1468 = vand.u32 %v1454, 2147483648
    %v1469 = vor.u32 1.1754944e-38, %v1468
    %v1470 = vsel %vm1467, %v1469, %v1465
    %v1471 = vmul.f32 1.0, %v1470
    %v1472 = vrcp.pop %v1455
    %v1473 = vmul.f32 %v1455, %v1472
    %v1474 = vsub.f32 1.0, %v1473
    %v1475 = vmul.f32 %v1472, %v1474
    %v1476 = vadd.f32 %v1472, %v1475
    %vm1477 = vweird.f32 %v1455
    %vm1478 = vweird.f32 %v1472
    %vm1479 = vmor %vm1477, %vm1478
    %v1480 = vsel %vm1479, %v1472, %v1476
    %v1481 = vand.u32 2147483647, %v1455
    %vm1482 = vcmp.eq.f32.partialorder %v1481, 8.507059e+37
    %v1483 = vand.u32 %v1455, 2147483648
    %v1484 = vor.u32 1.1754944e-38, %v1483
    %v1485 = vsel %vm1482, %v1484, %v1480
    %v1486 = vmul.f32 1.0, %v1485
    %v1487 = vrcp.pop %v1456
    %v1488 = vmul.f32 %v1456, %v1487
    %v1489 = vsub.f32 1.0, %v1488
    %v1490 = vmul.f32 %v1487, %v1489
    %v1491 = vadd.f32 %v1487, %v1490
    %vm1492 = vweird.f32 %v1456
    %vm1493 = vweird.f32 %v1487
    %vm1494 = vmor %vm1492, %vm1493
    %v1495 = vsel %vm1494, %v1487, %v1491
    %v1496 = vand.u32 2147483647, %v1456
    %vm1497 = vcmp.eq.f32.partialorder %v1496, 8.507059e+37
    %v1498 = vand.u32 %v1456, 2147483648
    %v1499 = vor.u32 1.1754944e-38, %v1498
    %v1500 = vsel %vm1497, %v1499, %v1495
    %v1501 = vmul.f32 1.0, %v1500
    %v1502 = vtanh.pop %v1444
    %v1503 = vmul.f32 %v1486, %v1355
    %v1504 = vmul.f32 %v1471, %v1502
    %v1505 = vadd.f32 %v1503, %v1504
    %v1506 = vtanh.pop %v1505
    %v1507 = vmul.f32 %v1501, %v1506
    %1508 = vst [vmem:[#allocation10] sm:$0xff] %v1505
    %1509 = vst [vmem:[#allocation9] sm:$0xff] %v1507
    %s1510 = scalar_lea.vmem [#allocation2], 40
    %1511 = vst [vmem:[%s1510] sm:$0xff] %v1507
    %v1512 = vld [vmem:[#allocation9] sm:$0xff]
    %v1513 = vld [vmem:[#allocation10] sm:$0xff]
    %s1514 = scalar_lea.vmem [#allocation5], 192
    %v1515 = vld [vmem:[%s1514] sm:$0xff]
    %v1516 = vld [vmem:[%s1514 + $0x8] sm:$0xff]
    %v1517 = vld [vmem:[%s1514 + $0x10] sm:$0xff]
    %v1518 = vld [vmem:[%s1514 + $0x18] sm:$0xff]
    %1519 = vmatpush.msra.mxu0 %v348
    %1520 = vmatpush.msra.mxu0 %v344
    %1521 = vmatpush.msra.mxu0 %v340
    %1522 = vmatpush.msra.mxu0 %v336
    %1523 = vmatpush.msra.mxu0 %v332
    %1524 = vmatpush.msra.mxu0 %v328
    %1525 = vmatpush.msra.mxu0 %v324
    %1526 = vmatpush.msra.mxu0 %v320
    %1527 = vmatpush.msra.mxu0 %v316
    %1528 = vmatpush.msra.mxu0 %v312
    %1529 = vmatpush.msra.mxu0 %v308
    %1530 = vmatpush.msra.mxu0 %v304
    %1531 = vmatpush.msra.mxu0 %v300
    %1532 = vmatpush.msra.mxu0 %v296
    %1533 = vmatpush.msra.mxu0 %v292
    %1534 = vmatpush.msra.mxu0 %v288
    %1535 = vmatmul.f32.gmra.mxu0 %v1512
    %v1536 = vpop.f32.mrf.mxu0
    %v1537 = vadd.f32 0.0, %v1536
    %1538 = vdwg.mxu0
    %1539 = vmatpush.msra.mxu0 %v349
    %1540 = vmatpush.msra.mxu0 %v345
    %1541 = vmatpush.msra.mxu0 %v341
    %1542 = vmatpush.msra.mxu0 %v337
    %1543 = vmatpush.msra.mxu0 %v333
    %1544 = vmatpush.msra.mxu0 %v329
    %1545 = vmatpush.msra.mxu0 %v325
    %1546 = vmatpush.msra.mxu0 %v321
    %1547 = vmatpush.msra.mxu0 %v317
    %1548 = vmatpush.msra.mxu0 %v313
    %1549 = vmatpush.msra.mxu0 %v309
    %1550 = vmatpush.msra.mxu0 %v305
    %1551 = vmatpush.msra.mxu0 %v301
    %1552 = vmatpush.msra.mxu0 %v297
    %1553 = vmatpush.msra.mxu0 %v293
    %1554 = vmatpush.msra.mxu0 %v289
    %1555 = vmatmul.f32.gmra.mxu0 %v1512
    %v1556 = vpop.f32.mrf.mxu0
    %v1557 = vadd.f32 0.0, %v1556
    %1558 = vdwg.mxu0
    %1559 = vmatpush.msra.mxu0 %v350
    %1560 = vmatpush.msra.mxu0 %v346
    %1561 = vmatpush.msra.mxu0 %v342
    %1562 = vmatpush.msra.mxu0 %v338
    %1563 = vmatpush.msra.mxu0 %v334
    %1564 = vmatpush.msra.mxu0 %v330
    %1565 = vmatpush.msra.mxu0 %v326
    %1566 = vmatpush.msra.mxu0 %v322
    %1567 = vmatpush.msra.mxu0 %v318
    %1568 = vmatpush.msra.mxu0 %v314
    %1569 = vmatpush.msra.mxu0 %v310
    %1570 = vmatpush.msra.mxu0 %v306
    %1571 = vmatpush.msra.mxu0 %v302
    %1572 = vmatpush.msra.mxu0 %v298
    %1573 = vmatpush.msra.mxu0 %v294
    %1574 = vmatpush.msra.mxu0 %v290
    %1575 = vmatmul.f32.gmra.mxu0 %v1512
    %v1576 = vpop.f32.mrf.mxu0
    %v1577 = vadd.f32 0.0, %v1576
    %1578 = vdwg.mxu0
    %1579 = vmatpush.msra.mxu0 %v351
    %1580 = vmatpush.msra.mxu0 %v347
    %1581 = vmatpush.msra.mxu0 %v343
    %1582 = vmatpush.msra.mxu0 %v339
    %1583 = vmatpush.msra.mxu0 %v335
    %1584 = vmatpush.msra.mxu0 %v331
    %1585 = vmatpush.msra.mxu0 %v327
    %1586 = vmatpush.msra.mxu0 %v323
    %1587 = vmatpush.msra.mxu0 %v319
    %1588 = vmatpush.msra.mxu0 %v315
    %1589 = vmatpush.msra.mxu0 %v311
    %1590 = vmatpush.msra.mxu0 %v307
    %1591 = vmatpush.msra.mxu0 %v303
    %1592 = vmatpush.msra.mxu0 %v299
    %1593 = vmatpush.msra.mxu0 %v295
    %1594 = vmatpush.msra.mxu0 %v291
    %1595 = vmatmul.f32.gmra.mxu0 %v1512
    %v1596 = vpop.f32.mrf.mxu0
    %v1597 = vadd.f32 0.0, %v1596
    %1598 = vdwg.mxu0
    %v1599 = vadd.f32 %v1515, %v1537
    %v1600 = vadd.f32 %v1516, %v1557
    %v1601 = vadd.f32 %v1517, %v1577
    %v1602 = vadd.f32 %v1518, %v1597
    %v1603 = vxor.u32 %v1599, 2147483648
    %v1604 = vxor.u32 %v1600, 2147483648
    %v1605 = vxor.u32 %v1601, 2147483648
    %v1606 = vmul.f32 %v1603, 1.442695
    %v1607 = vpow.pop %v1606
    %v1608 = vmul.f32 %v1604, 1.442695
    %v1609 = vpow.pop %v1608
    %v1610 = vmul.f32 %v1605, 1.442695
    %v1611 = vpow.pop %v1610
    %v1612 = vadd.f32 %v1607, 1.0
    %v1613 = vadd.f32 %v1609, 1.0
    %v1614 = vadd.f32 %v1611, 1.0
    %v1615 = vrcp.pop %v1612
    %v1616 = vmul.f32 %v1612, %v1615
    %v1617 = vsub.f32 1.0, %v1616
    %v1618 = vmul.f32 %v1615, %v1617
    %v1619 = vadd.f32 %v1615, %v1618
    %vm1620 = vweird.f32 %v1612
    %vm1621 = vweird.f32 %v1615
    %vm1622 = vmor %vm1620, %vm1621
    %v1623 = vsel %vm1622, %v1615, %v1619
    %v1624 = vand.u32 2147483647, %v1612
    %vm1625 = vcmp.eq.f32.partialorder %v1624, 8.507059e+37
    %v1626 = vand.u32 %v1612, 2147483648
    %v1627 = vor.u32 1.1754944e-38, %v1626
    %v1628 = vsel %vm1625, %v1627, %v1623
    %v1629 = vmul.f32 1.0, %v1628
    %v1630 = vrcp.pop %v1613
    %v1631 = vmul.f32 %v1613, %v1630
    %v1632 = vsub.f32 1.0, %v1631
    %v1633 = vmul.f32 %v1630, %v1632
    %v1634 = vadd.f32 %v1630, %v1633
    %vm1635 = vweird.f32 %v1613
    %vm1636 = vweird.f32 %v1630
    %vm1637 = vmor %vm1635, %vm1636
    %v1638 = vsel %vm1637, %v1630, %v1634
    %v1639 = vand.u32 2147483647, %v1613
    %vm1640 = vcmp.eq.f32.partialorder %v1639, 8.507059e+37
    %v1641 = vand.u32 %v1613, 2147483648
    %v1642 = vor.u32 1.1754944e-38, %v1641
    %v1643 = vsel %vm1640, %v1642, %v1638
    %v1644 = vmul.f32 1.0, %v1643
    %v1645 = vrcp.pop %v1614
    %v1646 = vmul.f32 %v1614, %v1645
    %v1647 = vsub.f32 1.0, %v1646
    %v1648 = vmul.f32 %v1645, %v1647
    %v1649 = vadd.f32 %v1645, %v1648
    %vm1650 = vweird.f32 %v1614
    %vm1651 = vweird.f32 %v1645
    %vm1652 = vmor %vm1650, %vm1651
    %v1653 = vsel %vm1652, %v1645, %v1649
    %v1654 = vand.u32 2147483647, %v1614
    %vm1655 = vcmp.eq.f32.partialorder %v1654, 8.507059e+37
    %v1656 = vand.u32 %v1614, 2147483648
    %v1657 = vor.u32 1.1754944e-38, %v1656
    %v1658 = vsel %vm1655, %v1657, %v1653
    %v1659 = vmul.f32 1.0, %v1658
    %v1660 = vtanh.pop %v1602
    %v1661 = vmul.f32 %v1644, %v1513
    %v1662 = vmul.f32 %v1629, %v1660
    %v1663 = vadd.f32 %v1661, %v1662
    %v1664 = vtanh.pop %v1663
    %v1665 = vmul.f32 %v1659, %v1664
    %1666 = vst [vmem:[#allocation10] sm:$0xff] %v1663
    %1667 = vst [vmem:[#allocation9] sm:$0xff] %v1665
    %s1668 = scalar_lea.vmem [#allocation2], 48
    %1669 = vst [vmem:[%s1668] sm:$0xff] %v1665
    %v1670 = vld [vmem:[#allocation9] sm:$0xff]
    %v1671 = vld [vmem:[#allocation10] sm:$0xff]
    %s1672 = scalar_lea.vmem [#allocation5], 224
    %v1673 = vld [vmem:[%s1672] sm:$0xff]
    %v1674 = vld [vmem:[%s1672 + $0x8] sm:$0xff]
    %v1675 = vld [vmem:[%s1672 + $0x10] sm:$0xff]
    %v1676 = vld [vmem:[%s1672 + $0x18] sm:$0xff]
    %1677 = vmatpush.msra.mxu0 %v348
    %1678 = vmatpush.msra.mxu0 %v344
    %1679 = vmatpush.msra.mxu0 %v340
    %1680 = vmatpush.msra.mxu0 %v336
    %1681 = vmatpush.msra.mxu0 %v332
    %1682 = vmatpush.msra.mxu0 %v328
    %1683 = vmatpush.msra.mxu0 %v324
    %1684 = vmatpush.msra.mxu0 %v320
    %1685 = vmatpush.msra.mxu0 %v316
    %1686 = vmatpush.msra.mxu0 %v312
    %1687 = vmatpush.msra.mxu0 %v308
    %1688 = vmatpush.msra.mxu0 %v304
    %1689 = vmatpush.msra.mxu0 %v300
    %1690 = vmatpush.msra.mxu0 %v296
    %1691 = vmatpush.msra.mxu0 %v292
    %1692 = vmatpush.msra.mxu0 %v288
    %1693 = vmatmul.f32.gmra.mxu0 %v1670
    %v1694 = vpop.f32.mrf.mxu0
    %v1695 = vadd.f32 0.0, %v1694
    %1696 = vdwg.mxu0
    %1697 = vmatpush.msra.mxu0 %v349
    %1698 = vmatpush.msra.mxu0 %v345
    %1699 = vmatpush.msra.mxu0 %v341
    %1700 = vmatpush.msra.mxu0 %v337
    %1701 = vmatpush.msra.mxu0 %v333
    %1702 = vmatpush.msra.mxu0 %v329
    %1703 = vmatpush.msra.mxu0 %v325
    %1704 = vmatpush.msra.mxu0 %v321
    %1705 = vmatpush.msra.mxu0 %v317
    %1706 = vmatpush.msra.mxu0 %v313
    %1707 = vmatpush.msra.mxu0 %v309
    %1708 = vmatpush.msra.mxu0 %v305
    %1709 = vmatpush.msra.mxu0 %v301
    %1710 = vmatpush.msra.mxu0 %v297
    %1711 = vmatpush.msra.mxu0 %v293
    %1712 = vmatpush.msra.mxu0 %v289
    %1713 = vmatmul.f32.gmra.mxu0 %v1670
    %v1714 = vpop.f32.mrf.mxu0
    %v1715 = vadd.f32 0.0, %v1714
    %1716 = vdwg.mxu0
    %1717 = vmatpush.msra.mxu0 %v350
    %1718 = vmatpush.msra.mxu0 %v346
    %1719 = vmatpush.msra.mxu0 %v342
    %1720 = vmatpush.msra.mxu0 %v338
    %1721 = vmatpush.msra.mxu0 %v334
    %1722 = vmatpush.msra.mxu0 %v330
    %1723 = vmatpush.msra.mxu0 %v326
    %1724 = vmatpush.msra.mxu0 %v322
    %1725 = vmatpush.msra.mxu0 %v318
    %1726 = vmatpush.msra.mxu0 %v314
    %1727 = vmatpush.msra.mxu0 %v310
    %1728 = vmatpush.msra.mxu0 %v306
    %1729 = vmatpush.msra.mxu0 %v302
    %1730 = vmatpush.msra.mxu0 %v298
    %1731 = vmatpush.msra.mxu0 %v294
    %1732 = vmatpush.msra.mxu0 %v290
    %1733 = vmatmul.f32.gmra.mxu0 %v1670
    %v1734 = vpop.f32.mrf.mxu0
    %v1735 = vadd.f32 0.0, %v1734
    %1736 = vdwg.mxu0
    %1737 = vmatpush.msra.mxu0 %v351
    %1738 = vmatpush.msra.mxu0 %v347
    %1739 = vmatpush.msra.mxu0 %v343
    %1740 = vmatpush.msra.mxu0 %v339
    %1741 = vmatpush.msra.mxu0 %v335
    %1742 = vmatpush.msra.mxu0 %v331
    %1743 = vmatpush.msra.mxu0 %v327
    %1744 = vmatpush.msra.mxu0 %v323
    %1745 = vmatpush.msra.mxu0 %v319
    %1746 = vmatpush.msra.mxu0 %v315
    %1747 = vmatpush.msra.mxu0 %v311
    %1748 = vmatpush.msra.mxu0 %v307
    %1749 = vmatpush.msra.mxu0 %v303
    %1750 = vmatpush.msra.mxu0 %v299
    %1751 = vmatpush.msra.mxu0 %v295
    %1752 = vmatpush.msra.mxu0 %v291
    %1753 = vmatmul.f32.gmra.mxu0 %v1670
    %v1754 = vpop.f32.mrf.mxu0
    %v1755 = vadd.f32 0.0, %v1754
    %1756 = vdwg.mxu0
    %v1757 = vadd.f32 %v1673, %v1695
    %v1758 = vadd.f32 %v1674, %v1715
    %v1759 = vadd.f32 %v1675, %v1735
    %v1760 = vadd.f32 %v1676, %v1755
    %v1761 = vxor.u32 %v1757, 2147483648
    %v1762 = vxor.u32 %v1758, 2147483648
    %v1763 = vxor.u32 %v1759, 2147483648
    %v1764 = vmul.f32 %v1761, 1.442695
    %v1765 = vpow.pop %v1764
    %v1766 = vmul.f32 %v1762, 1.442695
    %v1767 = vpow.pop %v1766
    %v1768 = vmul.f32 %v1763, 1.442695
    %v1769 = vpow.pop %v1768
    %v1770 = vadd.f32 %v1765, 1.0
    %v1771 = vadd.f32 %v1767, 1.0
    %v1772 = vadd.f32 %v1769, 1.0
    %v1773 = vrcp.pop %v1770
    %v1774 = vmul.f32 %v1770, %v1773
    %v1775 = vsub.f32 1.0, %v1774
    %v1776 = vmul.f32 %v1773, %v1775
    %v1777 = vadd.f32 %v1773, %v1776
    %vm1778 = vweird.f32 %v1770
    %vm1779 = vweird.f32 %v1773
    %vm1780 = vmor %vm1778, %vm1779
    %v1781 = vsel %vm1780, %v1773, %v1777
    %v1782 = vand.u32 2147483647, %v1770
    %vm1783 = vcmp.eq.f32.partialorder %v1782, 8.507059e+37
    %v1784 = vand.u32 %v1770, 2147483648
    %v1785 = vor.u32 1.1754944e-38, %v1784
    %v1786 = vsel %vm1783, %v1785, %v1781
    %v1787 = vmul.f32 1.0, %v1786
    %v1788 = vrcp.pop %v1771
    %v1789 = vmul.f32 %v1771, %v1788
    %v1790 = vsub.f32 1.0, %v1789
    %v1791 = vmul.f32 %v1788, %v1790
    %v1792 = vadd.f32 %v1788, %v1791
    %vm1793 = vweird.f32 %v1771
    %vm1794 = vweird.f32 %v1788
    %vm1795 = vmor %vm1793, %vm1794
    %v1796 = vsel %vm1795, %v1788, %v1792
    %v1797 = vand.u32 2147483647, %v1771
    %vm1798 = vcmp.eq.f32.partialorder %v1797, 8.507059e+37
    %v1799 = vand.u32 %v1771, 2147483648
    %v1800 = vor.u32 1.1754944e-38, %v1799
    %v1801 = vsel %vm1798, %v1800, %v1796
    %v1802 = vmul.f32 1.0, %v1801
    %v1803 = vrcp.pop %v1772
    %v1804 = vmul.f32 %v1772, %v1803
    %v1805 = vsub.f32 1.0, %v1804
    %v1806 = vmul.f32 %v1803, %v1805
    %v1807 = vadd.f32 %v1803, %v1806
    %vm1808 = vweird.f32 %v1772
    %vm1809 = vweird.f32 %v1803
    %vm1810 = vmor %vm1808, %vm1809
    %v1811 = vsel %vm1810, %v1803, %v1807
    %v1812 = vand.u32 2147483647, %v1772
    %vm1813 = vcmp.eq.f32.partialorder %v1812, 8.507059e+37
    %v1814 = vand.u32 %v1772, 2147483648
    %v1815 = vor.u32 1.1754944e-38, %v1814
    %v1816 = vsel %vm1813, %v1815, %v1811
    %v1817 = vmul.f32 1.0, %v1816
    %v1818 = vtanh.pop %v1760
    %v1819 = vmul.f32 %v1802, %v1671
    %v1820 = vmul.f32 %v1787, %v1818
    %v1821 = vadd.f32 %v1819, %v1820
    %v1822 = vtanh.pop %v1821
    %v1823 = vmul.f32 %v1817, %v1822
    %1824 = vst [vmem:[#allocation10] sm:$0xff] %v1821
    %1825 = vst [vmem:[#allocation9] sm:$0xff] %v1823
    %s1826 = scalar_lea.vmem [#allocation2], 56
    %1827 = vst [vmem:[%s1826] sm:$0xff] %v1823
    %v1828 = vld [vmem:[#allocation22] sm:$0xff]
    %v1829 = vld [vmem:[#allocation22 + $0x8] sm:$0xff]
    %v1830 = vld [vmem:[#allocation22 + $0x10] sm:$0xff]
    %v1831 = vld [vmem:[#allocation22 + $0x18] sm:$0xff]
    %v1832 = vld [vmem:[#allocation22 + $0x20] sm:$0xff]
    %v1833 = vld [vmem:[#allocation22 + $0x28] sm:$0xff]
    %v1834 = vld [vmem:[#allocation22 + $0x30] sm:$0xff]
    %v1835 = vld [vmem:[#allocation22 + $0x38] sm:$0xff]
    %v1836 = vld [vmem:[#allocation22 + $0x40] sm:$0xff]
    %v1837 = vld [vmem:[#allocation22 + $0x48] sm:$0xff]
    %v1838 = vld [vmem:[#allocation22 + $0x50] sm:$0xff]
    %v1839 = vld [vmem:[#allocation22 + $0x58] sm:$0xff]
    %v1840 = vld [vmem:[#allocation22 + $0x60] sm:$0xff]
    %v1841 = vld [vmem:[#allocation22 + $0x68] sm:$0xff]
    %v1842 = vld [vmem:[#allocation22 + $0x70] sm:$0xff]
    %v1843 = vld [vmem:[#allocation22 + $0x78] sm:$0xff]
    %v1844 = vld [vmem:[#allocation22 + $0x80] sm:$0xff]
    %v1845 = vld [vmem:[#allocation22 + $0x88] sm:$0xff]
    %v1846 = vld [vmem:[#allocation22 + $0x90] sm:$0xff]
    %v1847 = vld [vmem:[#allocation22 + $0x98] sm:$0xff]
    %v1848 = vld [vmem:[#allocation22 + $0xa0] sm:$0xff]
    %v1849 = vld [vmem:[#allocation22 + $0xa8] sm:$0xff]
    %v1850 = vld [vmem:[#allocation22 + $0xb0] sm:$0xff]
    %v1851 = vld [vmem:[#allocation22 + $0xb8] sm:$0xff]
    %v1852 = vld [vmem:[#allocation22 + $0xc0] sm:$0xff]
    %v1853 = vld [vmem:[#allocation22 + $0xc8] sm:$0xff]
    %v1854 = vld [vmem:[#allocation22 + $0xd0] sm:$0xff]
    %v1855 = vld [vmem:[#allocation22 + $0xd8] sm:$0xff]
    %v1856 = vld [vmem:[#allocation22 + $0xe0] sm:$0xff]
    %v1857 = vld [vmem:[#allocation22 + $0xe8] sm:$0xff]
    %v1858 = vld [vmem:[#allocation22 + $0xf0] sm:$0xff]
    %v1859 = vld [vmem:[#allocation22 + $0xf8] sm:$0xff]
    %v1860 = vld [vmem:[#allocation22 + $0x100] sm:$0xff]
    %v1861 = vld [vmem:[#allocation22 + $0x108] sm:$0xff]
    %v1862 = vld [vmem:[#allocation22 + $0x110] sm:$0xff]
    %v1863 = vld [vmem:[#allocation22 + $0x118] sm:$0xff]
    %v1864 = vld [vmem:[#allocation22 + $0x120] sm:$0xff]
    %v1865 = vld [vmem:[#allocation22 + $0x128] sm:$0xff]
    %v1866 = vld [vmem:[#allocation22 + $0x130] sm:$0xff]
    %v1867 = vld [vmem:[#allocation22 + $0x138] sm:$0xff]
    %v1868 = vld [vmem:[#allocation22 + $0x140] sm:$0xff]
    %v1869 = vld [vmem:[#allocation22 + $0x148] sm:$0xff]
    %v1870 = vld [vmem:[#allocation22 + $0x150] sm:$0xff]
    %v1871 = vld [vmem:[#allocation22 + $0x158] sm:$0xff]
    %v1872 = vld [vmem:[#allocation22 + $0x160] sm:$0xff]
    %v1873 = vld [vmem:[#allocation22 + $0x168] sm:$0xff]
    %v1874 = vld [vmem:[#allocation22 + $0x170] sm:$0xff]
    %v1875 = vld [vmem:[#allocation22 + $0x178] sm:$0xff]
    %v1876 = vld [vmem:[#allocation22 + $0x180] sm:$0xff]
    %v1877 = vld [vmem:[#allocation22 + $0x188] sm:$0xff]
    %v1878 = vld [vmem:[#allocation22 + $0x190] sm:$0xff]
    %v1879 = vld [vmem:[#allocation22 + $0x198] sm:$0xff]
    %v1880 = vld [vmem:[#allocation22 + $0x1a0] sm:$0xff]
    %v1881 = vld [vmem:[#allocation22 + $0x1a8] sm:$0xff]
    %v1882 = vld [vmem:[#allocation22 + $0x1b0] sm:$0xff]
    %v1883 = vld [vmem:[#allocation22 + $0x1b8] sm:$0xff]
    %v1884 = vld [vmem:[#allocation22 + $0x1c0] sm:$0xff]
    %v1885 = vld [vmem:[#allocation22 + $0x1c8] sm:$0xff]
    %v1886 = vld [vmem:[#allocation22 + $0x1d0] sm:$0xff]
    %v1887 = vld [vmem:[#allocation22 + $0x1d8] sm:$0xff]
    %v1888 = vld [vmem:[#allocation22 + $0x1e0] sm:$0xff]
    %v1889 = vld [vmem:[#allocation22 + $0x1e8] sm:$0xff]
    %v1890 = vld [vmem:[#allocation22 + $0x1f0] sm:$0xff]
    %v1891 = vld [vmem:[#allocation22 + $0x1f8] sm:$0xff]
    %v1892 = vld [vmem:[#allocation28] sm:$0xff]
    %v1893 = vld [vmem:[#allocation28 + $0x8] sm:$0xff]
    %v1894 = vld [vmem:[#allocation28 + $0x10] sm:$0xff]
    %v1895 = vld [vmem:[#allocation28 + $0x18] sm:$0xff]
    %v1896 = vld [vmem:[#allocation28 + $0x20] sm:$0xff]
    %v1897 = vld [vmem:[#allocation28 + $0x28] sm:$0xff]
    %v1898 = vld [vmem:[#allocation28 + $0x30] sm:$0xff]
    %v1899 = vld [vmem:[#allocation28 + $0x38] sm:$0xff]
    %v1900 = vld [vmem:[#allocation28 + $0x40] sm:$0xff]
    %v1901 = vld [vmem:[#allocation28 + $0x48] sm:$0xff]
    %v1902 = vld [vmem:[#allocation28 + $0x50] sm:$0xff]
    %v1903 = vld [vmem:[#allocation28 + $0x58] sm:$0xff]
    %v1904 = vld [vmem:[#allocation28 + $0x60] sm:$0xff]
    %v1905 = vld [vmem:[#allocation28 + $0x68] sm:$0xff]
    %v1906 = vld [vmem:[#allocation28 + $0x70] sm:$0xff]
    %v1907 = vld [vmem:[#allocation28 + $0x78] sm:$0xff]
    %v1908 = vld [vmem:[#allocation28 + $0x80] sm:$0xff]
    %v1909 = vld [vmem:[#allocation28 + $0x88] sm:$0xff]
    %v1910 = vld [vmem:[#allocation28 + $0x90] sm:$0xff]
    %v1911 = vld [vmem:[#allocation28 + $0x98] sm:$0xff]
    %v1912 = vld [vmem:[#allocation28 + $0xa0] sm:$0xff]
    %v1913 = vld [vmem:[#allocation28 + $0xa8] sm:$0xff]
    %v1914 = vld [vmem:[#allocation28 + $0xb0] sm:$0xff]
    %v1915 = vld [vmem:[#allocation28 + $0xb8] sm:$0xff]
    %v1916 = vld [vmem:[#allocation28 + $0xc0] sm:$0xff]
    %v1917 = vld [vmem:[#allocation28 + $0xc8] sm:$0xff]
    %v1918 = vld [vmem:[#allocation28 + $0xd0] sm:$0xff]
    %v1919 = vld [vmem:[#allocation28 + $0xd8] sm:$0xff]
    %v1920 = vld [vmem:[#allocation28 + $0xe0] sm:$0xff]
    %v1921 = vld [vmem:[#allocation28 + $0xe8] sm:$0xff]
    %v1922 = vld [vmem:[#allocation28 + $0xf0] sm:$0xff]
    %v1923 = vld [vmem:[#allocation28 + $0xf8] sm:$0xff]
    %v1924 = vld [vmem:[#allocation28 + $0x100] sm:$0xff]
    %v1925 = vld [vmem:[#allocation28 + $0x108] sm:$0xff]
    %v1926 = vld [vmem:[#allocation28 + $0x110] sm:$0xff]
    %v1927 = vld [vmem:[#allocation28 + $0x118] sm:$0xff]
    %v1928 = vld [vmem:[#allocation28 + $0x120] sm:$0xff]
    %v1929 = vld [vmem:[#allocation28 + $0x128] sm:$0xff]
    %v1930 = vld [vmem:[#allocation28 + $0x130] sm:$0xff]
    %v1931 = vld [vmem:[#allocation28 + $0x138] sm:$0xff]
    %v1932 = vld [vmem:[#allocation28 + $0x140] sm:$0xff]
    %v1933 = vld [vmem:[#allocation28 + $0x148] sm:$0xff]
    %v1934 = vld [vmem:[#allocation28 + $0x150] sm:$0xff]
    %v1935 = vld [vmem:[#allocation28 + $0x158] sm:$0xff]
    %v1936 = vld [vmem:[#allocation28 + $0x160] sm:$0xff]
    %v1937 = vld [vmem:[#allocation28 + $0x168] sm:$0xff]
    %v1938 = vld [vmem:[#allocation28 + $0x170] sm:$0xff]
    %v1939 = vld [vmem:[#allocation28 + $0x178] sm:$0xff]
    %v1940 = vld [vmem:[#allocation28 + $0x180] sm:$0xff]
    %v1941 = vld [vmem:[#allocation28 + $0x188] sm:$0xff]
    %v1942 = vld [vmem:[#allocation28 + $0x190] sm:$0xff]
    %v1943 = vld [vmem:[#allocation28 + $0x198] sm:$0xff]
    %v1944 = vld [vmem:[#allocation28 + $0x1a0] sm:$0xff]
    %v1945 = vld [vmem:[#allocation28 + $0x1a8] sm:$0xff]
    %v1946 = vld [vmem:[#allocation28 + $0x1b0] sm:$0xff]
    %v1947 = vld [vmem:[#allocation28 + $0x1b8] sm:$0xff]
    %v1948 = vld [vmem:[#allocation28 + $0x1c0] sm:$0xff]
    %v1949 = vld [vmem:[#allocation28 + $0x1c8] sm:$0xff]
    %v1950 = vld [vmem:[#allocation28 + $0x1d0] sm:$0xff]
    %v1951 = vld [vmem:[#allocation28 + $0x1d8] sm:$0xff]
    %v1952 = vld [vmem:[#allocation28 + $0x1e0] sm:$0xff]
    %v1953 = vld [vmem:[#allocation28 + $0x1e8] sm:$0xff]
    %v1954 = vld [vmem:[#allocation28 + $0x1f0] sm:$0xff]
    %v1955 = vld [vmem:[#allocation28 + $0x1f8] sm:$0xff]
    %v1956 = vld [vmem:[%s10] sm:$0xf]
    %v1957 = vld [vmem:[#allocation2] sm:$0xff]
    %v1958 = vld [vmem:[#allocation2 + $0x8] sm:$0xff]
    %v1959 = vld [vmem:[#allocation2 + $0x10] sm:$0xff]
    %v1960 = vld [vmem:[#allocation2 + $0x18] sm:$0xff]
    %v1961 = vld [vmem:[#allocation2 + $0x20] sm:$0xff]
    %v1962 = vld [vmem:[#allocation2 + $0x28] sm:$0xff]
    %v1963 = vld [vmem:[#allocation2 + $0x30] sm:$0xff]
    %v1964 = vld [vmem:[#allocation2 + $0x38] sm:$0xff]
    %v1966 = vperm.slane %v1956, 0
    %v1967 = vperm.slane %v1956, 1
    %v1968 = vperm.slane %v1956, 2
    %v1969 = vperm.slane %v1956, 3
    %1974 = vmatpush.msra.mxu0 %v1888
    %1975 = vmatpush.msra.mxu0 %v1884
    %1976 = vmatpush.msra.mxu0 %v1880
    %1977 = vmatpush.msra.mxu0 %v1876
    %1978 = vmatpush.msra.mxu0 %v1872
    %1979 = vmatpush.msra.mxu0 %v1868
    %1980 = vmatpush.msra.mxu0 %v1864
    %1981 = vmatpush.msra.mxu0 %v1860
    %1982 = vmatpush.msra.mxu0 %v1856
    %1983 = vmatpush.msra.mxu0 %v1852
    %1984 = vmatpush.msra.mxu0 %v1848
    %1985 = vmatpush.msra.mxu0 %v1844
    %1986 = vmatpush.msra.mxu0 %v1840
    %1987 = vmatpush.msra.mxu0 %v1836
    %1988 = vmatpush.msra.mxu0 %v1832
    %1989 = vmatpush.msra.mxu0 %v1828
    %1990 = vmatmul.f32.gmra.mxu0 %v1957
    %v1991 = vpop.f32.mrf.mxu0
    %v1992 = vadd.f32 %v1966, %v1991
    %1993 = vmatmul.f32.gmra.mxu0 %v1958
    %v1994 = vpop.f32.mrf.mxu0
    %v1995 = vadd.f32 %v1966, %v1994
    %1996 = vmatmul.f32.gmra.mxu0 %v1959
    %v1997 = vpop.f32.mrf.mxu0
    %v1998 = vadd.f32 %v1966, %v1997
    %1999 = vmatmul.f32.gmra.mxu0 %v1960
    %v2000 = vpop.f32.mrf.mxu0
    %v2001 = vadd.f32 %v1966, %v2000
    %2002 = vmatmul.f32.gmra.mxu0 %v1961
    %v2003 = vpop.f32.mrf.mxu0
    %v2004 = vadd.f32 %v1966, %v2003
    %2005 = vmatmul.f32.gmra.mxu0 %v1962
    %v2006 = vpop.f32.mrf.mxu0
    %v2007 = vadd.f32 %v1966, %v2006
    %2008 = vmatmul.f32.gmra.mxu0 %v1963
    %v2009 = vpop.f32.mrf.mxu0
    %v2010 = vadd.f32 %v1966, %v2009
    %2011 = vmatmul.f32.gmra.mxu0 %v1964
    %v2012 = vpop.f32.mrf.mxu0
    %v2013 = vadd.f32 %v1966, %v2012
    %2014 = vdwg.mxu0
    %2015 = vmatpush.msra.mxu0 %v1889
    %2016 = vmatpush.msra.mxu0 %v1885
    %2017 = vmatpush.msra.mxu0 %v1881
    %2018 = vmatpush.msra.mxu0 %v1877
    %2019 = vmatpush.msra.mxu0 %v1873
    %2020 = vmatpush.msra.mxu0 %v1869
    %2021 = vmatpush.msra.mxu0 %v1865
    %2022 = vmatpush.msra.mxu0 %v1861
    %2023 = vmatpush.msra.mxu0 %v1857
    %2024 = vmatpush.msra.mxu0 %v1853
    %2025 = vmatpush.msra.mxu0 %v1849
    %2026 = vmatpush.msra.mxu0 %v1845
    %2027 = vmatpush.msra.mxu0 %v1841
    %2028 = vmatpush.msra.mxu0 %v1837
    %2029 = vmatpush.msra.mxu0 %v1833
    %2030 = vmatpush.msra.mxu0 %v1829
    %2031 = vmatmul.f32.gmra.mxu0 %v1957
    %v2032 = vpop.f32.mrf.mxu0
    %v2033 = vadd.f32 %v1967, %v2032
    %2034 = vmatmul.f32.gmra.mxu0 %v1958
    %v2035 = vpop.f32.mrf.mxu0
    %v2036 = vadd.f32 %v1967, %v2035
    %2037 = vmatmul.f32.gmra.mxu0 %v1959
    %v2038 = vpop.f32.mrf.mxu0
    %v2039 = vadd.f32 %v1967, %v2038
    %2040 = vmatmul.f32.gmra.mxu0 %v1960
    %v2041 = vpop.f32.mrf.mxu0
    %v2042 = vadd.f32 %v1967, %v2041
    %2043 = vmatmul.f32.gmra.mxu0 %v1961
    %v2044 = vpop.f32.mrf.mxu0
    %v2045 = vadd.f32 %v1967, %v2044
    %2046 = vmatmul.f32.gmra.mxu0 %v1962
    %v2047 = vpop.f32.mrf.mxu0
    %v2048 = vadd.f32 %v1967, %v2047
    %2049 = vmatmul.f32.gmra.mxu0 %v1963
    %v2050 = vpop.f32.mrf.mxu0
    %v2051 = vadd.f32 %v1967, %v2050
    %2052 = vmatmul.f32.gmra.mxu0 %v1964
    %v2053 = vpop.f32.mrf.mxu0
    %v2054 = vadd.f32 %v1967, %v2053
    %2055 = vdwg.mxu0
    %2056 = vmatpush.msra.mxu0 %v1890
    %2057 = vmatpush.msra.mxu0 %v1886
    %2058 = vmatpush.msra.mxu0 %v1882
    %2059 = vmatpush.msra.mxu0 %v1878
    %2060 = vmatpush.msra.mxu0 %v1874
    %2061 = vmatpush.msra.mxu0 %v1870
    %2062 = vmatpush.msra.mxu0 %v1866
    %2063 = vmatpush.msra.mxu0 %v1862
    %2064 = vmatpush.msra.mxu0 %v1858
    %2065 = vmatpush.msra.mxu0 %v1854
    %2066 = vmatpush.msra.mxu0 %v1850
    %2067 = vmatpush.msra.mxu0 %v1846
    %2068 = vmatpush.msra.mxu0 %v1842
    %2069 = vmatpush.msra.mxu0 %v1838
    %2070 = vmatpush.msra.mxu0 %v1834
    %2071 = vmatpush.msra.mxu0 %v1830
    %2072 = vmatmul.f32.gmra.mxu0 %v1957
    %v2073 = vpop.f32.mrf.mxu0
    %v2074 = vadd.f32 %v1968, %v2073
    %2075 = vmatmul.f32.gmra.mxu0 %v1958
    %v2076 = vpop.f32.mrf.mxu0
    %v2077 = vadd.f32 %v1968, %v2076
    %2078 = vmatmul.f32.gmra.mxu0 %v1959
    %v2079 = vpop.f32.mrf.mxu0
    %v2080 = vadd.f32 %v1968, %v2079
    %2081 = vmatmul.f32.gmra.mxu0 %v1960
    %v2082 = vpop.f32.mrf.mxu0
    %v2083 = vadd.f32 %v1968, %v2082
    %2084 = vmatmul.f32.gmra.mxu0 %v1961
    %v2085 = vpop.f32.mrf.mxu0
    %v2086 = vadd.f32 %v1968, %v2085
    %2087 = vmatmul.f32.gmra.mxu0 %v1962
    %v2088 = vpop.f32.mrf.mxu0
    %v2089 = vadd.f32 %v1968, %v2088
    %2090 = vmatmul.f32.gmra.mxu0 %v1963
    %v2091 = vpop.f32.mrf.mxu0
    %v2092 = vadd.f32 %v1968, %v2091
    %2093 = vmatmul.f32.gmra.mxu0 %v1964
    %v2094 = vpop.f32.mrf.mxu0
    %v2095 = vadd.f32 %v1968, %v2094
    %2096 = vdwg.mxu0
    %2097 = vmatpush.msra.mxu0 %v1891
    %2098 = vmatpush.msra.mxu0 %v1887
    %2099 = vmatpush.msra.mxu0 %v1883
    %2100 = vmatpush.msra.mxu0 %v1879
    %2101 = vmatpush.msra.mxu0 %v1875
    %2102 = vmatpush.msra.mxu0 %v1871
    %2103 = vmatpush.msra.mxu0 %v1867
    %2104 = vmatpush.msra.mxu0 %v1863
    %2105 = vmatpush.msra.mxu0 %v1859
    %2106 = vmatpush.msra.mxu0 %v1855
    %2107 = vmatpush.msra.mxu0 %v1851
    %2108 = vmatpush.msra.mxu0 %v1847
    %2109 = vmatpush.msra.mxu0 %v1843
    %2110 = vmatpush.msra.mxu0 %v1839
    %2111 = vmatpush.msra.mxu0 %v1835
    %2112 = vmatpush.msra.mxu0 %v1831
    %2113 = vmatmul.f32.gmra.mxu0 %v1957
    %v2114 = vpop.f32.mrf.mxu0
    %v2115 = vadd.f32 %v1969, %v2114
    %2116 = vmatmul.f32.gmra.mxu0 %v1958
    %v2117 = vpop.f32.mrf.mxu0
    %v2118 = vadd.f32 %v1969, %v2117
    %2119 = vmatmul.f32.gmra.mxu0 %v1959
    %v2120 = vpop.f32.mrf.mxu0
    %v2121 = vadd.f32 %v1969, %v2120
    %2122 = vmatmul.f32.gmra.mxu0 %v1960
    %v2123 = vpop.f32.mrf.mxu0
    %v2124 = vadd.f32 %v1969, %v2123
    %2125 = vmatmul.f32.gmra.mxu0 %v1961
    %v2126 = vpop.f32.mrf.mxu0
    %v2127 = vadd.f32 %v1969, %v2126
    %2128 = vmatmul.f32.gmra.mxu0 %v1962
    %v2129 = vpop.f32.mrf.mxu0
    %v2130 = vadd.f32 %v1969, %v2129
    %2131 = vmatmul.f32.gmra.mxu0 %v1963
    %v2132 = vpop.f32.mrf.mxu0
    %v2133 = vadd.f32 %v1969, %v2132
    %2134 = vmatmul.f32.gmra.mxu0 %v1964
    %v2135 = vpop.f32.mrf.mxu0
    %v2136 = vadd.f32 %v1969, %v2135
    %2137 = vdwg.mxu0
    %2138 = vst [vmem:[#allocation6] sm:$0xff] %v1992
    %2139 = vst [vmem:[#allocation6 + $0x8] sm:$0xff] %v2033
    %2140 = vst [vmem:[#allocation6 + $0x10] sm:$0xff] %v2074
    %2141 = vst [vmem:[#allocation6 + $0x18] sm:$0xff] %v2115
    %2142 = vst [vmem:[#allocation6 + $0x20] sm:$0xff] %v1995
    %2143 = vst [vmem:[#allocation6 + $0x28] sm:$0xff] %v2036
    %2144 = vst [vmem:[#allocation6 + $0x30] sm:$0xff] %v2077
    %2145 = vst [vmem:[#allocation6 + $0x38] sm:$0xff] %v2118
    %2146 = vst [vmem:[#allocation6 + $0x40] sm:$0xff] %v1998
    %2147 = vst [vmem:[#allocation6 + $0x48] sm:$0xff] %v2039
    %2148 = vst [vmem:[#allocation6 + $0x50] sm:$0xff] %v2080
    %2149 = vst [vmem:[#allocation6 + $0x58] sm:$0xff] %v2121
    %2150 = vst [vmem:[#allocation6 + $0x60] sm:$0xff] %v2001
    %2151 = vst [vmem:[#allocation6 + $0x68] sm:$0xff] %v2042
    %2152 = vst [vmem:[#allocation6 + $0x70] sm:$0xff] %v2083
    %2153 = vst [vmem:[#allocation6 + $0x78] sm:$0xff] %v2124
    %2154 = vst [vmem:[#allocation6 + $0x80] sm:$0xff] %v2004
    %2155 = vst [vmem:[#allocation6 + $0x88] sm:$0xff] %v2045
    %2156 = vst [vmem:[#allocation6 + $0x90] sm:$0xff] %v2086
    %2157 = vst [vmem:[#allocation6 + $0x98] sm:$0xff] %v2127
    %2158 = vst [vmem:[#allocation6 + $0xa0] sm:$0xff] %v2007
    %2159 = vst [vmem:[#allocation6 + $0xa8] sm:$0xff] %v2048
    %2160 = vst [vmem:[#allocation6 + $0xb0] sm:$0xff] %v2089
    %2161 = vst [vmem:[#allocation6 + $0xb8] sm:$0xff] %v2130
    %2162 = vst [vmem:[#allocation6 + $0xc0] sm:$0xff] %v2010
    %2163 = vst [vmem:[#allocation6 + $0xc8] sm:$0xff] %v2051
    %2164 = vst [vmem:[#allocation6 + $0xd0] sm:$0xff] %v2092
    %2165 = vst [vmem:[#allocation6 + $0xd8] sm:$0xff] %v2133
    %2166 = vst [vmem:[#allocation6 + $0xe0] sm:$0xff] %v2013
    %2167 = vst [vmem:[#allocation6 + $0xe8] sm:$0xff] %v2054
    %2168 = vst [vmem:[#allocation6 + $0xf0] sm:$0xff] %v2095
    %2169 = vst [vmem:[#allocation6 + $0xf8] sm:$0xff] %v2136
    %v2170 = vld [vmem:[#allocation11] sm:$0xff]
    %v2171 = vld [vmem:[#allocation12] sm:$0xff]
    %v2172 = vld [vmem:[#allocation6] sm:$0xff]
    %v2173 = vld [vmem:[#allocation6 + $0x8] sm:$0xff]
    %v2174 = vld [vmem:[#allocation6 + $0x10] sm:$0xff]
    %v2175 = vld [vmem:[#allocation6 + $0x18] sm:$0xff]
    %2176 = vmatpush.msra.mxu0 %v1952
    %2177 = vmatpush.msra.mxu0 %v1948
    %2178 = vmatpush.msra.mxu0 %v1944
    %2179 = vmatpush.msra.mxu0 %v1940
    %2180 = vmatpush.msra.mxu0 %v1936
    %2181 = vmatpush.msra.mxu0 %v1932
    %2182 = vmatpush.msra.mxu0 %v1928
    %2183 = vmatpush.msra.mxu0 %v1924
    %2184 = vmatpush.msra.mxu0 %v1920
    %2185 = vmatpush.msra.mxu0 %v1916
    %2186 = vmatpush.msra.mxu0 %v1912
    %2187 = vmatpush.msra.mxu0 %v1908
    %2188 = vmatpush.msra.mxu0 %v1904
    %2189 = vmatpush.msra.mxu0 %v1900
    %2190 = vmatpush.msra.mxu0 %v1896
    %2191 = vmatpush.msra.mxu0 %v1892
    %2192 = vmatmul.f32.gmra.mxu0 %v2170
    %v2193 = vpop.f32.mrf.mxu0
    %v2194 = vadd.f32 0.0, %v2193
    %2195 = vdwg.mxu0
    %2196 = vmatpush.msra.mxu0 %v1953
    %2197 = vmatpush.msra.mxu0 %v1949
    %2198 = vmatpush.msra.mxu0 %v1945
    %2199 = vmatpush.msra.mxu0 %v1941
    %2200 = vmatpush.msra.mxu0 %v1937
    %2201 = vmatpush.msra.mxu0 %v1933
    %2202 = vmatpush.msra.mxu0 %v1929
    %2203 = vmatpush.msra.mxu0 %v1925
    %2204 = vmatpush.msra.mxu0 %v1921
    %2205 = vmatpush.msra.mxu0 %v1917
    %2206 = vmatpush.msra.mxu0 %v1913
    %2207 = vmatpush.msra.mxu0 %v1909
    %2208 = vmatpush.msra.mxu0 %v1905
    %2209 = vmatpush.msra.mxu0 %v1901
    %2210 = vmatpush.msra.mxu0 %v1897
    %2211 = vmatpush.msra.mxu0 %v1893
    %2212 = vmatmul.f32.gmra.mxu0 %v2170
    %v2213 = vpop.f32.mrf.mxu0
    %v2214 = vadd.f32 0.0, %v2213
    %2215 = vdwg.mxu0
    %2216 = vmatpush.msra.mxu0 %v1954
    %2217 = vmatpush.msra.mxu0 %v1950
    %2218 = vmatpush.msra.mxu0 %v1946
    %2219 = vmatpush.msra.mxu0 %v1942
    %2220 = vmatpush.msra.mxu0 %v1938
    %2221 = vmatpush.msra.mxu0 %v1934
    %2222 = vmatpush.msra.mxu0 %v1930
    %2223 = vmatpush.msra.mxu0 %v1926
    %2224 = vmatpush.msra.mxu0 %v1922
    %2225 = vmatpush.msra.mxu0 %v1918
    %2226 = vmatpush.msra.mxu0 %v1914
    %2227 = vmatpush.msra.mxu0 %v1910
    %2228 = vmatpush.msra.mxu0 %v1906
    %2229 = vmatpush.msra.mxu0 %v1902
    %2230 = vmatpush.msra.mxu0 %v1898
    %2231 = vmatpush.msra.mxu0 %v1894
    %2232 = vmatmul.f32.gmra.mxu0 %v2170
    %v2233 = vpop.f32.mrf.mxu0
    %v2234 = vadd.f32 0.0, %v2233
    %2235 = vdwg.mxu0
    %2236 = vmatpush.msra.mxu0 %v1955
    %2237 = vmatpush.msra.mxu0 %v1951
    %2238 = vmatpush.msra.mxu0 %v1947
    %2239 = vmatpush.msra.mxu0 %v1943
    %2240 = vmatpush.msra.mxu0 %v1939
    %2241 = vmatpush.msra.mxu0 %v1935
    %2242 = vmatpush.msra.mxu0 %v1931
    %2243 = vmatpush.msra.mxu0 %v1927
    %2244 = vmatpush.msra.mxu0 %v1923
    %2245 = vmatpush.msra.mxu0 %v1919
    %2246 = vmatpush.msra.mxu0 %v1915
    %2247 = vmatpush.msra.mxu0 %v1911
    %2248 = vmatpush.msra.mxu0 %v1907
    %2249 = vmatpush.msra.mxu0 %v1903
    %2250 = vmatpush.msra.mxu0 %v1899
    %2251 = vmatpush.msra.mxu0 %v1895
    %2252 = vmatmul.f32.gmra.mxu0 %v2170
    %v2253 = vpop.f32.mrf.mxu0
    %v2254 = vadd.f32 0.0, %v2253
    %2255 = vdwg.mxu0
    %v2256 = vadd.f32 %v2172, %v2194
    %v2257 = vadd.f32 %v2173, %v2214
    %v2258 = vadd.f32 %v2174, %v2234
    %v2259 = vadd.f32 %v2175, %v2254
    %v2260 = vxor.u32 %v2256, 2147483648
    %v2261 = vxor.u32 %v2257, 2147483648
    %v2262 = vxor.u32 %v2258, 2147483648
    %v2263 = vmul.f32 %v2260, 1.442695
    %v2264 = vpow.pop %v2263
    %v2265 = vmul.f32 %v2261, 1.442695
    %v2266 = vpow.pop %v2265
    %v2267 = vmul.f32 %v2262, 1.442695
    %v2268 = vpow.pop %v2267
    %v2269 = vadd.f32 %v2264, 1.0
    %v2270 = vadd.f32 %v2266, 1.0
    %v2271 = vadd.f32 %v2268, 1.0
    %v2272 = vrcp.pop %v2269
    %v2273 = vmul.f32 %v2269, %v2272
    %v2274 = vsub.f32 1.0, %v2273
    %v2275 = vmul.f32 %v2272, %v2274
    %v2276 = vadd.f32 %v2272, %v2275
    %vm2277 = vweird.f32 %v2269
    %vm2278 = vweird.f32 %v2272
    %vm2279 = vmor %vm2277, %vm2278
    %v2280 = vsel %vm2279, %v2272, %v2276
    %v2281 = vand.u32 2147483647, %v2269
    %vm2282 = vcmp.eq.f32.partialorder %v2281, 8.507059e+37
    %v2283 = vand.u32 %v2269, 2147483648
    %v2284 = vor.u32 1.1754944e-38, %v2283
    %v2285 = vsel %vm2282, %v2284, %v2280
    %v2286 = vmul.f32 1.0, %v2285
    %v2287 = vrcp.pop %v2270
    %v2288 = vmul.f32 %v2270, %v2287
    %v2289 = vsub.f32 1.0, %v2288
    %v2290 = vmul.f32 %v2287, %v2289
    %v2291 = vadd.f32 %v2287, %v2290
    %vm2292 = vweird.f32 %v2270
    %vm2293 = vweird.f32 %v2287
    %vm2294 = vmor %vm2292, %vm2293
    %v2295 = vsel %vm2294, %v2287, %v2291
    %v2296 = vand.u32 2147483647, %v2270
    %vm2297 = vcmp.eq.f32.partialorder %v2296, 8.507059e+37
    %v2298 = vand.u32 %v2270, 2147483648
    %v2299 = vor.u32 1.1754944e-38, %v2298
    %v2300 = vsel %vm2297, %v2299, %v2295
    %v2301 = vmul.f32 1.0, %v2300
    %v2302 = vrcp.pop %v2271
    %v2303 = vmul.f32 %v2271, %v2302
    %v2304 = vsub.f32 1.0, %v2303
    %v2305 = vmul.f32 %v2302, %v2304
    %v2306 = vadd.f32 %v2302, %v2305
    %vm2307 = vweird.f32 %v2271
    %vm2308 = vweird.f32 %v2302
    %vm2309 = vmor %vm2307, %vm2308
    %v2310 = vsel %vm2309, %v2302, %v2306
    %v2311 = vand.u32 2147483647, %v2271
    %vm2312 = vcmp.eq.f32.partialorder %v2311, 8.507059e+37
    %v2313 = vand.u32 %v2271, 2147483648
    %v2314 = vor.u32 1.1754944e-38, %v2313
    %v2315 = vsel %vm2312, %v2314, %v2310
    %v2316 = vmul.f32 1.0, %v2315
    %v2317 = vtanh.pop %v2259
    %v2318 = vmul.f32 %v2301, %v2171
    %v2319 = vmul.f32 %v2286, %v2317
    %v2320 = vadd.f32 %v2318, %v2319
    %v2321 = vtanh.pop %v2320
    %v2322 = vmul.f32 %v2316, %v2321
    %2323 = vst [vmem:[#allocation12] sm:$0xff] %v2320
    %2324 = vst [vmem:[#allocation11] sm:$0xff] %v2322
    %2325 = vst [vmem:[#allocation3] sm:$0xff] %v2322
    %v2326 = vld [vmem:[#allocation11] sm:$0xff]
    %v2327 = vld [vmem:[#allocation12] sm:$0xff]
    %s2328 = scalar_lea.vmem [#allocation6], 32
    %v2329 = vld [vmem:[%s2328] sm:$0xff]
    %v2330 = vld [vmem:[%s2328 + $0x8] sm:$0xff]
    %v2331 = vld [vmem:[%s2328 + $0x10] sm:$0xff]
    %v2332 = vld [vmem:[%s2328 + $0x18] sm:$0xff]
    %2333 = vmatpush.msra.mxu0 %v1952
    %2334 = vmatpush.msra.mxu0 %v1948
    %2335 = vmatpush.msra.mxu0 %v1944
    %2336 = vmatpush.msra.mxu0 %v1940
    %2337 = vmatpush.msra.mxu0 %v1936
    %2338 = vmatpush.msra.mxu0 %v1932
    %2339 = vmatpush.msra.mxu0 %v1928
    %2340 = vmatpush.msra.mxu0 %v1924
    %2341 = vmatpush.msra.mxu0 %v1920
    %2342 = vmatpush.msra.mxu0 %v1916
    %2343 = vmatpush.msra.mxu0 %v1912
    %2344 = vmatpush.msra.mxu0 %v1908
    %2345 = vmatpush.msra.mxu0 %v1904
    %2346 = vmatpush.msra.mxu0 %v1900
    %2347 = vmatpush.msra.mxu0 %v1896
    %2348 = vmatpush.msra.mxu0 %v1892
    %2349 = vmatmul.f32.gmra.mxu0 %v2326
    %v2350 = vpop.f32.mrf.mxu0
    %v2351 = vadd.f32 0.0, %v2350
    %2352 = vdwg.mxu0
    %2353 = vmatpush.msra.mxu0 %v1953
    %2354 = vmatpush.msra.mxu0 %v1949
    %2355 = vmatpush.msra.mxu0 %v1945
    %2356 = vmatpush.msra.mxu0 %v1941
    %2357 = vmatpush.msra.mxu0 %v1937
    %2358 = vmatpush.msra.mxu0 %v1933
    %2359 = vmatpush.msra.mxu0 %v1929
    %2360 = vmatpush.msra.mxu0 %v1925
    %2361 = vmatpush.msra.mxu0 %v1921
    %2362 = vmatpush.msra.mxu0 %v1917
    %2363 = vmatpush.msra.mxu0 %v1913
    %2364 = vmatpush.msra.mxu0 %v1909
    %2365 = vmatpush.msra.mxu0 %v1905
    %2366 = vmatpush.msra.mxu0 %v1901
    %2367 = vmatpush.msra.mxu0 %v1897
    %2368 = vmatpush.msra.mxu0 %v1893
    %2369 = vmatmul.f32.gmra.mxu0 %v2326
    %v2370 = vpop.f32.mrf.mxu0
    %v2371 = vadd.f32 0.0, %v2370
    %2372 = vdwg.mxu0
    %2373 = vmatpush.msra.mxu0 %v1954
    %2374 = vmatpush.msra.mxu0 %v1950
    %2375 = vmatpush.msra.mxu0 %v1946
    %2376 = vmatpush.msra.mxu0 %v1942
    %2377 = vmatpush.msra.mxu0 %v1938
    %2378 = vmatpush.msra.mxu0 %v1934
    %2379 = vmatpush.msra.mxu0 %v1930
    %2380 = vmatpush.msra.mxu0 %v1926
    %2381 = vmatpush.msra.mxu0 %v1922
    %2382 = vmatpush.msra.mxu0 %v1918
    %2383 = vmatpush.msra.mxu0 %v1914
    %2384 = vmatpush.msra.mxu0 %v1910
    %2385 = vmatpush.msra.mxu0 %v1906
    %2386 = vmatpush.msra.mxu0 %v1902
    %2387 = vmatpush.msra.mxu0 %v1898
    %2388 = vmatpush.msra.mxu0 %v1894
    %2389 = vmatmul.f32.gmra.mxu0 %v2326
    %v2390 = vpop.f32.mrf.mxu0
    %v2391 = vadd.f32 0.0, %v2390
    %2392 = vdwg.mxu0
    %2393 = vmatpush.msra.mxu0 %v1955
    %2394 = vmatpush.msra.mxu0 %v1951
    %2395 = vmatpush.msra.mxu0 %v1947
    %2396 = vmatpush.msra.mxu0 %v1943
    %2397 = vmatpush.msra.mxu0 %v1939
    %2398 = vmatpush.msra.mxu0 %v1935
    %2399 = vmatpush.msra.mxu0 %v1931
    %2400 = vmatpush.msra.mxu0 %v1927
    %2401 = vmatpush.msra.mxu0 %v1923
    %2402 = vmatpush.msra.mxu0 %v1919
    %2403 = vmatpush.msra.mxu0 %v1915
    %2404 = vmatpush.msra.mxu0 %v1911
    %2405 = vmatpush.msra.mxu0 %v1907
    %2406 = vmatpush.msra.mxu0 %v1903
    %2407 = vmatpush.msra.mxu0 %v1899
    %2408 = vmatpush.msra.mxu0 %v1895
    %2409 = vmatmul.f32.gmra.mxu0 %v2326
    %v2410 = vpop.f32.mrf.mxu0
    %v2411 = vadd.f32 0.0, %v2410
    %2412 = vdwg.mxu0
    %v2413 = vadd.f32 %v2329, %v2351
    %v2414 = vadd.f32 %v2330, %v2371
    %v2415 = vadd.f32 %v2331, %v2391
    %v2416 = vadd.f32 %v2332, %v2411
    %v2417 = vxor.u32 %v2413, 2147483648
    %v2418 = vxor.u32 %v2414, 2147483648
    %v2419 = vxor.u32 %v2415, 2147483648
    %v2420 = vmul.f32 %v2417, 1.442695
    %v2421 = vpow.pop %v2420
    %v2422 = vmul.f32 %v2418, 1.442695
    %v2423 = vpow.pop %v2422
    %v2424 = vmul.f32 %v2419, 1.442695
    %v2425 = vpow.pop %v2424
    %v2426 = vadd.f32 %v2421, 1.0
    %v2427 = vadd.f32 %v2423, 1.0
    %v2428 = vadd.f32 %v2425, 1.0
    %v2429 = vrcp.pop %v2426
    %v2430 = vmul.f32 %v2426, %v2429
    %v2431 = vsub.f32 1.0, %v2430
    %v2432 = vmul.f32 %v2429, %v2431
    %v2433 = vadd.f32 %v2429, %v2432
    %vm2434 = vweird.f32 %v2426
    %vm2435 = vweird.f32 %v2429
    %vm2436 = vmor %vm2434, %vm2435
    %v2437 = vsel %vm2436, %v2429, %v2433
    %v2438 = vand.u32 2147483647, %v2426
    %vm2439 = vcmp.eq.f32.partialorder %v2438, 8.507059e+37
    %v2440 = vand.u32 %v2426, 2147483648
    %v2441 = vor.u32 1.1754944e-38, %v2440
    %v2442 = vsel %vm2439, %v2441, %v2437
    %v2443 = vmul.f32 1.0, %v2442
    %v2444 = vrcp.pop %v2427
    %v2445 = vmul.f32 %v2427, %v2444
    %v2446 = vsub.f32 1.0, %v2445
    %v2447 = vmul.f32 %v2444, %v2446
    %v2448 = vadd.f32 %v2444, %v2447
    %vm2449 = vweird.f32 %v2427
    %vm2450 = vweird.f32 %v2444
    %vm2451 = vmor %vm2449, %vm2450
    %v2452 = vsel %vm2451, %v2444, %v2448
    %v2453 = vand.u32 2147483647, %v2427
    %vm2454 = vcmp.eq.f32.partialorder %v2453, 8.507059e+37
    %v2455 = vand.u32 %v2427, 2147483648
    %v2456 = vor.u32 1.1754944e-38, %v2455
    %v2457 = vsel %vm2454, %v2456, %v2452
    %v2458 = vmul.f32 1.0, %v2457
    %v2459 = vrcp.pop %v2428
    %v2460 = vmul.f32 %v2428, %v2459
    %v2461 = vsub.f32 1.0, %v2460
    %v2462 = vmul.f32 %v2459, %v2461
    %v2463 = vadd.f32 %v2459, %v2462
    %vm2464 = vweird.f32 %v2428
    %vm2465 = vweird.f32 %v2459
    %vm2466 = vmor %vm2464, %vm2465
    %v2467 = vsel %vm2466, %v2459, %v2463
    %v2468 = vand.u32 2147483647, %v2428
    %vm2469 = vcmp.eq.f32.partialorder %v2468, 8.507059e+37
    %v2470 = vand.u32 %v2428, 2147483648
    %v2471 = vor.u32 1.1754944e-38, %v2470
    %v2472 = vsel %vm2469, %v2471, %v2467
    %v2473 = vmul.f32 1.0, %v2472
    %v2474 = vtanh.pop %v2416
    %v2475 = vmul.f32 %v2458, %v2327
    %v2476 = vmul.f32 %v2443, %v2474
    %v2477 = vadd.f32 %v2475, %v2476
    %v2478 = vtanh.pop %v2477
    %v2479 = vmul.f32 %v2473, %v2478
    %2480 = vst [vmem:[#allocation12] sm:$0xff] %v2477
    %2481 = vst [vmem:[#allocation11] sm:$0xff] %v2479
    %s2482 = scalar_lea.vmem [#allocation3], 8
    %2483 = vst [vmem:[%s2482] sm:$0xff] %v2479
    %v2484 = vld [vmem:[#allocation11] sm:$0xff]
    %v2485 = vld [vmem:[#allocation12] sm:$0xff]
    %s2486 = scalar_lea.vmem [#allocation6], 64
    %v2487 = vld [vmem:[%s2486] sm:$0xff]
    %v2488 = vld [vmem:[%s2486 + $0x8] sm:$0xff]
    %v2489 = vld [vmem:[%s2486 + $0x10] sm:$0xff]
    %v2490 = vld [vmem:[%s2486 + $0x18] sm:$0xff]
    %2491 = vmatpush.msra.mxu0 %v1952
    %2492 = vmatpush.msra.mxu0 %v1948
    %2493 = vmatpush.msra.mxu0 %v1944
    %2494 = vmatpush.msra.mxu0 %v1940
    %2495 = vmatpush.msra.mxu0 %v1936
    %2496 = vmatpush.msra.mxu0 %v1932
    %2497 = vmatpush.msra.mxu0 %v1928
    %2498 = vmatpush.msra.mxu0 %v1924
    %2499 = vmatpush.msra.mxu0 %v1920
    %2500 = vmatpush.msra.mxu0 %v1916
    %2501 = vmatpush.msra.mxu0 %v1912
    %2502 = vmatpush.msra.mxu0 %v1908
    %2503 = vmatpush.msra.mxu0 %v1904
    %2504 = vmatpush.msra.mxu0 %v1900
    %2505 = vmatpush.msra.mxu0 %v1896
    %2506 = vmatpush.msra.mxu0 %v1892
    %2507 = vmatmul.f32.gmra.mxu0 %v2484
    %v2508 = vpop.f32.mrf.mxu0
    %v2509 = vadd.f32 0.0, %v2508
    %2510 = vdwg.mxu0
    %2511 = vmatpush.msra.mxu0 %v1953
    %2512 = vmatpush.msra.mxu0 %v1949
    %2513 = vmatpush.msra.mxu0 %v1945
    %2514 = vmatpush.msra.mxu0 %v1941
    %2515 = vmatpush.msra.mxu0 %v1937
    %2516 = vmatpush.msra.mxu0 %v1933
    %2517 = vmatpush.msra.mxu0 %v1929
    %2518 = vmatpush.msra.mxu0 %v1925
    %2519 = vmatpush.msra.mxu0 %v1921
    %2520 = vmatpush.msra.mxu0 %v1917
    %2521 = vmatpush.msra.mxu0 %v1913
    %2522 = vmatpush.msra.mxu0 %v1909
    %2523 = vmatpush.msra.mxu0 %v1905
    %2524 = vmatpush.msra.mxu0 %v1901
    %2525 = vmatpush.msra.mxu0 %v1897
    %2526 = vmatpush.msra.mxu0 %v1893
    %2527 = vmatmul.f32.gmra.mxu0 %v2484
    %v2528 = vpop.f32.mrf.mxu0
    %v2529 = vadd.f32 0.0, %v2528
    %2530 = vdwg.mxu0
    %2531 = vmatpush.msra.mxu0 %v1954
    %2532 = vmatpush.msra.mxu0 %v1950
    %2533 = vmatpush.msra.mxu0 %v1946
    %2534 = vmatpush.msra.mxu0 %v1942
    %2535 = vmatpush.msra.mxu0 %v1938
    %2536 = vmatpush.msra.mxu0 %v1934
    %2537 = vmatpush.msra.mxu0 %v1930
    %2538 = vmatpush.msra.mxu0 %v1926
    %2539 = vmatpush.msra.mxu0 %v1922
    %2540 = vmatpush.msra.mxu0 %v1918
    %2541 = vmatpush.msra.mxu0 %v1914
    %2542 = vmatpush.msra.mxu0 %v1910
    %2543 = vmatpush.msra.mxu0 %v1906
    %2544 = vmatpush.msra.mxu0 %v1902
    %2545 = vmatpush.msra.mxu0 %v1898
    %2546 = vmatpush.msra.mxu0 %v1894
    %2547 = vmatmul.f32.gmra.mxu0 %v2484
    %v2548 = vpop.f32.mrf.mxu0
    %v2549 = vadd.f32 0.0, %v2548
    %2550 = vdwg.mxu0
    %2551 = vmatpush.msra.mxu0 %v1955
    %2552 = vmatpush.msra.mxu0 %v1951
    %2553 = vmatpush.msra.mxu0 %v1947
    %2554 = vmatpush.msra.mxu0 %v1943
    %2555 = vmatpush.msra.mxu0 %v1939
    %2556 = vmatpush.msra.mxu0 %v1935
    %2557 = vmatpush.msra.mxu0 %v1931
    %2558 = vmatpush.msra.mxu0 %v1927
    %2559 = vmatpush.msra.mxu0 %v1923
    %2560 = vmatpush.msra.mxu0 %v1919
    %2561 = vmatpush.msra.mxu0 %v1915
    %2562 = vmatpush.msra.mxu0 %v1911
    %2563 = vmatpush.msra.mxu0 %v1907
    %2564 = vmatpush.msra.mxu0 %v1903
    %2565 = vmatpush.msra.mxu0 %v1899
    %2566 = vmatpush.msra.mxu0 %v1895
    %2567 = vmatmul.f32.gmra.mxu0 %v2484
    %v2568 = vpop.f32.mrf.mxu0
    %v2569 = vadd.f32 0.0, %v2568
    %2570 = vdwg.mxu0
    %v2571 = vadd.f32 %v2487, %v2509
    %v2572 = vadd.f32 %v2488, %v2529
    %v2573 = vadd.f32 %v2489, %v2549
    %v2574 = vadd.f32 %v2490, %v2569
    %v2575 = vxor.u32 %v2571, 2147483648
    %v2576 = vxor.u32 %v2572, 2147483648
    %v2577 = vxor.u32 %v2573, 2147483648
    %v2578 = vmul.f32 %v2575, 1.442695
    %v2579 = vpow.pop %v2578
    %v2580 = vmul.f32 %v2576, 1.442695
    %v2581 = vpow.pop %v2580
    %v2582 = vmul.f32 %v2577, 1.442695
    %v2583 = vpow.pop %v2582
    %v2584 = vadd.f32 %v2579, 1.0
    %v2585 = vadd.f32 %v2581, 1.0
    %v2586 = vadd.f32 %v2583, 1.0
    %v2587 = vrcp.pop %v2584
    %v2588 = vmul.f32 %v2584, %v2587
    %v2589 = vsub.f32 1.0, %v2588
    %v2590 = vmul.f32 %v2587, %v2589
    %v2591 = vadd.f32 %v2587, %v2590
    %vm2592 = vweird.f32 %v2584
    %vm2593 = vweird.f32 %v2587
    %vm2594 = vmor %vm2592, %vm2593
    %v2595 = vsel %vm2594, %v2587, %v2591
    %v2596 = vand.u32 2147483647, %v2584
    %vm2597 = vcmp.eq.f32.partialorder %v2596, 8.507059e+37
    %v2598 = vand.u32 %v2584, 2147483648
    %v2599 = vor.u32 1.1754944e-38, %v2598
    %v2600 = vsel %vm2597, %v2599, %v2595
    %v2601 = vmul.f32 1.0, %v2600
    %v2602 = vrcp.pop %v2585
    %v2603 = vmul.f32 %v2585, %v2602
    %v2604 = vsub.f32 1.0, %v2603
    %v2605 = vmul.f32 %v2602, %v2604
    %v2606 = vadd.f32 %v2602, %v2605
    %vm2607 = vweird.f32 %v2585
    %vm2608 = vweird.f32 %v2602
    %vm2609 = vmor %vm2607, %vm2608
    %v2610 = vsel %vm2609, %v2602, %v2606
    %v2611 = vand.u32 2147483647, %v2585
    %vm2612 = vcmp.eq.f32.partialorder %v2611, 8.507059e+37
    %v2613 = vand.u32 %v2585, 2147483648
    %v2614 = vor.u32 1.1754944e-38, %v2613
    %v2615 = vsel %vm2612, %v2614, %v2610
    %v2616 = vmul.f32 1.0, %v2615
    %v2617 = vrcp.pop %v2586
    %v2618 = vmul.f32 %v2586, %v2617
    %v2619 = vsub.f32 1.0, %v2618
    %v2620 = vmul.f32 %v2617, %v2619
    %v2621 = vadd.f32 %v2617, %v2620
    %vm2622 = vweird.f32 %v2586
    %vm2623 = vweird.f32 %v2617
    %vm2624 = vmor %vm2622, %vm2623
    %v2625 = vsel %vm2624, %v2617, %v2621
    %v2626 = vand.u32 2147483647, %v2586
    %vm2627 = vcmp.eq.f32.partialorder %v2626, 8.507059e+37
    %v2628 = vand.u32 %v2586, 2147483648
    %v2629 = vor.u32 1.1754944e-38, %v2628
    %v2630 = vsel %vm2627, %v2629, %v2625
    %v2631 = vmul.f32 1.0, %v2630
    %v2632 = vtanh.pop %v2574
    %v2633 = vmul.f32 %v2616, %v2485
    %v2634 = vmul.f32 %v2601, %v2632
    %v2635 = vadd.f32 %v2633, %v2634
    %v2636 = vtanh.pop %v2635
    %v2637 = vmul.f32 %v2631, %v2636
    %2638 = vst [vmem:[#allocation12] sm:$0xff] %v2635
    %2639 = vst [vmem:[#allocation11] sm:$0xff] %v2637
    %s2640 = scalar_lea.vmem [#allocation3], 16
    %2641 = vst [vmem:[%s2640] sm:$0xff] %v2637
    %v2642 = vld [vmem:[#allocation11] sm:$0xff]
    %v2643 = vld [vmem:[#allocation12] sm:$0xff]
    %s2644 = scalar_lea.vmem [#allocation6], 96
    %v2645 = vld [vmem:[%s2644] sm:$0xff]
    %v2646 = vld [vmem:[%s2644 + $0x8] sm:$0xff]
    %v2647 = vld [vmem:[%s2644 + $0x10] sm:$0xff]
    %v2648 = vld [vmem:[%s2644 + $0x18] sm:$0xff]
    %2649 = vmatpush.msra.mxu0 %v1952
    %2650 = vmatpush.msra.mxu0 %v1948
    %2651 = vmatpush.msra.mxu0 %v1944
    %2652 = vmatpush.msra.mxu0 %v1940
    %2653 = vmatpush.msra.mxu0 %v1936
    %2654 = vmatpush.msra.mxu0 %v1932
    %2655 = vmatpush.msra.mxu0 %v1928
    %2656 = vmatpush.msra.mxu0 %v1924
    %2657 = vmatpush.msra.mxu0 %v1920
    %2658 = vmatpush.msra.mxu0 %v1916
    %2659 = vmatpush.msra.mxu0 %v1912
    %2660 = vmatpush.msra.mxu0 %v1908
    %2661 = vmatpush.msra.mxu0 %v1904
    %2662 = vmatpush.msra.mxu0 %v1900
    %2663 = vmatpush.msra.mxu0 %v1896
    %2664 = vmatpush.msra.mxu0 %v1892
    %2665 = vmatmul.f32.gmra.mxu0 %v2642
    %v2666 = vpop.f32.mrf.mxu0
    %v2667 = vadd.f32 0.0, %v2666
    %2668 = vdwg.mxu0
    %2669 = vmatpush.msra.mxu0 %v1953
    %2670 = vmatpush.msra.mxu0 %v1949
    %2671 = vmatpush.msra.mxu0 %v1945
    %2672 = vmatpush.msra.mxu0 %v1941
    %2673 = vmatpush.msra.mxu0 %v1937
    %2674 = vmatpush.msra.mxu0 %v1933
    %2675 = vmatpush.msra.mxu0 %v1929
    %2676 = vmatpush.msra.mxu0 %v1925
    %2677 = vmatpush.msra.mxu0 %v1921
    %2678 = vmatpush.msra.mxu0 %v1917
    %2679 = vmatpush.msra.mxu0 %v1913
    %2680 = vmatpush.msra.mxu0 %v1909
    %2681 = vmatpush.msra.mxu0 %v1905
    %2682 = vmatpush.msra.mxu0 %v1901
    %2683 = vmatpush.msra.mxu0 %v1897
    %2684 = vmatpush.msra.mxu0 %v1893
    %2685 = vmatmul.f32.gmra.mxu0 %v2642
    %v2686 = vpop.f32.mrf.mxu0
    %v2687 = vadd.f32 0.0, %v2686
    %2688 = vdwg.mxu0
    %2689 = vmatpush.msra.mxu0 %v1954
    %2690 = vmatpush.msra.mxu0 %v1950
    %2691 = vmatpush.msra.mxu0 %v1946
    %2692 = vmatpush.msra.mxu0 %v1942
    %2693 = vmatpush.msra.mxu0 %v1938
    %2694 = vmatpush.msra.mxu0 %v1934
    %2695 = vmatpush.msra.mxu0 %v1930
    %2696 = vmatpush.msra.mxu0 %v1926
    %2697 = vmatpush.msra.mxu0 %v1922
    %2698 = vmatpush.msra.mxu0 %v1918
    %2699 = vmatpush.msra.mxu0 %v1914
    %2700 = vmatpush.msra.mxu0 %v1910
    %2701 = vmatpush.msra.mxu0 %v1906
    %2702 = vmatpush.msra.mxu0 %v1902
    %2703 = vmatpush.msra.mxu0 %v1898
    %2704 = vmatpush.msra.mxu0 %v1894
    %2705 = vmatmul.f32.gmra.mxu0 %v2642
    %v2706 = vpop.f32.mrf.mxu0
    %v2707 = vadd.f32 0.0, %v2706
    %2708 = vdwg.mxu0
    %2709 = vmatpush.msra.mxu0 %v1955
    %2710 = vmatpush.msra.mxu0 %v1951
    %2711 = vmatpush.msra.mxu0 %v1947
    %2712 = vmatpush.msra.mxu0 %v1943
    %2713 = vmatpush.msra.mxu0 %v1939
    %2714 = vmatpush.msra.mxu0 %v1935
    %2715 = vmatpush.msra.mxu0 %v1931
    %2716 = vmatpush.msra.mxu0 %v1927
    %2717 = vmatpush.msra.mxu0 %v1923
    %2718 = vmatpush.msra.mxu0 %v1919
    %2719 = vmatpush.msra.mxu0 %v1915
    %2720 = vmatpush.msra.mxu0 %v1911
    %2721 = vmatpush.msra.mxu0 %v1907
    %2722 = vmatpush.msra.mxu0 %v1903
    %2723 = vmatpush.msra.mxu0 %v1899
    %2724 = vmatpush.msra.mxu0 %v1895
    %2725 = vmatmul.f32.gmra.mxu0 %v2642
    %v2726 = vpop.f32.mrf.mxu0
    %v2727 = vadd.f32 0.0, %v2726
    %2728 = vdwg.mxu0
    %v2729 = vadd.f32 %v2645, %v2667
    %v2730 = vadd.f32 %v2646, %v2687
    %v2731 = vadd.f32 %v2647, %v2707
    %v2732 = vadd.f32 %v2648, %v2727
    %v2733 = vxor.u32 %v2729, 2147483648
    %v2734 = vxor.u32 %v2730, 2147483648
    %v2735 = vxor.u32 %v2731, 2147483648
    %v2736 = vmul.f32 %v2733, 1.442695
    %v2737 = vpow.pop %v2736
    %v2738 = vmul.f32 %v2734, 1.442695
    %v2739 = vpow.pop %v2738
    %v2740 = vmul.f32 %v2735, 1.442695
    %v2741 = vpow.pop %v2740
    %v2742 = vadd.f32 %v2737, 1.0
    %v2743 = vadd.f32 %v2739, 1.0
    %v2744 = vadd.f32 %v2741, 1.0
    %v2745 = vrcp.pop %v2742
    %v2746 = vmul.f32 %v2742, %v2745
    %v2747 = vsub.f32 1.0, %v2746
    %v2748 = vmul.f32 %v2745, %v2747
    %v2749 = vadd.f32 %v2745, %v2748
    %vm2750 = vweird.f32 %v2742
    %vm2751 = vweird.f32 %v2745
    %vm2752 = vmor %vm2750, %vm2751
    %v2753 = vsel %vm2752, %v2745, %v2749
    %v2754 = vand.u32 2147483647, %v2742
    %vm2755 = vcmp.eq.f32.partialorder %v2754, 8.507059e+37
    %v2756 = vand.u32 %v2742, 2147483648
    %v2757 = vor.u32 1.1754944e-38, %v2756
    %v2758 = vsel %vm2755, %v2757, %v2753
    %v2759 = vmul.f32 1.0, %v2758
    %v2760 = vrcp.pop %v2743
    %v2761 = vmul.f32 %v2743, %v2760
    %v2762 = vsub.f32 1.0, %v2761
    %v2763 = vmul.f32 %v2760, %v2762
    %v2764 = vadd.f32 %v2760, %v2763
    %vm2765 = vweird.f32 %v2743
    %vm2766 = vweird.f32 %v2760
    %vm2767 = vmor %vm2765, %vm2766
    %v2768 = vsel %vm2767, %v2760, %v2764
    %v2769 = vand.u32 2147483647, %v2743
    %vm2770 = vcmp.eq.f32.partialorder %v2769, 8.507059e+37
    %v2771 = vand.u32 %v2743, 2147483648
    %v2772 = vor.u32 1.1754944e-38, %v2771
    %v2773 = vsel %vm2770, %v2772, %v2768
    %v2774 = vmul.f32 1.0, %v2773
    %v2775 = vrcp.pop %v2744
    %v2776 = vmul.f32 %v2744, %v2775
    %v2777 = vsub.f32 1.0, %v2776
    %v2778 = vmul.f32 %v2775, %v2777
    %v2779 = vadd.f32 %v2775, %v2778
    %vm2780 = vweird.f32 %v2744
    %vm2781 = vweird.f32 %v2775
    %vm2782 = vmor %vm2780, %vm2781
    %v2783 = vsel %vm2782, %v2775, %v2779
    %v2784 = vand.u32 2147483647, %v2744
    %vm2785 = vcmp.eq.f32.partialorder %v2784, 8.507059e+37
    %v2786 = vand.u32 %v2744, 2147483648
    %v2787 = vor.u32 1.1754944e-38, %v2786
    %v2788 = vsel %vm2785, %v2787, %v2783
    %v2789 = vmul.f32 1.0, %v2788
    %v2790 = vtanh.pop %v2732
    %v2791 = vmul.f32 %v2774, %v2643
    %v2792 = vmul.f32 %v2759, %v2790
    %v2793 = vadd.f32 %v2791, %v2792
    %v2794 = vtanh.pop %v2793
    %v2795 = vmul.f32 %v2789, %v2794
    %2796 = vst [vmem:[#allocation12] sm:$0xff] %v2793
    %2797 = vst [vmem:[#allocation11] sm:$0xff] %v2795
    %s2798 = scalar_lea.vmem [#allocation3], 24
    %2799 = vst [vmem:[%s2798] sm:$0xff] %v2795
    %v2800 = vld [vmem:[#allocation11] sm:$0xff]
    %v2801 = vld [vmem:[#allocation12] sm:$0xff]
    %s2802 = scalar_lea.vmem [#allocation6], 128
    %v2803 = vld [vmem:[%s2802] sm:$0xff]
    %v2804 = vld [vmem:[%s2802 + $0x8] sm:$0xff]
    %v2805 = vld [vmem:[%s2802 + $0x10] sm:$0xff]
    %v2806 = vld [vmem:[%s2802 + $0x18] sm:$0xff]
    %2807 = vmatpush.msra.mxu0 %v1952
    %2808 = vmatpush.msra.mxu0 %v1948
    %2809 = vmatpush.msra.mxu0 %v1944
    %2810 = vmatpush.msra.mxu0 %v1940
    %2811 = vmatpush.msra.mxu0 %v1936
    %2812 = vmatpush.msra.mxu0 %v1932
    %2813 = vmatpush.msra.mxu0 %v1928
    %2814 = vmatpush.msra.mxu0 %v1924
    %2815 = vmatpush.msra.mxu0 %v1920
    %2816 = vmatpush.msra.mxu0 %v1916
    %2817 = vmatpush.msra.mxu0 %v1912
    %2818 = vmatpush.msra.mxu0 %v1908
    %2819 = vmatpush.msra.mxu0 %v1904
    %2820 = vmatpush.msra.mxu0 %v1900
    %2821 = vmatpush.msra.mxu0 %v1896
    %2822 = vmatpush.msra.mxu0 %v1892
    %2823 = vmatmul.f32.gmra.mxu0 %v2800
    %v2824 = vpop.f32.mrf.mxu0
    %v2825 = vadd.f32 0.0, %v2824
    %2826 = vdwg.mxu0
    %2827 = vmatpush.msra.mxu0 %v1953
    %2828 = vmatpush.msra.mxu0 %v1949
    %2829 = vmatpush.msra.mxu0 %v1945
    %2830 = vmatpush.msra.mxu0 %v1941
    %2831 = vmatpush.msra.mxu0 %v1937
    %2832 = vmatpush.msra.mxu0 %v1933
    %2833 = vmatpush.msra.mxu0 %v1929
    %2834 = vmatpush.msra.mxu0 %v1925
    %2835 = vmatpush.msra.mxu0 %v1921
    %2836 = vmatpush.msra.mxu0 %v1917
    %2837 = vmatpush.msra.mxu0 %v1913
    %2838 = vmatpush.msra.mxu0 %v1909
    %2839 = vmatpush.msra.mxu0 %v1905
    %2840 = vmatpush.msra.mxu0 %v1901
    %2841 = vmatpush.msra.mxu0 %v1897
    %2842 = vmatpush.msra.mxu0 %v1893
    %2843 = vmatmul.f32.gmra.mxu0 %v2800
    %v2844 = vpop.f32.mrf.mxu0
    %v2845 = vadd.f32 0.0, %v2844
    %2846 = vdwg.mxu0
    %2847 = vmatpush.msra.mxu0 %v1954
    %2848 = vmatpush.msra.mxu0 %v1950
    %2849 = vmatpush.msra.mxu0 %v1946
    %2850 = vmatpush.msra.mxu0 %v1942
    %2851 = vmatpush.msra.mxu0 %v1938
    %2852 = vmatpush.msra.mxu0 %v1934
    %2853 = vmatpush.msra.mxu0 %v1930
    %2854 = vmatpush.msra.mxu0 %v1926
    %2855 = vmatpush.msra.mxu0 %v1922
    %2856 = vmatpush.msra.mxu0 %v1918
    %2857 = vmatpush.msra.mxu0 %v1914
    %2858 = vmatpush.msra.mxu0 %v1910
    %2859 = vmatpush.msra.mxu0 %v1906
    %2860 = vmatpush.msra.mxu0 %v1902
    %2861 = vmatpush.msra.mxu0 %v1898
    %2862 = vmatpush.msra.mxu0 %v1894
    %2863 = vmatmul.f32.gmra.mxu0 %v2800
    %v2864 = vpop.f32.mrf.mxu0
    %v2865 = vadd.f32 0.0, %v2864
    %2866 = vdwg.mxu0
    %2867 = vmatpush.msra.mxu0 %v1955
    %2868 = vmatpush.msra.mxu0 %v1951
    %2869 = vmatpush.msra.mxu0 %v1947
    %2870 = vmatpush.msra.mxu0 %v1943
    %2871 = vmatpush.msra.mxu0 %v1939
    %2872 = vmatpush.msra.mxu0 %v1935
    %2873 = vmatpush.msra.mxu0 %v1931
    %2874 = vmatpush.msra.mxu0 %v1927
    %2875 = vmatpush.msra.mxu0 %v1923
    %2876 = vmatpush.msra.mxu0 %v1919
    %2877 = vmatpush.msra.mxu0 %v1915
    %2878 = vmatpush.msra.mxu0 %v1911
    %2879 = vmatpush.msra.mxu0 %v1907
    %2880 = vmatpush.msra.mxu0 %v1903
    %2881 = vmatpush.msra.mxu0 %v1899
    %2882 = vmatpush.msra.mxu0 %v1895
    %2883 = vmatmul.f32.gmra.mxu0 %v2800
    %v2884 = vpop.f32.mrf.mxu0
    %v2885 = vadd.f32 0.0, %v2884
    %2886 = vdwg.mxu0
    %v2887 = vadd.f32 %v2803, %v2825
    %v2888 = vadd.f32 %v2804, %v2845
    %v2889 = vadd.f32 %v2805, %v2865
    %v2890 = vadd.f32 %v2806, %v2885
    %v2891 = vxor.u32 %v2887, 2147483648
    %v2892 = vxor.u32 %v2888, 2147483648
    %v2893 = vxor.u32 %v2889, 2147483648
    %v2894 = vmul.f32 %v2891, 1.442695
    %v2895 = vpow.pop %v2894
    %v2896 = vmul.f32 %v2892, 1.442695
    %v2897 = vpow.pop %v2896
    %v2898 = vmul.f32 %v2893, 1.442695
    %v2899 = vpow.pop %v2898
    %v2900 = vadd.f32 %v2895, 1.0
    %v2901 = vadd.f32 %v2897, 1.0
    %v2902 = vadd.f32 %v2899, 1.0
    %v2903 = vrcp.pop %v2900
    %v2904 = vmul.f32 %v2900, %v2903
    %v2905 = vsub.f32 1.0, %v2904
    %v2906 = vmul.f32 %v2903, %v2905
    %v2907 = vadd.f32 %v2903, %v2906
    %vm2908 = vweird.f32 %v2900
    %vm2909 = vweird.f32 %v2903
    %vm2910 = vmor %vm2908, %vm2909
    %v2911 = vsel %vm2910, %v2903, %v2907
    %v2912 = vand.u32 2147483647, %v2900
    %vm2913 = vcmp.eq.f32.partialorder %v2912, 8.507059e+37
    %v2914 = vand.u32 %v2900, 2147483648
    %v2915 = vor.u32 1.1754944e-38, %v2914
    %v2916 = vsel %vm2913, %v2915, %v2911
    %v2917 = vmul.f32 1.0, %v2916
    %v2918 = vrcp.pop %v2901
    %v2919 = vmul.f32 %v2901, %v2918
    %v2920 = vsub.f32 1.0, %v2919
    %v2921 = vmul.f32 %v2918, %v2920
    %v2922 = vadd.f32 %v2918, %v2921
    %vm2923 = vweird.f32 %v2901
    %vm2924 = vweird.f32 %v2918
    %vm2925 = vmor %vm2923, %vm2924
    %v2926 = vsel %vm2925, %v2918, %v2922
    %v2927 = vand.u32 2147483647, %v2901
    %vm2928 = vcmp.eq.f32.partialorder %v2927, 8.507059e+37
    %v2929 = vand.u32 %v2901, 2147483648
    %v2930 = vor.u32 1.1754944e-38, %v2929
    %v2931 = vsel %vm2928, %v2930, %v2926
    %v2932 = vmul.f32 1.0, %v2931
    %v2933 = vrcp.pop %v2902
    %v2934 = vmul.f32 %v2902, %v2933
    %v2935 = vsub.f32 1.0, %v2934
    %v2936 = vmul.f32 %v2933, %v2935
    %v2937 = vadd.f32 %v2933, %v2936
    %vm2938 = vweird.f32 %v2902
    %vm2939 = vweird.f32 %v2933
    %vm2940 = vmor %vm2938, %vm2939
    %v2941 = vsel %vm2940, %v2933, %v2937
    %v2942 = vand.u32 2147483647, %v2902
    %vm2943 = vcmp.eq.f32.partialorder %v2942, 8.507059e+37
    %v2944 = vand.u32 %v2902, 2147483648
    %v2945 = vor.u32 1.1754944e-38, %v2944
    %v2946 = vsel %vm2943, %v2945, %v2941
    %v2947 = vmul.f32 1.0, %v2946
    %v2948 = vtanh.pop %v2890
    %v2949 = vmul.f32 %v2932, %v2801
    %v2950 = vmul.f32 %v2917, %v2948
    %v2951 = vadd.f32 %v2949, %v2950
    %v2952 = vtanh.pop %v2951
    %v2953 = vmul.f32 %v2947, %v2952
    %2954 = vst [vmem:[#allocation12] sm:$0xff] %v2951
    %2955 = vst [vmem:[#allocation11] sm:$0xff] %v2953
    %s2956 = scalar_lea.vmem [#allocation3], 32
    %2957 = vst [vmem:[%s2956] sm:$0xff] %v2953
    %v2958 = vld [vmem:[#allocation11] sm:$0xff]
    %v2959 = vld [vmem:[#allocation12] sm:$0xff]
    %s2960 = scalar_lea.vmem [#allocation6], 160
    %v2961 = vld [vmem:[%s2960] sm:$0xff]
    %v2962 = vld [vmem:[%s2960 + $0x8] sm:$0xff]
    %v2963 = vld [vmem:[%s2960 + $0x10] sm:$0xff]
    %v2964 = vld [vmem:[%s2960 + $0x18] sm:$0xff]
    %2965 = vmatpush.msra.mxu0 %v1952
    %2966 = vmatpush.msra.mxu0 %v1948
    %2967 = vmatpush.msra.mxu0 %v1944
    %2968 = vmatpush.msra.mxu0 %v1940
    %2969 = vmatpush.msra.mxu0 %v1936
    %2970 = vmatpush.msra.mxu0 %v1932
    %2971 = vmatpush.msra.mxu0 %v1928
    %2972 = vmatpush.msra.mxu0 %v1924
    %2973 = vmatpush.msra.mxu0 %v1920
    %2974 = vmatpush.msra.mxu0 %v1916
    %2975 = vmatpush.msra.mxu0 %v1912
    %2976 = vmatpush.msra.mxu0 %v1908
    %2977 = vmatpush.msra.mxu0 %v1904
    %2978 = vmatpush.msra.mxu0 %v1900
    %2979 = vmatpush.msra.mxu0 %v1896
    %2980 = vmatpush.msra.mxu0 %v1892
    %2981 = vmatmul.f32.gmra.mxu0 %v2958
    %v2982 = vpop.f32.mrf.mxu0
    %v2983 = vadd.f32 0.0, %v2982
    %2984 = vdwg.mxu0
    %2985 = vmatpush.msra.mxu0 %v1953
    %2986 = vmatpush.msra.mxu0 %v1949
    %2987 = vmatpush.msra.mxu0 %v1945
    %2988 = vmatpush.msra.mxu0 %v1941
    %2989 = vmatpush.msra.mxu0 %v1937
    %2990 = vmatpush.msra.mxu0 %v1933
    %2991 = vmatpush.msra.mxu0 %v1929
    %2992 = vmatpush.msra.mxu0 %v1925
    %2993 = vmatpush.msra.mxu0 %v1921
    %2994 = vmatpush.msra.mxu0 %v1917
    %2995 = vmatpush.msra.mxu0 %v1913
    %2996 = vmatpush.msra.mxu0 %v1909
    %2997 = vmatpush.msra.mxu0 %v1905
    %2998 = vmatpush.msra.mxu0 %v1901
    %2999 = vmatpush.msra.mxu0 %v1897
    %3000 = vmatpush.msra.mxu0 %v1893
    %3001 = vmatmul.f32.gmra.mxu0 %v2958
    %v3002 = vpop.f32.mrf.mxu0
    %v3003 = vadd.f32 0.0, %v3002
    %3004 = vdwg.mxu0
    %3005 = vmatpush.msra.mxu0 %v1954
    %3006 = vmatpush.msra.mxu0 %v1950
    %3007 = vmatpush.msra.mxu0 %v1946
    %3008 = vmatpush.msra.mxu0 %v1942
    %3009 = vmatpush.msra.mxu0 %v1938
    %3010 = vmatpush.msra.mxu0 %v1934
    %3011 = vmatpush.msra.mxu0 %v1930
    %3012 = vmatpush.msra.mxu0 %v1926
    %3013 = vmatpush.msra.mxu0 %v1922
    %3014 = vmatpush.msra.mxu0 %v1918
    %3015 = vmatpush.msra.mxu0 %v1914
    %3016 = vmatpush.msra.mxu0 %v1910
    %3017 = vmatpush.msra.mxu0 %v1906
    %3018 = vmatpush.msra.mxu0 %v1902
    %3019 = vmatpush.msra.mxu0 %v1898
    %3020 = vmatpush.msra.mxu0 %v1894
    %3021 = vmatmul.f32.gmra.mxu0 %v2958
    %v3022 = vpop.f32.mrf.mxu0
    %v3023 = vadd.f32 0.0, %v3022
    %3024 = vdwg.mxu0
    %3025 = vmatpush.msra.mxu0 %v1955
    %3026 = vmatpush.msra.mxu0 %v1951
    %3027 = vmatpush.msra.mxu0 %v1947
    %3028 = vmatpush.msra.mxu0 %v1943
    %3029 = vmatpush.msra.mxu0 %v1939
    %3030 = vmatpush.msra.mxu0 %v1935
    %3031 = vmatpush.msra.mxu0 %v1931
    %3032 = vmatpush.msra.mxu0 %v1927
    %3033 = vmatpush.msra.mxu0 %v1923
    %3034 = vmatpush.msra.mxu0 %v1919
    %3035 = vmatpush.msra.mxu0 %v1915
    %3036 = vmatpush.msra.mxu0 %v1911
    %3037 = vmatpush.msra.mxu0 %v1907
    %3038 = vmatpush.msra.mxu0 %v1903
    %3039 = vmatpush.msra.mxu0 %v1899
    %3040 = vmatpush.msra.mxu0 %v1895
    %3041 = vmatmul.f32.gmra.mxu0 %v2958
    %v3042 = vpop.f32.mrf.mxu0
    %v3043 = vadd.f32 0.0, %v3042
    %3044 = vdwg.mxu0
    %v3045 = vadd.f32 %v2961, %v2983
    %v3046 = vadd.f32 %v2962, %v3003
    %v3047 = vadd.f32 %v2963, %v3023
    %v3048 = vadd.f32 %v2964, %v3043
    %v3049 = vxor.u32 %v3045, 2147483648
    %v3050 = vxor.u32 %v3046, 2147483648
    %v3051 = vxor.u32 %v3047, 2147483648
    %v3052 = vmul.f32 %v3049, 1.442695
    %v3053 = vpow.pop %v3052
    %v3054 = vmul.f32 %v3050, 1.442695
    %v3055 = vpow.pop %v3054
    %v3056 = vmul.f32 %v3051, 1.442695
    %v3057 = vpow.pop %v3056
    %v3058 = vadd.f32 %v3053, 1.0
    %v3059 = vadd.f32 %v3055, 1.0
    %v3060 = vadd.f32 %v3057, 1.0
    %v3061 = vrcp.pop %v3058
    %v3062 = vmul.f32 %v3058, %v3061
    %v3063 = vsub.f32 1.0, %v3062
    %v3064 = vmul.f32 %v3061, %v3063
    %v3065 = vadd.f32 %v3061, %v3064
    %vm3066 = vweird.f32 %v3058
    %vm3067 = vweird.f32 %v3061
    %vm3068 = vmor %vm3066, %vm3067
    %v3069 = vsel %vm3068, %v3061, %v3065
    %v3070 = vand.u32 2147483647, %v3058
    %vm3071 = vcmp.eq.f32.partialorder %v3070, 8.507059e+37
    %v3072 = vand.u32 %v3058, 2147483648
    %v3073 = vor.u32 1.1754944e-38, %v3072
    %v3074 = vsel %vm3071, %v3073, %v3069
    %v3075 = vmul.f32 1.0, %v3074
    %v3076 = vrcp.pop %v3059
    %v3077 = vmul.f32 %v3059, %v3076
    %v3078 = vsub.f32 1.0, %v3077
    %v3079 = vmul.f32 %v3076, %v3078
    %v3080 = vadd.f32 %v3076, %v3079
    %vm3081 = vweird.f32 %v3059
    %vm3082 = vweird.f32 %v3076
    %vm3083 = vmor %vm3081, %vm3082
    %v3084 = vsel %vm3083, %v3076, %v3080
    %v3085 = vand.u32 2147483647, %v3059
    %vm3086 = vcmp.eq.f32.partialorder %v3085, 8.507059e+37
    %v3087 = vand.u32 %v3059, 2147483648
    %v3088 = vor.u32 1.1754944e-38, %v3087
    %v3089 = vsel %vm3086, %v3088, %v3084
    %v3090 = vmul.f32 1.0, %v3089
    %v3091 = vrcp.pop %v3060
    %v3092 = vmul.f32 %v3060, %v3091
    %v3093 = vsub.f32 1.0, %v3092
    %v3094 = vmul.f32 %v3091, %v3093
    %v3095 = vadd.f32 %v3091, %v3094
    %vm3096 = vweird.f32 %v3060
    %vm3097 = vweird.f32 %v3091
    %vm3098 = vmor %vm3096, %vm3097
    %v3099 = vsel %vm3098, %v3091, %v3095
    %v3100 = vand.u32 2147483647, %v3060
    %vm3101 = vcmp.eq.f32.partialorder %v3100, 8.507059e+37
    %v3102 = vand.u32 %v3060, 2147483648
    %v3103 = vor.u32 1.1754944e-38, %v3102
    %v3104 = vsel %vm3101, %v3103, %v3099
    %v3105 = vmul.f32 1.0, %v3104
    %v3106 = vtanh.pop %v3048
    %v3107 = vmul.f32 %v3090, %v2959
    %v3108 = vmul.f32 %v3075, %v3106
    %v3109 = vadd.f32 %v3107, %v3108
    %v3110 = vtanh.pop %v3109
    %v3111 = vmul.f32 %v3105, %v3110
    %3112 = vst [vmem:[#allocation12] sm:$0xff] %v3109
    %3113 = vst [vmem:[#allocation11] sm:$0xff] %v3111
    %s3114 = scalar_lea.vmem [#allocation3], 40
    %3115 = vst [vmem:[%s3114] sm:$0xff] %v3111
    %v3116 = vld [vmem:[#allocation11] sm:$0xff]
    %v3117 = vld [vmem:[#allocation12] sm:$0xff]
    %s3118 = scalar_lea.vmem [#allocation6], 192
    %v3119 = vld [vmem:[%s3118] sm:$0xff]
    %v3120 = vld [vmem:[%s3118 + $0x8] sm:$0xff]
    %v3121 = vld [vmem:[%s3118 + $0x10] sm:$0xff]
    %v3122 = vld [vmem:[%s3118 + $0x18] sm:$0xff]
    %3123 = vmatpush.msra.mxu0 %v1952
    %3124 = vmatpush.msra.mxu0 %v1948
    %3125 = vmatpush.msra.mxu0 %v1944
    %3126 = vmatpush.msra.mxu0 %v1940
    %3127 = vmatpush.msra.mxu0 %v1936
    %3128 = vmatpush.msra.mxu0 %v1932
    %3129 = vmatpush.msra.mxu0 %v1928
    %3130 = vmatpush.msra.mxu0 %v1924
    %3131 = vmatpush.msra.mxu0 %v1920
    %3132 = vmatpush.msra.mxu0 %v1916
    %3133 = vmatpush.msra.mxu0 %v1912
    %3134 = vmatpush.msra.mxu0 %v1908
    %3135 = vmatpush.msra.mxu0 %v1904
    %3136 = vmatpush.msra.mxu0 %v1900
    %3137 = vmatpush.msra.mxu0 %v1896
    %3138 = vmatpush.msra.mxu0 %v1892
    %3139 = vmatmul.f32.gmra.mxu0 %v3116
    %v3140 = vpop.f32.mrf.mxu0
    %v3141 = vadd.f32 0.0, %v3140
    %3142 = vdwg.mxu0
    %3143 = vmatpush.msra.mxu0 %v1953
    %3144 = vmatpush.msra.mxu0 %v1949
    %3145 = vmatpush.msra.mxu0 %v1945
    %3146 = vmatpush.msra.mxu0 %v1941
    %3147 = vmatpush.msra.mxu0 %v1937
    %3148 = vmatpush.msra.mxu0 %v1933
    %3149 = vmatpush.msra.mxu0 %v1929
    %3150 = vmatpush.msra.mxu0 %v1925
    %3151 = vmatpush.msra.mxu0 %v1921
    %3152 = vmatpush.msra.mxu0 %v1917
    %3153 = vmatpush.msra.mxu0 %v1913
    %3154 = vmatpush.msra.mxu0 %v1909
    %3155 = vmatpush.msra.mxu0 %v1905
    %3156 = vmatpush.msra.mxu0 %v1901
    %3157 = vmatpush.msra.mxu0 %v1897
    %3158 = vmatpush.msra.mxu0 %v1893
    %3159 = vmatmul.f32.gmra.mxu0 %v3116
    %v3160 = vpop.f32.mrf.mxu0
    %v3161 = vadd.f32 0.0, %v3160
    %3162 = vdwg.mxu0
    %3163 = vmatpush.msra.mxu0 %v1954
    %3164 = vmatpush.msra.mxu0 %v1950
    %3165 = vmatpush.msra.mxu0 %v1946
    %3166 = vmatpush.msra.mxu0 %v1942
    %3167 = vmatpush.msra.mxu0 %v1938
    %3168 = vmatpush.msra.mxu0 %v1934
    %3169 = vmatpush.msra.mxu0 %v1930
    %3170 = vmatpush.msra.mxu0 %v1926
    %3171 = vmatpush.msra.mxu0 %v1922
    %3172 = vmatpush.msra.mxu0 %v1918
    %3173 = vmatpush.msra.mxu0 %v1914
    %3174 = vmatpush.msra.mxu0 %v1910
    %3175 = vmatpush.msra.mxu0 %v1906
    %3176 = vmatpush.msra.mxu0 %v1902
    %3177 = vmatpush.msra.mxu0 %v1898
    %3178 = vmatpush.msra.mxu0 %v1894
    %3179 = vmatmul.f32.gmra.mxu0 %v3116
    %v3180 = vpop.f32.mrf.mxu0
    %v3181 = vadd.f32 0.0, %v3180
    %3182 = vdwg.mxu0
    %3183 = vmatpush.msra.mxu0 %v1955
    %3184 = vmatpush.msra.mxu0 %v1951
    %3185 = vmatpush.msra.mxu0 %v1947
    %3186 = vmatpush.msra.mxu0 %v1943
    %3187 = vmatpush.msra.mxu0 %v1939
    %3188 = vmatpush.msra.mxu0 %v1935
    %3189 = vmatpush.msra.mxu0 %v1931
    %3190 = vmatpush.msra.mxu0 %v1927
    %3191 = vmatpush.msra.mxu0 %v1923
    %3192 = vmatpush.msra.mxu0 %v1919
    %3193 = vmatpush.msra.mxu0 %v1915
    %3194 = vmatpush.msra.mxu0 %v1911
    %3195 = vmatpush.msra.mxu0 %v1907
    %3196 = vmatpush.msra.mxu0 %v1903
    %3197 = vmatpush.msra.mxu0 %v1899
    %3198 = vmatpush.msra.mxu0 %v1895
    %3199 = vmatmul.f32.gmra.mxu0 %v3116
    %v3200 = vpop.f32.mrf.mxu0
    %v3201 = vadd.f32 0.0, %v3200
    %3202 = vdwg.mxu0
    %v3203 = vadd.f32 %v3119, %v3141
    %v3204 = vadd.f32 %v3120, %v3161
    %v3205 = vadd.f32 %v3121, %v3181
    %v3206 = vadd.f32 %v3122, %v3201
    %v3207 = vxor.u32 %v3203, 2147483648
    %v3208 = vxor.u32 %v3204, 2147483648
    %v3209 = vxor.u32 %v3205, 2147483648
    %v3210 = vmul.f32 %v3207, 1.442695
    %v3211 = vpow.pop %v3210
    %v3212 = vmul.f32 %v3208, 1.442695
    %v3213 = vpow.pop %v3212
    %v3214 = vmul.f32 %v3209, 1.442695
    %v3215 = vpow.pop %v3214
    %v3216 = vadd.f32 %v3211, 1.0
    %v3217 = vadd.f32 %v3213, 1.0
    %v3218 = vadd.f32 %v3215, 1.0
    %v3219 = vrcp.pop %v3216
    %v3220 = vmul.f32 %v3216, %v3219
    %v3221 = vsub.f32 1.0, %v3220
    %v3222 = vmul.f32 %v3219, %v3221
    %v3223 = vadd.f32 %v3219, %v3222
    %vm3224 = vweird.f32 %v3216
    %vm3225 = vweird.f32 %v3219
    %vm3226 = vmor %vm3224, %vm3225
    %v3227 = vsel %vm3226, %v3219, %v3223
    %v3228 = vand.u32 2147483647, %v3216
    %vm3229 = vcmp.eq.f32.partialorder %v3228, 8.507059e+37
    %v3230 = vand.u32 %v3216, 2147483648
    %v3231 = vor.u32 1.1754944e-38, %v3230
    %v3232 = vsel %vm3229, %v3231, %v3227
    %v3233 = vmul.f32 1.0, %v3232
    %v3234 = vrcp.pop %v3217
    %v3235 = vmul.f32 %v3217, %v3234
    %v3236 = vsub.f32 1.0, %v3235
    %v3237 = vmul.f32 %v3234, %v3236
    %v3238 = vadd.f32 %v3234, %v3237
    %vm3239 = vweird.f32 %v3217
    %vm3240 = vweird.f32 %v3234
    %vm3241 = vmor %vm3239, %vm3240
    %v3242 = vsel %vm3241, %v3234, %v3238
    %v3243 = vand.u32 2147483647, %v3217
    %vm3244 = vcmp.eq.f32.partialorder %v3243, 8.507059e+37
    %v3245 = vand.u32 %v3217, 2147483648
    %v3246 = vor.u32 1.1754944e-38, %v3245
    %v3247 = vsel %vm3244, %v3246, %v3242
    %v3248 = vmul.f32 1.0, %v3247
    %v3249 = vrcp.pop %v3218
    %v3250 = vmul.f32 %v3218, %v3249
    %v3251 = vsub.f32 1.0, %v3250
    %v3252 = vmul.f32 %v3249, %v3251
    %v3253 = vadd.f32 %v3249, %v3252
    %vm3254 = vweird.f32 %v3218
    %vm3255 = vweird.f32 %v3249
    %vm3256 = vmor %vm3254, %vm3255
    %v3257 = vsel %vm3256, %v3249, %v3253
    %v3258 = vand.u32 2147483647, %v3218
    %vm3259 = vcmp.eq.f32.partialorder %v3258, 8.507059e+37
    %v3260 = vand.u32 %v3218, 2147483648
    %v3261 = vor.u32 1.1754944e-38, %v3260
    %v3262 = vsel %vm3259, %v3261, %v3257
    %v3263 = vmul.f32 1.0, %v3262
    %v3264 = vtanh.pop %v3206
    %v3265 = vmul.f32 %v3248, %v3117
    %v3266 = vmul.f32 %v3233, %v3264
    %v3267 = vadd.f32 %v3265, %v3266
    %v3268 = vtanh.pop %v3267
    %v3269 = vmul.f32 %v3263, %v3268
    %3270 = vst [vmem:[#allocation12] sm:$0xff] %v3267
    %3271 = vst [vmem:[#allocation11] sm:$0xff] %v3269
    %s3272 = scalar_lea.vmem [#allocation3], 48
    %3273 = vst [vmem:[%s3272] sm:$0xff] %v3269
    %v3274 = vld [vmem:[#allocation11] sm:$0xff]
    %v3275 = vld [vmem:[#allocation12] sm:$0xff]
    %s3276 = scalar_lea.vmem [#allocation6], 224
    %v3277 = vld [vmem:[%s3276] sm:$0xff]
    %v3278 = vld [vmem:[%s3276 + $0x8] sm:$0xff]
    %v3279 = vld [vmem:[%s3276 + $0x10] sm:$0xff]
    %v3280 = vld [vmem:[%s3276 + $0x18] sm:$0xff]
    %3281 = vmatpush.msra.mxu0 %v1952
    %3282 = vmatpush.msra.mxu0 %v1948
    %3283 = vmatpush.msra.mxu0 %v1944
    %3284 = vmatpush.msra.mxu0 %v1940
    %3285 = vmatpush.msra.mxu0 %v1936
    %3286 = vmatpush.msra.mxu0 %v1932
    %3287 = vmatpush.msra.mxu0 %v1928
    %3288 = vmatpush.msra.mxu0 %v1924
    %3289 = vmatpush.msra.mxu0 %v1920
    %3290 = vmatpush.msra.mxu0 %v1916
    %3291 = vmatpush.msra.mxu0 %v1912
    %3292 = vmatpush.msra.mxu0 %v1908
    %3293 = vmatpush.msra.mxu0 %v1904
    %3294 = vmatpush.msra.mxu0 %v1900
    %3295 = vmatpush.msra.mxu0 %v1896
    %3296 = vmatpush.msra.mxu0 %v1892
    %3297 = vmatmul.f32.gmra.mxu0 %v3274
    %v3298 = vpop.f32.mrf.mxu0
    %v3299 = vadd.f32 0.0, %v3298
    %3300 = vdwg.mxu0
    %3301 = vmatpush.msra.mxu0 %v1953
    %3302 = vmatpush.msra.mxu0 %v1949
    %3303 = vmatpush.msra.mxu0 %v1945
    %3304 = vmatpush.msra.mxu0 %v1941
    %3305 = vmatpush.msra.mxu0 %v1937
    %3306 = vmatpush.msra.mxu0 %v1933
    %3307 = vmatpush.msra.mxu0 %v1929
    %3308 = vmatpush.msra.mxu0 %v1925
    %3309 = vmatpush.msra.mxu0 %v1921
    %3310 = vmatpush.msra.mxu0 %v1917
    %3311 = vmatpush.msra.mxu0 %v1913
    %3312 = vmatpush.msra.mxu0 %v1909
    %3313 = vmatpush.msra.mxu0 %v1905
    %3314 = vmatpush.msra.mxu0 %v1901
    %3315 = vmatpush.msra.mxu0 %v1897
    %3316 = vmatpush.msra.mxu0 %v1893
    %3317 = vmatmul.f32.gmra.mxu0 %v3274
    %v3318 = vpop.f32.mrf.mxu0
    %v3319 = vadd.f32 0.0, %v3318
    %3320 = vdwg.mxu0
    %3321 = vmatpush.msra.mxu0 %v1954
    %3322 = vmatpush.msra.mxu0 %v1950
    %3323 = vmatpush.msra.mxu0 %v1946
    %3324 = vmatpush.msra.mxu0 %v1942
    %3325 = vmatpush.msra.mxu0 %v1938
    %3326 = vmatpush.msra.mxu0 %v1934
    %3327 = vmatpush.msra.mxu0 %v1930
    %3328 = vmatpush.msra.mxu0 %v1926
    %3329 = vmatpush.msra.mxu0 %v1922
    %3330 = vmatpush.msra.mxu0 %v1918
    %3331 = vmatpush.msra.mxu0 %v1914
    %3332 = vmatpush.msra.mxu0 %v1910
    %3333 = vmatpush.msra.mxu0 %v1906
    %3334 = vmatpush.msra.mxu0 %v1902
    %3335 = vmatpush.msra.mxu0 %v1898
    %3336 = vmatpush.msra.mxu0 %v1894
    %3337 = vmatmul.f32.gmra.mxu0 %v3274
    %v3338 = vpop.f32.mrf.mxu0
    %v3339 = vadd.f32 0.0, %v3338
    %3340 = vdwg.mxu0
    %3341 = vmatpush.msra.mxu0 %v1955
    %3342 = vmatpush.msra.mxu0 %v1951
    %3343 = vmatpush.msra.mxu0 %v1947
    %3344 = vmatpush.msra.mxu0 %v1943
    %3345 = vmatpush.msra.mxu0 %v1939
    %3346 = vmatpush.msra.mxu0 %v1935
    %3347 = vmatpush.msra.mxu0 %v1931
    %3348 = vmatpush.msra.mxu0 %v1927
    %3349 = vmatpush.msra.mxu0 %v1923
    %3350 = vmatpush.msra.mxu0 %v1919
    %3351 = vmatpush.msra.mxu0 %v1915
    %3352 = vmatpush.msra.mxu0 %v1911
    %3353 = vmatpush.msra.mxu0 %v1907
    %3354 = vmatpush.msra.mxu0 %v1903
    %3355 = vmatpush.msra.mxu0 %v1899
    %3356 = vmatpush.msra.mxu0 %v1895
    %3357 = vmatmul.f32.gmra.mxu0 %v3274
    %v3358 = vpop.f32.mrf.mxu0
    %v3359 = vadd.f32 0.0, %v3358
    %3360 = vdwg.mxu0
    %v3361 = vadd.f32 %v3277, %v3299
    %v3362 = vadd.f32 %v3278, %v3319
    %v3363 = vadd.f32 %v3279, %v3339
    %v3364 = vadd.f32 %v3280, %v3359
    %v3365 = vxor.u32 %v3361, 2147483648
    %v3366 = vxor.u32 %v3362, 2147483648
    %v3367 = vxor.u32 %v3363, 2147483648
    %v3368 = vmul.f32 %v3365, 1.442695
    %v3369 = vpow.pop %v3368
    %v3370 = vmul.f32 %v3366, 1.442695
    %v3371 = vpow.pop %v3370
    %v3372 = vmul.f32 %v3367, 1.442695
    %v3373 = vpow.pop %v3372
    %v3374 = vadd.f32 %v3369, 1.0
    %v3375 = vadd.f32 %v3371, 1.0
    %v3376 = vadd.f32 %v3373, 1.0
    %v3377 = vrcp.pop %v3374
    %v3378 = vmul.f32 %v3374, %v3377
    %v3379 = vsub.f32 1.0, %v3378
    %v3380 = vmul.f32 %v3377, %v3379
    %v3381 = vadd.f32 %v3377, %v3380
    %vm3382 = vweird.f32 %v3374
    %vm3383 = vweird.f32 %v3377
    %vm3384 = vmor %vm3382, %vm3383
    %v3385 = vsel %vm3384, %v3377, %v3381
    %v3386 = vand.u32 2147483647, %v3374
    %vm3387 = vcmp.eq.f32.partialorder %v3386, 8.507059e+37
    %v3388 = vand.u32 %v3374, 2147483648
    %v3389 = vor.u32 1.1754944e-38, %v3388
    %v3390 = vsel %vm3387, %v3389, %v3385
    %v3391 = vmul.f32 1.0, %v3390
    %v3392 = vrcp.pop %v3375
    %v3393 = vmul.f32 %v3375, %v3392
    %v3394 = vsub.f32 1.0, %v3393
    %v3395 = vmul.f32 %v3392, %v3394
    %v3396 = vadd.f32 %v3392, %v3395
    %vm3397 = vweird.f32 %v3375
    %vm3398 = vweird.f32 %v3392
    %vm3399 = vmor %vm3397, %vm3398
    %v3400 = vsel %vm3399, %v3392, %v3396
    %v3401 = vand.u32 2147483647, %v3375
    %vm3402 = vcmp.eq.f32.partialorder %v3401, 8.507059e+37
    %v3403 = vand.u32 %v3375, 2147483648
    %v3404 = vor.u32 1.1754944e-38, %v3403
    %v3405 = vsel %vm3402, %v3404, %v3400
    %v3406 = vmul.f32 1.0, %v3405
    %v3407 = vrcp.pop %v3376
    %v3408 = vmul.f32 %v3376, %v3407
    %v3409 = vsub.f32 1.0, %v3408
    %v3410 = vmul.f32 %v3407, %v3409
    %v3411 = vadd.f32 %v3407, %v3410
    %vm3412 = vweird.f32 %v3376
    %vm3413 = vweird.f32 %v3407
    %vm3414 = vmor %vm3412, %vm3413
    %v3415 = vsel %vm3414, %v3407, %v3411
    %v3416 = vand.u32 2147483647, %v3376
    %vm3417 = vcmp.eq.f32.partialorder %v3416, 8.507059e+37
    %v3418 = vand.u32 %v3376, 2147483648
    %v3419 = vor.u32 1.1754944e-38, %v3418
    %v3420 = vsel %vm3417, %v3419, %v3415
    %v3421 = vmul.f32 1.0, %v3420
    %v3422 = vtanh.pop %v3364
    %v3423 = vmul.f32 %v3406, %v3275
    %v3424 = vmul.f32 %v3391, %v3422
    %v3425 = vadd.f32 %v3423, %v3424
    %v3426 = vtanh.pop %v3425
    %v3427 = vmul.f32 %v3421, %v3426
    %3428 = vst [vmem:[#allocation12] sm:$0xff] %v3425
    %3429 = vst [vmem:[#allocation11] sm:$0xff] %v3427
    %s3430 = scalar_lea.vmem [#allocation3], 56
    %3431 = vst [vmem:[%s3430] sm:$0xff] %v3427
    %v3432 = vld [vmem:[#allocation23] sm:$0xff]
    %v3433 = vld [vmem:[#allocation23 + $0x8] sm:$0xff]
    %v3434 = vld [vmem:[#allocation23 + $0x10] sm:$0xff]
    %v3435 = vld [vmem:[#allocation23 + $0x18] sm:$0xff]
    %v3436 = vld [vmem:[#allocation23 + $0x20] sm:$0xff]
    %v3437 = vld [vmem:[#allocation23 + $0x28] sm:$0xff]
    %v3438 = vld [vmem:[#allocation23 + $0x30] sm:$0xff]
    %v3439 = vld [vmem:[#allocation23 + $0x38] sm:$0xff]
    %v3440 = vld [vmem:[#allocation23 + $0x40] sm:$0xff]
    %v3441 = vld [vmem:[#allocation23 + $0x48] sm:$0xff]
    %v3442 = vld [vmem:[#allocation23 + $0x50] sm:$0xff]
    %v3443 = vld [vmem:[#allocation23 + $0x58] sm:$0xff]
    %v3444 = vld [vmem:[#allocation23 + $0x60] sm:$0xff]
    %v3445 = vld [vmem:[#allocation23 + $0x68] sm:$0xff]
    %v3446 = vld [vmem:[#allocation23 + $0x70] sm:$0xff]
    %v3447 = vld [vmem:[#allocation23 + $0x78] sm:$0xff]
    %v3448 = vld [vmem:[#allocation23 + $0x80] sm:$0xff]
    %v3449 = vld [vmem:[#allocation23 + $0x88] sm:$0xff]
    %v3450 = vld [vmem:[#allocation23 + $0x90] sm:$0xff]
    %v3451 = vld [vmem:[#allocation23 + $0x98] sm:$0xff]
    %v3452 = vld [vmem:[#allocation23 + $0xa0] sm:$0xff]
    %v3453 = vld [vmem:[#allocation23 + $0xa8] sm:$0xff]
    %v3454 = vld [vmem:[#allocation23 + $0xb0] sm:$0xff]
    %v3455 = vld [vmem:[#allocation23 + $0xb8] sm:$0xff]
    %v3456 = vld [vmem:[#allocation23 + $0xc0] sm:$0xff]
    %v3457 = vld [vmem:[#allocation23 + $0xc8] sm:$0xff]
    %v3458 = vld [vmem:[#allocation23 + $0xd0] sm:$0xff]
    %v3459 = vld [vmem:[#allocation23 + $0xd8] sm:$0xff]
    %v3460 = vld [vmem:[#allocation23 + $0xe0] sm:$0xff]
    %v3461 = vld [vmem:[#allocation23 + $0xe8] sm:$0xff]
    %v3462 = vld [vmem:[#allocation23 + $0xf0] sm:$0xff]
    %v3463 = vld [vmem:[#allocation23 + $0xf8] sm:$0xff]
    %v3464 = vld [vmem:[#allocation23 + $0x100] sm:$0xff]
    %v3465 = vld [vmem:[#allocation23 + $0x108] sm:$0xff]
    %v3466 = vld [vmem:[#allocation23 + $0x110] sm:$0xff]
    %v3467 = vld [vmem:[#allocation23 + $0x118] sm:$0xff]
    %v3468 = vld [vmem:[#allocation23 + $0x120] sm:$0xff]
    %v3469 = vld [vmem:[#allocation23 + $0x128] sm:$0xff]
    %v3470 = vld [vmem:[#allocation23 + $0x130] sm:$0xff]
    %v3471 = vld [vmem:[#allocation23 + $0x138] sm:$0xff]
    %v3472 = vld [vmem:[#allocation23 + $0x140] sm:$0xff]
    %v3473 = vld [vmem:[#allocation23 + $0x148] sm:$0xff]
    %v3474 = vld [vmem:[#allocation23 + $0x150] sm:$0xff]
    %v3475 = vld [vmem:[#allocation23 + $0x158] sm:$0xff]
    %v3476 = vld [vmem:[#allocation23 + $0x160] sm:$0xff]
    %v3477 = vld [vmem:[#allocation23 + $0x168] sm:$0xff]
    %v3478 = vld [vmem:[#allocation23 + $0x170] sm:$0xff]
    %v3479 = vld [vmem:[#allocation23 + $0x178] sm:$0xff]
    %v3480 = vld [vmem:[#allocation23 + $0x180] sm:$0xff]
    %v3481 = vld [vmem:[#allocation23 + $0x188] sm:$0xff]
    %v3482 = vld [vmem:[#allocation23 + $0x190] sm:$0xff]
    %v3483 = vld [vmem:[#allocation23 + $0x198] sm:$0xff]
    %v3484 = vld [vmem:[#allocation23 + $0x1a0] sm:$0xff]
    %v3485 = vld [vmem:[#allocation23 + $0x1a8] sm:$0xff]
    %v3486 = vld [vmem:[#allocation23 + $0x1b0] sm:$0xff]
    %v3487 = vld [vmem:[#allocation23 + $0x1b8] sm:$0xff]
    %v3488 = vld [vmem:[#allocation23 + $0x1c0] sm:$0xff]
    %v3489 = vld [vmem:[#allocation23 + $0x1c8] sm:$0xff]
    %v3490 = vld [vmem:[#allocation23 + $0x1d0] sm:$0xff]
    %v3491 = vld [vmem:[#allocation23 + $0x1d8] sm:$0xff]
    %v3492 = vld [vmem:[#allocation23 + $0x1e0] sm:$0xff]
    %v3493 = vld [vmem:[#allocation23 + $0x1e8] sm:$0xff]
    %v3494 = vld [vmem:[#allocation23 + $0x1f0] sm:$0xff]
    %v3495 = vld [vmem:[#allocation23 + $0x1f8] sm:$0xff]
    %v3496 = vld [vmem:[#allocation29] sm:$0xff]
    %v3497 = vld [vmem:[#allocation29 + $0x8] sm:$0xff]
    %v3498 = vld [vmem:[#allocation29 + $0x10] sm:$0xff]
    %v3499 = vld [vmem:[#allocation29 + $0x18] sm:$0xff]
    %v3500 = vld [vmem:[#allocation29 + $0x20] sm:$0xff]
    %v3501 = vld [vmem:[#allocation29 + $0x28] sm:$0xff]
    %v3502 = vld [vmem:[#allocation29 + $0x30] sm:$0xff]
    %v3503 = vld [vmem:[#allocation29 + $0x38] sm:$0xff]
    %v3504 = vld [vmem:[#allocation29 + $0x40] sm:$0xff]
    %v3505 = vld [vmem:[#allocation29 + $0x48] sm:$0xff]
    %v3506 = vld [vmem:[#allocation29 + $0x50] sm:$0xff]
    %v3507 = vld [vmem:[#allocation29 + $0x58] sm:$0xff]
    %v3508 = vld [vmem:[#allocation29 + $0x60] sm:$0xff]
    %v3509 = vld [vmem:[#allocation29 + $0x68] sm:$0xff]
    %v3510 = vld [vmem:[#allocation29 + $0x70] sm:$0xff]
    %v3511 = vld [vmem:[#allocation29 + $0x78] sm:$0xff]
    %v3512 = vld [vmem:[#allocation29 + $0x80] sm:$0xff]
    %v3513 = vld [vmem:[#allocation29 + $0x88] sm:$0xff]
    %v3514 = vld [vmem:[#allocation29 + $0x90] sm:$0xff]
    %v3515 = vld [vmem:[#allocation29 + $0x98] sm:$0xff]
    %v3516 = vld [vmem:[#allocation29 + $0xa0] sm:$0xff]
    %v3517 = vld [vmem:[#allocation29 + $0xa8] sm:$0xff]
    %v3518 = vld [vmem:[#allocation29 + $0xb0] sm:$0xff]
    %v3519 = vld [vmem:[#allocation29 + $0xb8] sm:$0xff]
    %v3520 = vld [vmem:[#allocation29 + $0xc0] sm:$0xff]
    %v3521 = vld [vmem:[#allocation29 + $0xc8] sm:$0xff]
    %v3522 = vld [vmem:[#allocation29 + $0xd0] sm:$0xff]
    %v3523 = vld [vmem:[#allocation29 + $0xd8] sm:$0xff]
    %v3524 = vld [vmem:[#allocation29 + $0xe0] sm:$0xff]
    %v3525 = vld [vmem:[#allocation29 + $0xe8] sm:$0xff]
    %v3526 = vld [vmem:[#allocation29 + $0xf0] sm:$0xff]
    %v3527 = vld [vmem:[#allocation29 + $0xf8] sm:$0xff]
    %v3528 = vld [vmem:[#allocation29 + $0x100] sm:$0xff]
    %v3529 = vld [vmem:[#allocation29 + $0x108] sm:$0xff]
    %v3530 = vld [vmem:[#allocation29 + $0x110] sm:$0xff]
    %v3531 = vld [vmem:[#allocation29 + $0x118] sm:$0xff]
    %v3532 = vld [vmem:[#allocation29 + $0x120] sm:$0xff]
    %v3533 = vld [vmem:[#allocation29 + $0x128] sm:$0xff]
    %v3534 = vld [vmem:[#allocation29 + $0x130] sm:$0xff]
    %v3535 = vld [vmem:[#allocation29 + $0x138] sm:$0xff]
    %v3536 = vld [vmem:[#allocation29 + $0x140] sm:$0xff]
    %v3537 = vld [vmem:[#allocation29 + $0x148] sm:$0xff]
    %v3538 = vld [vmem:[#allocation29 + $0x150] sm:$0xff]
    %v3539 = vld [vmem:[#allocation29 + $0x158] sm:$0xff]
    %v3540 = vld [vmem:[#allocation29 + $0x160] sm:$0xff]
    %v3541 = vld [vmem:[#allocation29 + $0x168] sm:$0xff]
    %v3542 = vld [vmem:[#allocation29 + $0x170] sm:$0xff]
    %v3543 = vld [vmem:[#allocation29 + $0x178] sm:$0xff]
    %v3544 = vld [vmem:[#allocation29 + $0x180] sm:$0xff]
    %v3545 = vld [vmem:[#allocation29 + $0x188] sm:$0xff]
    %v3546 = vld [vmem:[#allocation29 + $0x190] sm:$0xff]
    %v3547 = vld [vmem:[#allocation29 + $0x198] sm:$0xff]
    %v3548 = vld [vmem:[#allocation29 + $0x1a0] sm:$0xff]
    %v3549 = vld [vmem:[#allocation29 + $0x1a8] sm:$0xff]
    %v3550 = vld [vmem:[#allocation29 + $0x1b0] sm:$0xff]
    %v3551 = vld [vmem:[#allocation29 + $0x1b8] sm:$0xff]
    %v3552 = vld [vmem:[#allocation29 + $0x1c0] sm:$0xff]
    %v3553 = vld [vmem:[#allocation29 + $0x1c8] sm:$0xff]
    %v3554 = vld [vmem:[#allocation29 + $0x1d0] sm:$0xff]
    %v3555 = vld [vmem:[#allocation29 + $0x1d8] sm:$0xff]
    %v3556 = vld [vmem:[#allocation29 + $0x1e0] sm:$0xff]
    %v3557 = vld [vmem:[#allocation29 + $0x1e8] sm:$0xff]
    %v3558 = vld [vmem:[#allocation29 + $0x1f0] sm:$0xff]
    %v3559 = vld [vmem:[#allocation29 + $0x1f8] sm:$0xff]
    %v3560 = vld [vmem:[#allocation32] sm:$0xf]
    %v3561 = vld [vmem:[#allocation3] sm:$0xff]
    %v3562 = vld [vmem:[#allocation3 + $0x8] sm:$0xff]
    %v3563 = vld [vmem:[#allocation3 + $0x10] sm:$0xff]
    %v3564 = vld [vmem:[#allocation3 + $0x18] sm:$0xff]
    %v3565 = vld [vmem:[#allocation3 + $0x20] sm:$0xff]
    %v3566 = vld [vmem:[#allocation3 + $0x28] sm:$0xff]
    %v3567 = vld [vmem:[#allocation3 + $0x30] sm:$0xff]
    %v3568 = vld [vmem:[#allocation3 + $0x38] sm:$0xff]
    %v3570 = vperm.slane %v3560, 0
    %v3571 = vperm.slane %v3560, 1
    %v3572 = vperm.slane %v3560, 2
    %v3573 = vperm.slane %v3560, 3
    %3578 = vmatpush.msra.mxu0 %v3492
    %3579 = vmatpush.msra.mxu0 %v3488
    %3580 = vmatpush.msra.mxu0 %v3484
    %3581 = vmatpush.msra.mxu0 %v3480
    %3582 = vmatpush.msra.mxu0 %v3476
    %3583 = vmatpush.msra.mxu0 %v3472
    %3584 = vmatpush.msra.mxu0 %v3468
    %3585 = vmatpush.msra.mxu0 %v3464
    %3586 = vmatpush.msra.mxu0 %v3460
    %3587 = vmatpush.msra.mxu0 %v3456
    %3588 = vmatpush.msra.mxu0 %v3452
    %3589 = vmatpush.msra.mxu0 %v3448
    %3590 = vmatpush.msra.mxu0 %v3444
    %3591 = vmatpush.msra.mxu0 %v3440
    %3592 = vmatpush.msra.mxu0 %v3436
    %3593 = vmatpush.msra.mxu0 %v3432
    %3594 = vmatmul.f32.gmra.mxu0 %v3561
    %v3595 = vpop.f32.mrf.mxu0
    %v3596 = vadd.f32 %v3570, %v3595
    %3597 = vmatmul.f32.gmra.mxu0 %v3562
    %v3598 = vpop.f32.mrf.mxu0
    %v3599 = vadd.f32 %v3570, %v3598
    %3600 = vmatmul.f32.gmra.mxu0 %v3563
    %v3601 = vpop.f32.mrf.mxu0
    %v3602 = vadd.f32 %v3570, %v3601
    %3603 = vmatmul.f32.gmra.mxu0 %v3564
    %v3604 = vpop.f32.mrf.mxu0
    %v3605 = vadd.f32 %v3570, %v3604
    %3606 = vmatmul.f32.gmra.mxu0 %v3565
    %v3607 = vpop.f32.mrf.mxu0
    %v3608 = vadd.f32 %v3570, %v3607
    %3609 = vmatmul.f32.gmra.mxu0 %v3566
    %v3610 = vpop.f32.mrf.mxu0
    %v3611 = vadd.f32 %v3570, %v3610
    %3612 = vmatmul.f32.gmra.mxu0 %v3567
    %v3613 = vpop.f32.mrf.mxu0
    %v3614 = vadd.f32 %v3570, %v3613
    %3615 = vmatmul.f32.gmra.mxu0 %v3568
    %v3616 = vpop.f32.mrf.mxu0
    %v3617 = vadd.f32 %v3570, %v3616
    %3618 = vdwg.mxu0
    %3619 = vmatpush.msra.mxu0 %v3493
    %3620 = vmatpush.msra.mxu0 %v3489
    %3621 = vmatpush.msra.mxu0 %v3485
    %3622 = vmatpush.msra.mxu0 %v3481
    %3623 = vmatpush.msra.mxu0 %v3477
    %3624 = vmatpush.msra.mxu0 %v3473
    %3625 = vmatpush.msra.mxu0 %v3469
    %3626 = vmatpush.msra.mxu0 %v3465
    %3627 = vmatpush.msra.mxu0 %v3461
    %3628 = vmatpush.msra.mxu0 %v3457
    %3629 = vmatpush.msra.mxu0 %v3453
    %3630 = vmatpush.msra.mxu0 %v3449
    %3631 = vmatpush.msra.mxu0 %v3445
    %3632 = vmatpush.msra.mxu0 %v3441
    %3633 = vmatpush.msra.mxu0 %v3437
    %3634 = vmatpush.msra.mxu0 %v3433
    %3635 = vmatmul.f32.gmra.mxu0 %v3561
    %v3636 = vpop.f32.mrf.mxu0
    %v3637 = vadd.f32 %v3571, %v3636
    %3638 = vmatmul.f32.gmra.mxu0 %v3562
    %v3639 = vpop.f32.mrf.mxu0
    %v3640 = vadd.f32 %v3571, %v3639
    %3641 = vmatmul.f32.gmra.mxu0 %v3563
    %v3642 = vpop.f32.mrf.mxu0
    %v3643 = vadd.f32 %v3571, %v3642
    %3644 = vmatmul.f32.gmra.mxu0 %v3564
    %v3645 = vpop.f32.mrf.mxu0
    %v3646 = vadd.f32 %v3571, %v3645
    %3647 = vmatmul.f32.gmra.mxu0 %v3565
    %v3648 = vpop.f32.mrf.mxu0
    %v3649 = vadd.f32 %v3571, %v3648
    %3650 = vmatmul.f32.gmra.mxu0 %v3566
    %v3651 = vpop.f32.mrf.mxu0
    %v3652 = vadd.f32 %v3571, %v3651
    %3653 = vmatmul.f32.gmra.mxu0 %v3567
    %v3654 = vpop.f32.mrf.mxu0
    %v3655 = vadd.f32 %v3571, %v3654
    %3656 = vmatmul.f32.gmra.mxu0 %v3568
    %v3657 = vpop.f32.mrf.mxu0
    %v3658 = vadd.f32 %v3571, %v3657
    %3659 = vdwg.mxu0
    %3660 = vmatpush.msra.mxu0 %v3494
    %3661 = vmatpush.msra.mxu0 %v3490
    %3662 = vmatpush.msra.mxu0 %v3486
    %3663 = vmatpush.msra.mxu0 %v3482
    %3664 = vmatpush.msra.mxu0 %v3478
    %3665 = vmatpush.msra.mxu0 %v3474
    %3666 = vmatpush.msra.mxu0 %v3470
    %3667 = vmatpush.msra.mxu0 %v3466
    %3668 = vmatpush.msra.mxu0 %v3462
    %3669 = vmatpush.msra.mxu0 %v3458
    %3670 = vmatpush.msra.mxu0 %v3454
    %3671 = vmatpush.msra.mxu0 %v3450
    %3672 = vmatpush.msra.mxu0 %v3446
    %3673 = vmatpush.msra.mxu0 %v3442
    %3674 = vmatpush.msra.mxu0 %v3438
    %3675 = vmatpush.msra.mxu0 %v3434
    %3676 = vmatmul.f32.gmra.mxu0 %v3561
    %v3677 = vpop.f32.mrf.mxu0
    %v3678 = vadd.f32 %v3572, %v3677
    %3679 = vmatmul.f32.gmra.mxu0 %v3562
    %v3680 = vpop.f32.mrf.mxu0
    %v3681 = vadd.f32 %v3572, %v3680
    %3682 = vmatmul.f32.gmra.mxu0 %v3563
    %v3683 = vpop.f32.mrf.mxu0
    %v3684 = vadd.f32 %v3572, %v3683
    %3685 = vmatmul.f32.gmra.mxu0 %v3564
    %v3686 = vpop.f32.mrf.mxu0
    %v3687 = vadd.f32 %v3572, %v3686
    %3688 = vmatmul.f32.gmra.mxu0 %v3565
    %v3689 = vpop.f32.mrf.mxu0
    %v3690 = vadd.f32 %v3572, %v3689
    %3691 = vmatmul.f32.gmra.mxu0 %v3566
    %v3692 = vpop.f32.mrf.mxu0
    %v3693 = vadd.f32 %v3572, %v3692
    %3694 = vmatmul.f32.gmra.mxu0 %v3567
    %v3695 = vpop.f32.mrf.mxu0
    %v3696 = vadd.f32 %v3572, %v3695
    %3697 = vmatmul.f32.gmra.mxu0 %v3568
    %v3698 = vpop.f32.mrf.mxu0
    %v3699 = vadd.f32 %v3572, %v3698
    %3700 = vdwg.mxu0
    %3701 = vmatpush.msra.mxu0 %v3495
    %3702 = vmatpush.msra.mxu0 %v3491
    %3703 = vmatpush.msra.mxu0 %v3487
    %3704 = vmatpush.msra.mxu0 %v3483
    %3705 = vmatpush.msra.mxu0 %v3479
    %3706 = vmatpush.msra.mxu0 %v3475
    %3707 = vmatpush.msra.mxu0 %v3471
    %3708 = vmatpush.msra.mxu0 %v3467
    %3709 = vmatpush.msra.mxu0 %v3463
    %3710 = vmatpush.msra.mxu0 %v3459
    %3711 = vmatpush.msra.mxu0 %v3455
    %3712 = vmatpush.msra.mxu0 %v3451
    %3713 = vmatpush.msra.mxu0 %v3447
    %3714 = vmatpush.msra.mxu0 %v3443
    %3715 = vmatpush.msra.mxu0 %v3439
    %3716 = vmatpush.msra.mxu0 %v3435
    %3717 = vmatmul.f32.gmra.mxu0 %v3561
    %v3718 = vpop.f32.mrf.mxu0
    %v3719 = vadd.f32 %v3573, %v3718
    %3720 = vmatmul.f32.gmra.mxu0 %v3562
    %v3721 = vpop.f32.mrf.mxu0
    %v3722 = vadd.f32 %v3573, %v3721
    %3723 = vmatmul.f32.gmra.mxu0 %v3563
    %v3724 = vpop.f32.mrf.mxu0
    %v3725 = vadd.f32 %v3573, %v3724
    %3726 = vmatmul.f32.gmra.mxu0 %v3564
    %v3727 = vpop.f32.mrf.mxu0
    %v3728 = vadd.f32 %v3573, %v3727
    %3729 = vmatmul.f32.gmra.mxu0 %v3565
    %v3730 = vpop.f32.mrf.mxu0
    %v3731 = vadd.f32 %v3573, %v3730
    %3732 = vmatmul.f32.gmra.mxu0 %v3566
    %v3733 = vpop.f32.mrf.mxu0
    %v3734 = vadd.f32 %v3573, %v3733
    %3735 = vmatmul.f32.gmra.mxu0 %v3567
    %v3736 = vpop.f32.mrf.mxu0
    %v3737 = vadd.f32 %v3573, %v3736
    %3738 = vmatmul.f32.gmra.mxu0 %v3568
    %v3739 = vpop.f32.mrf.mxu0
    %v3740 = vadd.f32 %v3573, %v3739
    %3741 = vdwg.mxu0
    %3742 = vst [vmem:[#allocation7] sm:$0xff] %v3596
    %3743 = vst [vmem:[#allocation7 + $0x8] sm:$0xff] %v3637
    %3744 = vst [vmem:[#allocation7 + $0x10] sm:$0xff] %v3678
    %3745 = vst [vmem:[#allocation7 + $0x18] sm:$0xff] %v3719
    %3746 = vst [vmem:[#allocation7 + $0x20] sm:$0xff] %v3599
    %3747 = vst [vmem:[#allocation7 + $0x28] sm:$0xff] %v3640
    %3748 = vst [vmem:[#allocation7 + $0x30] sm:$0xff] %v3681
    %3749 = vst [vmem:[#allocation7 + $0x38] sm:$0xff] %v3722
    %3750 = vst [vmem:[#allocation7 + $0x40] sm:$0xff] %v3602
    %3751 = vst [vmem:[#allocation7 + $0x48] sm:$0xff] %v3643
    %3752 = vst [vmem:[#allocation7 + $0x50] sm:$0xff] %v3684
    %3753 = vst [vmem:[#allocation7 + $0x58] sm:$0xff] %v3725
    %3754 = vst [vmem:[#allocation7 + $0x60] sm:$0xff] %v3605
    %3755 = vst [vmem:[#allocation7 + $0x68] sm:$0xff] %v3646
    %3756 = vst [vmem:[#allocation7 + $0x70] sm:$0xff] %v3687
    %3757 = vst [vmem:[#allocation7 + $0x78] sm:$0xff] %v3728
    %3758 = vst [vmem:[#allocation7 + $0x80] sm:$0xff] %v3608
    %3759 = vst [vmem:[#allocation7 + $0x88] sm:$0xff] %v3649
    %3760 = vst [vmem:[#allocation7 + $0x90] sm:$0xff] %v3690
    %3761 = vst [vmem:[#allocation7 + $0x98] sm:$0xff] %v3731
    %3762 = vst [vmem:[#allocation7 + $0xa0] sm:$0xff] %v3611
    %3763 = vst [vmem:[#allocation7 + $0xa8] sm:$0xff] %v3652
    %3764 = vst [vmem:[#allocation7 + $0xb0] sm:$0xff] %v3693
    %3765 = vst [vmem:[#allocation7 + $0xb8] sm:$0xff] %v3734
    %3766 = vst [vmem:[#allocation7 + $0xc0] sm:$0xff] %v3614
    %3767 = vst [vmem:[#allocation7 + $0xc8] sm:$0xff] %v3655
    %3768 = vst [vmem:[#allocation7 + $0xd0] sm:$0xff] %v3696
    %3769 = vst [vmem:[#allocation7 + $0xd8] sm:$0xff] %v3737
    %3770 = vst [vmem:[#allocation7 + $0xe0] sm:$0xff] %v3617
    %3771 = vst [vmem:[#allocation7 + $0xe8] sm:$0xff] %v3658
    %3772 = vst [vmem:[#allocation7 + $0xf0] sm:$0xff] %v3699
    %3773 = vst [vmem:[#allocation7 + $0xf8] sm:$0xff] %v3740
    %v3774 = vld [vmem:[#allocation13] sm:$0xff]
    %v3775 = vld [vmem:[#allocation14] sm:$0xff]
    %v3776 = vld [vmem:[#allocation7] sm:$0xff]
    %v3777 = vld [vmem:[#allocation7 + $0x8] sm:$0xff]
    %v3778 = vld [vmem:[#allocation7 + $0x10] sm:$0xff]
    %v3779 = vld [vmem:[#allocation7 + $0x18] sm:$0xff]
    %3780 = vmatpush.msra.mxu0 %v3556
    %3781 = vmatpush.msra.mxu0 %v3552
    %3782 = vmatpush.msra.mxu0 %v3548
    %3783 = vmatpush.msra.mxu0 %v3544
    %3784 = vmatpush.msra.mxu0 %v3540
    %3785 = vmatpush.msra.mxu0 %v3536
    %3786 = vmatpush.msra.mxu0 %v3532
    %3787 = vmatpush.msra.mxu0 %v3528
    %3788 = vmatpush.msra.mxu0 %v3524
    %3789 = vmatpush.msra.mxu0 %v3520
    %3790 = vmatpush.msra.mxu0 %v3516
    %3791 = vmatpush.msra.mxu0 %v3512
    %3792 = vmatpush.msra.mxu0 %v3508
    %3793 = vmatpush.msra.mxu0 %v3504
    %3794 = vmatpush.msra.mxu0 %v3500
    %3795 = vmatpush.msra.mxu0 %v3496
    %3796 = vmatmul.f32.gmra.mxu0 %v3774
    %v3797 = vpop.f32.mrf.mxu0
    %v3798 = vadd.f32 0.0, %v3797
    %3799 = vdwg.mxu0
    %3800 = vmatpush.msra.mxu0 %v3557
    %3801 = vmatpush.msra.mxu0 %v3553
    %3802 = vmatpush.msra.mxu0 %v3549
    %3803 = vmatpush.msra.mxu0 %v3545
    %3804 = vmatpush.msra.mxu0 %v3541
    %3805 = vmatpush.msra.mxu0 %v3537
    %3806 = vmatpush.msra.mxu0 %v3533
    %3807 = vmatpush.msra.mxu0 %v3529
    %3808 = vmatpush.msra.mxu0 %v3525
    %3809 = vmatpush.msra.mxu0 %v3521
    %3810 = vmatpush.msra.mxu0 %v3517
    %3811 = vmatpush.msra.mxu0 %v3513
    %3812 = vmatpush.msra.mxu0 %v3509
    %3813 = vmatpush.msra.mxu0 %v3505
    %3814 = vmatpush.msra.mxu0 %v3501
    %3815 = vmatpush.msra.mxu0 %v3497
    %3816 = vmatmul.f32.gmra.mxu0 %v3774
    %v3817 = vpop.f32.mrf.mxu0
    %v3818 = vadd.f32 0.0, %v3817
    %3819 = vdwg.mxu0
    %3820 = vmatpush.msra.mxu0 %v3558
    %3821 = vmatpush.msra.mxu0 %v3554
    %3822 = vmatpush.msra.mxu0 %v3550
    %3823 = vmatpush.msra.mxu0 %v3546
    %3824 = vmatpush.msra.mxu0 %v3542
    %3825 = vmatpush.msra.mxu0 %v3538
    %3826 = vmatpush.msra.mxu0 %v3534
    %3827 = vmatpush.msra.mxu0 %v3530
    %3828 = vmatpush.msra.mxu0 %v3526
    %3829 = vmatpush.msra.mxu0 %v3522
    %3830 = vmatpush.msra.mxu0 %v3518
    %3831 = vmatpush.msra.mxu0 %v3514
    %3832 = vmatpush.msra.mxu0 %v3510
    %3833 = vmatpush.msra.mxu0 %v3506
    %3834 = vmatpush.msra.mxu0 %v3502
    %3835 = vmatpush.msra.mxu0 %v3498
    %3836 = vmatmul.f32.gmra.mxu0 %v3774
    %v3837 = vpop.f32.mrf.mxu0
    %v3838 = vadd.f32 0.0, %v3837
    %3839 = vdwg.mxu0
    %3840 = vmatpush.msra.mxu0 %v3559
    %3841 = vmatpush.msra.mxu0 %v3555
    %3842 = vmatpush.msra.mxu0 %v3551
    %3843 = vmatpush.msra.mxu0 %v3547
    %3844 = vmatpush.msra.mxu0 %v3543
    %3845 = vmatpush.msra.mxu0 %v3539
    %3846 = vmatpush.msra.mxu0 %v3535
    %3847 = vmatpush.msra.mxu0 %v3531
    %3848 = vmatpush.msra.mxu0 %v3527
    %3849 = vmatpush.msra.mxu0 %v3523
    %3850 = vmatpush.msra.mxu0 %v3519
    %3851 = vmatpush.msra.mxu0 %v3515
    %3852 = vmatpush.msra.mxu0 %v3511
    %3853 = vmatpush.msra.mxu0 %v3507
    %3854 = vmatpush.msra.mxu0 %v3503
    %3855 = vmatpush.msra.mxu0 %v3499
    %3856 = vmatmul.f32.gmra.mxu0 %v3774
    %v3857 = vpop.f32.mrf.mxu0
    %v3858 = vadd.f32 0.0, %v3857
    %3859 = vdwg.mxu0
    %v3860 = vadd.f32 %v3776, %v3798
    %v3861 = vadd.f32 %v3777, %v3818
    %v3862 = vadd.f32 %v3778, %v3838
    %v3863 = vadd.f32 %v3779, %v3858
    %v3864 = vxor.u32 %v3860, 2147483648
    %v3865 = vxor.u32 %v3861, 2147483648
    %v3866 = vxor.u32 %v3862, 2147483648
    %v3867 = vmul.f32 %v3864, 1.442695
    %v3868 = vpow.pop %v3867
    %v3869 = vmul.f32 %v3865, 1.442695
    %v3870 = vpow.pop %v3869
    %v3871 = vmul.f32 %v3866, 1.442695
    %v3872 = vpow.pop %v3871
    %v3873 = vadd.f32 %v3868, 1.0
    %v3874 = vadd.f32 %v3870, 1.0
    %v3875 = vadd.f32 %v3872, 1.0
    %v3876 = vrcp.pop %v3873
    %v3877 = vmul.f32 %v3873, %v3876
    %v3878 = vsub.f32 1.0, %v3877
    %v3879 = vmul.f32 %v3876, %v3878
    %v3880 = vadd.f32 %v3876, %v3879
    %vm3881 = vweird.f32 %v3873
    %vm3882 = vweird.f32 %v3876
    %vm3883 = vmor %vm3881, %vm3882
    %v3884 = vsel %vm3883, %v3876, %v3880
    %v3885 = vand.u32 2147483647, %v3873
    %vm3886 = vcmp.eq.f32.partialorder %v3885, 8.507059e+37
    %v3887 = vand.u32 %v3873, 2147483648
    %v3888 = vor.u32 1.1754944e-38, %v3887
    %v3889 = vsel %vm3886, %v3888, %v3884
    %v3890 = vmul.f32 1.0, %v3889
    %v3891 = vrcp.pop %v3874
    %v3892 = vmul.f32 %v3874, %v3891
    %v3893 = vsub.f32 1.0, %v3892
    %v3894 = vmul.f32 %v3891, %v3893
    %v3895 = vadd.f32 %v3891, %v3894
    %vm3896 = vweird.f32 %v3874
    %vm3897 = vweird.f32 %v3891
    %vm3898 = vmor %vm3896, %vm3897
    %v3899 = vsel %vm3898, %v3891, %v3895
    %v3900 = vand.u32 2147483647, %v3874
    %vm3901 = vcmp.eq.f32.partialorder %v3900, 8.507059e+37
    %v3902 = vand.u32 %v3874, 2147483648
    %v3903 = vor.u32 1.1754944e-38, %v3902
    %v3904 = vsel %vm3901, %v3903, %v3899
    %v3905 = vmul.f32 1.0, %v3904
    %v3906 = vrcp.pop %v3875
    %v3907 = vmul.f32 %v3875, %v3906
    %v3908 = vsub.f32 1.0, %v3907
    %v3909 = vmul.f32 %v3906, %v3908
    %v3910 = vadd.f32 %v3906, %v3909
    %vm3911 = vweird.f32 %v3875
    %vm3912 = vweird.f32 %v3906
    %vm3913 = vmor %vm3911, %vm3912
    %v3914 = vsel %vm3913, %v3906, %v3910
    %v3915 = vand.u32 2147483647, %v3875
    %vm3916 = vcmp.eq.f32.partialorder %v3915, 8.507059e+37
    %v3917 = vand.u32 %v3875, 2147483648
    %v3918 = vor.u32 1.1754944e-38, %v3917
    %v3919 = vsel %vm3916, %v3918, %v3914
    %v3920 = vmul.f32 1.0, %v3919
    %v3921 = vtanh.pop %v3863
    %v3922 = vmul.f32 %v3905, %v3775
    %v3923 = vmul.f32 %v3890, %v3921
    %v3924 = vadd.f32 %v3922, %v3923
    %v3925 = vtanh.pop %v3924
    %v3926 = vmul.f32 %v3920, %v3925
    %3927 = vst [vmem:[#allocation14] sm:$0xff] %v3924
    %3928 = vst [vmem:[#allocation13] sm:$0xff] %v3926
    %3929 = vst [vmem:[#allocation4] sm:$0xff] %v3926
    %v3930 = vld [vmem:[#allocation13] sm:$0xff]
    %v3931 = vld [vmem:[#allocation14] sm:$0xff]
    %s3932 = scalar_lea.vmem [#allocation7], 32
    %v3933 = vld [vmem:[%s3932] sm:$0xff]
    %v3934 = vld [vmem:[%s3932 + $0x8] sm:$0xff]
    %v3935 = vld [vmem:[%s3932 + $0x10] sm:$0xff]
    %v3936 = vld [vmem:[%s3932 + $0x18] sm:$0xff]
    %3937 = vmatpush.msra.mxu0 %v3556
    %3938 = vmatpush.msra.mxu0 %v3552
    %3939 = vmatpush.msra.mxu0 %v3548
    %3940 = vmatpush.msra.mxu0 %v3544
    %3941 = vmatpush.msra.mxu0 %v3540
    %3942 = vmatpush.msra.mxu0 %v3536
    %3943 = vmatpush.msra.mxu0 %v3532
    %3944 = vmatpush.msra.mxu0 %v3528
    %3945 = vmatpush.msra.mxu0 %v3524
    %3946 = vmatpush.msra.mxu0 %v3520
    %3947 = vmatpush.msra.mxu0 %v3516
    %3948 = vmatpush.msra.mxu0 %v3512
    %3949 = vmatpush.msra.mxu0 %v3508
    %3950 = vmatpush.msra.mxu0 %v3504
    %3951 = vmatpush.msra.mxu0 %v3500
    %3952 = vmatpush.msra.mxu0 %v3496
    %3953 = vmatmul.f32.gmra.mxu0 %v3930
    %v3954 = vpop.f32.mrf.mxu0
    %v3955 = vadd.f32 0.0, %v3954
    %3956 = vdwg.mxu0
    %3957 = vmatpush.msra.mxu0 %v3557
    %3958 = vmatpush.msra.mxu0 %v3553
    %3959 = vmatpush.msra.mxu0 %v3549
    %3960 = vmatpush.msra.mxu0 %v3545
    %3961 = vmatpush.msra.mxu0 %v3541
    %3962 = vmatpush.msra.mxu0 %v3537
    %3963 = vmatpush.msra.mxu0 %v3533
    %3964 = vmatpush.msra.mxu0 %v3529
    %3965 = vmatpush.msra.mxu0 %v3525
    %3966 = vmatpush.msra.mxu0 %v3521
    %3967 = vmatpush.msra.mxu0 %v3517
    %3968 = vmatpush.msra.mxu0 %v3513
    %3969 = vmatpush.msra.mxu0 %v3509
    %3970 = vmatpush.msra.mxu0 %v3505
    %3971 = vmatpush.msra.mxu0 %v3501
    %3972 = vmatpush.msra.mxu0 %v3497
    %3973 = vmatmul.f32.gmra.mxu0 %v3930
    %v3974 = vpop.f32.mrf.mxu0
    %v3975 = vadd.f32 0.0, %v3974
    %3976 = vdwg.mxu0
    %3977 = vmatpush.msra.mxu0 %v3558
    %3978 = vmatpush.msra.mxu0 %v3554
    %3979 = vmatpush.msra.mxu0 %v3550
    %3980 = vmatpush.msra.mxu0 %v3546
    %3981 = vmatpush.msra.mxu0 %v3542
    %3982 = vmatpush.msra.mxu0 %v3538
    %3983 = vmatpush.msra.mxu0 %v3534
    %3984 = vmatpush.msra.mxu0 %v3530
    %3985 = vmatpush.msra.mxu0 %v3526
    %3986 = vmatpush.msra.mxu0 %v3522
    %3987 = vmatpush.msra.mxu0 %v3518
    %3988 = vmatpush.msra.mxu0 %v3514
    %3989 = vmatpush.msra.mxu0 %v3510
    %3990 = vmatpush.msra.mxu0 %v3506
    %3991 = vmatpush.msra.mxu0 %v3502
    %3992 = vmatpush.msra.mxu0 %v3498
    %3993 = vmatmul.f32.gmra.mxu0 %v3930
    %v3994 = vpop.f32.mrf.mxu0
    %v3995 = vadd.f32 0.0, %v3994
    %3996 = vdwg.mxu0
    %3997 = vmatpush.msra.mxu0 %v3559
    %3998 = vmatpush.msra.mxu0 %v3555
    %3999 = vmatpush.msra.mxu0 %v3551
    %4000 = vmatpush.msra.mxu0 %v3547
    %4001 = vmatpush.msra.mxu0 %v3543
    %4002 = vmatpush.msra.mxu0 %v3539
    %4003 = vmatpush.msra.mxu0 %v3535
    %4004 = vmatpush.msra.mxu0 %v3531
    %4005 = vmatpush.msra.mxu0 %v3527
    %4006 = vmatpush.msra.mxu0 %v3523
    %4007 = vmatpush.msra.mxu0 %v3519
    %4008 = vmatpush.msra.mxu0 %v3515
    %4009 = vmatpush.msra.mxu0 %v3511
    %4010 = vmatpush.msra.mxu0 %v3507
    %4011 = vmatpush.msra.mxu0 %v3503
    %4012 = vmatpush.msra.mxu0 %v3499
    %4013 = vmatmul.f32.gmra.mxu0 %v3930
    %v4014 = vpop.f32.mrf.mxu0
    %v4015 = vadd.f32 0.0, %v4014
    %4016 = vdwg.mxu0
    %v4017 = vadd.f32 %v3933, %v3955
    %v4018 = vadd.f32 %v3934, %v3975
    %v4019 = vadd.f32 %v3935, %v3995
    %v4020 = vadd.f32 %v3936, %v4015
    %v4021 = vxor.u32 %v4017, 2147483648
    %v4022 = vxor.u32 %v4018, 2147483648
    %v4023 = vxor.u32 %v4019, 2147483648
    %v4024 = vmul.f32 %v4021, 1.442695
    %v4025 = vpow.pop %v4024
    %v4026 = vmul.f32 %v4022, 1.442695
    %v4027 = vpow.pop %v4026
    %v4028 = vmul.f32 %v4023, 1.442695
    %v4029 = vpow.pop %v4028
    %v4030 = vadd.f32 %v4025, 1.0
    %v4031 = vadd.f32 %v4027, 1.0
    %v4032 = vadd.f32 %v4029, 1.0
    %v4033 = vrcp.pop %v4030
    %v4034 = vmul.f32 %v4030, %v4033
    %v4035 = vsub.f32 1.0, %v4034
    %v4036 = vmul.f32 %v4033, %v4035
    %v4037 = vadd.f32 %v4033, %v4036
    %vm4038 = vweird.f32 %v4030
    %vm4039 = vweird.f32 %v4033
    %vm4040 = vmor %vm4038, %vm4039
    %v4041 = vsel %vm4040, %v4033, %v4037
    %v4042 = vand.u32 2147483647, %v4030
    %vm4043 = vcmp.eq.f32.partialorder %v4042, 8.507059e+37
    %v4044 = vand.u32 %v4030, 2147483648
    %v4045 = vor.u32 1.1754944e-38, %v4044
    %v4046 = vsel %vm4043, %v4045, %v4041
    %v4047 = vmul.f32 1.0, %v4046
    %v4048 = vrcp.pop %v4031
    %v4049 = vmul.f32 %v4031, %v4048
    %v4050 = vsub.f32 1.0, %v4049
    %v4051 = vmul.f32 %v4048, %v4050
    %v4052 = vadd.f32 %v4048, %v4051
    %vm4053 = vweird.f32 %v4031
    %vm4054 = vweird.f32 %v4048
    %vm4055 = vmor %vm4053, %vm4054
    %v4056 = vsel %vm4055, %v4048, %v4052
    %v4057 = vand.u32 2147483647, %v4031
    %vm4058 = vcmp.eq.f32.partialorder %v4057, 8.507059e+37
    %v4059 = vand.u32 %v4031, 2147483648
    %v4060 = vor.u32 1.1754944e-38, %v4059
    %v4061 = vsel %vm4058, %v4060, %v4056
    %v4062 = vmul.f32 1.0, %v4061
    %v4063 = vrcp.pop %v4032
    %v4064 = vmul.f32 %v4032, %v4063
    %v4065 = vsub.f32 1.0, %v4064
    %v4066 = vmul.f32 %v4063, %v4065
    %v4067 = vadd.f32 %v4063, %v4066
    %vm4068 = vweird.f32 %v4032
    %vm4069 = vweird.f32 %v4063
    %vm4070 = vmor %vm4068, %vm4069
    %v4071 = vsel %vm4070, %v4063, %v4067
    %v4072 = vand.u32 2147483647, %v4032
    %vm4073 = vcmp.eq.f32.partialorder %v4072, 8.507059e+37
    %v4074 = vand.u32 %v4032, 2147483648
    %v4075 = vor.u32 1.1754944e-38, %v4074
    %v4076 = vsel %vm4073, %v4075, %v4071
    %v4077 = vmul.f32 1.0, %v4076
    %v4078 = vtanh.pop %v4020
    %v4079 = vmul.f32 %v4062, %v3931
    %v4080 = vmul.f32 %v4047, %v4078
    %v4081 = vadd.f32 %v4079, %v4080
    %v4082 = vtanh.pop %v4081
    %v4083 = vmul.f32 %v4077, %v4082
    %4084 = vst [vmem:[#allocation14] sm:$0xff] %v4081
    %4085 = vst [vmem:[#allocation13] sm:$0xff] %v4083
    %s4086 = scalar_lea.vmem [#allocation4], 8
    %4087 = vst [vmem:[%s4086] sm:$0xff] %v4083
    %v4088 = vld [vmem:[#allocation13] sm:$0xff]
    %v4089 = vld [vmem:[#allocation14] sm:$0xff]
    %s4090 = scalar_lea.vmem [#allocation7], 64
    %v4091 = vld [vmem:[%s4090] sm:$0xff]
    %v4092 = vld [vmem:[%s4090 + $0x8] sm:$0xff]
    %v4093 = vld [vmem:[%s4090 + $0x10] sm:$0xff]
    %v4094 = vld [vmem:[%s4090 + $0x18] sm:$0xff]
    %4095 = vmatpush.msra.mxu0 %v3556
    %4096 = vmatpush.msra.mxu0 %v3552
    %4097 = vmatpush.msra.mxu0 %v3548
    %4098 = vmatpush.msra.mxu0 %v3544
    %4099 = vmatpush.msra.mxu0 %v3540
    %4100 = vmatpush.msra.mxu0 %v3536
    %4101 = vmatpush.msra.mxu0 %v3532
    %4102 = vmatpush.msra.mxu0 %v3528
    %4103 = vmatpush.msra.mxu0 %v3524
    %4104 = vmatpush.msra.mxu0 %v3520
    %4105 = vmatpush.msra.mxu0 %v3516
    %4106 = vmatpush.msra.mxu0 %v3512
    %4107 = vmatpush.msra.mxu0 %v3508
    %4108 = vmatpush.msra.mxu0 %v3504
    %4109 = vmatpush.msra.mxu0 %v3500
    %4110 = vmatpush.msra.mxu0 %v3496
    %4111 = vmatmul.f32.gmra.mxu0 %v4088
    %v4112 = vpop.f32.mrf.mxu0
    %v4113 = vadd.f32 0.0, %v4112
    %4114 = vdwg.mxu0
    %4115 = vmatpush.msra.mxu0 %v3557
    %4116 = vmatpush.msra.mxu0 %v3553
    %4117 = vmatpush.msra.mxu0 %v3549
    %4118 = vmatpush.msra.mxu0 %v3545
    %4119 = vmatpush.msra.mxu0 %v3541
    %4120 = vmatpush.msra.mxu0 %v3537
    %4121 = vmatpush.msra.mxu0 %v3533
    %4122 = vmatpush.msra.mxu0 %v3529
    %4123 = vmatpush.msra.mxu0 %v3525
    %4124 = vmatpush.msra.mxu0 %v3521
    %4125 = vmatpush.msra.mxu0 %v3517
    %4126 = vmatpush.msra.mxu0 %v3513
    %4127 = vmatpush.msra.mxu0 %v3509
    %4128 = vmatpush.msra.mxu0 %v3505
    %4129 = vmatpush.msra.mxu0 %v3501
    %4130 = vmatpush.msra.mxu0 %v3497
    %4131 = vmatmul.f32.gmra.mxu0 %v4088
    %v4132 = vpop.f32.mrf.mxu0
    %v4133 = vadd.f32 0.0, %v4132
    %4134 = vdwg.mxu0
    %4135 = vmatpush.msra.mxu0 %v3558
    %4136 = vmatpush.msra.mxu0 %v3554
    %4137 = vmatpush.msra.mxu0 %v3550
    %4138 = vmatpush.msra.mxu0 %v3546
    %4139 = vmatpush.msra.mxu0 %v3542
    %4140 = vmatpush.msra.mxu0 %v3538
    %4141 = vmatpush.msra.mxu0 %v3534
    %4142 = vmatpush.msra.mxu0 %v3530
    %4143 = vmatpush.msra.mxu0 %v3526
    %4144 = vmatpush.msra.mxu0 %v3522
    %4145 = vmatpush.msra.mxu0 %v3518
    %4146 = vmatpush.msra.mxu0 %v3514
    %4147 = vmatpush.msra.mxu0 %v3510
    %4148 = vmatpush.msra.mxu0 %v3506
    %4149 = vmatpush.msra.mxu0 %v3502
    %4150 = vmatpush.msra.mxu0 %v3498
    %4151 = vmatmul.f32.gmra.mxu0 %v4088
    %v4152 = vpop.f32.mrf.mxu0
    %v4153 = vadd.f32 0.0, %v4152
    %4154 = vdwg.mxu0
    %4155 = vmatpush.msra.mxu0 %v3559
    %4156 = vmatpush.msra.mxu0 %v3555
    %4157 = vmatpush.msra.mxu0 %v3551
    %4158 = vmatpush.msra.mxu0 %v3547
    %4159 = vmatpush.msra.mxu0 %v3543
    %4160 = vmatpush.msra.mxu0 %v3539
    %4161 = vmatpush.msra.mxu0 %v3535
    %4162 = vmatpush.msra.mxu0 %v3531
    %4163 = vmatpush.msra.mxu0 %v3527
    %4164 = vmatpush.msra.mxu0 %v3523
    %4165 = vmatpush.msra.mxu0 %v3519
    %4166 = vmatpush.msra.mxu0 %v3515
    %4167 = vmatpush.msra.mxu0 %v3511
    %4168 = vmatpush.msra.mxu0 %v3507
    %4169 = vmatpush.msra.mxu0 %v3503
    %4170 = vmatpush.msra.mxu0 %v3499
    %4171 = vmatmul.f32.gmra.mxu0 %v4088
    %v4172 = vpop.f32.mrf.mxu0
    %v4173 = vadd.f32 0.0, %v4172
    %4174 = vdwg.mxu0
    %v4175 = vadd.f32 %v4091, %v4113
    %v4176 = vadd.f32 %v4092, %v4133
    %v4177 = vadd.f32 %v4093, %v4153
    %v4178 = vadd.f32 %v4094, %v4173
    %v4179 = vxor.u32 %v4175, 2147483648
    %v4180 = vxor.u32 %v4176, 2147483648
    %v4181 = vxor.u32 %v4177, 2147483648
    %v4182 = vmul.f32 %v4179, 1.442695
    %v4183 = vpow.pop %v4182
    %v4184 = vmul.f32 %v4180, 1.442695
    %v4185 = vpow.pop %v4184
    %v4186 = vmul.f32 %v4181, 1.442695
    %v4187 = vpow.pop %v4186
    %v4188 = vadd.f32 %v4183, 1.0
    %v4189 = vadd.f32 %v4185, 1.0
    %v4190 = vadd.f32 %v4187, 1.0
    %v4191 = vrcp.pop %v4188
    %v4192 = vmul.f32 %v4188, %v4191
    %v4193 = vsub.f32 1.0, %v4192
    %v4194 = vmul.f32 %v4191, %v4193
    %v4195 = vadd.f32 %v4191, %v4194
    %vm4196 = vweird.f32 %v4188
    %vm4197 = vweird.f32 %v4191
    %vm4198 = vmor %vm4196, %vm4197
    %v4199 = vsel %vm4198, %v4191, %v4195
    %v4200 = vand.u32 2147483647, %v4188
    %vm4201 = vcmp.eq.f32.partialorder %v4200, 8.507059e+37
    %v4202 = vand.u32 %v4188, 2147483648
    %v4203 = vor.u32 1.1754944e-38, %v4202
    %v4204 = vsel %vm4201, %v4203, %v4199
    %v4205 = vmul.f32 1.0, %v4204
    %v4206 = vrcp.pop %v4189
    %v4207 = vmul.f32 %v4189, %v4206
    %v4208 = vsub.f32 1.0, %v4207
    %v4209 = vmul.f32 %v4206, %v4208
    %v4210 = vadd.f32 %v4206, %v4209
    %vm4211 = vweird.f32 %v4189
    %vm4212 = vweird.f32 %v4206
    %vm4213 = vmor %vm4211, %vm4212
    %v4214 = vsel %vm4213, %v4206, %v4210
    %v4215 = vand.u32 2147483647, %v4189
    %vm4216 = vcmp.eq.f32.partialorder %v4215, 8.507059e+37
    %v4217 = vand.u32 %v4189, 2147483648
    %v4218 = vor.u32 1.1754944e-38, %v4217
    %v4219 = vsel %vm4216, %v4218, %v4214
    %v4220 = vmul.f32 1.0, %v4219
    %v4221 = vrcp.pop %v4190
    %v4222 = vmul.f32 %v4190, %v4221
    %v4223 = vsub.f32 1.0, %v4222
    %v4224 = vmul.f32 %v4221, %v4223
    %v4225 = vadd.f32 %v4221, %v4224
    %vm4226 = vweird.f32 %v4190
    %vm4227 = vweird.f32 %v4221
    %vm4228 = vmor %vm4226, %vm4227
    %v4229 = vsel %vm4228, %v4221, %v4225
    %v4230 = vand.u32 2147483647, %v4190
    %vm4231 = vcmp.eq.f32.partialorder %v4230, 8.507059e+37
    %v4232 = vand.u32 %v4190, 2147483648
    %v4233 = vor.u32 1.1754944e-38, %v4232
    %v4234 = vsel %vm4231, %v4233, %v4229
    %v4235 = vmul.f32 1.0, %v4234
    %v4236 = vtanh.pop %v4178
    %v4237 = vmul.f32 %v4220, %v4089
    %v4238 = vmul.f32 %v4205, %v4236
    %v4239 = vadd.f32 %v4237, %v4238
    %v4240 = vtanh.pop %v4239
    %v4241 = vmul.f32 %v4235, %v4240
    %4242 = vst [vmem:[#allocation14] sm:$0xff] %v4239
    %4243 = vst [vmem:[#allocation13] sm:$0xff] %v4241
    %s4244 = scalar_lea.vmem [#allocation4], 16
    %4245 = vst [vmem:[%s4244] sm:$0xff] %v4241
    %v4246 = vld [vmem:[#allocation13] sm:$0xff]
    %v4247 = vld [vmem:[#allocation14] sm:$0xff]
    %s4248 = scalar_lea.vmem [#allocation7], 96
    %v4249 = vld [vmem:[%s4248] sm:$0xff]
    %v4250 = vld [vmem:[%s4248 + $0x8] sm:$0xff]
    %v4251 = vld [vmem:[%s4248 + $0x10] sm:$0xff]
    %v4252 = vld [vmem:[%s4248 + $0x18] sm:$0xff]
    %4253 = vmatpush.msra.mxu0 %v3556
    %4254 = vmatpush.msra.mxu0 %v3552
    %4255 = vmatpush.msra.mxu0 %v3548
    %4256 = vmatpush.msra.mxu0 %v3544
    %4257 = vmatpush.msra.mxu0 %v3540
    %4258 = vmatpush.msra.mxu0 %v3536
    %4259 = vmatpush.msra.mxu0 %v3532
    %4260 = vmatpush.msra.mxu0 %v3528
    %4261 = vmatpush.msra.mxu0 %v3524
    %4262 = vmatpush.msra.mxu0 %v3520
    %4263 = vmatpush.msra.mxu0 %v3516
    %4264 = vmatpush.msra.mxu0 %v3512
    %4265 = vmatpush.msra.mxu0 %v3508
    %4266 = vmatpush.msra.mxu0 %v3504
    %4267 = vmatpush.msra.mxu0 %v3500
    %4268 = vmatpush.msra.mxu0 %v3496
    %4269 = vmatmul.f32.gmra.mxu0 %v4246
    %v4270 = vpop.f32.mrf.mxu0
    %v4271 = vadd.f32 0.0, %v4270
    %4272 = vdwg.mxu0
    %4273 = vmatpush.msra.mxu0 %v3557
    %4274 = vmatpush.msra.mxu0 %v3553
    %4275 = vmatpush.msra.mxu0 %v3549
    %4276 = vmatpush.msra.mxu0 %v3545
    %4277 = vmatpush.msra.mxu0 %v3541
    %4278 = vmatpush.msra.mxu0 %v3537
    %4279 = vmatpush.msra.mxu0 %v3533
    %4280 = vmatpush.msra.mxu0 %v3529
    %4281 = vmatpush.msra.mxu0 %v3525
    %4282 = vmatpush.msra.mxu0 %v3521
    %4283 = vmatpush.msra.mxu0 %v3517
    %4284 = vmatpush.msra.mxu0 %v3513
    %4285 = vmatpush.msra.mxu0 %v3509
    %4286 = vmatpush.msra.mxu0 %v3505
    %4287 = vmatpush.msra.mxu0 %v3501
    %4288 = vmatpush.msra.mxu0 %v3497
    %4289 = vmatmul.f32.gmra.mxu0 %v4246
    %v4290 = vpop.f32.mrf.mxu0
    %v4291 = vadd.f32 0.0, %v4290
    %4292 = vdwg.mxu0
    %4293 = vmatpush.msra.mxu0 %v3558
    %4294 = vmatpush.msra.mxu0 %v3554
    %4295 = vmatpush.msra.mxu0 %v3550
    %4296 = vmatpush.msra.mxu0 %v3546
    %4297 = vmatpush.msra.mxu0 %v3542
    %4298 = vmatpush.msra.mxu0 %v3538
    %4299 = vmatpush.msra.mxu0 %v3534
    %4300 = vmatpush.msra.mxu0 %v3530
    %4301 = vmatpush.msra.mxu0 %v3526
    %4302 = vmatpush.msra.mxu0 %v3522
    %4303 = vmatpush.msra.mxu0 %v3518
    %4304 = vmatpush.msra.mxu0 %v3514
    %4305 = vmatpush.msra.mxu0 %v3510
    %4306 = vmatpush.msra.mxu0 %v3506
    %4307 = vmatpush.msra.mxu0 %v3502
    %4308 = vmatpush.msra.mxu0 %v3498
    %4309 = vmatmul.f32.gmra.mxu0 %v4246
    %v4310 = vpop.f32.mrf.mxu0
    %v4311 = vadd.f32 0.0, %v4310
    %4312 = vdwg.mxu0
    %4313 = vmatpush.msra.mxu0 %v3559
    %4314 = vmatpush.msra.mxu0 %v3555
    %4315 = vmatpush.msra.mxu0 %v3551
    %4316 = vmatpush.msra.mxu0 %v3547
    %4317 = vmatpush.msra.mxu0 %v3543
    %4318 = vmatpush.msra.mxu0 %v3539
    %4319 = vmatpush.msra.mxu0 %v3535
    %4320 = vmatpush.msra.mxu0 %v3531
    %4321 = vmatpush.msra.mxu0 %v3527
    %4322 = vmatpush.msra.mxu0 %v3523
    %4323 = vmatpush.msra.mxu0 %v3519
    %4324 = vmatpush.msra.mxu0 %v3515
    %4325 = vmatpush.msra.mxu0 %v3511
    %4326 = vmatpush.msra.mxu0 %v3507
    %4327 = vmatpush.msra.mxu0 %v3503
    %4328 = vmatpush.msra.mxu0 %v3499
    %4329 = vmatmul.f32.gmra.mxu0 %v4246
    %v4330 = vpop.f32.mrf.mxu0
    %v4331 = vadd.f32 0.0, %v4330
    %4332 = vdwg.mxu0
    %v4333 = vadd.f32 %v4249, %v4271
    %v4334 = vadd.f32 %v4250, %v4291
    %v4335 = vadd.f32 %v4251, %v4311
    %v4336 = vadd.f32 %v4252, %v4331
    %v4337 = vxor.u32 %v4333, 2147483648
    %v4338 = vxor.u32 %v4334, 2147483648
    %v4339 = vxor.u32 %v4335, 2147483648
    %v4340 = vmul.f32 %v4337, 1.442695
    %v4341 = vpow.pop %v4340
    %v4342 = vmul.f32 %v4338, 1.442695
    %v4343 = vpow.pop %v4342
    %v4344 = vmul.f32 %v4339, 1.442695
    %v4345 = vpow.pop %v4344
    %v4346 = vadd.f32 %v4341, 1.0
    %v4347 = vadd.f32 %v4343, 1.0
    %v4348 = vadd.f32 %v4345, 1.0
    %v4349 = vrcp.pop %v4346
    %v4350 = vmul.f32 %v4346, %v4349
    %v4351 = vsub.f32 1.0, %v4350
    %v4352 = vmul.f32 %v4349, %v4351
    %v4353 = vadd.f32 %v4349, %v4352
    %vm4354 = vweird.f32 %v4346
    %vm4355 = vweird.f32 %v4349
    %vm4356 = vmor %vm4354, %vm4355
    %v4357 = vsel %vm4356, %v4349, %v4353
    %v4358 = vand.u32 2147483647, %v4346
    %vm4359 = vcmp.eq.f32.partialorder %v4358, 8.507059e+37
    %v4360 = vand.u32 %v4346, 2147483648
    %v4361 = vor.u32 1.1754944e-38, %v4360
    %v4362 = vsel %vm4359, %v4361, %v4357
    %v4363 = vmul.f32 1.0, %v4362
    %v4364 = vrcp.pop %v4347
    %v4365 = vmul.f32 %v4347, %v4364
    %v4366 = vsub.f32 1.0, %v4365
    %v4367 = vmul.f32 %v4364, %v4366
    %v4368 = vadd.f32 %v4364, %v4367
    %vm4369 = vweird.f32 %v4347
    %vm4370 = vweird.f32 %v4364
    %vm4371 = vmor %vm4369, %vm4370
    %v4372 = vsel %vm4371, %v4364, %v4368
    %v4373 = vand.u32 2147483647, %v4347
    %vm4374 = vcmp.eq.f32.partialorder %v4373, 8.507059e+37
    %v4375 = vand.u32 %v4347, 2147483648
    %v4376 = vor.u32 1.1754944e-38, %v4375
    %v4377 = vsel %vm4374, %v4376, %v4372
    %v4378 = vmul.f32 1.0, %v4377
    %v4379 = vrcp.pop %v4348
    %v4380 = vmul.f32 %v4348, %v4379
    %v4381 = vsub.f32 1.0, %v4380
    %v4382 = vmul.f32 %v4379, %v4381
    %v4383 = vadd.f32 %v4379, %v4382
    %vm4384 = vweird.f32 %v4348
    %vm4385 = vweird.f32 %v4379
    %vm4386 = vmor %vm4384, %vm4385
    %v4387 = vsel %vm4386, %v4379, %v4383
    %v4388 = vand.u32 2147483647, %v4348
    %vm4389 = vcmp.eq.f32.partialorder %v4388, 8.507059e+37
    %v4390 = vand.u32 %v4348, 2147483648
    %v4391 = vor.u32 1.1754944e-38, %v4390
    %v4392 = vsel %vm4389, %v4391, %v4387
    %v4393 = vmul.f32 1.0, %v4392
    %v4394 = vtanh.pop %v4336
    %v4395 = vmul.f32 %v4378, %v4247
    %v4396 = vmul.f32 %v4363, %v4394
    %v4397 = vadd.f32 %v4395, %v4396
    %v4398 = vtanh.pop %v4397
    %v4399 = vmul.f32 %v4393, %v4398
    %4400 = vst [vmem:[#allocation14] sm:$0xff] %v4397
    %4401 = vst [vmem:[#allocation13] sm:$0xff] %v4399
    %s4402 = scalar_lea.vmem [#allocation4], 24
    %4403 = vst [vmem:[%s4402] sm:$0xff] %v4399
    %v4404 = vld [vmem:[#allocation13] sm:$0xff]
    %v4405 = vld [vmem:[#allocation14] sm:$0xff]
    %s4406 = scalar_lea.vmem [#allocation7], 128
    %v4407 = vld [vmem:[%s4406] sm:$0xff]
    %v4408 = vld [vmem:[%s4406 + $0x8] sm:$0xff]
    %v4409 = vld [vmem:[%s4406 + $0x10] sm:$0xff]
    %v4410 = vld [vmem:[%s4406 + $0x18] sm:$0xff]
    %4411 = vmatpush.msra.mxu0 %v3556
    %4412 = vmatpush.msra.mxu0 %v3552
    %4413 = vmatpush.msra.mxu0 %v3548
    %4414 = vmatpush.msra.mxu0 %v3544
    %4415 = vmatpush.msra.mxu0 %v3540
    %4416 = vmatpush.msra.mxu0 %v3536
    %4417 = vmatpush.msra.mxu0 %v3532
    %4418 = vmatpush.msra.mxu0 %v3528
    %4419 = vmatpush.msra.mxu0 %v3524
    %4420 = vmatpush.msra.mxu0 %v3520
    %4421 = vmatpush.msra.mxu0 %v3516
    %4422 = vmatpush.msra.mxu0 %v3512
    %4423 = vmatpush.msra.mxu0 %v3508
    %4424 = vmatpush.msra.mxu0 %v3504
    %4425 = vmatpush.msra.mxu0 %v3500
    %4426 = vmatpush.msra.mxu0 %v3496
    %4427 = vmatmul.f32.gmra.mxu0 %v4404
    %v4428 = vpop.f32.mrf.mxu0
    %v4429 = vadd.f32 0.0, %v4428
    %4430 = vdwg.mxu0
    %4431 = vmatpush.msra.mxu0 %v3557
    %4432 = vmatpush.msra.mxu0 %v3553
    %4433 = vmatpush.msra.mxu0 %v3549
    %4434 = vmatpush.msra.mxu0 %v3545
    %4435 = vmatpush.msra.mxu0 %v3541
    %4436 = vmatpush.msra.mxu0 %v3537
    %4437 = vmatpush.msra.mxu0 %v3533
    %4438 = vmatpush.msra.mxu0 %v3529
    %4439 = vmatpush.msra.mxu0 %v3525
    %4440 = vmatpush.msra.mxu0 %v3521
    %4441 = vmatpush.msra.mxu0 %v3517
    %4442 = vmatpush.msra.mxu0 %v3513
    %4443 = vmatpush.msra.mxu0 %v3509
    %4444 = vmatpush.msra.mxu0 %v3505
    %4445 = vmatpush.msra.mxu0 %v3501
    %4446 = vmatpush.msra.mxu0 %v3497
    %4447 = vmatmul.f32.gmra.mxu0 %v4404
    %v4448 = vpop.f32.mrf.mxu0
    %v4449 = vadd.f32 0.0, %v4448
    %4450 = vdwg.mxu0
    %4451 = vmatpush.msra.mxu0 %v3558
    %4452 = vmatpush.msra.mxu0 %v3554
    %4453 = vmatpush.msra.mxu0 %v3550
    %4454 = vmatpush.msra.mxu0 %v3546
    %4455 = vmatpush.msra.mxu0 %v3542
    %4456 = vmatpush.msra.mxu0 %v3538
    %4457 = vmatpush.msra.mxu0 %v3534
    %4458 = vmatpush.msra.mxu0 %v3530
    %4459 = vmatpush.msra.mxu0 %v3526
    %4460 = vmatpush.msra.mxu0 %v3522
    %4461 = vmatpush.msra.mxu0 %v3518
    %4462 = vmatpush.msra.mxu0 %v3514
    %4463 = vmatpush.msra.mxu0 %v3510
    %4464 = vmatpush.msra.mxu0 %v3506
    %4465 = vmatpush.msra.mxu0 %v3502
    %4466 = vmatpush.msra.mxu0 %v3498
    %4467 = vmatmul.f32.gmra.mxu0 %v4404
    %v4468 = vpop.f32.mrf.mxu0
    %v4469 = vadd.f32 0.0, %v4468
    %4470 = vdwg.mxu0
    %4471 = vmatpush.msra.mxu0 %v3559
    %4472 = vmatpush.msra.mxu0 %v3555
    %4473 = vmatpush.msra.mxu0 %v3551
    %4474 = vmatpush.msra.mxu0 %v3547
    %4475 = vmatpush.msra.mxu0 %v3543
    %4476 = vmatpush.msra.mxu0 %v3539
    %4477 = vmatpush.msra.mxu0 %v3535
    %4478 = vmatpush.msra.mxu0 %v3531
    %4479 = vmatpush.msra.mxu0 %v3527
    %4480 = vmatpush.msra.mxu0 %v3523
    %4481 = vmatpush.msra.mxu0 %v3519
    %4482 = vmatpush.msra.mxu0 %v3515
    %4483 = vmatpush.msra.mxu0 %v3511
    %4484 = vmatpush.msra.mxu0 %v3507
    %4485 = vmatpush.msra.mxu0 %v3503
    %4486 = vmatpush.msra.mxu0 %v3499
    %4487 = vmatmul.f32.gmra.mxu0 %v4404
    %v4488 = vpop.f32.mrf.mxu0
    %v4489 = vadd.f32 0.0, %v4488
    %4490 = vdwg.mxu0
    %v4491 = vadd.f32 %v4407, %v4429
    %v4492 = vadd.f32 %v4408, %v4449
    %v4493 = vadd.f32 %v4409, %v4469
    %v4494 = vadd.f32 %v4410, %v4489
    %v4495 = vxor.u32 %v4491, 2147483648
    %v4496 = vxor.u32 %v4492, 2147483648
    %v4497 = vxor.u32 %v4493, 2147483648
    %v4498 = vmul.f32 %v4495, 1.442695
    %v4499 = vpow.pop %v4498
    %v4500 = vmul.f32 %v4496, 1.442695
    %v4501 = vpow.pop %v4500
    %v4502 = vmul.f32 %v4497, 1.442695
    %v4503 = vpow.pop %v4502
    %v4504 = vadd.f32 %v4499, 1.0
    %v4505 = vadd.f32 %v4501, 1.0
    %v4506 = vadd.f32 %v4503, 1.0
    %v4507 = vrcp.pop %v4504
    %v4508 = vmul.f32 %v4504, %v4507
    %v4509 = vsub.f32 1.0, %v4508
    %v4510 = vmul.f32 %v4507, %v4509
    %v4511 = vadd.f32 %v4507, %v4510
    %vm4512 = vweird.f32 %v4504
    %vm4513 = vweird.f32 %v4507
    %vm4514 = vmor %vm4512, %vm4513
    %v4515 = vsel %vm4514, %v4507, %v4511
    %v4516 = vand.u32 2147483647, %v4504
    %vm4517 = vcmp.eq.f32.partialorder %v4516, 8.507059e+37
    %v4518 = vand.u32 %v4504, 2147483648
    %v4519 = vor.u32 1.1754944e-38, %v4518
    %v4520 = vsel %vm4517, %v4519, %v4515
    %v4521 = vmul.f32 1.0, %v4520
    %v4522 = vrcp.pop %v4505
    %v4523 = vmul.f32 %v4505, %v4522
    %v4524 = vsub.f32 1.0, %v4523
    %v4525 = vmul.f32 %v4522, %v4524
    %v4526 = vadd.f32 %v4522, %v4525
    %vm4527 = vweird.f32 %v4505
    %vm4528 = vweird.f32 %v4522
    %vm4529 = vmor %vm4527, %vm4528
    %v4530 = vsel %vm4529, %v4522, %v4526
    %v4531 = vand.u32 2147483647, %v4505
    %vm4532 = vcmp.eq.f32.partialorder %v4531, 8.507059e+37
    %v4533 = vand.u32 %v4505, 2147483648
    %v4534 = vor.u32 1.1754944e-38, %v4533
    %v4535 = vsel %vm4532, %v4534, %v4530
    %v4536 = vmul.f32 1.0, %v4535
    %v4537 = vrcp.pop %v4506
    %v4538 = vmul.f32 %v4506, %v4537
    %v4539 = vsub.f32 1.0, %v4538
    %v4540 = vmul.f32 %v4537, %v4539
    %v4541 = vadd.f32 %v4537, %v4540
    %vm4542 = vweird.f32 %v4506
    %vm4543 = vweird.f32 %v4537
    %vm4544 = vmor %vm4542, %vm4543
    %v4545 = vsel %vm4544, %v4537, %v4541
    %v4546 = vand.u32 2147483647, %v4506
    %vm4547 = vcmp.eq.f32.partialorder %v4546, 8.507059e+37
    %v4548 = vand.u32 %v4506, 2147483648
    %v4549 = vor.u32 1.1754944e-38, %v4548
    %v4550 = vsel %vm4547, %v4549, %v4545
    %v4551 = vmul.f32 1.0, %v4550
    %v4552 = vtanh.pop %v4494
    %v4553 = vmul.f32 %v4536, %v4405
    %v4554 = vmul.f32 %v4521, %v4552
    %v4555 = vadd.f32 %v4553, %v4554
    %v4556 = vtanh.pop %v4555
    %v4557 = vmul.f32 %v4551, %v4556
    %4558 = vst [vmem:[#allocation14] sm:$0xff] %v4555
    %4559 = vst [vmem:[#allocation13] sm:$0xff] %v4557
    %s4560 = scalar_lea.vmem [#allocation4], 32
    %4561 = vst [vmem:[%s4560] sm:$0xff] %v4557
    %v4562 = vld [vmem:[#allocation13] sm:$0xff]
    %v4563 = vld [vmem:[#allocation14] sm:$0xff]
    %s4564 = scalar_lea.vmem [#allocation7], 160
    %v4565 = vld [vmem:[%s4564] sm:$0xff]
    %v4566 = vld [vmem:[%s4564 + $0x8] sm:$0xff]
    %v4567 = vld [vmem:[%s4564 + $0x10] sm:$0xff]
    %v4568 = vld [vmem:[%s4564 + $0x18] sm:$0xff]
    %4569 = vmatpush.msra.mxu0 %v3556
    %4570 = vmatpush.msra.mxu0 %v3552
    %4571 = vmatpush.msra.mxu0 %v3548
    %4572 = vmatpush.msra.mxu0 %v3544
    %4573 = vmatpush.msra.mxu0 %v3540
    %4574 = vmatpush.msra.mxu0 %v3536
    %4575 = vmatpush.msra.mxu0 %v3532
    %4576 = vmatpush.msra.mxu0 %v3528
    %4577 = vmatpush.msra.mxu0 %v3524
    %4578 = vmatpush.msra.mxu0 %v3520
    %4579 = vmatpush.msra.mxu0 %v3516
    %4580 = vmatpush.msra.mxu0 %v3512
    %4581 = vmatpush.msra.mxu0 %v3508
    %4582 = vmatpush.msra.mxu0 %v3504
    %4583 = vmatpush.msra.mxu0 %v3500
    %4584 = vmatpush.msra.mxu0 %v3496
    %4585 = vmatmul.f32.gmra.mxu0 %v4562
    %v4586 = vpop.f32.mrf.mxu0
    %v4587 = vadd.f32 0.0, %v4586
    %4588 = vdwg.mxu0
    %4589 = vmatpush.msra.mxu0 %v3557
    %4590 = vmatpush.msra.mxu0 %v3553
    %4591 = vmatpush.msra.mxu0 %v3549
    %4592 = vmatpush.msra.mxu0 %v3545
    %4593 = vmatpush.msra.mxu0 %v3541
    %4594 = vmatpush.msra.mxu0 %v3537
    %4595 = vmatpush.msra.mxu0 %v3533
    %4596 = vmatpush.msra.mxu0 %v3529
    %4597 = vmatpush.msra.mxu0 %v3525
    %4598 = vmatpush.msra.mxu0 %v3521
    %4599 = vmatpush.msra.mxu0 %v3517
    %4600 = vmatpush.msra.mxu0 %v3513
    %4601 = vmatpush.msra.mxu0 %v3509
    %4602 = vmatpush.msra.mxu0 %v3505
    %4603 = vmatpush.msra.mxu0 %v3501
    %4604 = vmatpush.msra.mxu0 %v3497
    %4605 = vmatmul.f32.gmra.mxu0 %v4562
    %v4606 = vpop.f32.mrf.mxu0
    %v4607 = vadd.f32 0.0, %v4606
    %4608 = vdwg.mxu0
    %4609 = vmatpush.msra.mxu0 %v3558
    %4610 = vmatpush.msra.mxu0 %v3554
    %4611 = vmatpush.msra.mxu0 %v3550
    %4612 = vmatpush.msra.mxu0 %v3546
    %4613 = vmatpush.msra.mxu0 %v3542
    %4614 = vmatpush.msra.mxu0 %v3538
    %4615 = vmatpush.msra.mxu0 %v3534
    %4616 = vmatpush.msra.mxu0 %v3530
    %4617 = vmatpush.msra.mxu0 %v3526
    %4618 = vmatpush.msra.mxu0 %v3522
    %4619 = vmatpush.msra.mxu0 %v3518
    %4620 = vmatpush.msra.mxu0 %v3514
    %4621 = vmatpush.msra.mxu0 %v3510
    %4622 = vmatpush.msra.mxu0 %v3506
    %4623 = vmatpush.msra.mxu0 %v3502
    %4624 = vmatpush.msra.mxu0 %v3498
    %4625 = vmatmul.f32.gmra.mxu0 %v4562
    %v4626 = vpop.f32.mrf.mxu0
    %v4627 = vadd.f32 0.0, %v4626
    %4628 = vdwg.mxu0
    %4629 = vmatpush.msra.mxu0 %v3559
    %4630 = vmatpush.msra.mxu0 %v3555
    %4631 = vmatpush.msra.mxu0 %v3551
    %4632 = vmatpush.msra.mxu0 %v3547
    %4633 = vmatpush.msra.mxu0 %v3543
    %4634 = vmatpush.msra.mxu0 %v3539
    %4635 = vmatpush.msra.mxu0 %v3535
    %4636 = vmatpush.msra.mxu0 %v3531
    %4637 = vmatpush.msra.mxu0 %v3527
    %4638 = vmatpush.msra.mxu0 %v3523
    %4639 = vmatpush.msra.mxu0 %v3519
    %4640 = vmatpush.msra.mxu0 %v3515
    %4641 = vmatpush.msra.mxu0 %v3511
    %4642 = vmatpush.msra.mxu0 %v3507
    %4643 = vmatpush.msra.mxu0 %v3503
    %4644 = vmatpush.msra.mxu0 %v3499
    %4645 = vmatmul.f32.gmra.mxu0 %v4562
    %v4646 = vpop.f32.mrf.mxu0
    %v4647 = vadd.f32 0.0, %v4646
    %4648 = vdwg.mxu0
    %v4649 = vadd.f32 %v4565, %v4587
    %v4650 = vadd.f32 %v4566, %v4607
    %v4651 = vadd.f32 %v4567, %v4627
    %v4652 = vadd.f32 %v4568, %v4647
    %v4653 = vxor.u32 %v4649, 2147483648
    %v4654 = vxor.u32 %v4650, 2147483648
    %v4655 = vxor.u32 %v4651, 2147483648
    %v4656 = vmul.f32 %v4653, 1.442695
    %v4657 = vpow.pop %v4656
    %v4658 = vmul.f32 %v4654, 1.442695
    %v4659 = vpow.pop %v4658
    %v4660 = vmul.f32 %v4655, 1.442695
    %v4661 = vpow.pop %v4660
    %v4662 = vadd.f32 %v4657, 1.0
    %v4663 = vadd.f32 %v4659, 1.0
    %v4664 = vadd.f32 %v4661, 1.0
    %v4665 = vrcp.pop %v4662
    %v4666 = vmul.f32 %v4662, %v4665
    %v4667 = vsub.f32 1.0, %v4666
    %v4668 = vmul.f32 %v4665, %v4667
    %v4669 = vadd.f32 %v4665, %v4668
    %vm4670 = vweird.f32 %v4662
    %vm4671 = vweird.f32 %v4665
    %vm4672 = vmor %vm4670, %vm4671
    %v4673 = vsel %vm4672, %v4665, %v4669
    %v4674 = vand.u32 2147483647, %v4662
    %vm4675 = vcmp.eq.f32.partialorder %v4674, 8.507059e+37
    %v4676 = vand.u32 %v4662, 2147483648
    %v4677 = vor.u32 1.1754944e-38, %v4676
    %v4678 = vsel %vm4675, %v4677, %v4673
    %v4679 = vmul.f32 1.0, %v4678
    %v4680 = vrcp.pop %v4663
    %v4681 = vmul.f32 %v4663, %v4680
    %v4682 = vsub.f32 1.0, %v4681
    %v4683 = vmul.f32 %v4680, %v4682
    %v4684 = vadd.f32 %v4680, %v4683
    %vm4685 = vweird.f32 %v4663
    %vm4686 = vweird.f32 %v4680
    %vm4687 = vmor %vm4685, %vm4686
    %v4688 = vsel %vm4687, %v4680, %v4684
    %v4689 = vand.u32 2147483647, %v4663
    %vm4690 = vcmp.eq.f32.partialorder %v4689, 8.507059e+37
    %v4691 = vand.u32 %v4663, 2147483648
    %v4692 = vor.u32 1.1754944e-38, %v4691
    %v4693 = vsel %vm4690, %v4692, %v4688
    %v4694 = vmul.f32 1.0, %v4693
    %v4695 = vrcp.pop %v4664
    %v4696 = vmul.f32 %v4664, %v4695
    %v4697 = vsub.f32 1.0, %v4696
    %v4698 = vmul.f32 %v4695, %v4697
    %v4699 = vadd.f32 %v4695, %v4698
    %vm4700 = vweird.f32 %v4664
    %vm4701 = vweird.f32 %v4695
    %vm4702 = vmor %vm4700, %vm4701
    %v4703 = vsel %vm4702, %v4695, %v4699
    %v4704 = vand.u32 2147483647, %v4664
    %vm4705 = vcmp.eq.f32.partialorder %v4704, 8.507059e+37
    %v4706 = vand.u32 %v4664, 2147483648
    %v4707 = vor.u32 1.1754944e-38, %v4706
    %v4708 = vsel %vm4705, %v4707, %v4703
    %v4709 = vmul.f32 1.0, %v4708
    %v4710 = vtanh.pop %v4652
    %v4711 = vmul.f32 %v4694, %v4563
    %v4712 = vmul.f32 %v4679, %v4710
    %v4713 = vadd.f32 %v4711, %v4712
    %v4714 = vtanh.pop %v4713
    %v4715 = vmul.f32 %v4709, %v4714
    %4716 = vst [vmem:[#allocation14] sm:$0xff] %v4713
    %4717 = vst [vmem:[#allocation13] sm:$0xff] %v4715
    %s4718 = scalar_lea.vmem [#allocation4], 40
    %4719 = vst [vmem:[%s4718] sm:$0xff] %v4715
    %v4720 = vld [vmem:[#allocation13] sm:$0xff]
    %v4721 = vld [vmem:[#allocation14] sm:$0xff]
    %s4722 = scalar_lea.vmem [#allocation7], 192
    %v4723 = vld [vmem:[%s4722] sm:$0xff]
    %v4724 = vld [vmem:[%s4722 + $0x8] sm:$0xff]
    %v4725 = vld [vmem:[%s4722 + $0x10] sm:$0xff]
    %v4726 = vld [vmem:[%s4722 + $0x18] sm:$0xff]
    %4727 = vmatpush.msra.mxu0 %v3556
    %4728 = vmatpush.msra.mxu0 %v3552
    %4729 = vmatpush.msra.mxu0 %v3548
    %4730 = vmatpush.msra.mxu0 %v3544
    %4731 = vmatpush.msra.mxu0 %v3540
    %4732 = vmatpush.msra.mxu0 %v3536
    %4733 = vmatpush.msra.mxu0 %v3532
    %4734 = vmatpush.msra.mxu0 %v3528
    %4735 = vmatpush.msra.mxu0 %v3524
    %4736 = vmatpush.msra.mxu0 %v3520
    %4737 = vmatpush.msra.mxu0 %v3516
    %4738 = vmatpush.msra.mxu0 %v3512
    %4739 = vmatpush.msra.mxu0 %v3508
    %4740 = vmatpush.msra.mxu0 %v3504
    %4741 = vmatpush.msra.mxu0 %v3500
    %4742 = vmatpush.msra.mxu0 %v3496
    %4743 = vmatmul.f32.gmra.mxu0 %v4720
    %v4744 = vpop.f32.mrf.mxu0
    %v4745 = vadd.f32 0.0, %v4744
    %4746 = vdwg.mxu0
    %4747 = vmatpush.msra.mxu0 %v3557
    %4748 = vmatpush.msra.mxu0 %v3553
    %4749 = vmatpush.msra.mxu0 %v3549
    %4750 = vmatpush.msra.mxu0 %v3545
    %4751 = vmatpush.msra.mxu0 %v3541
    %4752 = vmatpush.msra.mxu0 %v3537
    %4753 = vmatpush.msra.mxu0 %v3533
    %4754 = vmatpush.msra.mxu0 %v3529
    %4755 = vmatpush.msra.mxu0 %v3525
    %4756 = vmatpush.msra.mxu0 %v3521
    %4757 = vmatpush.msra.mxu0 %v3517
    %4758 = vmatpush.msra.mxu0 %v3513
    %4759 = vmatpush.msra.mxu0 %v3509
    %4760 = vmatpush.msra.mxu0 %v3505
    %4761 = vmatpush.msra.mxu0 %v3501
    %4762 = vmatpush.msra.mxu0 %v3497
    %4763 = vmatmul.f32.gmra.mxu0 %v4720
    %v4764 = vpop.f32.mrf.mxu0
    %v4765 = vadd.f32 0.0, %v4764
    %4766 = vdwg.mxu0
    %4767 = vmatpush.msra.mxu0 %v3558
    %4768 = vmatpush.msra.mxu0 %v3554
    %4769 = vmatpush.msra.mxu0 %v3550
    %4770 = vmatpush.msra.mxu0 %v3546
    %4771 = vmatpush.msra.mxu0 %v3542
    %4772 = vmatpush.msra.mxu0 %v3538
    %4773 = vmatpush.msra.mxu0 %v3534
    %4774 = vmatpush.msra.mxu0 %v3530
    %4775 = vmatpush.msra.mxu0 %v3526
    %4776 = vmatpush.msra.mxu0 %v3522
    %4777 = vmatpush.msra.mxu0 %v3518
    %4778 = vmatpush.msra.mxu0 %v3514
    %4779 = vmatpush.msra.mxu0 %v3510
    %4780 = vmatpush.msra.mxu0 %v3506
    %4781 = vmatpush.msra.mxu0 %v3502
    %4782 = vmatpush.msra.mxu0 %v3498
    %4783 = vmatmul.f32.gmra.mxu0 %v4720
    %v4784 = vpop.f32.mrf.mxu0
    %v4785 = vadd.f32 0.0, %v4784
    %4786 = vdwg.mxu0
    %4787 = vmatpush.msra.mxu0 %v3559
    %4788 = vmatpush.msra.mxu0 %v3555
    %4789 = vmatpush.msra.mxu0 %v3551
    %4790 = vmatpush.msra.mxu0 %v3547
    %4791 = vmatpush.msra.mxu0 %v3543
    %4792 = vmatpush.msra.mxu0 %v3539
    %4793 = vmatpush.msra.mxu0 %v3535
    %4794 = vmatpush.msra.mxu0 %v3531
    %4795 = vmatpush.msra.mxu0 %v3527
    %4796 = vmatpush.msra.mxu0 %v3523
    %4797 = vmatpush.msra.mxu0 %v3519
    %4798 = vmatpush.msra.mxu0 %v3515
    %4799 = vmatpush.msra.mxu0 %v3511
    %4800 = vmatpush.msra.mxu0 %v3507
    %4801 = vmatpush.msra.mxu0 %v3503
    %4802 = vmatpush.msra.mxu0 %v3499
    %4803 = vmatmul.f32.gmra.mxu0 %v4720
    %v4804 = vpop.f32.mrf.mxu0
    %v4805 = vadd.f32 0.0, %v4804
    %4806 = vdwg.mxu0
    %v4807 = vadd.f32 %v4723, %v4745
    %v4808 = vadd.f32 %v4724, %v4765
    %v4809 = vadd.f32 %v4725, %v4785
    %v4810 = vadd.f32 %v4726, %v4805
    %v4811 = vxor.u32 %v4807, 2147483648
    %v4812 = vxor.u32 %v4808, 2147483648
    %v4813 = vxor.u32 %v4809, 2147483648
    %v4814 = vmul.f32 %v4811, 1.442695
    %v4815 = vpow.pop %v4814
    %v4816 = vmul.f32 %v4812, 1.442695
    %v4817 = vpow.pop %v4816
    %v4818 = vmul.f32 %v4813, 1.442695
    %v4819 = vpow.pop %v4818
    %v4820 = vadd.f32 %v4815, 1.0
    %v4821 = vadd.f32 %v4817, 1.0
    %v4822 = vadd.f32 %v4819, 1.0
    %v4823 = vrcp.pop %v4820
    %v4824 = vmul.f32 %v4820, %v4823
    %v4825 = vsub.f32 1.0, %v4824
    %v4826 = vmul.f32 %v4823, %v4825
    %v4827 = vadd.f32 %v4823, %v4826
    %vm4828 = vweird.f32 %v4820
    %vm4829 = vweird.f32 %v4823
    %vm4830 = vmor %vm4828, %vm4829
    %v4831 = vsel %vm4830, %v4823, %v4827
    %v4832 = vand.u32 2147483647, %v4820
    %vm4833 = vcmp.eq.f32.partialorder %v4832, 8.507059e+37
    %v4834 = vand.u32 %v4820, 2147483648
    %v4835 = vor.u32 1.1754944e-38, %v4834
    %v4836 = vsel %vm4833, %v4835, %v4831
    %v4837 = vmul.f32 1.0, %v4836
    %v4838 = vrcp.pop %v4821
    %v4839 = vmul.f32 %v4821, %v4838
    %v4840 = vsub.f32 1.0, %v4839
    %v4841 = vmul.f32 %v4838, %v4840
    %v4842 = vadd.f32 %v4838, %v4841
    %vm4843 = vweird.f32 %v4821
    %vm4844 = vweird.f32 %v4838
    %vm4845 = vmor %vm4843, %vm4844
    %v4846 = vsel %vm4845, %v4838, %v4842
    %v4847 = vand.u32 2147483647, %v4821
    %vm4848 = vcmp.eq.f32.partialorder %v4847, 8.507059e+37
    %v4849 = vand.u32 %v4821, 2147483648
    %v4850 = vor.u32 1.1754944e-38, %v4849
    %v4851 = vsel %vm4848, %v4850, %v4846
    %v4852 = vmul.f32 1.0, %v4851
    %v4853 = vrcp.pop %v4822
    %v4854 = vmul.f32 %v4822, %v4853
    %v4855 = vsub.f32 1.0, %v4854
    %v4856 = vmul.f32 %v4853, %v4855
    %v4857 = vadd.f32 %v4853, %v4856
    %vm4858 = vweird.f32 %v4822
    %vm4859 = vweird.f32 %v4853
    %vm4860 = vmor %vm4858, %vm4859
    %v4861 = vsel %vm4860, %v4853, %v4857
    %v4862 = vand.u32 2147483647, %v4822
    %vm4863 = vcmp.eq.f32.partialorder %v4862, 8.507059e+37
    %v4864 = vand.u32 %v4822, 2147483648
    %v4865 = vor.u32 1.1754944e-38, %v4864
    %v4866 = vsel %vm4863, %v4865, %v4861
    %v4867 = vmul.f32 1.0, %v4866
    %v4868 = vtanh.pop %v4810
    %v4869 = vmul.f32 %v4852, %v4721
    %v4870 = vmul.f32 %v4837, %v4868
    %v4871 = vadd.f32 %v4869, %v4870
    %v4872 = vtanh.pop %v4871
    %v4873 = vmul.f32 %v4867, %v4872
    %4874 = vst [vmem:[#allocation14] sm:$0xff] %v4871
    %4875 = vst [vmem:[#allocation13] sm:$0xff] %v4873
    %s4876 = scalar_lea.vmem [#allocation4], 48
    %4877 = vst [vmem:[%s4876] sm:$0xff] %v4873
    %v4878 = vld [vmem:[#allocation13] sm:$0xff]
    %v4879 = vld [vmem:[#allocation14] sm:$0xff]
    %s4880 = scalar_lea.vmem [#allocation7], 224
    %v4881 = vld [vmem:[%s4880] sm:$0xff]
    %v4882 = vld [vmem:[%s4880 + $0x8] sm:$0xff]
    %v4883 = vld [vmem:[%s4880 + $0x10] sm:$0xff]
    %v4884 = vld [vmem:[%s4880 + $0x18] sm:$0xff]
    %4885 = vmatpush.msra.mxu0 %v3556
    %4886 = vmatpush.msra.mxu0 %v3552
    %4887 = vmatpush.msra.mxu0 %v3548
    %4888 = vmatpush.msra.mxu0 %v3544
    %4889 = vmatpush.msra.mxu0 %v3540
    %4890 = vmatpush.msra.mxu0 %v3536
    %4891 = vmatpush.msra.mxu0 %v3532
    %4892 = vmatpush.msra.mxu0 %v3528
    %4893 = vmatpush.msra.mxu0 %v3524
    %4894 = vmatpush.msra.mxu0 %v3520
    %4895 = vmatpush.msra.mxu0 %v3516
    %4896 = vmatpush.msra.mxu0 %v3512
    %4897 = vmatpush.msra.mxu0 %v3508
    %4898 = vmatpush.msra.mxu0 %v3504
    %4899 = vmatpush.msra.mxu0 %v3500
    %4900 = vmatpush.msra.mxu0 %v3496
    %4901 = vmatmul.f32.gmra.mxu0 %v4878
    %v4902 = vpop.f32.mrf.mxu0
    %v4903 = vadd.f32 0.0, %v4902
    %4904 = vdwg.mxu0
    %4905 = vmatpush.msra.mxu0 %v3557
    %4906 = vmatpush.msra.mxu0 %v3553
    %4907 = vmatpush.msra.mxu0 %v3549
    %4908 = vmatpush.msra.mxu0 %v3545
    %4909 = vmatpush.msra.mxu0 %v3541
    %4910 = vmatpush.msra.mxu0 %v3537
    %4911 = vmatpush.msra.mxu0 %v3533
    %4912 = vmatpush.msra.mxu0 %v3529
    %4913 = vmatpush.msra.mxu0 %v3525
    %4914 = vmatpush.msra.mxu0 %v3521
    %4915 = vmatpush.msra.mxu0 %v3517
    %4916 = vmatpush.msra.mxu0 %v3513
    %4917 = vmatpush.msra.mxu0 %v3509
    %4918 = vmatpush.msra.mxu0 %v3505
    %4919 = vmatpush.msra.mxu0 %v3501
    %4920 = vmatpush.msra.mxu0 %v3497
    %4921 = vmatmul.f32.gmra.mxu0 %v4878
    %v4922 = vpop.f32.mrf.mxu0
    %v4923 = vadd.f32 0.0, %v4922
    %4924 = vdwg.mxu0
    %4925 = vmatpush.msra.mxu0 %v3558
    %4926 = vmatpush.msra.mxu0 %v3554
    %4927 = vmatpush.msra.mxu0 %v3550
    %4928 = vmatpush.msra.mxu0 %v3546
    %4929 = vmatpush.msra.mxu0 %v3542
    %4930 = vmatpush.msra.mxu0 %v3538
    %4931 = vmatpush.msra.mxu0 %v3534
    %4932 = vmatpush.msra.mxu0 %v3530
    %4933 = vmatpush.msra.mxu0 %v3526
    %4934 = vmatpush.msra.mxu0 %v3522
    %4935 = vmatpush.msra.mxu0 %v3518
    %4936 = vmatpush.msra.mxu0 %v3514
    %4937 = vmatpush.msra.mxu0 %v3510
    %4938 = vmatpush.msra.mxu0 %v3506
    %4939 = vmatpush.msra.mxu0 %v3502
    %4940 = vmatpush.msra.mxu0 %v3498
    %4941 = vmatmul.f32.gmra.mxu0 %v4878
    %v4942 = vpop.f32.mrf.mxu0
    %v4943 = vadd.f32 0.0, %v4942
    %4944 = vdwg.mxu0
    %4945 = vmatpush.msra.mxu0 %v3559
    %4946 = vmatpush.msra.mxu0 %v3555
    %4947 = vmatpush.msra.mxu0 %v3551
    %4948 = vmatpush.msra.mxu0 %v3547
    %4949 = vmatpush.msra.mxu0 %v3543
    %4950 = vmatpush.msra.mxu0 %v3539
    %4951 = vmatpush.msra.mxu0 %v3535
    %4952 = vmatpush.msra.mxu0 %v3531
    %4953 = vmatpush.msra.mxu0 %v3527
    %4954 = vmatpush.msra.mxu0 %v3523
    %4955 = vmatpush.msra.mxu0 %v3519
    %4956 = vmatpush.msra.mxu0 %v3515
    %4957 = vmatpush.msra.mxu0 %v3511
    %4958 = vmatpush.msra.mxu0 %v3507
    %4959 = vmatpush.msra.mxu0 %v3503
    %4960 = vmatpush.msra.mxu0 %v3499
    %4961 = vmatmul.f32.gmra.mxu0 %v4878
    %v4962 = vpop.f32.mrf.mxu0
    %v4963 = vadd.f32 0.0, %v4962
    %4964 = vdwg.mxu0
    %v4965 = vadd.f32 %v4881, %v4903
    %v4966 = vadd.f32 %v4882, %v4923
    %v4967 = vadd.f32 %v4883, %v4943
    %v4968 = vadd.f32 %v4884, %v4963
    %v4969 = vxor.u32 %v4965, 2147483648
    %v4970 = vxor.u32 %v4966, 2147483648
    %v4971 = vxor.u32 %v4967, 2147483648
    %v4972 = vmul.f32 %v4969, 1.442695
    %v4973 = vpow.pop %v4972
    %v4974 = vmul.f32 %v4970, 1.442695
    %v4975 = vpow.pop %v4974
    %v4976 = vmul.f32 %v4971, 1.442695
    %v4977 = vpow.pop %v4976
    %v4978 = vadd.f32 %v4973, 1.0
    %v4979 = vadd.f32 %v4975, 1.0
    %v4980 = vadd.f32 %v4977, 1.0
    %v4981 = vrcp.pop %v4978
    %v4982 = vmul.f32 %v4978, %v4981
    %v4983 = vsub.f32 1.0, %v4982
    %v4984 = vmul.f32 %v4981, %v4983
    %v4985 = vadd.f32 %v4981, %v4984
    %vm4986 = vweird.f32 %v4978
    %vm4987 = vweird.f32 %v4981
    %vm4988 = vmor %vm4986, %vm4987
    %v4989 = vsel %vm4988, %v4981, %v4985
    %v4990 = vand.u32 2147483647, %v4978
    %vm4991 = vcmp.eq.f32.partialorder %v4990, 8.507059e+37
    %v4992 = vand.u32 %v4978, 2147483648
    %v4993 = vor.u32 1.1754944e-38, %v4992
    %v4994 = vsel %vm4991, %v4993, %v4989
    %v4995 = vmul.f32 1.0, %v4994
    %v4996 = vrcp.pop %v4979
    %v4997 = vmul.f32 %v4979, %v4996
    %v4998 = vsub.f32 1.0, %v4997
    %v4999 = vmul.f32 %v4996, %v4998
    %v5000 = vadd.f32 %v4996, %v4999
    %vm5001 = vweird.f32 %v4979
    %vm5002 = vweird.f32 %v4996
    %vm5003 = vmor %vm5001, %vm5002
    %v5004 = vsel %vm5003, %v4996, %v5000
    %v5005 = vand.u32 2147483647, %v4979
    %vm5006 = vcmp.eq.f32.partialorder %v5005, 8.507059e+37
    %v5007 = vand.u32 %v4979, 2147483648
    %v5008 = vor.u32 1.1754944e-38, %v5007
    %v5009 = vsel %vm5006, %v5008, %v5004
    %v5010 = vmul.f32 1.0, %v5009
    %v5011 = vrcp.pop %v4980
    %v5012 = vmul.f32 %v4980, %v5011
    %v5013 = vsub.f32 1.0, %v5012
    %v5014 = vmul.f32 %v5011, %v5013
    %v5015 = vadd.f32 %v5011, %v5014
    %vm5016 = vweird.f32 %v4980
    %vm5017 = vweird.f32 %v5011
    %vm5018 = vmor %vm5016, %vm5017
    %v5019 = vsel %vm5018, %v5011, %v5015
    %v5020 = vand.u32 2147483647, %v4980
    %vm5021 = vcmp.eq.f32.partialorder %v5020, 8.507059e+37
    %v5022 = vand.u32 %v4980, 2147483648
    %v5023 = vor.u32 1.1754944e-38, %v5022
    %v5024 = vsel %vm5021, %v5023, %v5019
    %v5025 = vmul.f32 1.0, %v5024
    %v5026 = vtanh.pop %v4968
    %v5027 = vmul.f32 %v5010, %v4879
    %v5028 = vmul.f32 %v4995, %v5026
    %v5029 = vadd.f32 %v5027, %v5028
    %v5030 = vtanh.pop %v5029
    %v5031 = vmul.f32 %v5025, %v5030
    %5032 = vst [vmem:[#allocation14] sm:$0xff] %v5029
    %5033 = vst [vmem:[#allocation13] sm:$0xff] %v5031
    %s5034 = scalar_lea.vmem [#allocation4], 56
    %5035 = vst [vmem:[%s5034] sm:$0xff] %v5031
    %v5036 = vld [vmem:[#allocation25] sm:$0xff]
    %v5037 = vld [vmem:[#allocation25 + $0x8] sm:$0xff]
    %v5038 = vld [vmem:[#allocation25 + $0x10] sm:$0xff]
    %v5039 = vld [vmem:[#allocation25 + $0x18] sm:$0xff]
    %v5040 = vld [vmem:[#allocation25 + $0x20] sm:$0xff]
    %v5041 = vld [vmem:[#allocation25 + $0x28] sm:$0xff]
    %v5042 = vld [vmem:[#allocation25 + $0x30] sm:$0xff]
    %v5043 = vld [vmem:[#allocation25 + $0x38] sm:$0xff]
    %v5044 = vld [vmem:[#allocation25 + $0x40] sm:$0xff]
    %v5045 = vld [vmem:[#allocation25 + $0x48] sm:$0xff]
    %v5046 = vld [vmem:[#allocation25 + $0x50] sm:$0xff]
    %v5047 = vld [vmem:[#allocation25 + $0x58] sm:$0xff]
    %v5048 = vld [vmem:[#allocation25 + $0x60] sm:$0xff]
    %v5049 = vld [vmem:[#allocation25 + $0x68] sm:$0xff]
    %v5050 = vld [vmem:[#allocation25 + $0x70] sm:$0xff]
    %v5051 = vld [vmem:[#allocation25 + $0x78] sm:$0xff]
    %v5052 = vld [vmem:[#allocation25 + $0x80] sm:$0xff]
    %v5053 = vld [vmem:[#allocation25 + $0x88] sm:$0xff]
    %v5054 = vld [vmem:[#allocation25 + $0x90] sm:$0xff]
    %v5055 = vld [vmem:[#allocation25 + $0x98] sm:$0xff]
    %v5056 = vld [vmem:[#allocation25 + $0xa0] sm:$0xff]
    %v5057 = vld [vmem:[#allocation25 + $0xa8] sm:$0xff]
    %v5058 = vld [vmem:[#allocation25 + $0xb0] sm:$0xff]
    %v5059 = vld [vmem:[#allocation25 + $0xb8] sm:$0xff]
    %v5060 = vld [vmem:[#allocation25 + $0xc0] sm:$0xff]
    %v5061 = vld [vmem:[#allocation25 + $0xc8] sm:$0xff]
    %v5062 = vld [vmem:[#allocation25 + $0xd0] sm:$0xff]
    %v5063 = vld [vmem:[#allocation25 + $0xd8] sm:$0xff]
    %v5064 = vld [vmem:[#allocation25 + $0xe0] sm:$0xff]
    %v5065 = vld [vmem:[#allocation25 + $0xe8] sm:$0xff]
    %v5066 = vld [vmem:[#allocation25 + $0xf0] sm:$0xff]
    %v5067 = vld [vmem:[#allocation25 + $0xf8] sm:$0xff]
    %v5068 = vld [vmem:[#allocation25 + $0x100] sm:$0xff]
    %v5069 = vld [vmem:[#allocation25 + $0x108] sm:$0xff]
    %v5070 = vld [vmem:[#allocation25 + $0x110] sm:$0xff]
    %v5071 = vld [vmem:[#allocation25 + $0x118] sm:$0xff]
    %v5072 = vld [vmem:[#allocation25 + $0x120] sm:$0xff]
    %v5073 = vld [vmem:[#allocation25 + $0x128] sm:$0xff]
    %v5074 = vld [vmem:[#allocation25 + $0x130] sm:$0xff]
    %v5075 = vld [vmem:[#allocation25 + $0x138] sm:$0xff]
    %v5076 = vld [vmem:[#allocation25 + $0x140] sm:$0xff]
    %v5077 = vld [vmem:[#allocation25 + $0x148] sm:$0xff]
    %v5078 = vld [vmem:[#allocation25 + $0x150] sm:$0xff]
    %v5079 = vld [vmem:[#allocation25 + $0x158] sm:$0xff]
    %v5080 = vld [vmem:[#allocation25 + $0x160] sm:$0xff]
    %v5081 = vld [vmem:[#allocation25 + $0x168] sm:$0xff]
    %v5082 = vld [vmem:[#allocation25 + $0x170] sm:$0xff]
    %v5083 = vld [vmem:[#allocation25 + $0x178] sm:$0xff]
    %v5084 = vld [vmem:[#allocation25 + $0x180] sm:$0xff]
    %v5085 = vld [vmem:[#allocation25 + $0x188] sm:$0xff]
    %v5086 = vld [vmem:[#allocation25 + $0x190] sm:$0xff]
    %v5087 = vld [vmem:[#allocation25 + $0x198] sm:$0xff]
    %v5088 = vld [vmem:[#allocation25 + $0x1a0] sm:$0xff]
    %v5089 = vld [vmem:[#allocation25 + $0x1a8] sm:$0xff]
    %v5090 = vld [vmem:[#allocation25 + $0x1b0] sm:$0xff]
    %v5091 = vld [vmem:[#allocation25 + $0x1b8] sm:$0xff]
    %v5092 = vld [vmem:[#allocation25 + $0x1c0] sm:$0xff]
    %v5093 = vld [vmem:[#allocation25 + $0x1c8] sm:$0xff]
    %v5094 = vld [vmem:[#allocation25 + $0x1d0] sm:$0xff]
    %v5095 = vld [vmem:[#allocation25 + $0x1d8] sm:$0xff]
    %v5096 = vld [vmem:[#allocation25 + $0x1e0] sm:$0xff]
    %v5097 = vld [vmem:[#allocation25 + $0x1e8] sm:$0xff]
    %v5098 = vld [vmem:[#allocation25 + $0x1f0] sm:$0xff]
    %v5099 = vld [vmem:[#allocation25 + $0x1f8] sm:$0xff]
    %v5100 = vld [vmem:[#allocation31] sm:$0xff]
    %v5101 = vld [vmem:[#allocation31 + $0x8] sm:$0xff]
    %v5102 = vld [vmem:[#allocation31 + $0x10] sm:$0xff]
    %v5103 = vld [vmem:[#allocation31 + $0x18] sm:$0xff]
    %v5104 = vld [vmem:[#allocation31 + $0x20] sm:$0xff]
    %v5105 = vld [vmem:[#allocation31 + $0x28] sm:$0xff]
    %v5106 = vld [vmem:[#allocation31 + $0x30] sm:$0xff]
    %v5107 = vld [vmem:[#allocation31 + $0x38] sm:$0xff]
    %v5108 = vld [vmem:[#allocation31 + $0x40] sm:$0xff]
    %v5109 = vld [vmem:[#allocation31 + $0x48] sm:$0xff]
    %v5110 = vld [vmem:[#allocation31 + $0x50] sm:$0xff]
    %v5111 = vld [vmem:[#allocation31 + $0x58] sm:$0xff]
    %v5112 = vld [vmem:[#allocation31 + $0x60] sm:$0xff]
    %v5113 = vld [vmem:[#allocation31 + $0x68] sm:$0xff]
    %v5114 = vld [vmem:[#allocation31 + $0x70] sm:$0xff]
    %v5115 = vld [vmem:[#allocation31 + $0x78] sm:$0xff]
    %v5116 = vld [vmem:[#allocation31 + $0x80] sm:$0xff]
    %v5117 = vld [vmem:[#allocation31 + $0x88] sm:$0xff]
    %v5118 = vld [vmem:[#allocation31 + $0x90] sm:$0xff]
    %v5119 = vld [vmem:[#allocation31 + $0x98] sm:$0xff]
    %v5120 = vld [vmem:[#allocation31 + $0xa0] sm:$0xff]
    %v5121 = vld [vmem:[#allocation31 + $0xa8] sm:$0xff]
    %v5122 = vld [vmem:[#allocation31 + $0xb0] sm:$0xff]
    %v5123 = vld [vmem:[#allocation31 + $0xb8] sm:$0xff]
    %v5124 = vld [vmem:[#allocation31 + $0xc0] sm:$0xff]
    %v5125 = vld [vmem:[#allocation31 + $0xc8] sm:$0xff]
    %v5126 = vld [vmem:[#allocation31 + $0xd0] sm:$0xff]
    %v5127 = vld [vmem:[#allocation31 + $0xd8] sm:$0xff]
    %v5128 = vld [vmem:[#allocation31 + $0xe0] sm:$0xff]
    %v5129 = vld [vmem:[#allocation31 + $0xe8] sm:$0xff]
    %v5130 = vld [vmem:[#allocation31 + $0xf0] sm:$0xff]
    %v5131 = vld [vmem:[#allocation31 + $0xf8] sm:$0xff]
    %v5132 = vld [vmem:[#allocation31 + $0x100] sm:$0xff]
    %v5133 = vld [vmem:[#allocation31 + $0x108] sm:$0xff]
    %v5134 = vld [vmem:[#allocation31 + $0x110] sm:$0xff]
    %v5135 = vld [vmem:[#allocation31 + $0x118] sm:$0xff]
    %v5136 = vld [vmem:[#allocation31 + $0x120] sm:$0xff]
    %v5137 = vld [vmem:[#allocation31 + $0x128] sm:$0xff]
    %v5138 = vld [vmem:[#allocation31 + $0x130] sm:$0xff]
    %v5139 = vld [vmem:[#allocation31 + $0x138] sm:$0xff]
    %v5140 = vld [vmem:[#allocation31 + $0x140] sm:$0xff]
    %v5141 = vld [vmem:[#allocation31 + $0x148] sm:$0xff]
    %v5142 = vld [vmem:[#allocation31 + $0x150] sm:$0xff]
    %v5143 = vld [vmem:[#allocation31 + $0x158] sm:$0xff]
    %v5144 = vld [vmem:[#allocation31 + $0x160] sm:$0xff]
    %v5145 = vld [vmem:[#allocation31 + $0x168] sm:$0xff]
    %v5146 = vld [vmem:[#allocation31 + $0x170] sm:$0xff]
    %v5147 = vld [vmem:[#allocation31 + $0x178] sm:$0xff]
    %v5148 = vld [vmem:[#allocation31 + $0x180] sm:$0xff]
    %v5149 = vld [vmem:[#allocation31 + $0x188] sm:$0xff]
    %v5150 = vld [vmem:[#allocation31 + $0x190] sm:$0xff]
    %v5151 = vld [vmem:[#allocation31 + $0x198] sm:$0xff]
    %v5152 = vld [vmem:[#allocation31 + $0x1a0] sm:$0xff]
    %v5153 = vld [vmem:[#allocation31 + $0x1a8] sm:$0xff]
    %v5154 = vld [vmem:[#allocation31 + $0x1b0] sm:$0xff]
    %v5155 = vld [vmem:[#allocation31 + $0x1b8] sm:$0xff]
    %v5156 = vld [vmem:[#allocation31 + $0x1c0] sm:$0xff]
    %v5157 = vld [vmem:[#allocation31 + $0x1c8] sm:$0xff]
    %v5158 = vld [vmem:[#allocation31 + $0x1d0] sm:$0xff]
    %v5159 = vld [vmem:[#allocation31 + $0x1d8] sm:$0xff]
    %v5160 = vld [vmem:[#allocation31 + $0x1e0] sm:$0xff]
    %v5161 = vld [vmem:[#allocation31 + $0x1e8] sm:$0xff]
    %v5162 = vld [vmem:[#allocation31 + $0x1f0] sm:$0xff]
    %v5163 = vld [vmem:[#allocation31 + $0x1f8] sm:$0xff]
    %v5164 = vld [vmem:[#allocation34] sm:$0xf]
    %v5165 = vld [vmem:[#allocation4] sm:$0xff]
    %v5166 = vld [vmem:[#allocation4 + $0x8] sm:$0xff]
    %v5167 = vld [vmem:[#allocation4 + $0x10] sm:$0xff]
    %v5168 = vld [vmem:[#allocation4 + $0x18] sm:$0xff]
    %v5169 = vld [vmem:[#allocation4 + $0x20] sm:$0xff]
    %v5170 = vld [vmem:[#allocation4 + $0x28] sm:$0xff]
    %v5171 = vld [vmem:[#allocation4 + $0x30] sm:$0xff]
    %v5172 = vld [vmem:[#allocation4 + $0x38] sm:$0xff]
    %v5174 = vperm.slane %v5164, 0
    %v5175 = vperm.slane %v5164, 1
    %v5176 = vperm.slane %v5164, 2
    %v5177 = vperm.slane %v5164, 3
    %5182 = vmatpush.msra.mxu0 %v5096
    %5183 = vmatpush.msra.mxu0 %v5092
    %5184 = vmatpush.msra.mxu0 %v5088
    %5185 = vmatpush.msra.mxu0 %v5084
    %5186 = vmatpush.msra.mxu0 %v5080
    %5187 = vmatpush.msra.mxu0 %v5076
    %5188 = vmatpush.msra.mxu0 %v5072
    %5189 = vmatpush.msra.mxu0 %v5068
    %5190 = vmatpush.msra.mxu0 %v5064
    %5191 = vmatpush.msra.mxu0 %v5060
    %5192 = vmatpush.msra.mxu0 %v5056
    %5193 = vmatpush.msra.mxu0 %v5052
    %5194 = vmatpush.msra.mxu0 %v5048
    %5195 = vmatpush.msra.mxu0 %v5044
    %5196 = vmatpush.msra.mxu0 %v5040
    %5197 = vmatpush.msra.mxu0 %v5036
    %5198 = vmatmul.f32.gmra.mxu0 %v5165
    %v5199 = vpop.f32.mrf.mxu0
    %v5200 = vadd.f32 %v5174, %v5199
    %5201 = vmatmul.f32.gmra.mxu0 %v5166
    %v5202 = vpop.f32.mrf.mxu0
    %v5203 = vadd.f32 %v5174, %v5202
    %5204 = vmatmul.f32.gmra.mxu0 %v5167
    %v5205 = vpop.f32.mrf.mxu0
    %v5206 = vadd.f32 %v5174, %v5205
    %5207 = vmatmul.f32.gmra.mxu0 %v5168
    %v5208 = vpop.f32.mrf.mxu0
    %v5209 = vadd.f32 %v5174, %v5208
    %5210 = vmatmul.f32.gmra.mxu0 %v5169
    %v5211 = vpop.f32.mrf.mxu0
    %v5212 = vadd.f32 %v5174, %v5211
    %5213 = vmatmul.f32.gmra.mxu0 %v5170
    %v5214 = vpop.f32.mrf.mxu0
    %v5215 = vadd.f32 %v5174, %v5214
    %5216 = vmatmul.f32.gmra.mxu0 %v5171
    %v5217 = vpop.f32.mrf.mxu0
    %v5218 = vadd.f32 %v5174, %v5217
    %5219 = vmatmul.f32.gmra.mxu0 %v5172
    %v5220 = vpop.f32.mrf.mxu0
    %v5221 = vadd.f32 %v5174, %v5220
    %5222 = vdwg.mxu0
    %5223 = vmatpush.msra.mxu0 %v5097
    %5224 = vmatpush.msra.mxu0 %v5093
    %5225 = vmatpush.msra.mxu0 %v5089
    %5226 = vmatpush.msra.mxu0 %v5085
    %5227 = vmatpush.msra.mxu0 %v5081
    %5228 = vmatpush.msra.mxu0 %v5077
    %5229 = vmatpush.msra.mxu0 %v5073
    %5230 = vmatpush.msra.mxu0 %v5069
    %5231 = vmatpush.msra.mxu0 %v5065
    %5232 = vmatpush.msra.mxu0 %v5061
    %5233 = vmatpush.msra.mxu0 %v5057
    %5234 = vmatpush.msra.mxu0 %v5053
    %5235 = vmatpush.msra.mxu0 %v5049
    %5236 = vmatpush.msra.mxu0 %v5045
    %5237 = vmatpush.msra.mxu0 %v5041
    %5238 = vmatpush.msra.mxu0 %v5037
    %5239 = vmatmul.f32.gmra.mxu0 %v5165
    %v5240 = vpop.f32.mrf.mxu0
    %v5241 = vadd.f32 %v5175, %v5240
    %5242 = vmatmul.f32.gmra.mxu0 %v5166
    %v5243 = vpop.f32.mrf.mxu0
    %v5244 = vadd.f32 %v5175, %v5243
    %5245 = vmatmul.f32.gmra.mxu0 %v5167
    %v5246 = vpop.f32.mrf.mxu0
    %v5247 = vadd.f32 %v5175, %v5246
    %5248 = vmatmul.f32.gmra.mxu0 %v5168
    %v5249 = vpop.f32.mrf.mxu0
    %v5250 = vadd.f32 %v5175, %v5249
    %5251 = vmatmul.f32.gmra.mxu0 %v5169
    %v5252 = vpop.f32.mrf.mxu0
    %v5253 = vadd.f32 %v5175, %v5252
    %5254 = vmatmul.f32.gmra.mxu0 %v5170
    %v5255 = vpop.f32.mrf.mxu0
    %v5256 = vadd.f32 %v5175, %v5255
    %5257 = vmatmul.f32.gmra.mxu0 %v5171
    %v5258 = vpop.f32.mrf.mxu0
    %v5259 = vadd.f32 %v5175, %v5258
    %5260 = vmatmul.f32.gmra.mxu0 %v5172
    %v5261 = vpop.f32.mrf.mxu0
    %v5262 = vadd.f32 %v5175, %v5261
    %5263 = vdwg.mxu0
    %5264 = vmatpush.msra.mxu0 %v5098
    %5265 = vmatpush.msra.mxu0 %v5094
    %5266 = vmatpush.msra.mxu0 %v5090
    %5267 = vmatpush.msra.mxu0 %v5086
    %5268 = vmatpush.msra.mxu0 %v5082
    %5269 = vmatpush.msra.mxu0 %v5078
    %5270 = vmatpush.msra.mxu0 %v5074
    %5271 = vmatpush.msra.mxu0 %v5070
    %5272 = vmatpush.msra.mxu0 %v5066
    %5273 = vmatpush.msra.mxu0 %v5062
    %5274 = vmatpush.msra.mxu0 %v5058
    %5275 = vmatpush.msra.mxu0 %v5054
    %5276 = vmatpush.msra.mxu0 %v5050
    %5277 = vmatpush.msra.mxu0 %v5046
    %5278 = vmatpush.msra.mxu0 %v5042
    %5279 = vmatpush.msra.mxu0 %v5038
    %5280 = vmatmul.f32.gmra.mxu0 %v5165
    %v5281 = vpop.f32.mrf.mxu0
    %v5282 = vadd.f32 %v5176, %v5281
    %5283 = vmatmul.f32.gmra.mxu0 %v5166
    %v5284 = vpop.f32.mrf.mxu0
    %v5285 = vadd.f32 %v5176, %v5284
    %5286 = vmatmul.f32.gmra.mxu0 %v5167
    %v5287 = vpop.f32.mrf.mxu0
    %v5288 = vadd.f32 %v5176, %v5287
    %5289 = vmatmul.f32.gmra.mxu0 %v5168
    %v5290 = vpop.f32.mrf.mxu0
    %v5291 = vadd.f32 %v5176, %v5290
    %5292 = vmatmul.f32.gmra.mxu0 %v5169
    %v5293 = vpop.f32.mrf.mxu0
    %v5294 = vadd.f32 %v5176, %v5293
    %5295 = vmatmul.f32.gmra.mxu0 %v5170
    %v5296 = vpop.f32.mrf.mxu0
    %v5297 = vadd.f32 %v5176, %v5296
    %5298 = vmatmul.f32.gmra.mxu0 %v5171
    %v5299 = vpop.f32.mrf.mxu0
    %v5300 = vadd.f32 %v5176, %v5299
    %5301 = vmatmul.f32.gmra.mxu0 %v5172
    %v5302 = vpop.f32.mrf.mxu0
    %v5303 = vadd.f32 %v5176, %v5302
    %5304 = vdwg.mxu0
    %5305 = vmatpush.msra.mxu0 %v5099
    %5306 = vmatpush.msra.mxu0 %v5095
    %5307 = vmatpush.msra.mxu0 %v5091
    %5308 = vmatpush.msra.mxu0 %v5087
    %5309 = vmatpush.msra.mxu0 %v5083
    %5310 = vmatpush.msra.mxu0 %v5079
    %5311 = vmatpush.msra.mxu0 %v5075
    %5312 = vmatpush.msra.mxu0 %v5071
    %5313 = vmatpush.msra.mxu0 %v5067
    %5314 = vmatpush.msra.mxu0 %v5063
    %5315 = vmatpush.msra.mxu0 %v5059
    %5316 = vmatpush.msra.mxu0 %v5055
    %5317 = vmatpush.msra.mxu0 %v5051
    %5318 = vmatpush.msra.mxu0 %v5047
    %5319 = vmatpush.msra.mxu0 %v5043
    %5320 = vmatpush.msra.mxu0 %v5039
    %5321 = vmatmul.f32.gmra.mxu0 %v5165
    %v5322 = vpop.f32.mrf.mxu0
    %v5323 = vadd.f32 %v5177, %v5322
    %5324 = vmatmul.f32.gmra.mxu0 %v5166
    %v5325 = vpop.f32.mrf.mxu0
    %v5326 = vadd.f32 %v5177, %v5325
    %5327 = vmatmul.f32.gmra.mxu0 %v5167
    %v5328 = vpop.f32.mrf.mxu0
    %v5329 = vadd.f32 %v5177, %v5328
    %5330 = vmatmul.f32.gmra.mxu0 %v5168
    %v5331 = vpop.f32.mrf.mxu0
    %v5332 = vadd.f32 %v5177, %v5331
    %5333 = vmatmul.f32.gmra.mxu0 %v5169
    %v5334 = vpop.f32.mrf.mxu0
    %v5335 = vadd.f32 %v5177, %v5334
    %5336 = vmatmul.f32.gmra.mxu0 %v5170
    %v5337 = vpop.f32.mrf.mxu0
    %v5338 = vadd.f32 %v5177, %v5337
    %5339 = vmatmul.f32.gmra.mxu0 %v5171
    %v5340 = vpop.f32.mrf.mxu0
    %v5341 = vadd.f32 %v5177, %v5340
    %5342 = vmatmul.f32.gmra.mxu0 %v5172
    %v5343 = vpop.f32.mrf.mxu0
    %v5344 = vadd.f32 %v5177, %v5343
    %5345 = vdwg.mxu0
    %5346 = vst [vmem:[#allocation8] sm:$0xff] %v5200
    %5347 = vst [vmem:[#allocation8 + $0x8] sm:$0xff] %v5241
    %5348 = vst [vmem:[#allocation8 + $0x10] sm:$0xff] %v5282
    %5349 = vst [vmem:[#allocation8 + $0x18] sm:$0xff] %v5323
    %5350 = vst [vmem:[#allocation8 + $0x20] sm:$0xff] %v5203
    %5351 = vst [vmem:[#allocation8 + $0x28] sm:$0xff] %v5244
    %5352 = vst [vmem:[#allocation8 + $0x30] sm:$0xff] %v5285
    %5353 = vst [vmem:[#allocation8 + $0x38] sm:$0xff] %v5326
    %5354 = vst [vmem:[#allocation8 + $0x40] sm:$0xff] %v5206
    %5355 = vst [vmem:[#allocation8 + $0x48] sm:$0xff] %v5247
    %5356 = vst [vmem:[#allocation8 + $0x50] sm:$0xff] %v5288
    %5357 = vst [vmem:[#allocation8 + $0x58] sm:$0xff] %v5329
    %5358 = vst [vmem:[#allocation8 + $0x60] sm:$0xff] %v5209
    %5359 = vst [vmem:[#allocation8 + $0x68] sm:$0xff] %v5250
    %5360 = vst [vmem:[#allocation8 + $0x70] sm:$0xff] %v5291
    %5361 = vst [vmem:[#allocation8 + $0x78] sm:$0xff] %v5332
    %5362 = vst [vmem:[#allocation8 + $0x80] sm:$0xff] %v5212
    %5363 = vst [vmem:[#allocation8 + $0x88] sm:$0xff] %v5253
    %5364 = vst [vmem:[#allocation8 + $0x90] sm:$0xff] %v5294
    %5365 = vst [vmem:[#allocation8 + $0x98] sm:$0xff] %v5335
    %5366 = vst [vmem:[#allocation8 + $0xa0] sm:$0xff] %v5215
    %5367 = vst [vmem:[#allocation8 + $0xa8] sm:$0xff] %v5256
    %5368 = vst [vmem:[#allocation8 + $0xb0] sm:$0xff] %v5297
    %5369 = vst [vmem:[#allocation8 + $0xb8] sm:$0xff] %v5338
    %5370 = vst [vmem:[#allocation8 + $0xc0] sm:$0xff] %v5218
    %5371 = vst [vmem:[#allocation8 + $0xc8] sm:$0xff] %v5259
    %5372 = vst [vmem:[#allocation8 + $0xd0] sm:$0xff] %v5300
    %5373 = vst [vmem:[#allocation8 + $0xd8] sm:$0xff] %v5341
    %5374 = vst [vmem:[#allocation8 + $0xe0] sm:$0xff] %v5221
    %5375 = vst [vmem:[#allocation8 + $0xe8] sm:$0xff] %v5262
    %5376 = vst [vmem:[#allocation8 + $0xf0] sm:$0xff] %v5303
    %5377 = vst [vmem:[#allocation8 + $0xf8] sm:$0xff] %v5344
    %v5378 = vld [vmem:[#allocation15] sm:$0xff]
    %v5379 = vld [vmem:[#allocation16] sm:$0xff]
    %v5380 = vld [vmem:[#allocation8] sm:$0xff]
    %v5381 = vld [vmem:[#allocation8 + $0x8] sm:$0xff]
    %v5382 = vld [vmem:[#allocation8 + $0x10] sm:$0xff]
    %v5383 = vld [vmem:[#allocation8 + $0x18] sm:$0xff]
    %5384 = vmatpush.msra.mxu0 %v5160
    %5385 = vmatpush.msra.mxu0 %v5156
    %5386 = vmatpush.msra.mxu0 %v5152
    %5387 = vmatpush.msra.mxu0 %v5148
    %5388 = vmatpush.msra.mxu0 %v5144
    %5389 = vmatpush.msra.mxu0 %v5140
    %5390 = vmatpush.msra.mxu0 %v5136
    %5391 = vmatpush.msra.mxu0 %v5132
    %5392 = vmatpush.msra.mxu0 %v5128
    %5393 = vmatpush.msra.mxu0 %v5124
    %5394 = vmatpush.msra.mxu0 %v5120
    %5395 = vmatpush.msra.mxu0 %v5116
    %5396 = vmatpush.msra.mxu0 %v5112
    %5397 = vmatpush.msra.mxu0 %v5108
    %5398 = vmatpush.msra.mxu0 %v5104
    %5399 = vmatpush.msra.mxu0 %v5100
    %5400 = vmatmul.f32.gmra.mxu0 %v5378
    %v5401 = vpop.f32.mrf.mxu0
    %v5402 = vadd.f32 0.0, %v5401
    %5403 = vdwg.mxu0
    %5404 = vmatpush.msra.mxu0 %v5161
    %5405 = vmatpush.msra.mxu0 %v5157
    %5406 = vmatpush.msra.mxu0 %v5153
    %5407 = vmatpush.msra.mxu0 %v5149
    %5408 = vmatpush.msra.mxu0 %v5145
    %5409 = vmatpush.msra.mxu0 %v5141
    %5410 = vmatpush.msra.mxu0 %v5137
    %5411 = vmatpush.msra.mxu0 %v5133
    %5412 = vmatpush.msra.mxu0 %v5129
    %5413 = vmatpush.msra.mxu0 %v5125
    %5414 = vmatpush.msra.mxu0 %v5121
    %5415 = vmatpush.msra.mxu0 %v5117
    %5416 = vmatpush.msra.mxu0 %v5113
    %5417 = vmatpush.msra.mxu0 %v5109
    %5418 = vmatpush.msra.mxu0 %v5105
    %5419 = vmatpush.msra.mxu0 %v5101
    %5420 = vmatmul.f32.gmra.mxu0 %v5378
    %v5421 = vpop.f32.mrf.mxu0
    %v5422 = vadd.f32 0.0, %v5421
    %5423 = vdwg.mxu0
    %5424 = vmatpush.msra.mxu0 %v5162
    %5425 = vmatpush.msra.mxu0 %v5158
    %5426 = vmatpush.msra.mxu0 %v5154
    %5427 = vmatpush.msra.mxu0 %v5150
    %5428 = vmatpush.msra.mxu0 %v5146
    %5429 = vmatpush.msra.mxu0 %v5142
    %5430 = vmatpush.msra.mxu0 %v5138
    %5431 = vmatpush.msra.mxu0 %v5134
    %5432 = vmatpush.msra.mxu0 %v5130
    %5433 = vmatpush.msra.mxu0 %v5126
    %5434 = vmatpush.msra.mxu0 %v5122
    %5435 = vmatpush.msra.mxu0 %v5118
    %5436 = vmatpush.msra.mxu0 %v5114
    %5437 = vmatpush.msra.mxu0 %v5110
    %5438 = vmatpush.msra.mxu0 %v5106
    %5439 = vmatpush.msra.mxu0 %v5102
    %5440 = vmatmul.f32.gmra.mxu0 %v5378
    %v5441 = vpop.f32.mrf.mxu0
    %v5442 = vadd.f32 0.0, %v5441
    %5443 = vdwg.mxu0
    %5444 = vmatpush.msra.mxu0 %v5163
    %5445 = vmatpush.msra.mxu0 %v5159
    %5446 = vmatpush.msra.mxu0 %v5155
    %5447 = vmatpush.msra.mxu0 %v5151
    %5448 = vmatpush.msra.mxu0 %v5147
    %5449 = vmatpush.msra.mxu0 %v5143
    %5450 = vmatpush.msra.mxu0 %v5139
    %5451 = vmatpush.msra.mxu0 %v5135
    %5452 = vmatpush.msra.mxu0 %v5131
    %5453 = vmatpush.msra.mxu0 %v5127
    %5454 = vmatpush.msra.mxu0 %v5123
    %5455 = vmatpush.msra.mxu0 %v5119
    %5456 = vmatpush.msra.mxu0 %v5115
    %5457 = vmatpush.msra.mxu0 %v5111
    %5458 = vmatpush.msra.mxu0 %v5107
    %5459 = vmatpush.msra.mxu0 %v5103
    %5460 = vmatmul.f32.gmra.mxu0 %v5378
    %v5461 = vpop.f32.mrf.mxu0
    %v5462 = vadd.f32 0.0, %v5461
    %5463 = vdwg.mxu0
    %v5464 = vadd.f32 %v5380, %v5402
    %v5465 = vadd.f32 %v5381, %v5422
    %v5466 = vadd.f32 %v5382, %v5442
    %v5467 = vadd.f32 %v5383, %v5462
    %v5468 = vxor.u32 %v5464, 2147483648
    %v5469 = vxor.u32 %v5465, 2147483648
    %v5470 = vxor.u32 %v5466, 2147483648
    %v5471 = vmul.f32 %v5468, 1.442695
    %v5472 = vpow.pop %v5471
    %v5473 = vmul.f32 %v5469, 1.442695
    %v5474 = vpow.pop %v5473
    %v5475 = vmul.f32 %v5470, 1.442695
    %v5476 = vpow.pop %v5475
    %v5477 = vadd.f32 %v5472, 1.0
    %v5478 = vadd.f32 %v5474, 1.0
    %v5479 = vadd.f32 %v5476, 1.0
    %v5480 = vrcp.pop %v5477
    %v5481 = vmul.f32 %v5477, %v5480
    %v5482 = vsub.f32 1.0, %v5481
    %v5483 = vmul.f32 %v5480, %v5482
    %v5484 = vadd.f32 %v5480, %v5483
    %vm5485 = vweird.f32 %v5477
    %vm5486 = vweird.f32 %v5480
    %vm5487 = vmor %vm5485, %vm5486
    %v5488 = vsel %vm5487, %v5480, %v5484
    %v5489 = vand.u32 2147483647, %v5477
    %vm5490 = vcmp.eq.f32.partialorder %v5489, 8.507059e+37
    %v5491 = vand.u32 %v5477, 2147483648
    %v5492 = vor.u32 1.1754944e-38, %v5491
    %v5493 = vsel %vm5490, %v5492, %v5488
    %v5494 = vmul.f32 1.0, %v5493
    %v5495 = vrcp.pop %v5478
    %v5496 = vmul.f32 %v5478, %v5495
    %v5497 = vsub.f32 1.0, %v5496
    %v5498 = vmul.f32 %v5495, %v5497
    %v5499 = vadd.f32 %v5495, %v5498
    %vm5500 = vweird.f32 %v5478
    %vm5501 = vweird.f32 %v5495
    %vm5502 = vmor %vm5500, %vm5501
    %v5503 = vsel %vm5502, %v5495, %v5499
    %v5504 = vand.u32 2147483647, %v5478
    %vm5505 = vcmp.eq.f32.partialorder %v5504, 8.507059e+37
    %v5506 = vand.u32 %v5478, 2147483648
    %v5507 = vor.u32 1.1754944e-38, %v5506
    %v5508 = vsel %vm5505, %v5507, %v5503
    %v5509 = vmul.f32 1.0, %v5508
    %v5510 = vrcp.pop %v5479
    %v5511 = vmul.f32 %v5479, %v5510
    %v5512 = vsub.f32 1.0, %v5511
    %v5513 = vmul.f32 %v5510, %v5512
    %v5514 = vadd.f32 %v5510, %v5513
    %vm5515 = vweird.f32 %v5479
    %vm5516 = vweird.f32 %v5510
    %vm5517 = vmor %vm5515, %vm5516
    %v5518 = vsel %vm5517, %v5510, %v5514
    %v5519 = vand.u32 2147483647, %v5479
    %vm5520 = vcmp.eq.f32.partialorder %v5519, 8.507059e+37
    %v5521 = vand.u32 %v5479, 2147483648
    %v5522 = vor.u32 1.1754944e-38, %v5521
    %v5523 = vsel %vm5520, %v5522, %v5518
    %v5524 = vmul.f32 1.0, %v5523
    %v5525 = vtanh.pop %v5467
    %v5526 = vmul.f32 %v5509, %v5379
    %v5527 = vmul.f32 %v5494, %v5525
    %v5528 = vadd.f32 %v5526, %v5527
    %v5529 = vtanh.pop %v5528
    %v5530 = vmul.f32 %v5524, %v5529
    %5531 = vst [vmem:[#allocation16] sm:$0xff] %v5528
    %5532 = vst [vmem:[#allocation15] sm:$0xff] %v5530
    %5533 = vst [vmem:[#allocation35] sm:$0xff] %v5530
    %v5534 = vld [vmem:[#allocation15] sm:$0xff]
    %v5535 = vld [vmem:[#allocation16] sm:$0xff]
    %s5536 = scalar_lea.vmem [#allocation8], 32
    %v5537 = vld [vmem:[%s5536] sm:$0xff]
    %v5538 = vld [vmem:[%s5536 + $0x8] sm:$0xff]
    %v5539 = vld [vmem:[%s5536 + $0x10] sm:$0xff]
    %v5540 = vld [vmem:[%s5536 + $0x18] sm:$0xff]
    %5541 = vmatpush.msra.mxu0 %v5160
    %5542 = vmatpush.msra.mxu0 %v5156
    %5543 = vmatpush.msra.mxu0 %v5152
    %5544 = vmatpush.msra.mxu0 %v5148
    %5545 = vmatpush.msra.mxu0 %v5144
    %5546 = vmatpush.msra.mxu0 %v5140
    %5547 = vmatpush.msra.mxu0 %v5136
    %5548 = vmatpush.msra.mxu0 %v5132
    %5549 = vmatpush.msra.mxu0 %v5128
    %5550 = vmatpush.msra.mxu0 %v5124
    %5551 = vmatpush.msra.mxu0 %v5120
    %5552 = vmatpush.msra.mxu0 %v5116
    %5553 = vmatpush.msra.mxu0 %v5112
    %5554 = vmatpush.msra.mxu0 %v5108
    %5555 = vmatpush.msra.mxu0 %v5104
    %5556 = vmatpush.msra.mxu0 %v5100
    %5557 = vmatmul.f32.gmra.mxu0 %v5534
    %v5558 = vpop.f32.mrf.mxu0
    %v5559 = vadd.f32 0.0, %v5558
    %5560 = vdwg.mxu0
    %5561 = vmatpush.msra.mxu0 %v5161
    %5562 = vmatpush.msra.mxu0 %v5157
    %5563 = vmatpush.msra.mxu0 %v5153
    %5564 = vmatpush.msra.mxu0 %v5149
    %5565 = vmatpush.msra.mxu0 %v5145
    %5566 = vmatpush.msra.mxu0 %v5141
    %5567 = vmatpush.msra.mxu0 %v5137
    %5568 = vmatpush.msra.mxu0 %v5133
    %5569 = vmatpush.msra.mxu0 %v5129
    %5570 = vmatpush.msra.mxu0 %v5125
    %5571 = vmatpush.msra.mxu0 %v5121
    %5572 = vmatpush.msra.mxu0 %v5117
    %5573 = vmatpush.msra.mxu0 %v5113
    %5574 = vmatpush.msra.mxu0 %v5109
    %5575 = vmatpush.msra.mxu0 %v5105
    %5576 = vmatpush.msra.mxu0 %v5101
    %5577 = vmatmul.f32.gmra.mxu0 %v5534
    %v5578 = vpop.f32.mrf.mxu0
    %v5579 = vadd.f32 0.0, %v5578
    %5580 = vdwg.mxu0
    %5581 = vmatpush.msra.mxu0 %v5162
    %5582 = vmatpush.msra.mxu0 %v5158
    %5583 = vmatpush.msra.mxu0 %v5154
    %5584 = vmatpush.msra.mxu0 %v5150
    %5585 = vmatpush.msra.mxu0 %v5146
    %5586 = vmatpush.msra.mxu0 %v5142
    %5587 = vmatpush.msra.mxu0 %v5138
    %5588 = vmatpush.msra.mxu0 %v5134
    %5589 = vmatpush.msra.mxu0 %v5130
    %5590 = vmatpush.msra.mxu0 %v5126
    %5591 = vmatpush.msra.mxu0 %v5122
    %5592 = vmatpush.msra.mxu0 %v5118
    %5593 = vmatpush.msra.mxu0 %v5114
    %5594 = vmatpush.msra.mxu0 %v5110
    %5595 = vmatpush.msra.mxu0 %v5106
    %5596 = vmatpush.msra.mxu0 %v5102
    %5597 = vmatmul.f32.gmra.mxu0 %v5534
    %v5598 = vpop.f32.mrf.mxu0
    %v5599 = vadd.f32 0.0, %v5598
    %5600 = vdwg.mxu0
    %5601 = vmatpush.msra.mxu0 %v5163
    %5602 = vmatpush.msra.mxu0 %v5159
    %5603 = vmatpush.msra.mxu0 %v5155
    %5604 = vmatpush.msra.mxu0 %v5151
    %5605 = vmatpush.msra.mxu0 %v5147
    %5606 = vmatpush.msra.mxu0 %v5143
    %5607 = vmatpush.msra.mxu0 %v5139
    %5608 = vmatpush.msra.mxu0 %v5135
    %5609 = vmatpush.msra.mxu0 %v5131
    %5610 = vmatpush.msra.mxu0 %v5127
    %5611 = vmatpush.msra.mxu0 %v5123
    %5612 = vmatpush.msra.mxu0 %v5119
    %5613 = vmatpush.msra.mxu0 %v5115
    %5614 = vmatpush.msra.mxu0 %v5111
    %5615 = vmatpush.msra.mxu0 %v5107
    %5616 = vmatpush.msra.mxu0 %v5103
    %5617 = vmatmul.f32.gmra.mxu0 %v5534
    %v5618 = vpop.f32.mrf.mxu0
    %v5619 = vadd.f32 0.0, %v5618
    %5620 = vdwg.mxu0
    %v5621 = vadd.f32 %v5537, %v5559
    %v5622 = vadd.f32 %v5538, %v5579
    %v5623 = vadd.f32 %v5539, %v5599
    %v5624 = vadd.f32 %v5540, %v5619
    %v5625 = vxor.u32 %v5621, 2147483648
    %v5626 = vxor.u32 %v5622, 2147483648
    %v5627 = vxor.u32 %v5623, 2147483648
    %v5628 = vmul.f32 %v5625, 1.442695
    %v5629 = vpow.pop %v5628
    %v5630 = vmul.f32 %v5626, 1.442695
    %v5631 = vpow.pop %v5630
    %v5632 = vmul.f32 %v5627, 1.442695
    %v5633 = vpow.pop %v5632
    %v5634 = vadd.f32 %v5629, 1.0
    %v5635 = vadd.f32 %v5631, 1.0
    %v5636 = vadd.f32 %v5633, 1.0
    %v5637 = vrcp.pop %v5634
    %v5638 = vmul.f32 %v5634, %v5637
    %v5639 = vsub.f32 1.0, %v5638
    %v5640 = vmul.f32 %v5637, %v5639
    %v5641 = vadd.f32 %v5637, %v5640
    %vm5642 = vweird.f32 %v5634
    %vm5643 = vweird.f32 %v5637
    %vm5644 = vmor %vm5642, %vm5643
    %v5645 = vsel %vm5644, %v5637, %v5641
    %v5646 = vand.u32 2147483647, %v5634
    %vm5647 = vcmp.eq.f32.partialorder %v5646, 8.507059e+37
    %v5648 = vand.u32 %v5634, 2147483648
    %v5649 = vor.u32 1.1754944e-38, %v5648
    %v5650 = vsel %vm5647, %v5649, %v5645
    %v5651 = vmul.f32 1.0, %v5650
    %v5652 = vrcp.pop %v5635
    %v5653 = vmul.f32 %v5635, %v5652
    %v5654 = vsub.f32 1.0, %v5653
    %v5655 = vmul.f32 %v5652, %v5654
    %v5656 = vadd.f32 %v5652, %v5655
    %vm5657 = vweird.f32 %v5635
    %vm5658 = vweird.f32 %v5652
    %vm5659 = vmor %vm5657, %vm5658
    %v5660 = vsel %vm5659, %v5652, %v5656
    %v5661 = vand.u32 2147483647, %v5635
    %vm5662 = vcmp.eq.f32.partialorder %v5661, 8.507059e+37
    %v5663 = vand.u32 %v5635, 2147483648
    %v5664 = vor.u32 1.1754944e-38, %v5663
    %v5665 = vsel %vm5662, %v5664, %v5660
    %v5666 = vmul.f32 1.0, %v5665
    %v5667 = vrcp.pop %v5636
    %v5668 = vmul.f32 %v5636, %v5667
    %v5669 = vsub.f32 1.0, %v5668
    %v5670 = vmul.f32 %v5667, %v5669
    %v5671 = vadd.f32 %v5667, %v5670
    %vm5672 = vweird.f32 %v5636
    %vm5673 = vweird.f32 %v5667
    %vm5674 = vmor %vm5672, %vm5673
    %v5675 = vsel %vm5674, %v5667, %v5671
    %v5676 = vand.u32 2147483647, %v5636
    %vm5677 = vcmp.eq.f32.partialorder %v5676, 8.507059e+37
    %v5678 = vand.u32 %v5636, 2147483648
    %v5679 = vor.u32 1.1754944e-38, %v5678
    %v5680 = vsel %vm5677, %v5679, %v5675
    %v5681 = vmul.f32 1.0, %v5680
    %v5682 = vtanh.pop %v5624
    %v5683 = vmul.f32 %v5666, %v5535
    %v5684 = vmul.f32 %v5651, %v5682
    %v5685 = vadd.f32 %v5683, %v5684
    %v5686 = vtanh.pop %v5685
    %v5687 = vmul.f32 %v5681, %v5686
    %5688 = vst [vmem:[#allocation16] sm:$0xff] %v5685
    %5689 = vst [vmem:[#allocation15] sm:$0xff] %v5687
    %s5690 = scalar_lea.vmem [#allocation35], 8
    %5691 = vst [vmem:[%s5690] sm:$0xff] %v5687
    %v5692 = vld [vmem:[#allocation15] sm:$0xff]
    %v5693 = vld [vmem:[#allocation16] sm:$0xff]
    %s5694 = scalar_lea.vmem [#allocation8], 64
    %v5695 = vld [vmem:[%s5694] sm:$0xff]
    %v5696 = vld [vmem:[%s5694 + $0x8] sm:$0xff]
    %v5697 = vld [vmem:[%s5694 + $0x10] sm:$0xff]
    %v5698 = vld [vmem:[%s5694 + $0x18] sm:$0xff]
    %5699 = vmatpush.msra.mxu0 %v5160
    %5700 = vmatpush.msra.mxu0 %v5156
    %5701 = vmatpush.msra.mxu0 %v5152
    %5702 = vmatpush.msra.mxu0 %v5148
    %5703 = vmatpush.msra.mxu0 %v5144
    %5704 = vmatpush.msra.mxu0 %v5140
    %5705 = vmatpush.msra.mxu0 %v5136
    %5706 = vmatpush.msra.mxu0 %v5132
    %5707 = vmatpush.msra.mxu0 %v5128
    %5708 = vmatpush.msra.mxu0 %v5124
    %5709 = vmatpush.msra.mxu0 %v5120
    %5710 = vmatpush.msra.mxu0 %v5116
    %5711 = vmatpush.msra.mxu0 %v5112
    %5712 = vmatpush.msra.mxu0 %v5108
    %5713 = vmatpush.msra.mxu0 %v5104
    %5714 = vmatpush.msra.mxu0 %v5100
    %5715 = vmatmul.f32.gmra.mxu0 %v5692
    %v5716 = vpop.f32.mrf.mxu0
    %v5717 = vadd.f32 0.0, %v5716
    %5718 = vdwg.mxu0
    %5719 = vmatpush.msra.mxu0 %v5161
    %5720 = vmatpush.msra.mxu0 %v5157
    %5721 = vmatpush.msra.mxu0 %v5153
    %5722 = vmatpush.msra.mxu0 %v5149
    %5723 = vmatpush.msra.mxu0 %v5145
    %5724 = vmatpush.msra.mxu0 %v5141
    %5725 = vmatpush.msra.mxu0 %v5137
    %5726 = vmatpush.msra.mxu0 %v5133
    %5727 = vmatpush.msra.mxu0 %v5129
    %5728 = vmatpush.msra.mxu0 %v5125
    %5729 = vmatpush.msra.mxu0 %v5121
    %5730 = vmatpush.msra.mxu0 %v5117
    %5731 = vmatpush.msra.mxu0 %v5113
    %5732 = vmatpush.msra.mxu0 %v5109
    %5733 = vmatpush.msra.mxu0 %v5105
    %5734 = vmatpush.msra.mxu0 %v5101
    %5735 = vmatmul.f32.gmra.mxu0 %v5692
    %v5736 = vpop.f32.mrf.mxu0
    %v5737 = vadd.f32 0.0, %v5736
    %5738 = vdwg.mxu0
    %5739 = vmatpush.msra.mxu0 %v5162
    %5740 = vmatpush.msra.mxu0 %v5158
    %5741 = vmatpush.msra.mxu0 %v5154
    %5742 = vmatpush.msra.mxu0 %v5150
    %5743 = vmatpush.msra.mxu0 %v5146
    %5744 = vmatpush.msra.mxu0 %v5142
    %5745 = vmatpush.msra.mxu0 %v5138
    %5746 = vmatpush.msra.mxu0 %v5134
    %5747 = vmatpush.msra.mxu0 %v5130
    %5748 = vmatpush.msra.mxu0 %v5126
    %5749 = vmatpush.msra.mxu0 %v5122
    %5750 = vmatpush.msra.mxu0 %v5118
    %5751 = vmatpush.msra.mxu0 %v5114
    %5752 = vmatpush.msra.mxu0 %v5110
    %5753 = vmatpush.msra.mxu0 %v5106
    %5754 = vmatpush.msra.mxu0 %v5102
    %5755 = vmatmul.f32.gmra.mxu0 %v5692
    %v5756 = vpop.f32.mrf.mxu0
    %v5757 = vadd.f32 0.0, %v5756
    %5758 = vdwg.mxu0
    %5759 = vmatpush.msra.mxu0 %v5163
    %5760 = vmatpush.msra.mxu0 %v5159
    %5761 = vmatpush.msra.mxu0 %v5155
    %5762 = vmatpush.msra.mxu0 %v5151
    %5763 = vmatpush.msra.mxu0 %v5147
    %5764 = vmatpush.msra.mxu0 %v5143
    %5765 = vmatpush.msra.mxu0 %v5139
    %5766 = vmatpush.msra.mxu0 %v5135
    %5767 = vmatpush.msra.mxu0 %v5131
    %5768 = vmatpush.msra.mxu0 %v5127
    %5769 = vmatpush.msra.mxu0 %v5123
    %5770 = vmatpush.msra.mxu0 %v5119
    %5771 = vmatpush.msra.mxu0 %v5115
    %5772 = vmatpush.msra.mxu0 %v5111
    %5773 = vmatpush.msra.mxu0 %v5107
    %5774 = vmatpush.msra.mxu0 %v5103
    %5775 = vmatmul.f32.gmra.mxu0 %v5692
    %v5776 = vpop.f32.mrf.mxu0
    %v5777 = vadd.f32 0.0, %v5776
    %5778 = vdwg.mxu0
    %v5779 = vadd.f32 %v5695, %v5717
    %v5780 = vadd.f32 %v5696, %v5737
    %v5781 = vadd.f32 %v5697, %v5757
    %v5782 = vadd.f32 %v5698, %v5777
    %v5783 = vxor.u32 %v5779, 2147483648
    %v5784 = vxor.u32 %v5780, 2147483648
    %v5785 = vxor.u32 %v5781, 2147483648
    %v5786 = vmul.f32 %v5783, 1.442695
    %v5787 = vpow.pop %v5786
    %v5788 = vmul.f32 %v5784, 1.442695
    %v5789 = vpow.pop %v5788
    %v5790 = vmul.f32 %v5785, 1.442695
    %v5791 = vpow.pop %v5790
    %v5792 = vadd.f32 %v5787, 1.0
    %v5793 = vadd.f32 %v5789, 1.0
    %v5794 = vadd.f32 %v5791, 1.0
    %v5795 = vrcp.pop %v5792
    %v5796 = vmul.f32 %v5792, %v5795
    %v5797 = vsub.f32 1.0, %v5796
    %v5798 = vmul.f32 %v5795, %v5797
    %v5799 = vadd.f32 %v5795, %v5798
    %vm5800 = vweird.f32 %v5792
    %vm5801 = vweird.f32 %v5795
    %vm5802 = vmor %vm5800, %vm5801
    %v5803 = vsel %vm5802, %v5795, %v5799
    %v5804 = vand.u32 2147483647, %v5792
    %vm5805 = vcmp.eq.f32.partialorder %v5804, 8.507059e+37
    %v5806 = vand.u32 %v5792, 2147483648
    %v5807 = vor.u32 1.1754944e-38, %v5806
    %v5808 = vsel %vm5805, %v5807, %v5803
    %v5809 = vmul.f32 1.0, %v5808
    %v5810 = vrcp.pop %v5793
    %v5811 = vmul.f32 %v5793, %v5810
    %v5812 = vsub.f32 1.0, %v5811
    %v5813 = vmul.f32 %v5810, %v5812
    %v5814 = vadd.f32 %v5810, %v5813
    %vm5815 = vweird.f32 %v5793
    %vm5816 = vweird.f32 %v5810
    %vm5817 = vmor %vm5815, %vm5816
    %v5818 = vsel %vm5817, %v5810, %v5814
    %v5819 = vand.u32 2147483647, %v5793
    %vm5820 = vcmp.eq.f32.partialorder %v5819, 8.507059e+37
    %v5821 = vand.u32 %v5793, 2147483648
    %v5822 = vor.u32 1.1754944e-38, %v5821
    %v5823 = vsel %vm5820, %v5822, %v5818
    %v5824 = vmul.f32 1.0, %v5823
    %v5825 = vrcp.pop %v5794
    %v5826 = vmul.f32 %v5794, %v5825
    %v5827 = vsub.f32 1.0, %v5826
    %v5828 = vmul.f32 %v5825, %v5827
    %v5829 = vadd.f32 %v5825, %v5828
    %vm5830 = vweird.f32 %v5794
    %vm5831 = vweird.f32 %v5825
    %vm5832 = vmor %vm5830, %vm5831
    %v5833 = vsel %vm5832, %v5825, %v5829
    %v5834 = vand.u32 2147483647, %v5794
    %vm5835 = vcmp.eq.f32.partialorder %v5834, 8.507059e+37
    %v5836 = vand.u32 %v5794, 2147483648
    %v5837 = vor.u32 1.1754944e-38, %v5836
    %v5838 = vsel %vm5835, %v5837, %v5833
    %v5839 = vmul.f32 1.0, %v5838
    %v5840 = vtanh.pop %v5782
    %v5841 = vmul.f32 %v5824, %v5693
    %v5842 = vmul.f32 %v5809, %v5840
    %v5843 = vadd.f32 %v5841, %v5842
    %v5844 = vtanh.pop %v5843
    %v5845 = vmul.f32 %v5839, %v5844
    %5846 = vst [vmem:[#allocation16] sm:$0xff] %v5843
    %5847 = vst [vmem:[#allocation15] sm:$0xff] %v5845
    %s5848 = scalar_lea.vmem [#allocation35], 16
    %5849 = vst [vmem:[%s5848] sm:$0xff] %v5845
    %v5850 = vld [vmem:[#allocation15] sm:$0xff]
    %v5851 = vld [vmem:[#allocation16] sm:$0xff]
    %s5852 = scalar_lea.vmem [#allocation8], 96
    %v5853 = vld [vmem:[%s5852] sm:$0xff]
    %v5854 = vld [vmem:[%s5852 + $0x8] sm:$0xff]
    %v5855 = vld [vmem:[%s5852 + $0x10] sm:$0xff]
    %v5856 = vld [vmem:[%s5852 + $0x18] sm:$0xff]
    %5857 = vmatpush.msra.mxu0 %v5160
    %5858 = vmatpush.msra.mxu0 %v5156
    %5859 = vmatpush.msra.mxu0 %v5152
    %5860 = vmatpush.msra.mxu0 %v5148
    %5861 = vmatpush.msra.mxu0 %v5144
    %5862 = vmatpush.msra.mxu0 %v5140
    %5863 = vmatpush.msra.mxu0 %v5136
    %5864 = vmatpush.msra.mxu0 %v5132
    %5865 = vmatpush.msra.mxu0 %v5128
    %5866 = vmatpush.msra.mxu0 %v5124
    %5867 = vmatpush.msra.mxu0 %v5120
    %5868 = vmatpush.msra.mxu0 %v5116
    %5869 = vmatpush.msra.mxu0 %v5112
    %5870 = vmatpush.msra.mxu0 %v5108
    %5871 = vmatpush.msra.mxu0 %v5104
    %5872 = vmatpush.msra.mxu0 %v5100
    %5873 = vmatmul.f32.gmra.mxu0 %v5850
    %v5874 = vpop.f32.mrf.mxu0
    %v5875 = vadd.f32 0.0, %v5874
    %5876 = vdwg.mxu0
    %5877 = vmatpush.msra.mxu0 %v5161
    %5878 = vmatpush.msra.mxu0 %v5157
    %5879 = vmatpush.msra.mxu0 %v5153
    %5880 = vmatpush.msra.mxu0 %v5149
    %5881 = vmatpush.msra.mxu0 %v5145
    %5882 = vmatpush.msra.mxu0 %v5141
    %5883 = vmatpush.msra.mxu0 %v5137
    %5884 = vmatpush.msra.mxu0 %v5133
    %5885 = vmatpush.msra.mxu0 %v5129
    %5886 = vmatpush.msra.mxu0 %v5125
    %5887 = vmatpush.msra.mxu0 %v5121
    %5888 = vmatpush.msra.mxu0 %v5117
    %5889 = vmatpush.msra.mxu0 %v5113
    %5890 = vmatpush.msra.mxu0 %v5109
    %5891 = vmatpush.msra.mxu0 %v5105
    %5892 = vmatpush.msra.mxu0 %v5101
    %5893 = vmatmul.f32.gmra.mxu0 %v5850
    %v5894 = vpop.f32.mrf.mxu0
    %v5895 = vadd.f32 0.0, %v5894
    %5896 = vdwg.mxu0
    %5897 = vmatpush.msra.mxu0 %v5162
    %5898 = vmatpush.msra.mxu0 %v5158
    %5899 = vmatpush.msra.mxu0 %v5154
    %5900 = vmatpush.msra.mxu0 %v5150
    %5901 = vmatpush.msra.mxu0 %v5146
    %5902 = vmatpush.msra.mxu0 %v5142
    %5903 = vmatpush.msra.mxu0 %v5138
    %5904 = vmatpush.msra.mxu0 %v5134
    %5905 = vmatpush.msra.mxu0 %v5130
    %5906 = vmatpush.msra.mxu0 %v5126
    %5907 = vmatpush.msra.mxu0 %v5122
    %5908 = vmatpush.msra.mxu0 %v5118
    %5909 = vmatpush.msra.mxu0 %v5114
    %5910 = vmatpush.msra.mxu0 %v5110
    %5911 = vmatpush.msra.mxu0 %v5106
    %5912 = vmatpush.msra.mxu0 %v5102
    %5913 = vmatmul.f32.gmra.mxu0 %v5850
    %v5914 = vpop.f32.mrf.mxu0
    %v5915 = vadd.f32 0.0, %v5914
    %5916 = vdwg.mxu0
    %5917 = vmatpush.msra.mxu0 %v5163
    %5918 = vmatpush.msra.mxu0 %v5159
    %5919 = vmatpush.msra.mxu0 %v5155
    %5920 = vmatpush.msra.mxu0 %v5151
    %5921 = vmatpush.msra.mxu0 %v5147
    %5922 = vmatpush.msra.mxu0 %v5143
    %5923 = vmatpush.msra.mxu0 %v5139
    %5924 = vmatpush.msra.mxu0 %v5135
    %5925 = vmatpush.msra.mxu0 %v5131
    %5926 = vmatpush.msra.mxu0 %v5127
    %5927 = vmatpush.msra.mxu0 %v5123
    %5928 = vmatpush.msra.mxu0 %v5119
    %5929 = vmatpush.msra.mxu0 %v5115
    %5930 = vmatpush.msra.mxu0 %v5111
    %5931 = vmatpush.msra.mxu0 %v5107
    %5932 = vmatpush.msra.mxu0 %v5103
    %5933 = vmatmul.f32.gmra.mxu0 %v5850
    %v5934 = vpop.f32.mrf.mxu0
    %v5935 = vadd.f32 0.0, %v5934
    %5936 = vdwg.mxu0
    %v5937 = vadd.f32 %v5853, %v5875
    %v5938 = vadd.f32 %v5854, %v5895
    %v5939 = vadd.f32 %v5855, %v5915
    %v5940 = vadd.f32 %v5856, %v5935
    %v5941 = vxor.u32 %v5937, 2147483648
    %v5942 = vxor.u32 %v5938, 2147483648
    %v5943 = vxor.u32 %v5939, 2147483648
    %v5944 = vmul.f32 %v5941, 1.442695
    %v5945 = vpow.pop %v5944
    %v5946 = vmul.f32 %v5942, 1.442695
    %v5947 = vpow.pop %v5946
    %v5948 = vmul.f32 %v5943, 1.442695
    %v5949 = vpow.pop %v5948
    %v5950 = vadd.f32 %v5945, 1.0
    %v5951 = vadd.f32 %v5947, 1.0
    %v5952 = vadd.f32 %v5949, 1.0
    %v5953 = vrcp.pop %v5950
    %v5954 = vmul.f32 %v5950, %v5953
    %v5955 = vsub.f32 1.0, %v5954
    %v5956 = vmul.f32 %v5953, %v5955
    %v5957 = vadd.f32 %v5953, %v5956
    %vm5958 = vweird.f32 %v5950
    %vm5959 = vweird.f32 %v5953
    %vm5960 = vmor %vm5958, %vm5959
    %v5961 = vsel %vm5960, %v5953, %v5957
    %v5962 = vand.u32 2147483647, %v5950
    %vm5963 = vcmp.eq.f32.partialorder %v5962, 8.507059e+37
    %v5964 = vand.u32 %v5950, 2147483648
    %v5965 = vor.u32 1.1754944e-38, %v5964
    %v5966 = vsel %vm5963, %v5965, %v5961
    %v5967 = vmul.f32 1.0, %v5966
    %v5968 = vrcp.pop %v5951
    %v5969 = vmul.f32 %v5951, %v5968
    %v5970 = vsub.f32 1.0, %v5969
    %v5971 = vmul.f32 %v5968, %v5970
    %v5972 = vadd.f32 %v5968, %v5971
    %vm5973 = vweird.f32 %v5951
    %vm5974 = vweird.f32 %v5968
    %vm5975 = vmor %vm5973, %vm5974
    %v5976 = vsel %vm5975, %v5968, %v5972
    %v5977 = vand.u32 2147483647, %v5951
    %vm5978 = vcmp.eq.f32.partialorder %v5977, 8.507059e+37
    %v5979 = vand.u32 %v5951, 2147483648
    %v5980 = vor.u32 1.1754944e-38, %v5979
    %v5981 = vsel %vm5978, %v5980, %v5976
    %v5982 = vmul.f32 1.0, %v5981
    %v5983 = vrcp.pop %v5952
    %v5984 = vmul.f32 %v5952, %v5983
    %v5985 = vsub.f32 1.0, %v5984
    %v5986 = vmul.f32 %v5983, %v5985
    %v5987 = vadd.f32 %v5983, %v5986
    %vm5988 = vweird.f32 %v5952
    %vm5989 = vweird.f32 %v5983
    %vm5990 = vmor %vm5988, %vm5989
    %v5991 = vsel %vm5990, %v5983, %v5987
    %v5992 = vand.u32 2147483647, %v5952
    %vm5993 = vcmp.eq.f32.partialorder %v5992, 8.507059e+37
    %v5994 = vand.u32 %v5952, 2147483648
    %v5995 = vor.u32 1.1754944e-38, %v5994
    %v5996 = vsel %vm5993, %v5995, %v5991
    %v5997 = vmul.f32 1.0, %v5996
    %v5998 = vtanh.pop %v5940
    %v5999 = vmul.f32 %v5982, %v5851
    %v6000 = vmul.f32 %v5967, %v5998
    %v6001 = vadd.f32 %v5999, %v6000
    %v6002 = vtanh.pop %v6001
    %v6003 = vmul.f32 %v5997, %v6002
    %6004 = vst [vmem:[#allocation16] sm:$0xff] %v6001
    %6005 = vst [vmem:[#allocation15] sm:$0xff] %v6003
    %s6006 = scalar_lea.vmem [#allocation35], 24
    %6007 = vst [vmem:[%s6006] sm:$0xff] %v6003
    %v6008 = vld [vmem:[#allocation15] sm:$0xff]
    %v6009 = vld [vmem:[#allocation16] sm:$0xff]
    %s6010 = scalar_lea.vmem [#allocation8], 128
    %v6011 = vld [vmem:[%s6010] sm:$0xff]
    %v6012 = vld [vmem:[%s6010 + $0x8] sm:$0xff]
    %v6013 = vld [vmem:[%s6010 + $0x10] sm:$0xff]
    %v6014 = vld [vmem:[%s6010 + $0x18] sm:$0xff]
    %6015 = vmatpush.msra.mxu0 %v5160
    %6016 = vmatpush.msra.mxu0 %v5156
    %6017 = vmatpush.msra.mxu0 %v5152
    %6018 = vmatpush.msra.mxu0 %v5148
    %6019 = vmatpush.msra.mxu0 %v5144
    %6020 = vmatpush.msra.mxu0 %v5140
    %6021 = vmatpush.msra.mxu0 %v5136
    %6022 = vmatpush.msra.mxu0 %v5132
    %6023 = vmatpush.msra.mxu0 %v5128
    %6024 = vmatpush.msra.mxu0 %v5124
    %6025 = vmatpush.msra.mxu0 %v5120
    %6026 = vmatpush.msra.mxu0 %v5116
    %6027 = vmatpush.msra.mxu0 %v5112
    %6028 = vmatpush.msra.mxu0 %v5108
    %6029 = vmatpush.msra.mxu0 %v5104
    %6030 = vmatpush.msra.mxu0 %v5100
    %6031 = vmatmul.f32.gmra.mxu0 %v6008
    %v6032 = vpop.f32.mrf.mxu0
    %v6033 = vadd.f32 0.0, %v6032
    %6034 = vdwg.mxu0
    %6035 = vmatpush.msra.mxu0 %v5161
    %6036 = vmatpush.msra.mxu0 %v5157
    %6037 = vmatpush.msra.mxu0 %v5153
    %6038 = vmatpush.msra.mxu0 %v5149
    %6039 = vmatpush.msra.mxu0 %v5145
    %6040 = vmatpush.msra.mxu0 %v5141
    %6041 = vmatpush.msra.mxu0 %v5137
    %6042 = vmatpush.msra.mxu0 %v5133
    %6043 = vmatpush.msra.mxu0 %v5129
    %6044 = vmatpush.msra.mxu0 %v5125
    %6045 = vmatpush.msra.mxu0 %v5121
    %6046 = vmatpush.msra.mxu0 %v5117
    %6047 = vmatpush.msra.mxu0 %v5113
    %6048 = vmatpush.msra.mxu0 %v5109
    %6049 = vmatpush.msra.mxu0 %v5105
    %6050 = vmatpush.msra.mxu0 %v5101
    %6051 = vmatmul.f32.gmra.mxu0 %v6008
    %v6052 = vpop.f32.mrf.mxu0
    %v6053 = vadd.f32 0.0, %v6052
    %6054 = vdwg.mxu0
    %6055 = vmatpush.msra.mxu0 %v5162
    %6056 = vmatpush.msra.mxu0 %v5158
    %6057 = vmatpush.msra.mxu0 %v5154
    %6058 = vmatpush.msra.mxu0 %v5150
    %6059 = vmatpush.msra.mxu0 %v5146
    %6060 = vmatpush.msra.mxu0 %v5142
    %6061 = vmatpush.msra.mxu0 %v5138
    %6062 = vmatpush.msra.mxu0 %v5134
    %6063 = vmatpush.msra.mxu0 %v5130
    %6064 = vmatpush.msra.mxu0 %v5126
    %6065 = vmatpush.msra.mxu0 %v5122
    %6066 = vmatpush.msra.mxu0 %v5118
    %6067 = vmatpush.msra.mxu0 %v5114
    %6068 = vmatpush.msra.mxu0 %v5110
    %6069 = vmatpush.msra.mxu0 %v5106
    %6070 = vmatpush.msra.mxu0 %v5102
    %6071 = vmatmul.f32.gmra.mxu0 %v6008
    %v6072 = vpop.f32.mrf.mxu0
    %v6073 = vadd.f32 0.0, %v6072
    %6074 = vdwg.mxu0
    %6075 = vmatpush.msra.mxu0 %v5163
    %6076 = vmatpush.msra.mxu0 %v5159
    %6077 = vmatpush.msra.mxu0 %v5155
    %6078 = vmatpush.msra.mxu0 %v5151
    %6079 = vmatpush.msra.mxu0 %v5147
    %6080 = vmatpush.msra.mxu0 %v5143
    %6081 = vmatpush.msra.mxu0 %v5139
    %6082 = vmatpush.msra.mxu0 %v5135
    %6083 = vmatpush.msra.mxu0 %v5131
    %6084 = vmatpush.msra.mxu0 %v5127
    %6085 = vmatpush.msra.mxu0 %v5123
    %6086 = vmatpush.msra.mxu0 %v5119
    %6087 = vmatpush.msra.mxu0 %v5115
    %6088 = vmatpush.msra.mxu0 %v5111
    %6089 = vmatpush.msra.mxu0 %v5107
    %6090 = vmatpush.msra.mxu0 %v5103
    %6091 = vmatmul.f32.gmra.mxu0 %v6008
    %v6092 = vpop.f32.mrf.mxu0
    %v6093 = vadd.f32 0.0, %v6092
    %6094 = vdwg.mxu0
    %v6095 = vadd.f32 %v6011, %v6033
    %v6096 = vadd.f32 %v6012, %v6053
    %v6097 = vadd.f32 %v6013, %v6073
    %v6098 = vadd.f32 %v6014, %v6093
    %v6099 = vxor.u32 %v6095, 2147483648
    %v6100 = vxor.u32 %v6096, 2147483648
    %v6101 = vxor.u32 %v6097, 2147483648
    %v6102 = vmul.f32 %v6099, 1.442695
    %v6103 = vpow.pop %v6102
    %v6104 = vmul.f32 %v6100, 1.442695
    %v6105 = vpow.pop %v6104
    %v6106 = vmul.f32 %v6101, 1.442695
    %v6107 = vpow.pop %v6106
    %v6108 = vadd.f32 %v6103, 1.0
    %v6109 = vadd.f32 %v6105, 1.0
    %v6110 = vadd.f32 %v6107, 1.0
    %v6111 = vrcp.pop %v6108
    %v6112 = vmul.f32 %v6108, %v6111
    %v6113 = vsub.f32 1.0, %v6112
    %v6114 = vmul.f32 %v6111, %v6113
    %v6115 = vadd.f32 %v6111, %v6114
    %vm6116 = vweird.f32 %v6108
    %vm6117 = vweird.f32 %v6111
    %vm6118 = vmor %vm6116, %vm6117
    %v6119 = vsel %vm6118, %v6111, %v6115
    %v6120 = vand.u32 2147483647, %v6108
    %vm6121 = vcmp.eq.f32.partialorder %v6120, 8.507059e+37
    %v6122 = vand.u32 %v6108, 2147483648
    %v6123 = vor.u32 1.1754944e-38, %v6122
    %v6124 = vsel %vm6121, %v6123, %v6119
    %v6125 = vmul.f32 1.0, %v6124
    %v6126 = vrcp.pop %v6109
    %v6127 = vmul.f32 %v6109, %v6126
    %v6128 = vsub.f32 1.0, %v6127
    %v6129 = vmul.f32 %v6126, %v6128
    %v6130 = vadd.f32 %v6126, %v6129
    %vm6131 = vweird.f32 %v6109
    %vm6132 = vweird.f32 %v6126
    %vm6133 = vmor %vm6131, %vm6132
    %v6134 = vsel %vm6133, %v6126, %v6130
    %v6135 = vand.u32 2147483647, %v6109
    %vm6136 = vcmp.eq.f32.partialorder %v6135, 8.507059e+37
    %v6137 = vand.u32 %v6109, 2147483648
    %v6138 = vor.u32 1.1754944e-38, %v6137
    %v6139 = vsel %vm6136, %v6138, %v6134
    %v6140 = vmul.f32 1.0, %v6139
    %v6141 = vrcp.pop %v6110
    %v6142 = vmul.f32 %v6110, %v6141
    %v6143 = vsub.f32 1.0, %v6142
    %v6144 = vmul.f32 %v6141, %v6143
    %v6145 = vadd.f32 %v6141, %v6144
    %vm6146 = vweird.f32 %v6110
    %vm6147 = vweird.f32 %v6141
    %vm6148 = vmor %vm6146, %vm6147
    %v6149 = vsel %vm6148, %v6141, %v6145
    %v6150 = vand.u32 2147483647, %v6110
    %vm6151 = vcmp.eq.f32.partialorder %v6150, 8.507059e+37
    %v6152 = vand.u32 %v6110, 2147483648
    %v6153 = vor.u32 1.1754944e-38, %v6152
    %v6154 = vsel %vm6151, %v6153, %v6149
    %v6155 = vmul.f32 1.0, %v6154
    %v6156 = vtanh.pop %v6098
    %v6157 = vmul.f32 %v6140, %v6009
    %v6158 = vmul.f32 %v6125, %v6156
    %v6159 = vadd.f32 %v6157, %v6158
    %v6160 = vtanh.pop %v6159
    %v6161 = vmul.f32 %v6155, %v6160
    %6162 = vst [vmem:[#allocation16] sm:$0xff] %v6159
    %6163 = vst [vmem:[#allocation15] sm:$0xff] %v6161
    %s6164 = scalar_lea.vmem [#allocation35], 32
    %6165 = vst [vmem:[%s6164] sm:$0xff] %v6161
    %v6166 = vld [vmem:[#allocation15] sm:$0xff]
    %v6167 = vld [vmem:[#allocation16] sm:$0xff]
    %s6168 = scalar_lea.vmem [#allocation8], 160
    %v6169 = vld [vmem:[%s6168] sm:$0xff]
    %v6170 = vld [vmem:[%s6168 + $0x8] sm:$0xff]
    %v6171 = vld [vmem:[%s6168 + $0x10] sm:$0xff]
    %v6172 = vld [vmem:[%s6168 + $0x18] sm:$0xff]
    %6173 = vmatpush.msra.mxu0 %v5160
    %6174 = vmatpush.msra.mxu0 %v5156
    %6175 = vmatpush.msra.mxu0 %v5152
    %6176 = vmatpush.msra.mxu0 %v5148
    %6177 = vmatpush.msra.mxu0 %v5144
    %6178 = vmatpush.msra.mxu0 %v5140
    %6179 = vmatpush.msra.mxu0 %v5136
    %6180 = vmatpush.msra.mxu0 %v5132
    %6181 = vmatpush.msra.mxu0 %v5128
    %6182 = vmatpush.msra.mxu0 %v5124
    %6183 = vmatpush.msra.mxu0 %v5120
    %6184 = vmatpush.msra.mxu0 %v5116
    %6185 = vmatpush.msra.mxu0 %v5112
    %6186 = vmatpush.msra.mxu0 %v5108
    %6187 = vmatpush.msra.mxu0 %v5104
    %6188 = vmatpush.msra.mxu0 %v5100
    %6189 = vmatmul.f32.gmra.mxu0 %v6166
    %v6190 = vpop.f32.mrf.mxu0
    %v6191 = vadd.f32 0.0, %v6190
    %6192 = vdwg.mxu0
    %6193 = vmatpush.msra.mxu0 %v5161
    %6194 = vmatpush.msra.mxu0 %v5157
    %6195 = vmatpush.msra.mxu0 %v5153
    %6196 = vmatpush.msra.mxu0 %v5149
    %6197 = vmatpush.msra.mxu0 %v5145
    %6198 = vmatpush.msra.mxu0 %v5141
    %6199 = vmatpush.msra.mxu0 %v5137
    %6200 = vmatpush.msra.mxu0 %v5133
    %6201 = vmatpush.msra.mxu0 %v5129
    %6202 = vmatpush.msra.mxu0 %v5125
    %6203 = vmatpush.msra.mxu0 %v5121
    %6204 = vmatpush.msra.mxu0 %v5117
    %6205 = vmatpush.msra.mxu0 %v5113
    %6206 = vmatpush.msra.mxu0 %v5109
    %6207 = vmatpush.msra.mxu0 %v5105
    %6208 = vmatpush.msra.mxu0 %v5101
    %6209 = vmatmul.f32.gmra.mxu0 %v6166
    %v6210 = vpop.f32.mrf.mxu0
    %v6211 = vadd.f32 0.0, %v6210
    %6212 = vdwg.mxu0
    %6213 = vmatpush.msra.mxu0 %v5162
    %6214 = vmatpush.msra.mxu0 %v5158
    %6215 = vmatpush.msra.mxu0 %v5154
    %6216 = vmatpush.msra.mxu0 %v5150
    %6217 = vmatpush.msra.mxu0 %v5146
    %6218 = vmatpush.msra.mxu0 %v5142
    %6219 = vmatpush.msra.mxu0 %v5138
    %6220 = vmatpush.msra.mxu0 %v5134
    %6221 = vmatpush.msra.mxu0 %v5130
    %6222 = vmatpush.msra.mxu0 %v5126
    %6223 = vmatpush.msra.mxu0 %v5122
    %6224 = vmatpush.msra.mxu0 %v5118
    %6225 = vmatpush.msra.mxu0 %v5114
    %6226 = vmatpush.msra.mxu0 %v5110
    %6227 = vmatpush.msra.mxu0 %v5106
    %6228 = vmatpush.msra.mxu0 %v5102
    %6229 = vmatmul.f32.gmra.mxu0 %v6166
    %v6230 = vpop.f32.mrf.mxu0
    %v6231 = vadd.f32 0.0, %v6230
    %6232 = vdwg.mxu0
    %6233 = vmatpush.msra.mxu0 %v5163
    %6234 = vmatpush.msra.mxu0 %v5159
    %6235 = vmatpush.msra.mxu0 %v5155
    %6236 = vmatpush.msra.mxu0 %v5151
    %6237 = vmatpush.msra.mxu0 %v5147
    %6238 = vmatpush.msra.mxu0 %v5143
    %6239 = vmatpush.msra.mxu0 %v5139
    %6240 = vmatpush.msra.mxu0 %v5135
    %6241 = vmatpush.msra.mxu0 %v5131
    %6242 = vmatpush.msra.mxu0 %v5127
    %6243 = vmatpush.msra.mxu0 %v5123
    %6244 = vmatpush.msra.mxu0 %v5119
    %6245 = vmatpush.msra.mxu0 %v5115
    %6246 = vmatpush.msra.mxu0 %v5111
    %6247 = vmatpush.msra.mxu0 %v5107
    %6248 = vmatpush.msra.mxu0 %v5103
    %6249 = vmatmul.f32.gmra.mxu0 %v6166
    %v6250 = vpop.f32.mrf.mxu0
    %v6251 = vadd.f32 0.0, %v6250
    %6252 = vdwg.mxu0
    %v6253 = vadd.f32 %v6169, %v6191
    %v6254 = vadd.f32 %v6170, %v6211
    %v6255 = vadd.f32 %v6171, %v6231
    %v6256 = vadd.f32 %v6172, %v6251
    %v6257 = vxor.u32 %v6253, 2147483648
    %v6258 = vxor.u32 %v6254, 2147483648
    %v6259 = vxor.u32 %v6255, 2147483648
    %v6260 = vmul.f32 %v6257, 1.442695
    %v6261 = vpow.pop %v6260
    %v6262 = vmul.f32 %v6258, 1.442695
    %v6263 = vpow.pop %v6262
    %v6264 = vmul.f32 %v6259, 1.442695
    %v6265 = vpow.pop %v6264
    %v6266 = vadd.f32 %v6261, 1.0
    %v6267 = vadd.f32 %v6263, 1.0
    %v6268 = vadd.f32 %v6265, 1.0
    %v6269 = vrcp.pop %v6266
    %v6270 = vmul.f32 %v6266, %v6269
    %v6271 = vsub.f32 1.0, %v6270
    %v6272 = vmul.f32 %v6269, %v6271
    %v6273 = vadd.f32 %v6269, %v6272
    %vm6274 = vweird.f32 %v6266
    %vm6275 = vweird.f32 %v6269
    %vm6276 = vmor %vm6274, %vm6275
    %v6277 = vsel %vm6276, %v6269, %v6273
    %v6278 = vand.u32 2147483647, %v6266
    %vm6279 = vcmp.eq.f32.partialorder %v6278, 8.507059e+37
    %v6280 = vand.u32 %v6266, 2147483648
    %v6281 = vor.u32 1.1754944e-38, %v6280
    %v6282 = vsel %vm6279, %v6281, %v6277
    %v6283 = vmul.f32 1.0, %v6282
    %v6284 = vrcp.pop %v6267
    %v6285 = vmul.f32 %v6267, %v6284
    %v6286 = vsub.f32 1.0, %v6285
    %v6287 = vmul.f32 %v6284, %v6286
    %v6288 = vadd.f32 %v6284, %v6287
    %vm6289 = vweird.f32 %v6267
    %vm6290 = vweird.f32 %v6284
    %vm6291 = vmor %vm6289, %vm6290
    %v6292 = vsel %vm6291, %v6284, %v6288
    %v6293 = vand.u32 2147483647, %v6267
    %vm6294 = vcmp.eq.f32.partialorder %v6293, 8.507059e+37
    %v6295 = vand.u32 %v6267, 2147483648
    %v6296 = vor.u32 1.1754944e-38, %v6295
    %v6297 = vsel %vm6294, %v6296, %v6292
    %v6298 = vmul.f32 1.0, %v6297
    %v6299 = vrcp.pop %v6268
    %v6300 = vmul.f32 %v6268, %v6299
    %v6301 = vsub.f32 1.0, %v6300
    %v6302 = vmul.f32 %v6299, %v6301
    %v6303 = vadd.f32 %v6299, %v6302
    %vm6304 = vweird.f32 %v6268
    %vm6305 = vweird.f32 %v6299
    %vm6306 = vmor %vm6304, %vm6305
    %v6307 = vsel %vm6306, %v6299, %v6303
    %v6308 = vand.u32 2147483647, %v6268
    %vm6309 = vcmp.eq.f32.partialorder %v6308, 8.507059e+37
    %v6310 = vand.u32 %v6268, 2147483648
    %v6311 = vor.u32 1.1754944e-38, %v6310
    %v6312 = vsel %vm6309, %v6311, %v6307
    %v6313 = vmul.f32 1.0, %v6312
    %v6314 = vtanh.pop %v6256
    %v6315 = vmul.f32 %v6298, %v6167
    %v6316 = vmul.f32 %v6283, %v6314
    %v6317 = vadd.f32 %v6315, %v6316
    %v6318 = vtanh.pop %v6317
    %v6319 = vmul.f32 %v6313, %v6318
    %6320 = vst [vmem:[#allocation16] sm:$0xff] %v6317
    %6321 = vst [vmem:[#allocation15] sm:$0xff] %v6319
    %s6322 = scalar_lea.vmem [#allocation35], 40
    %6323 = vst [vmem:[%s6322] sm:$0xff] %v6319
    %v6324 = vld [vmem:[#allocation15] sm:$0xff]
    %v6325 = vld [vmem:[#allocation16] sm:$0xff]
    %s6326 = scalar_lea.vmem [#allocation8], 192
    %v6327 = vld [vmem:[%s6326] sm:$0xff]
    %v6328 = vld [vmem:[%s6326 + $0x8] sm:$0xff]
    %v6329 = vld [vmem:[%s6326 + $0x10] sm:$0xff]
    %v6330 = vld [vmem:[%s6326 + $0x18] sm:$0xff]
    %6331 = vmatpush.msra.mxu0 %v5160
    %6332 = vmatpush.msra.mxu0 %v5156
    %6333 = vmatpush.msra.mxu0 %v5152
    %6334 = vmatpush.msra.mxu0 %v5148
    %6335 = vmatpush.msra.mxu0 %v5144
    %6336 = vmatpush.msra.mxu0 %v5140
    %6337 = vmatpush.msra.mxu0 %v5136
    %6338 = vmatpush.msra.mxu0 %v5132
    %6339 = vmatpush.msra.mxu0 %v5128
    %6340 = vmatpush.msra.mxu0 %v5124
    %6341 = vmatpush.msra.mxu0 %v5120
    %6342 = vmatpush.msra.mxu0 %v5116
    %6343 = vmatpush.msra.mxu0 %v5112
    %6344 = vmatpush.msra.mxu0 %v5108
    %6345 = vmatpush.msra.mxu0 %v5104
    %6346 = vmatpush.msra.mxu0 %v5100
    %6347 = vmatmul.f32.gmra.mxu0 %v6324
    %v6348 = vpop.f32.mrf.mxu0
    %v6349 = vadd.f32 0.0, %v6348
    %6350 = vdwg.mxu0
    %6351 = vmatpush.msra.mxu0 %v5161
    %6352 = vmatpush.msra.mxu0 %v5157
    %6353 = vmatpush.msra.mxu0 %v5153
    %6354 = vmatpush.msra.mxu0 %v5149
    %6355 = vmatpush.msra.mxu0 %v5145
    %6356 = vmatpush.msra.mxu0 %v5141
    %6357 = vmatpush.msra.mxu0 %v5137
    %6358 = vmatpush.msra.mxu0 %v5133
    %6359 = vmatpush.msra.mxu0 %v5129
    %6360 = vmatpush.msra.mxu0 %v5125
    %6361 = vmatpush.msra.mxu0 %v5121
    %6362 = vmatpush.msra.mxu0 %v5117
    %6363 = vmatpush.msra.mxu0 %v5113
    %6364 = vmatpush.msra.mxu0 %v5109
    %6365 = vmatpush.msra.mxu0 %v5105
    %6366 = vmatpush.msra.mxu0 %v5101
    %6367 = vmatmul.f32.gmra.mxu0 %v6324
    %v6368 = vpop.f32.mrf.mxu0
    %v6369 = vadd.f32 0.0, %v6368
    %6370 = vdwg.mxu0
    %6371 = vmatpush.msra.mxu0 %v5162
    %6372 = vmatpush.msra.mxu0 %v5158
    %6373 = vmatpush.msra.mxu0 %v5154
    %6374 = vmatpush.msra.mxu0 %v5150
    %6375 = vmatpush.msra.mxu0 %v5146
    %6376 = vmatpush.msra.mxu0 %v5142
    %6377 = vmatpush.msra.mxu0 %v5138
    %6378 = vmatpush.msra.mxu0 %v5134
    %6379 = vmatpush.msra.mxu0 %v5130
    %6380 = vmatpush.msra.mxu0 %v5126
    %6381 = vmatpush.msra.mxu0 %v5122
    %6382 = vmatpush.msra.mxu0 %v5118
    %6383 = vmatpush.msra.mxu0 %v5114
    %6384 = vmatpush.msra.mxu0 %v5110
    %6385 = vmatpush.msra.mxu0 %v5106
    %6386 = vmatpush.msra.mxu0 %v5102
    %6387 = vmatmul.f32.gmra.mxu0 %v6324
    %v6388 = vpop.f32.mrf.mxu0
    %v6389 = vadd.f32 0.0, %v6388
    %6390 = vdwg.mxu0
    %6391 = vmatpush.msra.mxu0 %v5163
    %6392 = vmatpush.msra.mxu0 %v5159
    %6393 = vmatpush.msra.mxu0 %v5155
    %6394 = vmatpush.msra.mxu0 %v5151
    %6395 = vmatpush.msra.mxu0 %v5147
    %6396 = vmatpush.msra.mxu0 %v5143
    %6397 = vmatpush.msra.mxu0 %v5139
    %6398 = vmatpush.msra.mxu0 %v5135
    %6399 = vmatpush.msra.mxu0 %v5131
    %6400 = vmatpush.msra.mxu0 %v5127
    %6401 = vmatpush.msra.mxu0 %v5123
    %6402 = vmatpush.msra.mxu0 %v5119
    %6403 = vmatpush.msra.mxu0 %v5115
    %6404 = vmatpush.msra.mxu0 %v5111
    %6405 = vmatpush.msra.mxu0 %v5107
    %6406 = vmatpush.msra.mxu0 %v5103
    %6407 = vmatmul.f32.gmra.mxu0 %v6324
    %v6408 = vpop.f32.mrf.mxu0
    %v6409 = vadd.f32 0.0, %v6408
    %6410 = vdwg.mxu0
    %v6411 = vadd.f32 %v6327, %v6349
    %v6412 = vadd.f32 %v6328, %v6369
    %v6413 = vadd.f32 %v6329, %v6389
    %v6414 = vadd.f32 %v6330, %v6409
    %v6415 = vxor.u32 %v6411, 2147483648
    %v6416 = vxor.u32 %v6412, 2147483648
    %v6417 = vxor.u32 %v6413, 2147483648
    %v6418 = vmul.f32 %v6415, 1.442695
    %v6419 = vpow.pop %v6418
    %v6420 = vmul.f32 %v6416, 1.442695
    %v6421 = vpow.pop %v6420
    %v6422 = vmul.f32 %v6417, 1.442695
    %v6423 = vpow.pop %v6422
    %v6424 = vadd.f32 %v6419, 1.0
    %v6425 = vadd.f32 %v6421, 1.0
    %v6426 = vadd.f32 %v6423, 1.0
    %v6427 = vrcp.pop %v6424
    %v6428 = vmul.f32 %v6424, %v6427
    %v6429 = vsub.f32 1.0, %v6428
    %v6430 = vmul.f32 %v6427, %v6429
    %v6431 = vadd.f32 %v6427, %v6430
    %vm6432 = vweird.f32 %v6424
    %vm6433 = vweird.f32 %v6427
    %vm6434 = vmor %vm6432, %vm6433
    %v6435 = vsel %vm6434, %v6427, %v6431
    %v6436 = vand.u32 2147483647, %v6424
    %vm6437 = vcmp.eq.f32.partialorder %v6436, 8.507059e+37
    %v6438 = vand.u32 %v6424, 2147483648
    %v6439 = vor.u32 1.1754944e-38, %v6438
    %v6440 = vsel %vm6437, %v6439, %v6435
    %v6441 = vmul.f32 1.0, %v6440
    %v6442 = vrcp.pop %v6425
    %v6443 = vmul.f32 %v6425, %v6442
    %v6444 = vsub.f32 1.0, %v6443
    %v6445 = vmul.f32 %v6442, %v6444
    %v6446 = vadd.f32 %v6442, %v6445
    %vm6447 = vweird.f32 %v6425
    %vm6448 = vweird.f32 %v6442
    %vm6449 = vmor %vm6447, %vm6448
    %v6450 = vsel %vm6449, %v6442, %v6446
    %v6451 = vand.u32 2147483647, %v6425
    %vm6452 = vcmp.eq.f32.partialorder %v6451, 8.507059e+37
    %v6453 = vand.u32 %v6425, 2147483648
    %v6454 = vor.u32 1.1754944e-38, %v6453
    %v6455 = vsel %vm6452, %v6454, %v6450
    %v6456 = vmul.f32 1.0, %v6455
    %v6457 = vrcp.pop %v6426
    %v6458 = vmul.f32 %v6426, %v6457
    %v6459 = vsub.f32 1.0, %v6458
    %v6460 = vmul.f32 %v6457, %v6459
    %v6461 = vadd.f32 %v6457, %v6460
    %vm6462 = vweird.f32 %v6426
    %vm6463 = vweird.f32 %v6457
    %vm6464 = vmor %vm6462, %vm6463
    %v6465 = vsel %vm6464, %v6457, %v6461
    %v6466 = vand.u32 2147483647, %v6426
    %vm6467 = vcmp.eq.f32.partialorder %v6466, 8.507059e+37
    %v6468 = vand.u32 %v6426, 2147483648
    %v6469 = vor.u32 1.1754944e-38, %v6468
    %v6470 = vsel %vm6467, %v6469, %v6465
    %v6471 = vmul.f32 1.0, %v6470
    %v6472 = vtanh.pop %v6414
    %v6473 = vmul.f32 %v6456, %v6325
    %v6474 = vmul.f32 %v6441, %v6472
    %v6475 = vadd.f32 %v6473, %v6474
    %v6476 = vtanh.pop %v6475
    %v6477 = vmul.f32 %v6471, %v6476
    %6478 = vst [vmem:[#allocation16] sm:$0xff] %v6475
    %6479 = vst [vmem:[#allocation15] sm:$0xff] %v6477
    %s6480 = scalar_lea.vmem [#allocation35], 48
    %6481 = vst [vmem:[%s6480] sm:$0xff] %v6477
    %v6482 = vld [vmem:[#allocation15] sm:$0xff]
    %v6483 = vld [vmem:[#allocation16] sm:$0xff]
    %s6484 = scalar_lea.vmem [#allocation8], 224
    %v6485 = vld [vmem:[%s6484] sm:$0xff]
    %v6486 = vld [vmem:[%s6484 + $0x8] sm:$0xff]
    %v6487 = vld [vmem:[%s6484 + $0x10] sm:$0xff]
    %v6488 = vld [vmem:[%s6484 + $0x18] sm:$0xff]
    %6489 = vmatpush.msra.mxu0 %v5160
    %6490 = vmatpush.msra.mxu0 %v5156
    %6491 = vmatpush.msra.mxu0 %v5152
    %6492 = vmatpush.msra.mxu0 %v5148
    %6493 = vmatpush.msra.mxu0 %v5144
    %6494 = vmatpush.msra.mxu0 %v5140
    %6495 = vmatpush.msra.mxu0 %v5136
    %6496 = vmatpush.msra.mxu0 %v5132
    %6497 = vmatpush.msra.mxu0 %v5128
    %6498 = vmatpush.msra.mxu0 %v5124
    %6499 = vmatpush.msra.mxu0 %v5120
    %6500 = vmatpush.msra.mxu0 %v5116
    %6501 = vmatpush.msra.mxu0 %v5112
    %6502 = vmatpush.msra.mxu0 %v5108
    %6503 = vmatpush.msra.mxu0 %v5104
    %6504 = vmatpush.msra.mxu0 %v5100
    %6505 = vmatmul.f32.gmra.mxu0 %v6482
    %v6506 = vpop.f32.mrf.mxu0
    %v6507 = vadd.f32 0.0, %v6506
    %6508 = vdwg.mxu0
    %6509 = vmatpush.msra.mxu0 %v5161
    %6510 = vmatpush.msra.mxu0 %v5157
    %6511 = vmatpush.msra.mxu0 %v5153
    %6512 = vmatpush.msra.mxu0 %v5149
    %6513 = vmatpush.msra.mxu0 %v5145
    %6514 = vmatpush.msra.mxu0 %v5141
    %6515 = vmatpush.msra.mxu0 %v5137
    %6516 = vmatpush.msra.mxu0 %v5133
    %6517 = vmatpush.msra.mxu0 %v5129
    %6518 = vmatpush.msra.mxu0 %v5125
    %6519 = vmatpush.msra.mxu0 %v5121
    %6520 = vmatpush.msra.mxu0 %v5117
    %6521 = vmatpush.msra.mxu0 %v5113
    %6522 = vmatpush.msra.mxu0 %v5109
    %6523 = vmatpush.msra.mxu0 %v5105
    %6524 = vmatpush.msra.mxu0 %v5101
    %6525 = vmatmul.f32.gmra.mxu0 %v6482
    %v6526 = vpop.f32.mrf.mxu0
    %v6527 = vadd.f32 0.0, %v6526
    %6528 = vdwg.mxu0
    %6529 = vmatpush.msra.mxu0 %v5162
    %6530 = vmatpush.msra.mxu0 %v5158
    %6531 = vmatpush.msra.mxu0 %v5154
    %6532 = vmatpush.msra.mxu0 %v5150
    %6533 = vmatpush.msra.mxu0 %v5146
    %6534 = vmatpush.msra.mxu0 %v5142
    %6535 = vmatpush.msra.mxu0 %v5138
    %6536 = vmatpush.msra.mxu0 %v5134
    %6537 = vmatpush.msra.mxu0 %v5130
    %6538 = vmatpush.msra.mxu0 %v5126
    %6539 = vmatpush.msra.mxu0 %v5122
    %6540 = vmatpush.msra.mxu0 %v5118
    %6541 = vmatpush.msra.mxu0 %v5114
    %6542 = vmatpush.msra.mxu0 %v5110
    %6543 = vmatpush.msra.mxu0 %v5106
    %6544 = vmatpush.msra.mxu0 %v5102
    %6545 = vmatmul.f32.gmra.mxu0 %v6482
    %v6546 = vpop.f32.mrf.mxu0
    %v6547 = vadd.f32 0.0, %v6546
    %6548 = vdwg.mxu0
    %6549 = vmatpush.msra.mxu0 %v5163
    %6550 = vmatpush.msra.mxu0 %v5159
    %6551 = vmatpush.msra.mxu0 %v5155
    %6552 = vmatpush.msra.mxu0 %v5151
    %6553 = vmatpush.msra.mxu0 %v5147
    %6554 = vmatpush.msra.mxu0 %v5143
    %6555 = vmatpush.msra.mxu0 %v5139
    %6556 = vmatpush.msra.mxu0 %v5135
    %6557 = vmatpush.msra.mxu0 %v5131
    %6558 = vmatpush.msra.mxu0 %v5127
    %6559 = vmatpush.msra.mxu0 %v5123
    %6560 = vmatpush.msra.mxu0 %v5119
    %6561 = vmatpush.msra.mxu0 %v5115
    %6562 = vmatpush.msra.mxu0 %v5111
    %6563 = vmatpush.msra.mxu0 %v5107
    %6564 = vmatpush.msra.mxu0 %v5103
    %6565 = vmatmul.f32.gmra.mxu0 %v6482
    %v6566 = vpop.f32.mrf.mxu0
    %v6567 = vadd.f32 0.0, %v6566
    %6568 = vdwg.mxu0
    %v6569 = vadd.f32 %v6485, %v6507
    %v6570 = vadd.f32 %v6486, %v6527
    %v6571 = vadd.f32 %v6487, %v6547
    %v6572 = vadd.f32 %v6488, %v6567
    %v6573 = vxor.u32 %v6569, 2147483648
    %v6574 = vxor.u32 %v6570, 2147483648
    %v6575 = vxor.u32 %v6571, 2147483648
    %v6576 = vmul.f32 %v6573, 1.442695
    %v6577 = vpow.pop %v6576
    %v6578 = vmul.f32 %v6574, 1.442695
    %v6579 = vpow.pop %v6578
    %v6580 = vmul.f32 %v6575, 1.442695
    %v6581 = vpow.pop %v6580
    %v6582 = vadd.f32 %v6577, 1.0
    %v6583 = vadd.f32 %v6579, 1.0
    %v6584 = vadd.f32 %v6581, 1.0
    %v6585 = vrcp.pop %v6582
    %v6586 = vmul.f32 %v6582, %v6585
    %v6587 = vsub.f32 1.0, %v6586
    %v6588 = vmul.f32 %v6585, %v6587
    %v6589 = vadd.f32 %v6585, %v6588
    %vm6590 = vweird.f32 %v6582
    %vm6591 = vweird.f32 %v6585
    %vm6592 = vmor %vm6590, %vm6591
    %v6593 = vsel %vm6592, %v6585, %v6589
    %v6594 = vand.u32 2147483647, %v6582
    %vm6595 = vcmp.eq.f32.partialorder %v6594, 8.507059e+37
    %v6596 = vand.u32 %v6582, 2147483648
    %v6597 = vor.u32 1.1754944e-38, %v6596
    %v6598 = vsel %vm6595, %v6597, %v6593
    %v6599 = vmul.f32 1.0, %v6598
    %v6600 = vrcp.pop %v6583
    %v6601 = vmul.f32 %v6583, %v6600
    %v6602 = vsub.f32 1.0, %v6601
    %v6603 = vmul.f32 %v6600, %v6602
    %v6604 = vadd.f32 %v6600, %v6603
    %vm6605 = vweird.f32 %v6583
    %vm6606 = vweird.f32 %v6600
    %vm6607 = vmor %vm6605, %vm6606
    %v6608 = vsel %vm6607, %v6600, %v6604
    %v6609 = vand.u32 2147483647, %v6583
    %vm6610 = vcmp.eq.f32.partialorder %v6609, 8.507059e+37
    %v6611 = vand.u32 %v6583, 2147483648
    %v6612 = vor.u32 1.1754944e-38, %v6611
    %v6613 = vsel %vm6610, %v6612, %v6608
    %v6614 = vmul.f32 1.0, %v6613
    %v6615 = vrcp.pop %v6584
    %v6616 = vmul.f32 %v6584, %v6615
    %v6617 = vsub.f32 1.0, %v6616
    %v6618 = vmul.f32 %v6615, %v6617
    %v6619 = vadd.f32 %v6615, %v6618
    %vm6620 = vweird.f32 %v6584
    %vm6621 = vweird.f32 %v6615
    %vm6622 = vmor %vm6620, %vm6621
    %v6623 = vsel %vm6622, %v6615, %v6619
    %v6624 = vand.u32 2147483647, %v6584
    %vm6625 = vcmp.eq.f32.partialorder %v6624, 8.507059e+37
    %v6626 = vand.u32 %v6584, 2147483648
    %v6627 = vor.u32 1.1754944e-38, %v6626
    %v6628 = vsel %vm6625, %v6627, %v6623
    %v6629 = vmul.f32 1.0, %v6628
    %v6630 = vtanh.pop %v6572
    %v6631 = vmul.f32 %v6614, %v6483
    %v6632 = vmul.f32 %v6599, %v6630
    %v6633 = vadd.f32 %v6631, %v6632
    %v6634 = vtanh.pop %v6633
    %v6635 = vmul.f32 %v6629, %v6634
    %6636 = vst [vmem:[#allocation16] sm:$0xff] %v6633
    %6637 = vst [vmem:[#allocation15] sm:$0xff] %v6635
    %s6638 = scalar_lea.vmem [#allocation35], 56
    %6639 = vst [vmem:[%s6638] sm:$0xff] %v6635
    // Predicated region
    $region102: #{tpu_custom_call.1} parent=1 // pred_check
      _
    $region103: #{tpu_custom_call.1} parent=1 // pred_check_branch
      %6641 = sbr.rel (0) target = $region105
    $region104: #{tpu_custom_call.1} parent=1 // pred_region
      %6643 = vsyncadd [#allocation19], 0
      %s6644 = sshll.u32 [#allocation35], 4
      %s6645 = int_to_ptr.vmem [resolvable:$true] %s6644
      %s6646 = sshll.u32 %s13, 4
      %s6647 = int_to_ptr.hbm [resolvable:$true] %s6646
      %6652 = dma.vmem_to_hbm [thread:$0]  %s6645, 1024, %s6647, [#allocation19], 128, 128, 8
    $region105: #{tpu_custom_call.1} parent=1 // pred_fallthru
      _
    // Predicated region
    $region106: #{tpu_custom_call.1} parent=1 // pred_check
      _
    $region107: #{tpu_custom_call.1} parent=1 // pred_check_branch
      %6654 = sbr.rel (0) target = $region109
    $region108: #{tpu_custom_call.1} parent=1 // pred_region
      %6656 = dma.done [#allocation19], 1024
    $region109: #{tpu_custom_call.1} parent=1 // pred_fallthru
      _
    %6657 = vsyncpa [#allocation18], 1
    %6658 = vsyncpa [#allocation21], 1
    %6659 = vsyncpa [#allocation24], 1
    %6660 = vsyncpa [#allocation27], 1
    %6661 = vsyncpa [#allocation30], 1
    %6662 = vsyncpa [#allocation33], 1
    %6663 = vsyncpa [#allocation19], 1

</llo_original>
